<compile_context>
chip_gen: v7x
topology: tpu7x:2x2x1
jax: 0.10.0
libtpu: 0.0.40
codegen_flags: <defaults>
</compile_context>

<pallas_src>
import math
from functools import partial

import jax
import jax.numpy as jnp
from jax import lax
from jax.experimental import pallas as pl
from jax.experimental.pallas import tpu as pltpu


# Rows of the packed per-layer vector array `vecs` (9, D), all f32.
_BQ, _BK, _BV, _BO, _G1, _BETA1, _B2, _G2, _BETA2 = range(9)


def _layer_norm(x, gamma, beta, eps):
    mean = jnp.mean(x, axis=-1, keepdims=True)
    var = jnp.mean((x - mean) ** 2, axis=-1, keepdims=True)
    return (x - mean) * lax.rsqrt(var + eps) * gamma + beta


# ----------------------------- fused layer kernel ----------------------------

def _make_layer_kernel(num_heads, head_dim, with_pe, with_head, eps=1e-5):
    """Fused encoder-layer kernel body.

    Ref order (matches in_specs below):
      x, [pe], wq, wk, wv, wo, w1, w2, b1, vecs, [w_cls, b_cls], out
    """
    scale = 1.0 / math.sqrt(head_dim)

    def kernel(*refs):
        idx = 0
        x_ref = refs[idx]; idx += 1
        if with_pe:
            pe_ref = refs[idx]; idx += 1
        (wq_ref, wk_ref, wv_ref, wo_ref,
         w1_ref, w2_ref, b1_ref, vecs_ref) = refs[idx:idx + 8]
        idx += 8
        if with_head:
            wcls_ref, bcls_ref = refs[idx:idx + 2]; idx += 2
        out_ref = refs[idx]

        x = x_ref[0]                                   # (S, D) f32 in VMEM
        if with_pe:
            x = x + pe_ref[0]                          # positional encoding

        # Packed small vectors (biases / LN params), f32.
        bq = vecs_ref[_BQ:_BQ + 1, :]
        bk = vecs_ref[_BK:_BK + 1, :]
        bv = vecs_ref[_BV:_BV + 1, :]
        bo = vecs_ref[_BO:_BO + 1, :]
        g1 = vecs_ref[_G1:_G1 + 1, :]
        beta1 = vecs_ref[_BETA1:_BETA1 + 1, :]
        b2 = vecs_ref[_B2:_B2 + 1, :]
        g2 = vecs_ref[_G2:_G2 + 1, :]
        beta2 = vecs_ref[_BETA2:_BETA2 + 1, :]

        x_bf = x.astype(jnp.bfloat16)
        # Last layer: everything downstream of K/V only needs token 0.
        xq_bf = x_bf[0:1, :] if with_head else x_bf

        # Lane-dense bf16 projections, f32 accumulation.
        q = jnp.dot(xq_bf, wq_ref[...], preferred_element_type=jnp.float32) + bq
        k = jnp.dot(x_bf, wk_ref[...], preferred_element_type=jnp.float32) + bk
        v = jnp.dot(x_bf, wv_ref[...], preferred_element_type=jnp.float32) + bv

        # Per-head attention on static lane slices of the shared Q/K/V.
        ctxs = []
        for h in range(num_heads):
            lo = h * head_dim
            hi = lo + head_dim
            qh = q[:, lo:hi].astype(jnp.bfloat16)      # (Sq, dh)
            kh = k[:, lo:hi].astype(jnp.bfloat16)      # (S, dh)
            vh = v[:, lo:hi].astype(jnp.bfloat16)      # (S, dh)
            # scores = qh @ kh^T without materializing the transpose
            s = lax.dot_general(qh, kh, (((1,), (1,)), ((), ())),
                                preferred_element_type=jnp.float32) * scale
            s = s - jnp.max(s, axis=-1, keepdims=True)
            p = jnp.exp(s)
            p = p * pl.reciprocal(jnp.sum(p, axis=-1, keepdims=True), approx=True)
            ctxs.append(jnp.dot(p.astype(jnp.bfloat16), vh,
                                preferred_element_type=jnp.float32))
        ctx = jnp.concatenate(ctxs, axis=-1)           # (Sq, D) f32

        attn = jnp.dot(ctx.astype(jnp.bfloat16), wo_ref[...],
                       preferred_element_type=jnp.float32) + bo

        # ---- Add & LayerNorm 1 (post-norm, torch eps=1e-5, biased var) ----
        x_res = x[0:1, :] if with_head else x
        y = _layer_norm(x_res + attn, g1, beta1, eps)

        # ---- Feed-forward (ReLU) ----
        h1 = jnp.maximum(
            jnp.dot(y.astype(jnp.bfloat16), w1_ref[...],
                    preferred_element_type=jnp.float32) + b1_ref[...],
            0.0)
        ff = jnp.dot(h1.astype(jnp.bfloat16), w2_ref[...],
                     preferred_element_type=jnp.float32) + b2

        # ---- Add & LayerNorm 2 ----
        z = _layer_norm(y + ff, g2, beta2, eps)

        if with_head:
            # Classifier epilogue fused into the last layer (token 0 only).
            out_ref[0] = (jnp.dot(z.astype(jnp.bfloat16), wcls_ref[...],
                                  preferred_element_type=jnp.float32)
                          + bcls_ref[...])             # (1, O)
        else:
            out_ref[0] = z                             # (S, D)

    return kernel


def _rep_spec(shape):
    """Full-array block, same block for every grid step (weights / biases)."""
    nd = len(shape)
    return pl.BlockSpec(shape, lambda b, _nd=nd: (0,) * _nd)


def fused_encoder_layer(x, lp, *, num_heads, pe=None, head=None):
    """One fused nn.TransformerEncoderLayer (+ optional PE add / classifier)."""
    B, S, D = x.shape
    dh = D // num_heads
    with_pe = pe is not None
    with_head = head is not None

    kernel = _make_layer_kernel(num_heads, dh, with_pe, with_head)

    inputs = [x]
    in_specs = [pl.BlockSpec((1, S, D), lambda b: (b, 0, 0))]
    if with_pe:
        inputs.append(pe)
        in_specs.append(_rep_spec((1, S, D)))

    for name in ("wq", "wk", "wv", "wo", "w1", "w2", "b1", "vecs"):
        w = lp[name]
        inputs.append(w)
        in_specs.append(_rep_spec(w.shape))

    F = lp["w1"].shape[1]
    if with_head:
        w_cls, b_cls = head                            # (D, O) bf16, (1, O) f32
        O = w_cls.shape[1]
        inputs += [w_cls, b_cls]
        in_specs += [_rep_spec(w_cls.shape), _rep_spec(b_cls.shape)]
        out_shape = jax.ShapeDtypeStruct((B, 1, O), jnp.float32)
        out_spec = pl.BlockSpec((1, 1, O), lambda b: (b, 0, 0))
    else:
        O = 0
        out_shape = jax.ShapeDtypeStruct((B, S, D), jnp.float32)
        out_spec = pl.BlockSpec((1, S, D), lambda b: (b, 0, 0))

    # Cost estimate: helps XLA overlap per-layer weight fetches with compute.
    flops_per_b = (2 * S * D * D * 3            # q/k/v projections
                   + 2 * num_heads * S * S * dh * 2   # scores + ctx
                   + 2 * S * D * D              # out projection
                   + 2 * S * D * F * 2)         # FFN
    if with_head:
        flops_per_b += 2 * D * O
    bytes_accessed = (sum(a.size * a.dtype.itemsize for a in inputs)
                      + math.prod(out_shape.shape) * 4)
    cost = pl.CostEstimate(flops=int(B * flops_per_b),
                           transcendentals=int(B * num_heads * S * S),
                           bytes_accessed=int(bytes_accessed))

    # Explicit VMEM budget: resident block bytes (x2 for double buffering)
    # plus headroom, clamped to stay under v7x's 64 MiB physical VMEM.
    block_bytes = sum(math.prod(spec.block_shape) * inp.dtype.itemsize
                      for spec, inp in zip(in_specs, inputs))
    block_bytes += math.prod(out_spec.block_shape) * 4
    vmem_limit = int(min(64 << 20, max(32 << 20, 4 * block_bytes + (8 << 20))))

    return pl.pallas_call(
        kernel,
        grid=(B,),
        in_specs=in_specs,
        out_specs=out_spec,
        out_shape=out_shape,
        compiler_params=pltpu.CompilerParams(
            dimension_semantics=("parallel",),
            vmem_limit_bytes=vmem_limit),
        cost_estimate=cost,
    )(*inputs)


# ------------------------------ model forward --------------------------------

def transformer_forward(input_ids, params, num_heads):
    B, S = input_ids.shape
    # Embedding lookup: data-dependent gather, kept in plain JAX (glue).
    x = jnp.take(params["embedding"], input_ids, axis=0)          # (B, S, D) f32
    pe = params["pe"][:, :S, :]                                    # (1, S, D)

    n_layers = len(params["layers"])
    for i, lp in enumerate(params["layers"]):
        x = fused_encoder_layer(
            x, lp, num_heads=num_heads,
            pe=pe if i == 0 else None,
            head=(params["w_cls"], params["b_cls"]) if i == n_layers - 1 else None)
    # Last layer returned (B, 1, output_dim) with the classifier fused in.
    return x[:, 0, :]


# --------------------------- parameter construction --------------------------

def _make_pe(max_len, d_model):
    pos = jnp.arange(max_len, dtype=jnp.float32)[:, None]
    div = jnp.exp(
        jnp.arange(0, d_model, 2, dtype=jnp.float32) * (-math.log(10000.0) / d_model))
    pe = jnp.zeros((max_len, d_model), dtype=jnp.float32)
    pe = pe.at[:, 0::2].set(jnp.sin(pos * div))
    pe = pe.at[:, 1::2].set(jnp.cos(pos * div))
    return pe[None]                                                # (1, L, D)


def _to_kernel_layout(raw, num_heads):
    """Torch-style layer params -> kernel layout (done once, host side).

    Note: weights are stored as (in, out) for x @ W (PyTorch stores the
    transposed (out, in) layout); self-initialized params are consistent here,
    but importing real torch weights would need a transpose.
    """
    wq, wk, wv = jnp.split(raw["w_in"], 3, axis=1)                 # (D, D) each
    bq, bk, bv = jnp.split(raw["b_in"], 3)                         # (D,) each
    F = raw["w1"].shape[1]
    vecs = jnp.stack([bq, bk, bv, raw["b_o"], raw["g1"], raw["beta1"],
                      raw["bf2"], raw["g2"], raw["beta2"]],
                     axis=0).astype(jnp.float32)                   # (9, D)
    return {
        "wq": wq.astype(jnp.bfloat16),
        "wk": wk.astype(jnp.bfloat16),
        "wv": wv.astype(jnp.bfloat16),
        "wo": raw["w_o"].astype(jnp.bfloat16),
        "w1": raw["w1"].astype(jnp.bfloat16),
        "w2": raw["w2"].astype(jnp.bfloat16),
        "b1": raw["bf1"].reshape(1, F).astype(jnp.float32),
        "vecs": vecs,
    }


def init_params(key, vocab_size, hidden_dim, output_dim, num_heads, num_layers,
                dim_feedforward=2048, max_len=64):
    D, F = hidden_dim, dim_feedforward

    def dense(k, fan_in, fan_out):
        return 0.02 * jax.random.normal(k, (fan_in, fan_out), dtype=jnp.float32)

    keys = iter(jax.random.split(key, 2 + 4 * num_layers))
    params = {
        "embedding": 0.02 * jax.random.normal(
            next(keys), (vocab_size, D), dtype=jnp.float32),
        "pe": _make_pe(max_len, D),
        "w_cls": dense(next(keys), D, output_dim).astype(jnp.bfloat16),
        "b_cls": jnp.zeros((1, output_dim), dtype=jnp.float32),
        "layers": [],
    }
    for _ in range(num_layers):
        raw = {
            # fused q/k/v in-projection (in_proj_weight of nn.MultiheadAttention)
            "w_in": dense(next(keys), D, 3 * D),
            "b_in": jnp.zeros((3 * D,), dtype=jnp.float32),
            "w_o": dense(next(keys), D, D),
            "b_o": jnp.zeros((D,), dtype=jnp.float32),
            "g1": jnp.ones((D,), dtype=jnp.float32),
            "beta1": jnp.zeros((D,), dtype=jnp.float32),
            "w1": dense(next(keys), D, F),
            "bf1": jnp.zeros((F,), dtype=jnp.float32),
            "w2": dense(next(keys), F, D),
            "bf2": jnp.zeros((D,), dtype=jnp.float32),
            "g2": jnp.ones((D,), dtype=jnp.float32),
            "beta2": jnp.zeros((D,), dtype=jnp.float32),
        }
        params["layers"].append(_to_kernel_layout(raw, num_heads))
    return params


# ----------------------------------- main -------------------------------------

if __name__ == "__main__":
    vocab_size = 100
    hidden_dim = 32
    output_dim = 8
    num_heads = 4
    num_layers = 2
    dim_feedforward = 2048          # nn.TransformerEncoderLayer default
    batch, seq = 2, 8

    root = jax.random.PRNGKey(0)
    pkey, dkey = jax.random.split(root)
    params = init_params(pkey, vocab_size, hidden_dim, output_dim,
                         num_heads, num_layers, dim_feedforward=dim_feedforward)

    input_ids = jax.random.randint(dkey, (batch, seq), 0, vocab_size,
                                   dtype=jnp.int32)

    fwd = jax.jit(partial(transformer_forward, num_heads=num_heads))
    out = jax.block_until_ready(fwd(input_ids, params))
    assert out.shape == (batch, output_dim), out.shape
    assert bool(jnp.all(jnp.isfinite(out)))
    print("KERNEL_OK")
</pallas_src>

<mosaic_0001>
module attributes {stable_mosaic.version = 11 : i64} {
  func.func @kernel(%arg0: i32, %arg1: memref<1x8x32xf32, #tpu.memory_space<vmem>>, %arg2: memref<32x32xbf16, #tpu.memory_space<vmem>>, %arg3: memref<32x32xbf16, #tpu.memory_space<vmem>>, %arg4: memref<32x32xbf16, #tpu.memory_space<vmem>>, %arg5: memref<32x32xbf16, #tpu.memory_space<vmem>>, %arg6: memref<32x2048xbf16, #tpu.memory_space<vmem>>, %arg7: memref<2048x32xbf16, #tpu.memory_space<vmem>>, %arg8: memref<1x2048xf32, #tpu.memory_space<vmem>>, %arg9: memref<9x32xf32, #tpu.memory_space<vmem>>, %arg10: memref<32x8xbf16, #tpu.memory_space<vmem>>, %arg11: memref<1x8xf32, #tpu.memory_space<vmem>>, %arg12: memref<1x1x8xf32, #tpu.memory_space<vmem>>) attributes {dimension_semantics = [#tpu.dimension_semantics<parallel>], iteration_bounds = array<i64: 2>, scalar_prefetch = 0 : i64, scratch_operands = 0 : i64, tpu.core_type = #tpu.core_type<tc>, window_params = [{transform_indices = @transform_0, window_bounds = array<i64: 1, 8, 32>}, {pipeline_mode = #tpu.pipeline_mode<synchronous>, transform_indices = @transform_1, window_bounds = array<i64: 32, 32>}, {pipeline_mode = #tpu.pipeline_mode<synchronous>, transform_indices = @transform_2, window_bounds = array<i64: 32, 32>}, {pipeline_mode = #tpu.pipeline_mode<synchronous>, transform_indices = @transform_3, window_bounds = array<i64: 32, 32>}, {pipeline_mode = #tpu.pipeline_mode<synchronous>, transform_indices = @transform_4, window_bounds = array<i64: 32, 32>}, {pipeline_mode = #tpu.pipeline_mode<synchronous>, transform_indices = @transform_5, window_bounds = array<i64: 32, 2048>}, {pipeline_mode = #tpu.pipeline_mode<synchronous>, transform_indices = @transform_6, window_bounds = array<i64: 2048, 32>}, {pipeline_mode = #tpu.pipeline_mode<synchronous>, transform_indices = @transform_7, window_bounds = array<i64: 1, 2048>}, {pipeline_mode = #tpu.pipeline_mode<synchronous>, transform_indices = @transform_8, window_bounds = array<i64: 9, 32>}, {pipeline_mode = #tpu.pipeline_mode<synchronous>, transform_indices = @transform_9, window_bounds = array<i64: 32, 8>}, {pipeline_mode = #tpu.pipeline_mode<synchronous>, transform_indices = @transform_10, window_bounds = array<i64: 1, 8>}, {transform_indices = @transform_11, window_bounds = array<i64: 1, 1, 8>}]} {
    %c0 = arith.constant 0 : index
    %c0_0 = arith.constant 0 : index
    %c0_1 = arith.constant 0 : index
    %0 = vector.load %arg1[%c0, %c0_0, %c0_1] : memref<1x8x32xf32, #tpu.memory_space<vmem>>, vector<1x8x32xf32>
    %1 = vector.shape_cast %0 : vector<1x8x32xf32> to vector<8x32xf32>
    %c0_2 = arith.constant 0 : index
    %c0_3 = arith.constant 0 : index
    %2 = vector.load %arg9[%c0_2, %c0_3] : memref<9x32xf32, #tpu.memory_space<vmem>>, vector<1x32xf32>
    %c1 = arith.constant 1 : index
    %c0_4 = arith.constant 0 : index
    %3 = vector.load %arg9[%c1, %c0_4] : memref<9x32xf32, #tpu.memory_space<vmem>>, vector<1x32xf32>
    %c2 = arith.constant 2 : index
    %c0_5 = arith.constant 0 : index
    %4 = vector.load %arg9[%c2, %c0_5] : memref<9x32xf32, #tpu.memory_space<vmem>>, vector<1x32xf32>
    %c3 = arith.constant 3 : index
    %c0_6 = arith.constant 0 : index
    %5 = vector.load %arg9[%c3, %c0_6] : memref<9x32xf32, #tpu.memory_space<vmem>>, vector<1x32xf32>
    %c4 = arith.constant 4 : index
    %c0_7 = arith.constant 0 : index
    %6 = vector.load %arg9[%c4, %c0_7] : memref<9x32xf32, #tpu.memory_space<vmem>>, vector<1x32xf32>
    %c5 = arith.constant 5 : index
    %c0_8 = arith.constant 0 : index
    %7 = vector.load %arg9[%c5, %c0_8] : memref<9x32xf32, #tpu.memory_space<vmem>>, vector<1x32xf32>
    %c6 = arith.constant 6 : index
    %c0_9 = arith.constant 0 : index
    %8 = vector.load %arg9[%c6, %c0_9] : memref<9x32xf32, #tpu.memory_space<vmem>>, vector<1x32xf32>
    %c7 = arith.constant 7 : index
    %c0_10 = arith.constant 0 : index
    %9 = vector.load %arg9[%c7, %c0_10] : memref<9x32xf32, #tpu.memory_space<vmem>>, vector<1x32xf32>
    %c8 = arith.constant 8 : index
    %c0_11 = arith.constant 0 : index
    %10 = vector.load %arg9[%c8, %c0_11] : memref<9x32xf32, #tpu.memory_space<vmem>>, vector<1x32xf32>
    %11 = arith.truncf %1 : vector<8x32xf32> to vector<8x32xbf16>
    %12 = vector.extract_strided_slice %11 {offsets = [0, 0], sizes = [1, 32], strides = [1, 1]} : vector<8x32xbf16> to vector<1x32xbf16>
    %c0_12 = arith.constant 0 : index
    %c0_13 = arith.constant 0 : index
    %13 = vector.load %arg2[%c0_12, %c0_13] : memref<32x32xbf16, #tpu.memory_space<vmem>>, vector<32x32xbf16>
    %cst = arith.constant dense<0.000000e+00> : vector<1x32xf32>
    %14 = tpu.matmul %12, %13, %cst {dimension_numbers = #tpu.dot_dimension_numbers<[1], [0], [0], [1], [0, 0, 1, 1], [], []>} : vector<1x32xbf16>, vector<32x32xbf16>, vector<1x32xf32> -> vector<1x32xf32>
    %15 = arith.addf %14, %2 : vector<1x32xf32>
    %c0_14 = arith.constant 0 : index
    %c0_15 = arith.constant 0 : index
    %16 = vector.load %arg3[%c0_14, %c0_15] : memref<32x32xbf16, #tpu.memory_space<vmem>>, vector<32x32xbf16>
    %cst_16 = arith.constant dense<0.000000e+00> : vector<8x32xf32>
    %17 = tpu.matmul %11, %16, %cst_16 {dimension_numbers = #tpu.dot_dimension_numbers<[1], [0], [0], [1], [0, 0, 1, 1], [], []>} : vector<8x32xbf16>, vector<32x32xbf16>, vector<8x32xf32> -> vector<8x32xf32>
    %18 = vector.broadcast %3 : vector<1x32xf32> to vector<8x32xf32>
    %19 = arith.addf %17, %18 : vector<8x32xf32>
    %c0_17 = arith.constant 0 : index
    %c0_18 = arith.constant 0 : index
    %20 = vector.load %arg4[%c0_17, %c0_18] : memref<32x32xbf16, #tpu.memory_space<vmem>>, vector<32x32xbf16>
    %cst_19 = arith.constant dense<0.000000e+00> : vector<8x32xf32>
    %21 = tpu.matmul %11, %20, %cst_19 {dimension_numbers = #tpu.dot_dimension_numbers<[1], [0], [0], [1], [0, 0, 1, 1], [], []>} : vector<8x32xbf16>, vector<32x32xbf16>, vector<8x32xf32> -> vector<8x32xf32>
    %22 = vector.broadcast %4 : vector<1x32xf32> to vector<8x32xf32>
    %23 = arith.addf %21, %22 : vector<8x32xf32>
    %24 = vector.extract_strided_slice %15 {offsets = [0, 0], sizes = [1, 8], strides = [1, 1]} : vector<1x32xf32> to vector<1x8xf32>
    %25 = arith.truncf %24 : vector<1x8xf32> to vector<1x8xbf16>
    %26 = vector.extract_strided_slice %19 {offsets = [0, 0], sizes = [8, 8], strides = [1, 1]} : vector<8x32xf32> to vector<8x8xf32>
    %27 = arith.truncf %26 : vector<8x8xf32> to vector<8x8xbf16>
    %28 = vector.extract_strided_slice %23 {offsets = [0, 0], sizes = [8, 8], strides = [1, 1]} : vector<8x32xf32> to vector<8x8xf32>
    %29 = arith.truncf %28 : vector<8x8xf32> to vector<8x8xbf16>
    %cst_20 = arith.constant dense<0.000000e+00> : vector<1x8xf32>
    %30 = tpu.matmul %25, %27, %cst_20 {dimension_numbers = #tpu.dot_dimension_numbers<[1], [1], [0], [0], [0, 0, 1, 0], [], []>} : vector<1x8xbf16>, vector<8x8xbf16>, vector<1x8xf32> -> vector<1x8xf32>
    %cst_21 = arith.constant 0.353553385 : f32
    %31 = vector.broadcast %cst_21 : f32 to vector<1x8xf32>
    %32 = arith.mulf %30, %31 : vector<1x8xf32>
    %cst_22 = arith.constant dense<0xFF800000> : vector<1xf32>
    %33 = vector.multi_reduction <maximumf>, %32, %cst_22 [1] : vector<1x8xf32> to vector<1xf32>
    %34 = vector.shape_cast %33 : vector<1xf32> to vector<1x1xf32>
    %35 = vector.broadcast %34 : vector<1x1xf32> to vector<1x8xf32>
    %36 = arith.subf %32, %35 : vector<1x8xf32>
    %37 = math.exp %36 : vector<1x8xf32>
    %cst_23 = arith.constant dense<0.000000e+00> : vector<1xf32>
    %38 = vector.multi_reduction <add>, %37, %cst_23 [1] : vector<1x8xf32> to vector<1xf32>
    %39 = vector.shape_cast %38 : vector<1xf32> to vector<1x1xf32>
    %40 = tpu.reciprocal %39 {approx = true} : vector<1x1xf32> -> vector<1x1xf32>
    %41 = vector.broadcast %40 : vector<1x1xf32> to vector<1x8xf32>
    %42 = arith.mulf %37, %41 : vector<1x8xf32>
    %43 = arith.truncf %42 : vector<1x8xf32> to vector<1x8xbf16>
    %cst_24 = arith.constant dense<0.000000e+00> : vector<1x8xf32>
    %44 = tpu.matmul %43, %29, %cst_24 {dimension_numbers = #tpu.dot_dimension_numbers<[1], [0], [0], [1], [0, 0, 1, 1], [], []>} : vector<1x8xbf16>, vector<8x8xbf16>, vector<1x8xf32> -> vector<1x8xf32>
    %45 = vector.extract_strided_slice %15 {offsets = [0, 8], sizes = [1, 8], strides = [1, 1]} : vector<1x32xf32> to vector<1x8xf32>
    %46 = arith.truncf %45 : vector<1x8xf32> to vector<1x8xbf16>
    %47 = vector.extract_strided_slice %19 {offsets = [0, 8], sizes = [8, 8], strides = [1, 1]} : vector<8x32xf32> to vector<8x8xf32>
    %48 = arith.truncf %47 : vector<8x8xf32> to vector<8x8xbf16>
    %49 = vector.extract_strided_slice %23 {offsets = [0, 8], sizes = [8, 8], strides = [1, 1]} : vector<8x32xf32> to vector<8x8xf32>
    %50 = arith.truncf %49 : vector<8x8xf32> to vector<8x8xbf16>
    %cst_25 = arith.constant dense<0.000000e+00> : vector<1x8xf32>
    %51 = tpu.matmul %46, %48, %cst_25 {dimension_numbers = #tpu.dot_dimension_numbers<[1], [1], [0], [0], [0, 0, 1, 0], [], []>} : vector<1x8xbf16>, vector<8x8xbf16>, vector<1x8xf32> -> vector<1x8xf32>
    %cst_26 = arith.constant 0.353553385 : f32
    %52 = vector.broadcast %cst_26 : f32 to vector<1x8xf32>
    %53 = arith.mulf %51, %52 : vector<1x8xf32>
    %cst_27 = arith.constant dense<0xFF800000> : vector<1xf32>
    %54 = vector.multi_reduction <maximumf>, %53, %cst_27 [1] : vector<1x8xf32> to vector<1xf32>
    %55 = vector.shape_cast %54 : vector<1xf32> to vector<1x1xf32>
    %56 = vector.broadcast %55 : vector<1x1xf32> to vector<1x8xf32>
    %57 = arith.subf %53, %56 : vector<1x8xf32>
    %58 = math.exp %57 : vector<1x8xf32>
    %cst_28 = arith.constant dense<0.000000e+00> : vector<1xf32>
    %59 = vector.multi_reduction <add>, %58, %cst_28 [1] : vector<1x8xf32> to vector<1xf32>
    %60 = vector.shape_cast %59 : vector<1xf32> to vector<1x1xf32>
    %61 = tpu.reciprocal %60 {approx = true} : vector<1x1xf32> -> vector<1x1xf32>
    %62 = vector.broadcast %61 : vector<1x1xf32> to vector<1x8xf32>
    %63 = arith.mulf %58, %62 : vector<1x8xf32>
    %64 = arith.truncf %63 : vector<1x8xf32> to vector<1x8xbf16>
    %cst_29 = arith.constant dense<0.000000e+00> : vector<1x8xf32>
    %65 = tpu.matmul %64, %50, %cst_29 {dimension_numbers = #tpu.dot_dimension_numbers<[1], [0], [0], [1], [0, 0, 1, 1], [], []>} : vector<1x8xbf16>, vector<8x8xbf16>, vector<1x8xf32> -> vector<1x8xf32>
    %66 = vector.extract_strided_slice %15 {offsets = [0, 16], sizes = [1, 8], strides = [1, 1]} : vector<1x32xf32> to vector<1x8xf32>
    %67 = arith.truncf %66 : vector<1x8xf32> to vector<1x8xbf16>
    %68 = vector.extract_strided_slice %19 {offsets = [0, 16], sizes = [8, 8], strides = [1, 1]} : vector<8x32xf32> to vector<8x8xf32>
    %69 = arith.truncf %68 : vector<8x8xf32> to vector<8x8xbf16>
    %70 = vector.extract_strided_slice %23 {offsets = [0, 16], sizes = [8, 8], strides = [1, 1]} : vector<8x32xf32> to vector<8x8xf32>
    %71 = arith.truncf %70 : vector<8x8xf32> to vector<8x8xbf16>
    %cst_30 = arith.constant dense<0.000000e+00> : vector<1x8xf32>
    %72 = tpu.matmul %67, %69, %cst_30 {dimension_numbers = #tpu.dot_dimension_numbers<[1], [1], [0], [0], [0, 0, 1, 0], [], []>} : vector<1x8xbf16>, vector<8x8xbf16>, vector<1x8xf32> -> vector<1x8xf32>
    %cst_31 = arith.constant 0.353553385 : f32
    %73 = vector.broadcast %cst_31 : f32 to vector<1x8xf32>
    %74 = arith.mulf %72, %73 : vector<1x8xf32>
    %cst_32 = arith.constant dense<0xFF800000> : vector<1xf32>
    %75 = vector.multi_reduction <maximumf>, %74, %cst_32 [1] : vector<1x8xf32> to vector<1xf32>
    %76 = vector.shape_cast %75 : vector<1xf32> to vector<1x1xf32>
    %77 = vector.broadcast %76 : vector<1x1xf32> to vector<1x8xf32>
    %78 = arith.subf %74, %77 : vector<1x8xf32>
    %79 = math.exp %78 : vector<1x8xf32>
    %cst_33 = arith.constant dense<0.000000e+00> : vector<1xf32>
    %80 = vector.multi_reduction <add>, %79, %cst_33 [1] : vector<1x8xf32> to vector<1xf32>
    %81 = vector.shape_cast %80 : vector<1xf32> to vector<1x1xf32>
    %82 = tpu.reciprocal %81 {approx = true} : vector<1x1xf32> -> vector<1x1xf32>
    %83 = vector.broadcast %82 : vector<1x1xf32> to vector<1x8xf32>
    %84 = arith.mulf %79, %83 : vector<1x8xf32>
    %85 = arith.truncf %84 : vector<1x8xf32> to vector<1x8xbf16>
    %cst_34 = arith.constant dense<0.000000e+00> : vector<1x8xf32>
    %86 = tpu.matmul %85, %71, %cst_34 {dimension_numbers = #tpu.dot_dimension_numbers<[1], [0], [0], [1], [0, 0, 1, 1], [], []>} : vector<1x8xbf16>, vector<8x8xbf16>, vector<1x8xf32> -> vector<1x8xf32>
    %87 = vector.extract_strided_slice %15 {offsets = [0, 24], sizes = [1, 8], strides = [1, 1]} : vector<1x32xf32> to vector<1x8xf32>
    %88 = arith.truncf %87 : vector<1x8xf32> to vector<1x8xbf16>
    %89 = vector.extract_strided_slice %19 {offsets = [0, 24], sizes = [8, 8], strides = [1, 1]} : vector<8x32xf32> to vector<8x8xf32>
    %90 = arith.truncf %89 : vector<8x8xf32> to vector<8x8xbf16>
    %91 = vector.extract_strided_slice %23 {offsets = [0, 24], sizes = [8, 8], strides = [1, 1]} : vector<8x32xf32> to vector<8x8xf32>
    %92 = arith.truncf %91 : vector<8x8xf32> to vector<8x8xbf16>
    %cst_35 = arith.constant dense<0.000000e+00> : vector<1x8xf32>
    %93 = tpu.matmul %88, %90, %cst_35 {dimension_numbers = #tpu.dot_dimension_numbers<[1], [1], [0], [0], [0, 0, 1, 0], [], []>} : vector<1x8xbf16>, vector<8x8xbf16>, vector<1x8xf32> -> vector<1x8xf32>
    %cst_36 = arith.constant 0.353553385 : f32
    %94 = vector.broadcast %cst_36 : f32 to vector<1x8xf32>
    %95 = arith.mulf %93, %94 : vector<1x8xf32>
    %cst_37 = arith.constant dense<0xFF800000> : vector<1xf32>
    %96 = vector.multi_reduction <maximumf>, %95, %cst_37 [1] : vector<1x8xf32> to vector<1xf32>
    %97 = vector.shape_cast %96 : vector<1xf32> to vector<1x1xf32>
    %98 = vector.broadcast %97 : vector<1x1xf32> to vector<1x8xf32>
    %99 = arith.subf %95, %98 : vector<1x8xf32>
    %100 = math.exp %99 : vector<1x8xf32>
    %cst_38 = arith.constant dense<0.000000e+00> : vector<1xf32>
    %101 = vector.multi_reduction <add>, %100, %cst_38 [1] : vector<1x8xf32> to vector<1xf32>
    %102 = vector.shape_cast %101 : vector<1xf32> to vector<1x1xf32>
    %103 = tpu.reciprocal %102 {approx = true} : vector<1x1xf32> -> vector<1x1xf32>
    %104 = vector.broadcast %103 : vector<1x1xf32> to vector<1x8xf32>
    %105 = arith.mulf %100, %104 : vector<1x8xf32>
    %106 = arith.truncf %105 : vector<1x8xf32> to vector<1x8xbf16>
    %cst_39 = arith.constant dense<0.000000e+00> : vector<1x8xf32>
    %107 = tpu.matmul %106, %92, %cst_39 {dimension_numbers = #tpu.dot_dimension_numbers<[1], [0], [0], [1], [0, 0, 1, 1], [], []>} : vector<1x8xbf16>, vector<8x8xbf16>, vector<1x8xf32> -> vector<1x8xf32>
    %108 = tpu.concatenate %44, %65, %86, %107 in 1 : vector<1x8xf32>, vector<1x8xf32>, vector<1x8xf32>, vector<1x8xf32> -> vector<1x32xf32>
    %109 = arith.truncf %108 : vector<1x32xf32> to vector<1x32xbf16>
    %c0_40 = arith.constant 0 : index
    %c0_41 = arith.constant 0 : index
    %110 = vector.load %arg5[%c0_40, %c0_41] : memref<32x32xbf16, #tpu.memory_space<vmem>>, vector<32x32xbf16>
    %cst_42 = arith.constant dense<0.000000e+00> : vector<1x32xf32>
    %111 = tpu.matmul %109, %110, %cst_42 {dimension_numbers = #tpu.dot_dimension_numbers<[1], [0], [0], [1], [0, 0, 1, 1], [], []>} : vector<1x32xbf16>, vector<32x32xbf16>, vector<1x32xf32> -> vector<1x32xf32>
    %112 = arith.addf %111, %5 : vector<1x32xf32>
    %113 = vector.extract_strided_slice %1 {offsets = [0, 0], sizes = [1, 32], strides = [1, 1]} : vector<8x32xf32> to vector<1x32xf32>
    %114 = arith.addf %113, %112 : vector<1x32xf32>
    %cst_43 = arith.constant dense<0.000000e+00> : vector<1xf32>
    %115 = vector.multi_reduction <add>, %114, %cst_43 [1] : vector<1x32xf32> to vector<1xf32>
    %116 = vector.shape_cast %115 : vector<1xf32> to vector<1x1xf32>
    %cst_44 = arith.constant 3.200000e+01 : f32
    %117 = vector.broadcast %cst_44 : f32 to vector<1x1xf32>
    %118 = arith.divf %116, %117 : vector<1x1xf32>
    %119 = vector.broadcast %118 : vector<1x1xf32> to vector<1x32xf32>
    %120 = arith.subf %114, %119 : vector<1x32xf32>
    %121 = arith.mulf %120, %120 : vector<1x32xf32>
    %cst_45 = arith.constant dense<0.000000e+00> : vector<1xf32>
    %122 = vector.multi_reduction <add>, %121, %cst_45 [1] : vector<1x32xf32> to vector<1xf32>
    %123 = vector.shape_cast %122 : vector<1xf32> to vector<1x1xf32>
    %cst_46 = arith.constant 3.200000e+01 : f32
    %124 = vector.broadcast %cst_46 : f32 to vector<1x1xf32>
    %125 = arith.divf %123, %124 : vector<1x1xf32>
    %126 = vector.broadcast %118 : vector<1x1xf32> to vector<1x32xf32>
    %127 = arith.subf %114, %126 : vector<1x32xf32>
    %cst_47 = arith.constant 9.99999974E-6 : f32
    %128 = vector.broadcast %cst_47 : f32 to vector<1x1xf32>
    %129 = arith.addf %125, %128 : vector<1x1xf32>
    %130 = math.rsqrt %129 : vector<1x1xf32>
    %131 = vector.broadcast %130 : vector<1x1xf32> to vector<1x32xf32>
    %132 = arith.mulf %127, %131 : vector<1x32xf32>
    %133 = arith.mulf %132, %6 : vector<1x32xf32>
    %134 = arith.addf %133, %7 : vector<1x32xf32>
    %135 = arith.truncf %134 : vector<1x32xf32> to vector<1x32xbf16>
    %c0_48 = arith.constant 0 : index
    %c0_49 = arith.constant 0 : index
    %136 = vector.load %arg6[%c0_48, %c0_49] : memref<32x2048xbf16, #tpu.memory_space<vmem>>, vector<32x2048xbf16>
    %cst_50 = arith.constant dense<0.000000e+00> : vector<1x2048xf32>
    %137 = tpu.matmul %135, %136, %cst_50 {dimension_numbers = #tpu.dot_dimension_numbers<[1], [0], [0], [1], [0, 0, 1, 1], [], []>} : vector<1x32xbf16>, vector<32x2048xbf16>, vector<1x2048xf32> -> vector<1x2048xf32>
    %c0_51 = arith.constant 0 : index
    %c0_52 = arith.constant 0 : index
    %138 = vector.load %arg8[%c0_51, %c0_52] : memref<1x2048xf32, #tpu.memory_space<vmem>>, vector<1x2048xf32>
    %139 = arith.addf %137, %138 : vector<1x2048xf32>
    %cst_53 = arith.constant 0.000000e+00 : f32
    %140 = vector.broadcast %cst_53 : f32 to vector<1x2048xf32>
    %141 = arith.maximumf %139, %140 : vector<1x2048xf32>
    %142 = arith.truncf %141 : vector<1x2048xf32> to vector<1x2048xbf16>
    %c0_54 = arith.constant 0 : index
    %c0_55 = arith.constant 0 : index
    %143 = vector.load %arg7[%c0_54, %c0_55] : memref<2048x32xbf16, #tpu.memory_space<vmem>>, vector<2048x32xbf16>
    %cst_56 = arith.constant dense<0.000000e+00> : vector<1x32xf32>
    %144 = tpu.matmul %142, %143, %cst_56 {dimension_numbers = #tpu.dot_dimension_numbers<[1], [0], [0], [1], [0, 0, 1, 1], [], []>} : vector<1x2048xbf16>, vector<2048x32xbf16>, vector<1x32xf32> -> vector<1x32xf32>
    %145 = arith.addf %144, %8 : vector<1x32xf32>
    %146 = arith.addf %134, %145 : vector<1x32xf32>
    %cst_57 = arith.constant dense<0.000000e+00> : vector<1xf32>
    %147 = vector.multi_reduction <add>, %146, %cst_57 [1] : vector<1x32xf32> to vector<1xf32>
    %148 = vector.shape_cast %147 : vector<1xf32> to vector<1x1xf32>
    %cst_58 = arith.constant 3.200000e+01 : f32
    %149 = vector.broadcast %cst_58 : f32 to vector<1x1xf32>
    %150 = arith.divf %148, %149 : vector<1x1xf32>
    %151 = vector.broadcast %150 : vector<1x1xf32> to vector<1x32xf32>
    %152 = arith.subf %146, %151 : vector<1x32xf32>
    %153 = arith.mulf %152, %152 : vector<1x32xf32>
    %cst_59 = arith.constant dense<0.000000e+00> : vector<1xf32>
    %154 = vector.multi_reduction <add>, %153, %cst_59 [1] : vector<1x32xf32> to vector<1xf32>
    %155 = vector.shape_cast %154 : vector<1xf32> to vector<1x1xf32>
    %cst_60 = arith.constant 3.200000e+01 : f32
    %156 = vector.broadcast %cst_60 : f32 to vector<1x1xf32>
    %157 = arith.divf %155, %156 : vector<1x1xf32>
    %158 = vector.broadcast %150 : vector<1x1xf32> to vector<1x32xf32>
    %159 = arith.subf %146, %158 : vector<1x32xf32>
    %cst_61 = arith.constant 9.99999974E-6 : f32
    %160 = vector.broadcast %cst_61 : f32 to vector<1x1xf32>
    %161 = arith.addf %157, %160 : vector<1x1xf32>
    %162 = math.rsqrt %161 : vector<1x1xf32>
    %163 = vector.broadcast %162 : vector<1x1xf32> to vector<1x32xf32>
    %164 = arith.mulf %159, %163 : vector<1x32xf32>
    %165 = arith.mulf %164, %9 : vector<1x32xf32>
    %166 = arith.addf %165, %10 : vector<1x32xf32>
    %167 = arith.truncf %166 : vector<1x32xf32> to vector<1x32xbf16>
    %c0_62 = arith.constant 0 : index
    %c0_63 = arith.constant 0 : index
    %168 = vector.load %arg10[%c0_62, %c0_63] : memref<32x8xbf16, #tpu.memory_space<vmem>>, vector<32x8xbf16>
    %cst_64 = arith.constant dense<0.000000e+00> : vector<1x8xf32>
    %169 = tpu.matmul %167, %168, %cst_64 {dimension_numbers = #tpu.dot_dimension_numbers<[1], [0], [0], [1], [0, 0, 1, 1], [], []>} : vector<1x32xbf16>, vector<32x8xbf16>, vector<1x8xf32> -> vector<1x8xf32>
    %c0_65 = arith.constant 0 : index
    %c0_66 = arith.constant 0 : index
    %170 = vector.load %arg11[%c0_65, %c0_66] : memref<1x8xf32, #tpu.memory_space<vmem>>, vector<1x8xf32>
    %171 = arith.addf %169, %170 : vector<1x8xf32>
    %c0_67 = arith.constant 0 : index
    %c0_68 = arith.constant 0 : index
    %c0_69 = arith.constant 0 : index
    %172 = vector.load %arg12[%c0_67, %c0_68, %c0_69] : memref<1x1x8xf32, #tpu.memory_space<vmem>>, vector<1x1x8xf32>
    %173 = vector.shape_cast %172 : vector<1x1x8xf32> to vector<1x8xf32>
    %174 = vector.shape_cast %171 : vector<1x8xf32> to vector<1x1x8xf32>
    tpu.vector_store %arg12[%c0_67, %c0_68, %c0_69], %174 {strides = array<i32>} : memref<1x1x8xf32, #tpu.memory_space<vmem>>, vector<1x1x8xf32>,
    return
  }
  func.func @transform_0(%arg0: i32) -> (i32, i32, i32) {
    %c0_i32 = arith.constant 0 : i32
    %c0_i32_0 = arith.constant 0 : i32
    %c0_i32_1 = arith.constant 0 : i32
    return %arg0, %c0_i32, %c0_i32_0 : i32, i32, i32
  }
  func.func @transform_1(%arg0: i32) -> (i32, i32) {
    %c0_i32 = arith.constant 0 : i32
    %c0_i32_0 = arith.constant 0 : i32
    %c0_i32_1 = arith.constant 0 : i32
    return %c0_i32, %c0_i32_0 : i32, i32
  }
  func.func @transform_2(%arg0: i32) -> (i32, i32) {
    %c0_i32 = arith.constant 0 : i32
    %c0_i32_0 = arith.constant 0 : i32
    %c0_i32_1 = arith.constant 0 : i32
    return %c0_i32, %c0_i32_0 : i32, i32
  }
  func.func @transform_3(%arg0: i32) -> (i32, i32) {
    %c0_i32 = arith.constant 0 : i32
    %c0_i32_0 = arith.constant 0 : i32
    %c0_i32_1 = arith.constant 0 : i32
    return %c0_i32, %c0_i32_0 : i32, i32
  }
  func.func @transform_4(%arg0: i32) -> (i32, i32) {
    %c0_i32 = arith.constant 0 : i32
    %c0_i32_0 = arith.constant 0 : i32
    %c0_i32_1 = arith.constant 0 : i32
    return %c0_i32, %c0_i32_0 : i32, i32
  }
  func.func @transform_5(%arg0: i32) -> (i32, i32) {
    %c0_i32 = arith.constant 0 : i32
    %c0_i32_0 = arith.constant 0 : i32
    %c0_i32_1 = arith.constant 0 : i32
    return %c0_i32, %c0_i32_0 : i32, i32
  }
  func.func @transform_6(%arg0: i32) -> (i32, i32) {
    %c0_i32 = arith.constant 0 : i32
    %c0_i32_0 = arith.constant 0 : i32
    %c0_i32_1 = arith.constant 0 : i32
    return %c0_i32, %c0_i32_0 : i32, i32
  }
  func.func @transform_7(%arg0: i32) -> (i32, i32) {
    %c0_i32 = arith.constant 0 : i32
    %c0_i32_0 = arith.constant 0 : i32
    %c0_i32_1 = arith.constant 0 : i32
    return %c0_i32, %c0_i32_0 : i32, i32
  }
  func.func @transform_8(%arg0: i32) -> (i32, i32) {
    %c0_i32 = arith.constant 0 : i32
    %c0_i32_0 = arith.constant 0 : i32
    %c0_i32_1 = arith.constant 0 : i32
    return %c0_i32, %c0_i32_0 : i32, i32
  }
  func.func @transform_9(%arg0: i32) -> (i32, i32) {
    %c0_i32 = arith.constant 0 : i32
    %c0_i32_0 = arith.constant 0 : i32
    %c0_i32_1 = arith.constant 0 : i32
    return %c0_i32, %c0_i32_0 : i32, i32
  }
  func.func @transform_10(%arg0: i32) -> (i32, i32) {
    %c0_i32 = arith.constant 0 : i32
    %c0_i32_0 = arith.constant 0 : i32
    %c0_i32_1 = arith.constant 0 : i32
    return %c0_i32, %c0_i32_0 : i32, i32
  }
  func.func @transform_11(%arg0: i32) -> (i32, i32, i32) {
    %c0_i32 = arith.constant 0 : i32
    %c0_i32_0 = arith.constant 0 : i32
    %c0_i32_1 = arith.constant 0 : i32
    return %arg0, %c0_i32, %c0_i32_0 : i32, i32, i32
  }
}

module attributes {stable_mosaic.version = 11 : i64} {
  func.func @kernel(%arg0: i32, %arg1: memref<1x8x32xf32, #tpu.memory_space<vmem>>, %arg2: memref<1x8x32xf32, #tpu.memory_space<vmem>>, %arg3: memref<32x32xbf16, #tpu.memory_space<vmem>>, %arg4: memref<32x32xbf16, #tpu.memory_space<vmem>>, %arg5: memref<32x32xbf16, #tpu.memory_space<vmem>>, %arg6: memref<32x32xbf16, #tpu.memory_space<vmem>>, %arg7: memref<32x2048xbf16, #tpu.memory_space<vmem>>, %arg8: memref<2048x32xbf16, #tpu.memory_space<vmem>>, %arg9: memref<1x2048xf32, #tpu.memory_space<vmem>>, %arg10: memref<9x32xf32, #tpu.memory_space<vmem>>, %arg11: memref<1x8x32xf32, #tpu.memory_space<vmem>>) attributes {dimension_semantics = [#tpu.dimension_semantics<parallel>], iteration_bounds = array<i64: 2>, scalar_prefetch = 0 : i64, scratch_operands = 0 : i64, tpu.core_type = #tpu.core_type<tc>, window_params = [{transform_indices = @transform_0, window_bounds = array<i64: 1, 8, 32>}, {pipeline_mode = #tpu.pipeline_mode<synchronous>, transform_indices = @transform_1, window_bounds = array<i64: 1, 8, 32>}, {pipeline_mode = #tpu.pipeline_mode<synchronous>, transform_indices = @transform_2, window_bounds = array<i64: 32, 32>}, {pipeline_mode = #tpu.pipeline_mode<synchronous>, transform_indices = @transform_3, window_bounds = array<i64: 32, 32>}, {pipeline_mode = #tpu.pipeline_mode<synchronous>, transform_indices = @transform_4, window_bounds = array<i64: 32, 32>}, {pipeline_mode = #tpu.pipeline_mode<synchronous>, transform_indices = @transform_5, window_bounds = array<i64: 32, 32>}, {pipeline_mode = #tpu.pipeline_mode<synchronous>, transform_indices = @transform_6, window_bounds = array<i64: 32, 2048>}, {pipeline_mode = #tpu.pipeline_mode<synchronous>, transform_indices = @transform_7, window_bounds = array<i64: 2048, 32>}, {pipeline_mode = #tpu.pipeline_mode<synchronous>, transform_indices = @transform_8, window_bounds = array<i64: 1, 2048>}, {pipeline_mode = #tpu.pipeline_mode<synchronous>, transform_indices = @transform_9, window_bounds = array<i64: 9, 32>}, {transform_indices = @transform_10, window_bounds = array<i64: 1, 8, 32>}]} {
    %c0 = arith.constant 0 : index
    %c0_0 = arith.constant 0 : index
    %c0_1 = arith.constant 0 : index
    %0 = vector.load %arg1[%c0, %c0_0, %c0_1] : memref<1x8x32xf32, #tpu.memory_space<vmem>>, vector<1x8x32xf32>
    %1 = vector.shape_cast %0 : vector<1x8x32xf32> to vector<8x32xf32>
    %c0_2 = arith.constant 0 : index
    %c0_3 = arith.constant 0 : index
    %c0_4 = arith.constant 0 : index
    %2 = vector.load %arg2[%c0_2, %c0_3, %c0_4] : memref<1x8x32xf32, #tpu.memory_space<vmem>>, vector<1x8x32xf32>
    %3 = vector.shape_cast %2 : vector<1x8x32xf32> to vector<8x32xf32>
    %4 = arith.addf %1, %3 : vector<8x32xf32>
    %c0_5 = arith.constant 0 : index
    %c0_6 = arith.constant 0 : index
    %5 = vector.load %arg10[%c0_5, %c0_6] : memref<9x32xf32, #tpu.memory_space<vmem>>, vector<1x32xf32>
    %c1 = arith.constant 1 : index
    %c0_7 = arith.constant 0 : index
    %6 = vector.load %arg10[%c1, %c0_7] : memref<9x32xf32, #tpu.memory_space<vmem>>, vector<1x32xf32>
    %c2 = arith.constant 2 : index
    %c0_8 = arith.constant 0 : index
    %7 = vector.load %arg10[%c2, %c0_8] : memref<9x32xf32, #tpu.memory_space<vmem>>, vector<1x32xf32>
    %c3 = arith.constant 3 : index
    %c0_9 = arith.constant 0 : index
    %8 = vector.load %arg10[%c3, %c0_9] : memref<9x32xf32, #tpu.memory_space<vmem>>, vector<1x32xf32>
    %c4 = arith.constant 4 : index
    %c0_10 = arith.constant 0 : index
    %9 = vector.load %arg10[%c4, %c0_10] : memref<9x32xf32, #tpu.memory_space<vmem>>, vector<1x32xf32>
    %c5 = arith.constant 5 : index
    %c0_11 = arith.constant 0 : index
    %10 = vector.load %arg10[%c5, %c0_11] : memref<9x32xf32, #tpu.memory_space<vmem>>, vector<1x32xf32>
    %c6 = arith.constant 6 : index
    %c0_12 = arith.constant 0 : index
    %11 = vector.load %arg10[%c6, %c0_12] : memref<9x32xf32, #tpu.memory_space<vmem>>, vector<1x32xf32>
    %c7 = arith.constant 7 : index
    %c0_13 = arith.constant 0 : index
    %12 = vector.load %arg10[%c7, %c0_13] : memref<9x32xf32, #tpu.memory_space<vmem>>, vector<1x32xf32>
    %c8 = arith.constant 8 : index
    %c0_14 = arith.constant 0 : index
    %13 = vector.load %arg10[%c8, %c0_14] : memref<9x32xf32, #tpu.memory_space<vmem>>, vector<1x32xf32>
    %14 = arith.truncf %4 : vector<8x32xf32> to vector<8x32xbf16>
    %c0_15 = arith.constant 0 : index
    %c0_16 = arith.constant 0 : index
    %15 = vector.load %arg3[%c0_15, %c0_16] : memref<32x32xbf16, #tpu.memory_space<vmem>>, vector<32x32xbf16>
    %cst = arith.constant dense<0.000000e+00> : vector<8x32xf32>
    %16 = tpu.matmul %14, %15, %cst {dimension_numbers = #tpu.dot_dimension_numbers<[1], [0], [0], [1], [0, 0, 1, 1], [], []>} : vector<8x32xbf16>, vector<32x32xbf16>, vector<8x32xf32> -> vector<8x32xf32>
    %17 = vector.broadcast %5 : vector<1x32xf32> to vector<8x32xf32>
    %18 = arith.addf %16, %17 : vector<8x32xf32>
    %c0_17 = arith.constant 0 : index
    %c0_18 = arith.constant 0 : index
    %19 = vector.load %arg4[%c0_17, %c0_18] : memref<32x32xbf16, #tpu.memory_space<vmem>>, vector<32x32xbf16>
    %cst_19 = arith.constant dense<0.000000e+00> : vector<8x32xf32>
    %20 = tpu.matmul %14, %19, %cst_19 {dimension_numbers = #tpu.dot_dimension_numbers<[1], [0], [0], [1], [0, 0, 1, 1], [], []>} : vector<8x32xbf16>, vector<32x32xbf16>, vector<8x32xf32> -> vector<8x32xf32>
    %21 = vector.broadcast %6 : vector<1x32xf32> to vector<8x32xf32>
    %22 = arith.addf %20, %21 : vector<8x32xf32>
    %c0_20 = arith.constant 0 : index
    %c0_21 = arith.constant 0 : index
    %23 = vector.load %arg5[%c0_20, %c0_21] : memref<32x32xbf16, #tpu.memory_space<vmem>>, vector<32x32xbf16>
    %cst_22 = arith.constant dense<0.000000e+00> : vector<8x32xf32>
    %24 = tpu.matmul %14, %23, %cst_22 {dimension_numbers = #tpu.dot_dimension_numbers<[1], [0], [0], [1], [0, 0, 1, 1], [], []>} : vector<8x32xbf16>, vector<32x32xbf16>, vector<8x32xf32> -> vector<8x32xf32>
    %25 = vector.broadcast %7 : vector<1x32xf32> to vector<8x32xf32>
    %26 = arith.addf %24, %25 : vector<8x32xf32>
    %27 = vector.extract_strided_slice %18 {offsets = [0, 0], sizes = [8, 8], strides = [1, 1]} : vector<8x32xf32> to vector<8x8xf32>
    %28 = arith.truncf %27 : vector<8x8xf32> to vector<8x8xbf16>
    %29 = vector.extract_strided_slice %22 {offsets = [0, 0], sizes = [8, 8], strides = [1, 1]} : vector<8x32xf32> to vector<8x8xf32>
    %30 = arith.truncf %29 : vector<8x8xf32> to vector<8x8xbf16>
    %31 = vector.extract_strided_slice %26 {offsets = [0, 0], sizes = [8, 8], strides = [1, 1]} : vector<8x32xf32> to vector<8x8xf32>
    %32 = arith.truncf %31 : vector<8x8xf32> to vector<8x8xbf16>
    %cst_23 = arith.constant dense<0.000000e+00> : vector<8x8xf32>
    %33 = tpu.matmul %28, %30, %cst_23 {dimension_numbers = #tpu.dot_dimension_numbers<[1], [1], [0], [0], [0, 0, 1, 0], [], []>} : vector<8x8xbf16>, vector<8x8xbf16>, vector<8x8xf32> -> vector<8x8xf32>
    %cst_24 = arith.constant 0.353553385 : f32
    %34 = vector.broadcast %cst_24 : f32 to vector<8x8xf32>
    %35 = arith.mulf %33, %34 : vector<8x8xf32>
    %cst_25 = arith.constant dense<0xFF800000> : vector<8xf32>
    %36 = vector.multi_reduction <maximumf>, %35, %cst_25 [1] : vector<8x8xf32> to vector<8xf32>
    %37 = vector.shape_cast %36 : vector<8xf32> to vector<8x1xf32>
    %38 = vector.broadcast %37 : vector<8x1xf32> to vector<8x8xf32>
    %39 = arith.subf %35, %38 : vector<8x8xf32>
    %40 = math.exp %39 : vector<8x8xf32>
    %cst_26 = arith.constant dense<0.000000e+00> : vector<8xf32>
    %41 = vector.multi_reduction <add>, %40, %cst_26 [1] : vector<8x8xf32> to vector<8xf32>
    %42 = vector.shape_cast %41 : vector<8xf32> to vector<8x1xf32>
    %43 = tpu.reciprocal %42 {approx = true} : vector<8x1xf32> -> vector<8x1xf32>
    %44 = vector.broadcast %43 : vector<8x1xf32> to vector<8x8xf32>
    %45 = arith.mulf %40, %44 : vector<8x8xf32>
    %46 = arith.truncf %45 : vector<8x8xf32> to vector<8x8xbf16>
    %cst_27 = arith.constant dense<0.000000e+00> : vector<8x8xf32>
    %47 = tpu.matmul %46, %32, %cst_27 {dimension_numbers = #tpu.dot_dimension_numbers<[1], [0], [0], [1], [0, 0, 1, 1], [], []>} : vector<8x8xbf16>, vector<8x8xbf16>, vector<8x8xf32> -> vector<8x8xf32>
    %48 = vector.extract_strided_slice %18 {offsets = [0, 8], sizes = [8, 8], strides = [1, 1]} : vector<8x32xf32> to vector<8x8xf32>
    %49 = arith.truncf %48 : vector<8x8xf32> to vector<8x8xbf16>
    %50 = vector.extract_strided_slice %22 {offsets = [0, 8], sizes = [8, 8], strides = [1, 1]} : vector<8x32xf32> to vector<8x8xf32>
    %51 = arith.truncf %50 : vector<8x8xf32> to vector<8x8xbf16>
    %52 = vector.extract_strided_slice %26 {offsets = [0, 8], sizes = [8, 8], strides = [1, 1]} : vector<8x32xf32> to vector<8x8xf32>
    %53 = arith.truncf %52 : vector<8x8xf32> to vector<8x8xbf16>
    %cst_28 = arith.constant dense<0.000000e+00> : vector<8x8xf32>
    %54 = tpu.matmul %49, %51, %cst_28 {dimension_numbers = #tpu.dot_dimension_numbers<[1], [1], [0], [0], [0, 0, 1, 0], [], []>} : vector<8x8xbf16>, vector<8x8xbf16>, vector<8x8xf32> -> vector<8x8xf32>
    %cst_29 = arith.constant 0.353553385 : f32
    %55 = vector.broadcast %cst_29 : f32 to vector<8x8xf32>
    %56 = arith.mulf %54, %55 : vector<8x8xf32>
    %cst_30 = arith.constant dense<0xFF800000> : vector<8xf32>
    %57 = vector.multi_reduction <maximumf>, %56, %cst_30 [1] : vector<8x8xf32> to vector<8xf32>
    %58 = vector.shape_cast %57 : vector<8xf32> to vector<8x1xf32>
    %59 = vector.broadcast %58 : vector<8x1xf32> to vector<8x8xf32>
    %60 = arith.subf %56, %59 : vector<8x8xf32>
    %61 = math.exp %60 : vector<8x8xf32>
    %cst_31 = arith.constant dense<0.000000e+00> : vector<8xf32>
    %62 = vector.multi_reduction <add>, %61, %cst_31 [1] : vector<8x8xf32> to vector<8xf32>
    %63 = vector.shape_cast %62 : vector<8xf32> to vector<8x1xf32>
    %64 = tpu.reciprocal %63 {approx = true} : vector<8x1xf32> -> vector<8x1xf32>
    %65 = vector.broadcast %64 : vector<8x1xf32> to vector<8x8xf32>
    %66 = arith.mulf %61, %65 : vector<8x8xf32>
    %67 = arith.truncf %66 : vector<8x8xf32> to vector<8x8xbf16>
    %cst_32 = arith.constant dense<0.000000e+00> : vector<8x8xf32>
    %68 = tpu.matmul %67, %53, %cst_32 {dimension_numbers = #tpu.dot_dimension_numbers<[1], [0], [0], [1], [0, 0, 1, 1], [], []>} : vector<8x8xbf16>, vector<8x8xbf16>, vector<8x8xf32> -> vector<8x8xf32>
    %69 = vector.extract_strided_slice %18 {offsets = [0, 16], sizes = [8, 8], strides = [1, 1]} : vector<8x32xf32> to vector<8x8xf32>
    %70 = arith.truncf %69 : vector<8x8xf32> to vector<8x8xbf16>
    %71 = vector.extract_strided_slice %22 {offsets = [0, 16], sizes = [8, 8], strides = [1, 1]} : vector<8x32xf32> to vector<8x8xf32>
    %72 = arith.truncf %71 : vector<8x8xf32> to vector<8x8xbf16>
    %73 = vector.extract_strided_slice %26 {offsets = [0, 16], sizes = [8, 8], strides = [1, 1]} : vector<8x32xf32> to vector<8x8xf32>
    %74 = arith.truncf %73 : vector<8x8xf32> to vector<8x8xbf16>
    %cst_33 = arith.constant dense<0.000000e+00> : vector<8x8xf32>
    %75 = tpu.matmul %70, %72, %cst_33 {dimension_numbers = #tpu.dot_dimension_numbers<[1], [1], [0], [0], [0, 0, 1, 0], [], []>} : vector<8x8xbf16>, vector<8x8xbf16>, vector<8x8xf32> -> vector<8x8xf32>
    %cst_34 = arith.constant 0.353553385 : f32
    %76 = vector.broadcast %cst_34 : f32 to vector<8x8xf32>
    %77 = arith.mulf %75, %76 : vector<8x8xf32>
    %cst_35 = arith.constant dense<0xFF800000> : vector<8xf32>
    %78 = vector.multi_reduction <maximumf>, %77, %cst_35 [1] : vector<8x8xf32> to vector<8xf32>
    %79 = vector.shape_cast %78 : vector<8xf32> to vector<8x1xf32>
    %80 = vector.broadcast %79 : vector<8x1xf32> to vector<8x8xf32>
    %81 = arith.subf %77, %80 : vector<8x8xf32>
    %82 = math.exp %81 : vector<8x8xf32>
    %cst_36 = arith.constant dense<0.000000e+00> : vector<8xf32>
    %83 = vector.multi_reduction <add>, %82, %cst_36 [1] : vector<8x8xf32> to vector<8xf32>
    %84 = vector.shape_cast %83 : vector<8xf32> to vector<8x1xf32>
    %85 = tpu.reciprocal %84 {approx = true} : vector<8x1xf32> -> vector<8x1xf32>
    %86 = vector.broadcast %85 : vector<8x1xf32> to vector<8x8xf32>
    %87 = arith.mulf %82, %86 : vector<8x8xf32>
    %88 = arith.truncf %87 : vector<8x8xf32> to vector<8x8xbf16>
    %cst_37 = arith.constant dense<0.000000e+00> : vector<8x8xf32>
    %89 = tpu.matmul %88, %74, %cst_37 {dimension_numbers = #tpu.dot_dimension_numbers<[1], [0], [0], [1], [0, 0, 1, 1], [], []>} : vector<8x8xbf16>, vector<8x8xbf16>, vector<8x8xf32> -> vector<8x8xf32>
    %90 = vector.extract_strided_slice %18 {offsets = [0, 24], sizes = [8, 8], strides = [1, 1]} : vector<8x32xf32> to vector<8x8xf32>
    %91 = arith.truncf %90 : vector<8x8xf32> to vector<8x8xbf16>
    %92 = vector.extract_strided_slice %22 {offsets = [0, 24], sizes = [8, 8], strides = [1, 1]} : vector<8x32xf32> to vector<8x8xf32>
    %93 = arith.truncf %92 : vector<8x8xf32> to vector<8x8xbf16>
    %94 = vector.extract_strided_slice %26 {offsets = [0, 24], sizes = [8, 8], strides = [1, 1]} : vector<8x32xf32> to vector<8x8xf32>
    %95 = arith.truncf %94 : vector<8x8xf32> to vector<8x8xbf16>
    %cst_38 = arith.constant dense<0.000000e+00> : vector<8x8xf32>
    %96 = tpu.matmul %91, %93, %cst_38 {dimension_numbers = #tpu.dot_dimension_numbers<[1], [1], [0], [0], [0, 0, 1, 0], [], []>} : vector<8x8xbf16>, vector<8x8xbf16>, vector<8x8xf32> -> vector<8x8xf32>
    %cst_39 = arith.constant 0.353553385 : f32
    %97 = vector.broadcast %cst_39 : f32 to vector<8x8xf32>
    %98 = arith.mulf %96, %97 : vector<8x8xf32>
    %cst_40 = arith.constant dense<0xFF800000> : vector<8xf32>
    %99 = vector.multi_reduction <maximumf>, %98, %cst_40 [1] : vector<8x8xf32> to vector<8xf32>
    %100 = vector.shape_cast %99 : vector<8xf32> to vector<8x1xf32>
    %101 = vector.broadcast %100 : vector<8x1xf32> to vector<8x8xf32>
    %102 = arith.subf %98, %101 : vector<8x8xf32>
    %103 = math.exp %102 : vector<8x8xf32>
    %cst_41 = arith.constant dense<0.000000e+00> : vector<8xf32>
    %104 = vector.multi_reduction <add>, %103, %cst_41 [1] : vector<8x8xf32> to vector<8xf32>
    %105 = vector.shape_cast %104 : vector<8xf32> to vector<8x1xf32>
    %106 = tpu.reciprocal %105 {approx = true} : vector<8x1xf32> -> vector<8x1xf32>
    %107 = vector.broadcast %106 : vector<8x1xf32> to vector<8x8xf32>
    %108 = arith.mulf %103, %107 : vector<8x8xf32>
    %109 = arith.truncf %108 : vector<8x8xf32> to vector<8x8xbf16>
    %cst_42 = arith.constant dense<0.000000e+00> : vector<8x8xf32>
    %110 = tpu.matmul %109, %95, %cst_42 {dimension_numbers = #tpu.dot_dimension_numbers<[1], [0], [0], [1], [0, 0, 1, 1], [], []>} : vector<8x8xbf16>, vector<8x8xbf16>, vector<8x8xf32> -> vector<8x8xf32>
    %111 = tpu.concatenate %47, %68, %89, %110 in 1 : vector<8x8xf32>, vector<8x8xf32>, vector<8x8xf32>, vector<8x8xf32> -> vector<8x32xf32>
    %112 = arith.truncf %111 : vector<8x32xf32> to vector<8x32xbf16>
    %c0_43 = arith.constant 0 : index
    %c0_44 = arith.constant 0 : index
    %113 = vector.load %arg6[%c0_43, %c0_44] : memref<32x32xbf16, #tpu.memory_space<vmem>>, vector<32x32xbf16>
    %cst_45 = arith.constant dense<0.000000e+00> : vector<8x32xf32>
    %114 = tpu.matmul %112, %113, %cst_45 {dimension_numbers = #tpu.dot_dimension_numbers<[1], [0], [0], [1], [0, 0, 1, 1], [], []>} : vector<8x32xbf16>, vector<32x32xbf16>, vector<8x32xf32> -> vector<8x32xf32>
    %115 = vector.broadcast %8 : vector<1x32xf32> to vector<8x32xf32>
    %116 = arith.addf %114, %115 : vector<8x32xf32>
    %117 = arith.addf %4, %116 : vector<8x32xf32>
    %cst_46 = arith.constant dense<0.000000e+00> : vector<8xf32>
    %118 = vector.multi_reduction <add>, %117, %cst_46 [1] : vector<8x32xf32> to vector<8xf32>
    %119 = vector.shape_cast %118 : vector<8xf32> to vector<8x1xf32>
    %cst_47 = arith.constant 3.200000e+01 : f32
    %120 = vector.broadcast %cst_47 : f32 to vector<8x1xf32>
    %121 = arith.divf %119, %120 : vector<8x1xf32>
    %122 = vector.broadcast %121 : vector<8x1xf32> to vector<8x32xf32>
    %123 = arith.subf %117, %122 : vector<8x32xf32>
    %124 = arith.mulf %123, %123 : vector<8x32xf32>
    %cst_48 = arith.constant dense<0.000000e+00> : vector<8xf32>
    %125 = vector.multi_reduction <add>, %124, %cst_48 [1] : vector<8x32xf32> to vector<8xf32>
    %126 = vector.shape_cast %125 : vector<8xf32> to vector<8x1xf32>
    %cst_49 = arith.constant 3.200000e+01 : f32
    %127 = vector.broadcast %cst_49 : f32 to vector<8x1xf32>
    %128 = arith.divf %126, %127 : vector<8x1xf32>
    %129 = vector.broadcast %121 : vector<8x1xf32> to vector<8x32xf32>
    %130 = arith.subf %117, %129 : vector<8x32xf32>
    %cst_50 = arith.constant 9.99999974E-6 : f32
    %131 = vector.broadcast %cst_50 : f32 to vector<8x1xf32>
    %132 = arith.addf %128, %131 : vector<8x1xf32>
    %133 = math.rsqrt %132 : vector<8x1xf32>
    %134 = vector.broadcast %133 : vector<8x1xf32> to vector<8x32xf32>
    %135 = arith.mulf %130, %134 : vector<8x32xf32>
    %136 = vector.broadcast %9 : vector<1x32xf32> to vector<8x32xf32>
    %137 = arith.mulf %135, %136 : vector<8x32xf32>
    %138 = vector.broadcast %10 : vector<1x32xf32> to vector<8x32xf32>
    %139 = arith.addf %137, %138 : vector<8x32xf32>
    %140 = arith.truncf %139 : vector<8x32xf32> to vector<8x32xbf16>
    %c0_51 = arith.constant 0 : index
    %c0_52 = arith.constant 0 : index
    %141 = vector.load %arg7[%c0_51, %c0_52] : memref<32x2048xbf16, #tpu.memory_space<vmem>>, vector<32x2048xbf16>
    %cst_53 = arith.constant dense<0.000000e+00> : vector<8x2048xf32>
    %142 = tpu.matmul %140, %141, %cst_53 {dimension_numbers = #tpu.dot_dimension_numbers<[1], [0], [0], [1], [0, 0, 1, 1], [], []>} : vector<8x32xbf16>, vector<32x2048xbf16>, vector<8x2048xf32> -> vector<8x2048xf32>
    %c0_54 = arith.constant 0 : index
    %c0_55 = arith.constant 0 : index
    %143 = vector.load %arg9[%c0_54, %c0_55] : memref<1x2048xf32, #tpu.memory_space<vmem>>, vector<1x2048xf32>
    %144 = vector.broadcast %143 : vector<1x2048xf32> to vector<8x2048xf32>
    %145 = arith.addf %142, %144 : vector<8x2048xf32>
    %cst_56 = arith.constant 0.000000e+00 : f32
    %146 = vector.broadcast %cst_56 : f32 to vector<8x2048xf32>
    %147 = arith.maximumf %145, %146 : vector<8x2048xf32>
    %148 = arith.truncf %147 : vector<8x2048xf32> to vector<8x2048xbf16>
    %c0_57 = arith.constant 0 : index
    %c0_58 = arith.constant 0 : index
    %149 = vector.load %arg8[%c0_57, %c0_58] : memref<2048x32xbf16, #tpu.memory_space<vmem>>, vector<2048x32xbf16>
    %cst_59 = arith.constant dense<0.000000e+00> : vector<8x32xf32>
    %150 = tpu.matmul %148, %149, %cst_59 {dimension_numbers = #tpu.dot_dimension_numbers<[1], [0], [0], [1], [0, 0, 1, 1], [], []>} : vector<8x2048xbf16>, vector<2048x32xbf16>, vector<8x32xf32> -> vector<8x32xf32>
    %151 = vector.broadcast %11 : vector<1x32xf32> to vector<8x32xf32>
    %152 = arith.addf %150, %151 : vector<8x32xf32>
    %153 = arith.addf %139, %152 : vector<8x32xf32>
    %cst_60 = arith.constant dense<0.000000e+00> : vector<8xf32>
    %154 = vector.multi_reduction <add>, %153, %cst_60 [1] : vector<8x32xf32> to vector<8xf32>
    %155 = vector.shape_cast %154 : vector<8xf32> to vector<8x1xf32>
    %cst_61 = arith.constant 3.200000e+01 : f32
    %156 = vector.broadcast %cst_61 : f32 to vector<8x1xf32>
    %157 = arith.divf %155, %156 : vector<8x1xf32>
    %158 = vector.broadcast %157 : vector<8x1xf32> to vector<8x32xf32>
    %159 = arith.subf %153, %158 : vector<8x32xf32>
    %160 = arith.mulf %159, %159 : vector<8x32xf32>
    %cst_62 = arith.constant dense<0.000000e+00> : vector<8xf32>
    %161 = vector.multi_reduction <add>, %160, %cst_62 [1] : vector<8x32xf32> to vector<8xf32>
    %162 = vector.shape_cast %161 : vector<8xf32> to vector<8x1xf32>
    %cst_63 = arith.constant 3.200000e+01 : f32
    %163 = vector.broadcast %cst_63 : f32 to vector<8x1xf32>
    %164 = arith.divf %162, %163 : vector<8x1xf32>
    %165 = vector.broadcast %157 : vector<8x1xf32> to vector<8x32xf32>
    %166 = arith.subf %153, %165 : vector<8x32xf32>
    %cst_64 = arith.constant 9.99999974E-6 : f32
    %167 = vector.broadcast %cst_64 : f32 to vector<8x1xf32>
    %168 = arith.addf %164, %167 : vector<8x1xf32>
    %169 = math.rsqrt %168 : vector<8x1xf32>
    %170 = vector.broadcast %169 : vector<8x1xf32> to vector<8x32xf32>
    %171 = arith.mulf %166, %170 : vector<8x32xf32>
    %172 = vector.broadcast %12 : vector<1x32xf32> to vector<8x32xf32>
    %173 = arith.mulf %171, %172 : vector<8x32xf32>
    %174 = vector.broadcast %13 : vector<1x32xf32> to vector<8x32xf32>
    %175 = arith.addf %173, %174 : vector<8x32xf32>
    %c0_65 = arith.constant 0 : index
    %c0_66 = arith.constant 0 : index
    %c0_67 = arith.constant 0 : index
    %176 = vector.load %arg11[%c0_65, %c0_66, %c0_67] : memref<1x8x32xf32, #tpu.memory_space<vmem>>, vector<1x8x32xf32>
    %177 = vector.shape_cast %176 : vector<1x8x32xf32> to vector<8x32xf32>
    %178 = vector.shape_cast %175 : vector<8x32xf32> to vector<1x8x32xf32>
    tpu.vector_store %arg11[%c0_65, %c0_66, %c0_67], %178 {strides = array<i32>} : memref<1x8x32xf32, #tpu.memory_space<vmem>>, vector<1x8x32xf32>,
    return
  }
  func.func @transform_0(%arg0: i32) -> (i32, i32, i32) {
    %c0_i32 = arith.constant 0 : i32
    %c0_i32_0 = arith.constant 0 : i32
    %c0_i32_1 = arith.constant 0 : i32
    return %arg0, %c0_i32, %c0_i32_0 : i32, i32, i32
  }
  func.func @transform_1(%arg0: i32) -> (i32, i32, i32) {
    %c0_i32 = arith.constant 0 : i32
    %c0_i32_0 = arith.constant 0 : i32
    %c0_i32_1 = arith.constant 0 : i32
    %c0_i32_2 = arith.constant 0 : i32
    return %c0_i32, %c0_i32_0, %c0_i32_1 : i32, i32, i32
  }
  func.func @transform_2(%arg0: i32) -> (i32, i32) {
    %c0_i32 = arith.constant 0 : i32
    %c0_i32_0 = arith.constant 0 : i32
    %c0_i32_1 = arith.constant 0 : i32
    return %c0_i32, %c0_i32_0 : i32, i32
  }
  func.func @transform_3(%arg0: i32) -> (i32, i32) {
    %c0_i32 = arith.constant 0 : i32
    %c0_i32_0 = arith.constant 0 : i32
    %c0_i32_1 = arith.constant 0 : i32
    return %c0_i32, %c0_i32_0 : i32, i32
  }
  func.func @transform_4(%arg0: i32) -> (i32, i32) {
    %c0_i32 = arith.constant 0 : i32
    %c0_i32_0 = arith.constant 0 : i32
    %c0_i32_1 = arith.constant 0 : i32
    return %c0_i32, %c0_i32_0 : i32, i32
  }
  func.func @transform_5(%arg0: i32) -> (i32, i32) {
    %c0_i32 = arith.constant 0 : i32
    %c0_i32_0 = arith.constant 0 : i32
    %c0_i32_1 = arith.constant 0 : i32
    return %c0_i32, %c0_i32_0 : i32, i32
  }
  func.func @transform_6(%arg0: i32) -> (i32, i32) {
    %c0_i32 = arith.constant 0 : i32
    %c0_i32_0 = arith.constant 0 : i32
    %c0_i32_1 = arith.constant 0 : i32
    return %c0_i32, %c0_i32_0 : i32, i32
  }
  func.func @transform_7(%arg0: i32) -> (i32, i32) {
    %c0_i32 = arith.constant 0 : i32
    %c0_i32_0 = arith.constant 0 : i32
    %c0_i32_1 = arith.constant 0 : i32
    return %c0_i32, %c0_i32_0 : i32, i32
  }
  func.func @transform_8(%arg0: i32) -> (i32, i32) {
    %c0_i32 = arith.constant 0 : i32
    %c0_i32_0 = arith.constant 0 : i32
    %c0_i32_1 = arith.constant 0 : i32
    return %c0_i32, %c0_i32_0 : i32, i32
  }
  func.func @transform_9(%arg0: i32) -> (i32, i32) {
    %c0_i32 = arith.constant 0 : i32
    %c0_i32_0 = arith.constant 0 : i32
    %c0_i32_1 = arith.constant 0 : i32
    return %c0_i32, %c0_i32_0 : i32, i32
  }
  func.func @transform_10(%arg0: i32) -> (i32, i32, i32) {
    %c0_i32 = arith.constant 0 : i32
    %c0_i32_0 = arith.constant 0 : i32
    %c0_i32_1 = arith.constant 0 : i32
    return %arg0, %c0_i32, %c0_i32_0 : i32, i32, i32
  }
}

</mosaic_0001>

<llo_original>
// kernel: transformer_forward.2
$region0: #{transformer_forward.2}
  #allocation0 [shape = 'u32[]', space=smem, size = 0x4, offset = 0x4, fixed_abs, tag = 'smem constant byte address 0x4 - core index']
  #allocation1 [shape = 'u32[144,128]{1,0:T(1,128)}', space=vmem, size = 0x12000, scoped, tag = 'internal scratch']
  %s0 = inlined_call_operand.vmem [shape: f32[2,8,32], index: 0, kind: input, shape index: {}]
  %s1 = inlined_call_operand.vmem [shape: f32[1,8,32], index: 1, kind: input, shape index: {}]
  %s2 = inlined_call_operand.vmem [shape: bf16[32,32], index: 2, kind: input, shape index: {}]
  %s3 = inlined_call_operand.vmem [shape: bf16[32,32], index: 3, kind: input, shape index: {}]
  %s4 = inlined_call_operand.vmem [shape: bf16[32,32], index: 4, kind: input, shape index: {}]
  %s5 = inlined_call_operand.vmem [shape: bf16[32,32], index: 5, kind: input, shape index: {}]
  %s6 = inlined_call_operand.vmem [shape: bf16[32,2048], index: 6, kind: input, shape index: {}]
  %s7 = inlined_call_operand.vmem [shape: bf16[2048,32], index: 7, kind: input, shape index: {}]
  %s8 = inlined_call_operand.vmem [shape: f32[1,2048], index: 8, kind: input, shape index: {}]
  %s9 = inlined_call_operand.vmem [shape: f32[9,32], index: 9, kind: input, shape index: {}]
  %s10 = inlined_call_operand.vmem [shape: f32[2,8,32], index: 10, kind: output, shape index: {}]
  %s11 = sld [smem:[#allocation0]]
  $region73: #{transformer_forward.2} parent=0
    _
  %s13 = ssub.s32 1, %s11
  %s14 = scalar_select 0, %s13, %s11
  loop: start=0, step=1, limit=4
  $region2: #{transformer_forward.2} parent=0 // loop_pre_header
    _
  $region3: #{transformer_forward.2} parent=0 // loop_header
    %s16 = sphi 0, %s20
    %p17 = scmp.ge.s32.totalorder %s16, 4
    %s26 = sphi 0, %s28
    %s29 = sphi 0, %s26
    %s30 = sphi 0, %s29
    %s46 = sphi 0, %s30
    %s50 = sphi 0, %s50
    %s52 = sphi 0, %s50
    %s53 = sphi 0, %s52
    %s67 = sphi 0, %s53
    %s71 = sphi 0, %s71
    %s73 = sphi 0, %s71
    %s74 = sphi 0, %s73
    %s88 = sphi 0, %s74
    %s92 = sphi 0, %s92
    %s94 = sphi 0, %s92
    %s95 = sphi 0, %s94
    %s109 = sphi 0, %s95
    %s113 = sphi 0, %s113
    %s115 = sphi 0, %s113
    %s116 = sphi 0, %s115
    %s130 = sphi 0, %s116
    %s134 = sphi 0, %s134
    %s136 = sphi 0, %s134
    %s137 = sphi 0, %s136
    %s151 = sphi 0, %s137
    %s155 = sphi 0, %s155
    %s157 = sphi 0, %s155
    %s158 = sphi 0, %s157
    %s172 = sphi 0, %s158
    %s176 = sphi 0, %s176
    %s178 = sphi 0, %s176
    %s179 = sphi 0, %s178
    %s193 = sphi 0, %s179
    %s197 = sphi 0, %s197
    %s199 = sphi 0, %s197
    %s200 = sphi 0, %s199
    %s214 = sphi 0, %s200
    %s218 = sphi 0, %s218
    %s220 = sphi 0, %s218
    %s221 = sphi 0, %s220
    %s235 = sphi 0, %s221
    %s241 = sphi 0, %s243
    %s244 = sphi 0, %s241
    %s245 = sphi 0, %s244
    %s261 = sphi 0, %s245
  $region4: #{transformer_forward.2} parent=0 // loop_header_branch
    %19 = sbr.rel (%p17) target = $region8
  $region5: #{transformer_forward.2} parent=0 // loop_body
    %s21 = ssub.s32 %s16, 1
    %s22 = ssub.s32 %s16, 2
    %s23 = sadd.s32 %s16, 1
    %s24 = ssub.s32 %s16, %s23
    %p25 = scmp.eq.s32.totalorder %s24, 0
    %s27 = sadd.s32 %s26, 1
    %s28 = scalar_select %p25, %s26, %s27
    %p31 = pneg %p25
    %p32 = scmp.eq.s32.totalorder %s16, 1
    %p33 = por %p31, %p32
    %p34 = scmp.ne.s32.totalorder %s26, %s29
    %p35 = scmp.eq.s32.totalorder %s16, 0
    %p36 = por %p34, %p35
    %p37 = scmp.ne.s32.totalorder %s26, %s29
    %p38 = scmp.eq.s32.totalorder %s21, 1
    %p39 = por %p37, %p38
    %p40 = scmp.ne.s32.totalorder %s29, %s30
    %p41 = scmp.eq.s32.totalorder %s21, 0
    %p42 = por %p40, %p41
    %p43 = scmp.ne.s32.totalorder %s29, %s30
    %p44 = scmp.eq.s32.totalorder %s22, 1
    %p45 = por %p43, %p44
    %p47 = scmp.ne.s32.totalorder %s30, %s46
    %p48 = scmp.eq.s32.totalorder %s22, 0
    %p49 = por %p47, %p48
    %s51 = sadd.s32 %s50, 1
    %p54 = scmp.eq.s32.totalorder %s16, 1
    %p55 = scmp.ne.s32.totalorder %s50, %s52
    %p56 = scmp.eq.s32.totalorder %s16, 0
    %p57 = por %p55, %p56
    %p58 = scmp.ne.s32.totalorder %s50, %s52
    %p59 = scmp.eq.s32.totalorder %s21, 1
    %p60 = por %p58, %p59
    %p61 = scmp.ne.s32.totalorder %s52, %s53
    %p62 = scmp.eq.s32.totalorder %s21, 0
    %p63 = por %p61, %p62
    %p64 = scmp.ne.s32.totalorder %s52, %s53
    %p65 = scmp.eq.s32.totalorder %s22, 1
    %p66 = por %p64, %p65
    %p68 = scmp.ne.s32.totalorder %s53, %s67
    %p69 = scmp.eq.s32.totalorder %s22, 0
    %p70 = por %p68, %p69
    %s72 = sadd.s32 %s71, 1
    %p75 = scmp.eq.s32.totalorder %s16, 1
    %p76 = scmp.ne.s32.totalorder %s71, %s73
    %p77 = scmp.eq.s32.totalorder %s16, 0
    %p78 = por %p76, %p77
    %p79 = scmp.ne.s32.totalorder %s71, %s73
    %p80 = scmp.eq.s32.totalorder %s21, 1
    %p81 = por %p79, %p80
    %p82 = scmp.ne.s32.totalorder %s73, %s74
    %p83 = scmp.eq.s32.totalorder %s21, 0
    %p84 = por %p82, %p83
    %p85 = scmp.ne.s32.totalorder %s73, %s74
    %p86 = scmp.eq.s32.totalorder %s22, 1
    %p87 = por %p85, %p86
    %p89 = scmp.ne.s32.totalorder %s74, %s88
    %p90 = scmp.eq.s32.totalorder %s22, 0
    %p91 = por %p89, %p90
    %s93 = sadd.s32 %s92, 1
    %p96 = scmp.eq.s32.totalorder %s16, 1
    %p97 = scmp.ne.s32.totalorder %s92, %s94
    %p98 = scmp.eq.s32.totalorder %s16, 0
    %p99 = por %p97, %p98
    %p100 = scmp.ne.s32.totalorder %s92, %s94
    %p101 = scmp.eq.s32.totalorder %s21, 1
    %p102 = por %p100, %p101
    %p103 = scmp.ne.s32.totalorder %s94, %s95
    %p104 = scmp.eq.s32.totalorder %s21, 0
    %p105 = por %p103, %p104
    %p106 = scmp.ne.s32.totalorder %s94, %s95
    %p107 = scmp.eq.s32.totalorder %s22, 1
    %p108 = por %p106, %p107
    %p110 = scmp.ne.s32.totalorder %s95, %s109
    %p111 = scmp.eq.s32.totalorder %s22, 0
    %p112 = por %p110, %p111
    %s114 = sadd.s32 %s113, 1
    %p117 = scmp.eq.s32.totalorder %s16, 1
    %p118 = scmp.ne.s32.totalorder %s113, %s115
    %p119 = scmp.eq.s32.totalorder %s16, 0
    %p120 = por %p118, %p119
    %p121 = scmp.ne.s32.totalorder %s113, %s115
    %p122 = scmp.eq.s32.totalorder %s21, 1
    %p123 = por %p121, %p122
    %p124 = scmp.ne.s32.totalorder %s115, %s116
    %p125 = scmp.eq.s32.totalorder %s21, 0
    %p126 = por %p124, %p125
    %p127 = scmp.ne.s32.totalorder %s115, %s116
    %p128 = scmp.eq.s32.totalorder %s22, 1
    %p129 = por %p127, %p128
    %p131 = scmp.ne.s32.totalorder %s116, %s130
    %p132 = scmp.eq.s32.totalorder %s22, 0
    %p133 = por %p131, %p132
    %s135 = sadd.s32 %s134, 1
    %p138 = scmp.eq.s32.totalorder %s16, 1
    %p139 = scmp.ne.s32.totalorder %s134, %s136
    %p140 = scmp.eq.s32.totalorder %s16, 0
    %p141 = por %p139, %p140
    %p142 = scmp.ne.s32.totalorder %s134, %s136
    %p143 = scmp.eq.s32.totalorder %s21, 1
    %p144 = por %p142, %p143
    %p145 = scmp.ne.s32.totalorder %s136, %s137
    %p146 = scmp.eq.s32.totalorder %s21, 0
    %p147 = por %p145, %p146
    %p148 = scmp.ne.s32.totalorder %s136, %s137
    %p149 = scmp.eq.s32.totalorder %s22, 1
    %p150 = por %p148, %p149
    %p152 = scmp.ne.s32.totalorder %s137, %s151
    %p153 = scmp.eq.s32.totalorder %s22, 0
    %p154 = por %p152, %p153
    %s156 = sadd.s32 %s155, 1
    %p159 = scmp.eq.s32.totalorder %s16, 1
    %p160 = scmp.ne.s32.totalorder %s155, %s157
    %p161 = scmp.eq.s32.totalorder %s16, 0
    %p162 = por %p160, %p161
    %p163 = scmp.ne.s32.totalorder %s155, %s157
    %p164 = scmp.eq.s32.totalorder %s21, 1
    %p165 = por %p163, %p164
    %p166 = scmp.ne.s32.totalorder %s157, %s158
    %p167 = scmp.eq.s32.totalorder %s21, 0
    %p168 = por %p166, %p167
    %p169 = scmp.ne.s32.totalorder %s157, %s158
    %p170 = scmp.eq.s32.totalorder %s22, 1
    %p171 = por %p169, %p170
    %p173 = scmp.ne.s32.totalorder %s158, %s172
    %p174 = scmp.eq.s32.totalorder %s22, 0
    %p175 = por %p173, %p174
    %s177 = sadd.s32 %s176, 1
    %p180 = scmp.eq.s32.totalorder %s16, 1
    %p181 = scmp.ne.s32.totalorder %s176, %s178
    %p182 = scmp.eq.s32.totalorder %s16, 0
    %p183 = por %p181, %p182
    %p184 = scmp.ne.s32.totalorder %s176, %s178
    %p185 = scmp.eq.s32.totalorder %s21, 1
    %p186 = por %p184, %p185
    %p187 = scmp.ne.s32.totalorder %s178, %s179
    %p188 = scmp.eq.s32.totalorder %s21, 0
    %p189 = por %p187, %p188
    %p190 = scmp.ne.s32.totalorder %s178, %s179
    %p191 = scmp.eq.s32.totalorder %s22, 1
    %p192 = por %p190, %p191
    %p194 = scmp.ne.s32.totalorder %s179, %s193
    %p195 = scmp.eq.s32.totalorder %s22, 0
    %p196 = por %p194, %p195
    %s198 = sadd.s32 %s197, 1
    %p201 = scmp.eq.s32.totalorder %s16, 1
    %p202 = scmp.ne.s32.totalorder %s197, %s199
    %p203 = scmp.eq.s32.totalorder %s16, 0
    %p204 = por %p202, %p203
    %p205 = scmp.ne.s32.totalorder %s197, %s199
    %p206 = scmp.eq.s32.totalorder %s21, 1
    %p207 = por %p205, %p206
    %p208 = scmp.ne.s32.totalorder %s199, %s200
    %p209 = scmp.eq.s32.totalorder %s21, 0
    %p210 = por %p208, %p209
    %p211 = scmp.ne.s32.totalorder %s199, %s200
    %p212 = scmp.eq.s32.totalorder %s22, 1
    %p213 = por %p211, %p212
    %p215 = scmp.ne.s32.totalorder %s200, %s214
    %p216 = scmp.eq.s32.totalorder %s22, 0
    %p217 = por %p215, %p216
    %s219 = sadd.s32 %s218, 1
    %p222 = scmp.eq.s32.totalorder %s16, 1
    %p223 = scmp.ne.s32.totalorder %s218, %s220
    %p224 = scmp.eq.s32.totalorder %s16, 0
    %p225 = por %p223, %p224
    %p226 = scmp.ne.s32.totalorder %s218, %s220
    %p227 = scmp.eq.s32.totalorder %s21, 1
    %p228 = por %p226, %p227
    %p229 = scmp.ne.s32.totalorder %s220, %s221
    %p230 = scmp.eq.s32.totalorder %s21, 0
    %p231 = por %p229, %p230
    %p232 = scmp.ne.s32.totalorder %s220, %s221
    %p233 = scmp.eq.s32.totalorder %s22, 1
    %p234 = por %p232, %p233
    %p236 = scmp.ne.s32.totalorder %s221, %s235
    %p237 = scmp.eq.s32.totalorder %s22, 0
    %p238 = por %p236, %p237
    %s239 = ssub.s32 %s16, %s23
    %p240 = scmp.eq.s32.totalorder %s239, 0
    %s242 = sadd.s32 %s241, 1
    %s243 = scalar_select %p240, %s241, %s242
    %p246 = pneg %p240
    %p247 = scmp.eq.s32.totalorder %s16, 1
    %p248 = por %p246, %p247
    %p249 = scmp.ne.s32.totalorder %s241, %s244
    %p250 = scmp.eq.s32.totalorder %s16, 0
    %p251 = por %p249, %p250
    %p252 = scmp.ne.s32.totalorder %s241, %s244
    %p253 = scmp.eq.s32.totalorder %s21, 1
    %p254 = por %p252, %p253
    %p255 = scmp.ne.s32.totalorder %s244, %s245
    %p256 = scmp.eq.s32.totalorder %s21, 0
    %p257 = por %p255, %p256
    %p258 = scmp.ne.s32.totalorder %s244, %s245
    %p259 = scmp.eq.s32.totalorder %s22, 1
    %p260 = por %p258, %p259
    %p262 = scmp.ne.s32.totalorder %s245, %s261
    %p263 = scmp.eq.s32.totalorder %s22, 0
    %p264 = por %p262, %p263
    %p265 = scmp.le.s32.totalorder 1, %s16
    %p266 = scmp.lt.s32.totalorder %s16, 3
    %p267 = pnand %p265, %p266
    %p268 = pneg %p267
    // Predicated region
    $region9: #{transformer_forward.2} parent=5 // pred_check
      _
    $region10: #{transformer_forward.2} parent=5 // pred_check_branch
      %270 = sbr.rel (%p267) target = $region12
    $region11: #{transformer_forward.2} parent=5 // pred_region
      %s271 = ssub.s32 %s16, 1
      // Predicated region
      $region13: #{transformer_forward.2} parent=11 // pred_check
        %p272 = pneg %p63
      $region14: #{transformer_forward.2} parent=11 // pred_check_branch
        %274 = sbr.rel (%p272) target = $region16
      $region15: #{transformer_forward.2} parent=11 // pred_region
        _
      $region16: #{transformer_forward.2} parent=11 // pred_fallthru
        _
      // Predicated region
      $region17: #{transformer_forward.2} parent=11 // pred_check
        %p275 = pneg %p84
      $region18: #{transformer_forward.2} parent=11 // pred_check_branch
        %277 = sbr.rel (%p275) target = $region20
      $region19: #{transformer_forward.2} parent=11 // pred_region
        _
      $region20: #{transformer_forward.2} parent=11 // pred_fallthru
        _
      // Predicated region
      $region21: #{transformer_forward.2} parent=11 // pred_check
        %p278 = pneg %p105
      $region22: #{transformer_forward.2} parent=11 // pred_check_branch
        %280 = sbr.rel (%p278) target = $region24
      $region23: #{transformer_forward.2} parent=11 // pred_region
        _
      $region24: #{transformer_forward.2} parent=11 // pred_fallthru
        _
      // Predicated region
      $region25: #{transformer_forward.2} parent=11 // pred_check
        %p281 = pneg %p126
      $region26: #{transformer_forward.2} parent=11 // pred_check_branch
        %283 = sbr.rel (%p281) target = $region28
      $region27: #{transformer_forward.2} parent=11 // pred_region
        _
      $region28: #{transformer_forward.2} parent=11 // pred_fallthru
        _
      // Predicated region
      $region29: #{transformer_forward.2} parent=11 // pred_check
        %p284 = pneg %p147
      $region30: #{transformer_forward.2} parent=11 // pred_check_branch
        %286 = sbr.rel (%p284) target = $region32
      $region31: #{transformer_forward.2} parent=11 // pred_region
        _
      $region32: #{transformer_forward.2} parent=11 // pred_fallthru
        _
      // Predicated region
      $region33: #{transformer_forward.2} parent=11 // pred_check
        %p287 = pneg %p168
      $region34: #{transformer_forward.2} parent=11 // pred_check_branch
        %289 = sbr.rel (%p287) target = $region36
      $region35: #{transformer_forward.2} parent=11 // pred_region
        _
      $region36: #{transformer_forward.2} parent=11 // pred_fallthru
        _
      // Predicated region
      $region37: #{transformer_forward.2} parent=11 // pred_check
        %p290 = pneg %p189
      $region38: #{transformer_forward.2} parent=11 // pred_check_branch
        %292 = sbr.rel (%p290) target = $region40
      $region39: #{transformer_forward.2} parent=11 // pred_region
        _
      $region40: #{transformer_forward.2} parent=11 // pred_fallthru
        _
      // Predicated region
      $region41: #{transformer_forward.2} parent=11 // pred_check
        %p293 = pneg %p210
      $region42: #{transformer_forward.2} parent=11 // pred_check_branch
        %295 = sbr.rel (%p293) target = $region44
      $region43: #{transformer_forward.2} parent=11 // pred_region
        _
      $region44: #{transformer_forward.2} parent=11 // pred_fallthru
        _
      // Predicated region
      $region45: #{transformer_forward.2} parent=11 // pred_check
        %p296 = pneg %p231
      $region46: #{transformer_forward.2} parent=11 // pred_check_branch
        %298 = sbr.rel (%p296) target = $region48
      $region47: #{transformer_forward.2} parent=11 // pred_region
        _
      $region48: #{transformer_forward.2} parent=11 // pred_fallthru
        _
    $region12: #{transformer_forward.2} parent=5 // pred_fallthru
      _
    %p299 = scmp.lt.s32.totalorder %s16, 2
    // Predicated region
    $region49: #{transformer_forward.2} parent=5 // pred_check
      %p300 = pneg %p299
    $region50: #{transformer_forward.2} parent=5 // pred_check_branch
      %302 = sbr.rel (%p300) target = $region52
    $region51: #{transformer_forward.2} parent=5 // pred_region
      // Predicated region
      $region53: #{transformer_forward.2} parent=51 // pred_check
        %p303 = pneg %p36
      $region54: #{transformer_forward.2} parent=51 // pred_check_branch
        %305 = sbr.rel (%p303) target = $region56
      $region55: #{transformer_forward.2} parent=51 // pred_region
        %p306 = scmp.lt.s32.totalorder %s16, 1
        %s307 = scalar_select %p306, %s16, 1
        %s308 = smul.addr %s307, 8
        %s309 = scalar_lea.vmem %s0, %s308
      $region56: #{transformer_forward.2} parent=51 // pred_fallthru
        _
    $region52: #{transformer_forward.2} parent=5 // pred_fallthru
      _
    %p310 = scmp.le.s32.totalorder 1, %s16
    %p311 = scmp.lt.s32.totalorder %s16, 3
    %p312 = pnand %p310, %p311
    %p313 = pneg %p312
    // Predicated region
    $region57: #{transformer_forward.2} parent=5 // pred_check
      _
    $region58: #{transformer_forward.2} parent=5 // pred_check_branch
      %315 = sbr.rel (%p312) target = $region60
    $region59: #{transformer_forward.2} parent=5 // pred_region
      %s316 = ssub.s32 %s16, 1
      %p317 = scmp.lt.s32.totalorder %s21, 1
      %s318 = scalar_select %p317, %s21, 1
      %s319 = smul.addr %s318, 8
      %s320 = scalar_lea.vmem %s0, %s319
      %p321 = pneg %p42
      %p322 = pneg %p39
      %p323 = pneg %p63
      %p324 = pneg %p60
      %p325 = pneg %p84
      %p326 = pneg %p81
      %p327 = pneg %p105
      %p328 = pneg %p102
      %p329 = pneg %p126
      %p330 = pneg %p123
      %p331 = pneg %p147
      %p332 = pneg %p144
      %p333 = pneg %p168
      %p334 = pneg %p165
      %p335 = pneg %p189
      %p336 = pneg %p186
      %p337 = pneg %p210
      %p338 = pneg %p207
      %p339 = pneg %p231
      %p340 = pneg %p228
      %p341 = pneg %p257
      %p342 = pneg %p254
      %p343 = scmp.lt.s32.totalorder %s21, 1
      %s344 = scalar_select %p343, %s21, 1
      %s345 = smul.addr %s344, 8
      %s346 = scalar_lea.vmem %s10, %s345
      %p347 = scmp.lt.s32.totalorder %s21, 1
      %s348 = scalar_select %p347, %s21, 1
      %s349 = smul.addr %s348, 8
      %s350 = scalar_lea.vmem %s0, %s349
      %p351 = scmp.lt.s32.totalorder %s21, 1
      %s352 = scalar_select %p351, %s21, 1
      %s353 = smul.addr %s352, 8
      %s354 = scalar_lea.vmem %s10, %s353
      %v356 = vld [vmem:[%s350] sm:$0xff]
      %v357 = vld [vmem:[%s1] sm:$0xff]
      %v358 = vadd.f32 %v356, %v357
      %v359 = vld [vmem:[%s9] sm:$0x1]
      %v360 = vld [vmem:[%s9 + $0x1] sm:$0x1]
      %v361 = vld [vmem:[%s9 + $0x2] sm:$0x1]
      %v362 = vld [vmem:[%s9 + $0x3] sm:$0x1]
      %v363 = vld [vmem:[%s9 + $0x4] sm:$0x1]
      %v364 = vld [vmem:[%s9 + $0x5] sm:$0x1]
      %v365 = vld [vmem:[%s9 + $0x6] sm:$0x1]
      %v366 = vld [vmem:[%s9 + $0x7] sm:$0x1]
      %v367 = vld [vmem:[%s9 + $0x8] sm:$0x1]
      %v368 = vpack.c.bf16 %v358, %v358
      %v369 = vld [vmem:[%s2] sm:$0xf]
      %v370 = vld [vmem:[%s2 + $0x4] sm:$0xf]
      %v371 = vld [vmem:[%s2 + $0x8] sm:$0xf]
      %v372 = vld [vmem:[%s2 + $0xc] sm:$0xf]
      %v373 = vlaneseq
      %v374 = vshrl.u32 %v373, 7
      %v375 = vsub.s32 0, %v374
      %v376 = vrot.slane %v359, %v375
      %v381 = vunpack.c.l.b16 %v369
      %v382 = vunpack.c.l.b16 %v370
      %v383 = vunpack.c.l.b16 %v371
      %v384 = vunpack.c.l.b16 %v372
      %v385 = vpack.c.b16 %v382, %v381
      %v386 = vpack.c.b16 %v384, %v383
      %vm389 = vcmask 261120
      %v391 = vsel %vm389, %v368, 0
      %393 = vmatprep.subr.bf16.mxu0 0
      %394 = vmatpush1.bf16.msra.mxu0 %v385
      %395 = vmatprep.subr.bf16.mxu0 0
      %396 = vmatpush1.bf16.msra.mxu0 %v386
      %397 = vmatprep.subr.bf16.mxu0 0
      %398 = vmatpush1.bf16.msra.mxu0 0
      %399 = vmatprep.subr.bf16.mxu0 0
      %400 = vmatpush1.bf16.msra.mxu0 0
      %401 = vmatprep.subr.bf16.mxu0 0
      %402 = vmatpush1.bf16.msra.mxu0 0
      %403 = vmatprep.subr.bf16.mxu0 0
      %404 = vmatpush1.bf16.msra.mxu0 0
      %405 = vmatprep.subr.bf16.mxu0 0
      %406 = vmatpush1.bf16.msra.mxu0 0
      %407 = vmatprep.subr.bf16.mxu0 0
      %408 = vmatpush1.bf16.msra.mxu0 0
      %409 = vmatprep.subr.bf16.mxu0 0
      %410 = vmatpush1.bf16.msra.mxu0 0
      %411 = vmatprep.subr.bf16.mxu0 0
      %412 = vmatpush1.bf16.msra.mxu0 0
      %413 = vmatprep.subr.bf16.mxu0 0
      %414 = vmatpush1.bf16.msra.mxu0 0
      %415 = vmatprep.subr.bf16.mxu0 0
      %416 = vmatpush1.bf16.msra.mxu0 0
      %417 = vmatprep.subr.bf16.mxu0 0
      %418 = vmatpush1.bf16.msra.mxu0 0
      %419 = vmatprep.subr.bf16.mxu0 0
      %420 = vmatpush1.bf16.msra.mxu0 0
      %421 = vmatprep.subr.bf16.mxu0 0
      %422 = vmatpush1.bf16.msra.mxu0 0
      %423 = vmatprep.subr.bf16.mxu0 0
      %424 = vmatpush1.bf16.msra.mxu0 0
      %425 = vmatprep.mubr.bf16.mxu0 0
      %426 = vmatmul.mubr.bf16.gmra.mrb[0].mxu0 %v391
      %v427 = vpop.f32.mrb[0].mxu0
      %v428 = vadd.f32 %v376, %v427
      %v429 = vpop.f32.mrb[0].mxu0
      %v430 = vpop.f32.mrb[0].mxu0
      %v431 = vpop.f32.mrb[0].mxu0
      %432 = vdwg.mxu0
      %v433 = vld [vmem:[%s3] sm:$0xf]
      %v434 = vld [vmem:[%s3 + $0x4] sm:$0xf]
      %v435 = vld [vmem:[%s3 + $0x8] sm:$0xf]
      %v436 = vld [vmem:[%s3 + $0xc] sm:$0xf]
      %v437 = vlaneseq
      %v438 = vshrl.u32 %v437, 7
      %v439 = vsub.s32 0, %v438
      %v440 = vrot.slane %v360, %v439
      %v445 = vunpack.c.l.b16 %v433
      %v446 = vunpack.c.l.b16 %v434
      %v447 = vunpack.c.l.b16 %v435
      %v448 = vunpack.c.l.b16 %v436
      %v449 = vpack.c.b16 %v446, %v445
      %v450 = vpack.c.b16 %v448, %v447
      %453 = vmatprep.subr.bf16.mxu0 0
      %454 = vmatpush1.bf16.msra.mxu0 %v449
      %455 = vmatprep.subr.bf16.mxu0 0
      %456 = vmatpush1.bf16.msra.mxu0 %v450
      %457 = vmatprep.subr.bf16.mxu0 0
      %458 = vmatpush1.bf16.msra.mxu0 0
      %459 = vmatprep.subr.bf16.mxu0 0
      %460 = vmatpush1.bf16.msra.mxu0 0
      %461 = vmatprep.subr.bf16.mxu0 0
      %462 = vmatpush1.bf16.msra.mxu0 0
      %463 = vmatprep.subr.bf16.mxu0 0
      %464 = vmatpush1.bf16.msra.mxu0 0
      %465 = vmatprep.subr.bf16.mxu0 0
      %466 = vmatpush1.bf16.msra.mxu0 0
      %467 = vmatprep.subr.bf16.mxu0 0
      %468 = vmatpush1.bf16.msra.mxu0 0
      %469 = vmatprep.subr.bf16.mxu0 0
      %470 = vmatpush1.bf16.msra.mxu0 0
      %471 = vmatprep.subr.bf16.mxu0 0
      %472 = vmatpush1.bf16.msra.mxu0 0
      %473 = vmatprep.subr.bf16.mxu0 0
      %474 = vmatpush1.bf16.msra.mxu0 0
      %475 = vmatprep.subr.bf16.mxu0 0
      %476 = vmatpush1.bf16.msra.mxu0 0
      %477 = vmatprep.subr.bf16.mxu0 0
      %478 = vmatpush1.bf16.msra.mxu0 0
      %479 = vmatprep.subr.bf16.mxu0 0
      %480 = vmatpush1.bf16.msra.mxu0 0
      %481 = vmatprep.subr.bf16.mxu0 0
      %482 = vmatpush1.bf16.msra.mxu0 0
      %483 = vmatprep.subr.bf16.mxu0 0
      %484 = vmatpush1.bf16.msra.mxu0 0
      %485 = vmatprep.mubr.bf16.mxu0 0
      %486 = vmatmul.mubr.bf16.gmra.mrb[0].mxu0 %v391
      %v487 = vpop.f32.mrb[0].mxu0
      %v488 = vadd.f32 %v440, %v487
      %v489 = vpop.f32.mrb[0].mxu0
      %v490 = vpop.f32.mrb[0].mxu0
      %v491 = vpop.f32.mrb[0].mxu0
      %492 = vdwg.mxu0
      %v493 = vld [vmem:[%s4] sm:$0xf]
      %v494 = vld [vmem:[%s4 + $0x4] sm:$0xf]
      %v495 = vld [vmem:[%s4 + $0x8] sm:$0xf]
      %v496 = vld [vmem:[%s4 + $0xc] sm:$0xf]
      %v497 = vlaneseq
      %v498 = vshrl.u32 %v497, 7
      %v499 = vsub.s32 0, %v498
      %v500 = vrot.slane %v361, %v499
      %v505 = vunpack.c.l.b16 %v493
      %v506 = vunpack.c.l.b16 %v494
      %v507 = vunpack.c.l.b16 %v495
      %v508 = vunpack.c.l.b16 %v496
      %v509 = vpack.c.b16 %v506, %v505
      %v510 = vpack.c.b16 %v508, %v507
      %513 = vmatprep.subr.bf16.mxu0 0
      %514 = vmatpush1.bf16.msra.mxu0 %v509
      %515 = vmatprep.subr.bf16.mxu0 0
      %516 = vmatpush1.bf16.msra.mxu0 %v510
      %517 = vmatprep.subr.bf16.mxu0 0
      %518 = vmatpush1.bf16.msra.mxu0 0
      %519 = vmatprep.subr.bf16.mxu0 0
      %520 = vmatpush1.bf16.msra.mxu0 0
      %521 = vmatprep.subr.bf16.mxu0 0
      %522 = vmatpush1.bf16.msra.mxu0 0
      %523 = vmatprep.subr.bf16.mxu0 0
      %524 = vmatpush1.bf16.msra.mxu0 0
      %525 = vmatprep.subr.bf16.mxu0 0
      %526 = vmatpush1.bf16.msra.mxu0 0
      %527 = vmatprep.subr.bf16.mxu0 0
      %528 = vmatpush1.bf16.msra.mxu0 0
      %529 = vmatprep.subr.bf16.mxu0 0
      %530 = vmatpush1.bf16.msra.mxu0 0
      %531 = vmatprep.subr.bf16.mxu0 0
      %532 = vmatpush1.bf16.msra.mxu0 0
      %533 = vmatprep.subr.bf16.mxu0 0
      %534 = vmatpush1.bf16.msra.mxu0 0
      %535 = vmatprep.subr.bf16.mxu0 0
      %536 = vmatpush1.bf16.msra.mxu0 0
      %537 = vmatprep.subr.bf16.mxu0 0
      %538 = vmatpush1.bf16.msra.mxu0 0
      %539 = vmatprep.subr.bf16.mxu0 0
      %540 = vmatpush1.bf16.msra.mxu0 0
      %541 = vmatprep.subr.bf16.mxu0 0
      %542 = vmatpush1.bf16.msra.mxu0 0
      %543 = vmatprep.subr.bf16.mxu0 0
      %544 = vmatpush1.bf16.msra.mxu0 0
      %545 = vmatprep.mubr.bf16.mxu0 0
      %546 = vmatmul.mubr.bf16.gmra.mrb[0].mxu0 %v391
      %v547 = vpop.f32.mrb[0].mxu0
      %v548 = vadd.f32 %v500, %v547
      %v549 = vpop.f32.mrb[0].mxu0
      %v550 = vpop.f32.mrb[0].mxu0
      %v551 = vpop.f32.mrb[0].mxu0
      %552 = vdwg.mxu0
      %v553 = vpack.c.bf16 %v428, %v428
      %v554 = vpack.c.bf16 %v488, %v488
      %v555 = vpack.c.bf16 %v548, %v548
      %vm556 = vcmask 64512
      %v558 = vsel %vm556, %v553, 0
      %v561 = vsel %vm556, %v554, 0
      %563 = vmatprep.subr.bf16.mxu0 0
      %564 = vmatpush1.bf16.xpose.msra.mxu0 %v561
      %565 = vmatprep.subr.bf16.mxu0 0
      %566 = vmatpush1.bf16.xpose.msra.mxu0 0
      %567 = vmatprep.subr.bf16.mxu0 0
      %568 = vmatpush1.bf16.xpose.msra.mxu0 0
      %569 = vmatprep.subr.bf16.mxu0 0
      %570 = vmatpush1.bf16.xpose.msra.mxu0 0
      %571 = vmatprep.subr.bf16.mxu0 0
      %572 = vmatpush1.bf16.xpose.msra.mxu0 0
      %573 = vmatprep.subr.bf16.mxu0 0
      %574 = vmatpush1.bf16.xpose.msra.mxu0 0
      %575 = vmatprep.subr.bf16.mxu0 0
      %576 = vmatpush1.bf16.xpose.msra.mxu0 0
      %577 = vmatprep.subr.bf16.mxu0 0
      %578 = vmatpush1.bf16.xpose.msra.mxu0 0
      %579 = vmatprep.subr.bf16.mxu0 0
      %580 = vmatpush1.bf16.xpose.msra.mxu0 0
      %581 = vmatprep.subr.bf16.mxu0 0
      %582 = vmatpush1.bf16.xpose.msra.mxu0 0
      %583 = vmatprep.subr.bf16.mxu0 0
      %584 = vmatpush1.bf16.xpose.msra.mxu0 0
      %585 = vmatprep.subr.bf16.mxu0 0
      %586 = vmatpush1.bf16.xpose.msra.mxu0 0
      %587 = vmatprep.subr.bf16.mxu0 0
      %588 = vmatpush1.bf16.xpose.msra.mxu0 0
      %589 = vmatprep.subr.bf16.mxu0 0
      %590 = vmatpush1.bf16.xpose.msra.mxu0 0
      %591 = vmatprep.subr.bf16.mxu0 0
      %592 = vmatpush1.bf16.xpose.msra.mxu0 0
      %593 = vmatprep.subr.bf16.mxu0 0
      %594 = vmatpush1.bf16.xpose.msra.mxu0 0
      %595 = vmatprep.mubr.bf16.mxu0 0
      %596 = vmatmul.mubr.bf16.gmra.mrb[0].mxu0 %v558
      %v597 = vpop.f32.mrb[0].mxu0
      %v598 = vadd.f32 0.0, %v597
      %v599 = vpop.f32.mrb[0].mxu0
      %v600 = vpop.f32.mrb[0].mxu0
      %v601 = vpop.f32.mrb[0].mxu0
      %602 = vdwg.mxu0
      %v603 = vmul.f32 %v598, 0.35355338
      %v604 = vsel %vm556, %v603, -inf
      %605 = vmax.xlane.f32.xlu0 %v604
      %v606 = vpop.xlane.xlu0 %605
      %v607 = vsub.f32 %v603, %v606
      %v608 = vmul.f32 %v607, 1.442695
      %v609 = vpow.pop %v608
      %v610 = vsel %vm556, %v609, 0.0
      %611 = vadd.xlane.f32.xlu0 %v610
      %v612 = vpop.xlane.xlu0 %611
      %v613 = vrcp.pop %v612
      %v614 = vmul.f32 %v609, %v613
      %v615 = vpack.c.bf16 %v614, %v614
      %v617 = vsel %vm556, %v615, 0
      %vm619 = vcmask 1043456
      %v621 = vsel %vm619, %v555, 0
      %623 = vmatprep.subr.bf16.mxu0 0
      %624 = vmatpush1.bf16.msra.mxu0 %v621
      %625 = vmatprep.subr.bf16.mxu0 0
      %626 = vmatpush1.bf16.msra.mxu0 0
      %627 = vmatprep.subr.bf16.mxu0 0
      %628 = vmatpush1.bf16.msra.mxu0 0
      %629 = vmatprep.subr.bf16.mxu0 0
      %630 = vmatpush1.bf16.msra.mxu0 0
      %631 = vmatprep.subr.bf16.mxu0 0
      %632 = vmatpush1.bf16.msra.mxu0 0
      %633 = vmatprep.subr.bf16.mxu0 0
      %634 = vmatpush1.bf16.msra.mxu0 0
      %635 = vmatprep.subr.bf16.mxu0 0
      %636 = vmatpush1.bf16.msra.mxu0 0
      %637 = vmatprep.subr.bf16.mxu0 0
      %638 = vmatpush1.bf16.msra.mxu0 0
      %639 = vmatprep.subr.bf16.mxu0 0
      %640 = vmatpush1.bf16.msra.mxu0 0
      %641 = vmatprep.subr.bf16.mxu0 0
      %642 = vmatpush1.bf16.msra.mxu0 0
      %643 = vmatprep.subr.bf16.mxu0 0
      %644 = vmatpush1.bf16.msra.mxu0 0
      %645 = vmatprep.subr.bf16.mxu0 0
      %646 = vmatpush1.bf16.msra.mxu0 0
      %647 = vmatprep.subr.bf16.mxu0 0
      %648 = vmatpush1.bf16.msra.mxu0 0
      %649 = vmatprep.subr.bf16.mxu0 0
      %650 = vmatpush1.bf16.msra.mxu0 0
      %651 = vmatprep.subr.bf16.mxu0 0
      %652 = vmatpush1.bf16.msra.mxu0 0
      %653 = vmatprep.subr.bf16.mxu0 0
      %654 = vmatpush1.bf16.msra.mxu0 0
      %655 = vmatprep.mubr.bf16.mxu0 0
      %656 = vmatmul.mubr.bf16.gmra.mrb[0].mxu0 %v617
      %v657 = vpop.f32.mrb[0].mxu0
      %v658 = vadd.f32 0.0, %v657
      %v659 = vpop.f32.mrb[0].mxu0
      %v660 = vpop.f32.mrb[0].mxu0
      %v661 = vpop.f32.mrb[0].mxu0
      %662 = vdwg.mxu0
      %664 = vrot.lane.b32.xlu0 %v553, 120
      %v665 = vpop.permute.xlu0 %664
      %667 = vrot.lane.b32.xlu0 %v554, 120
      %v668 = vpop.permute.xlu0 %667
      %v670 = vsel %vm556, %v665, 0
      %v673 = vsel %vm556, %v668, 0
      %675 = vmatprep.subr.bf16.mxu0 0
      %676 = vmatpush1.bf16.xpose.msra.mxu0 %v673
      %677 = vmatprep.subr.bf16.mxu0 0
      %678 = vmatpush1.bf16.xpose.msra.mxu0 0
      %679 = vmatprep.subr.bf16.mxu0 0
      %680 = vmatpush1.bf16.xpose.msra.mxu0 0
      %681 = vmatprep.subr.bf16.mxu0 0
      %682 = vmatpush1.bf16.xpose.msra.mxu0 0
      %683 = vmatprep.subr.bf16.mxu0 0
      %684 = vmatpush1.bf16.xpose.msra.mxu0 0
      %685 = vmatprep.subr.bf16.mxu0 0
      %686 = vmatpush1.bf16.xpose.msra.mxu0 0
      %687 = vmatprep.subr.bf16.mxu0 0
      %688 = vmatpush1.bf16.xpose.msra.mxu0 0
      %689 = vmatprep.subr.bf16.mxu0 0
      %690 = vmatpush1.bf16.xpose.msra.mxu0 0
      %691 = vmatprep.subr.bf16.mxu0 0
      %692 = vmatpush1.bf16.xpose.msra.mxu0 0
      %693 = vmatprep.subr.bf16.mxu0 0
      %694 = vmatpush1.bf16.xpose.msra.mxu0 0
      %695 = vmatprep.subr.bf16.mxu0 0
      %696 = vmatpush1.bf16.xpose.msra.mxu0 0
      %697 = vmatprep.subr.bf16.mxu0 0
      %698 = vmatpush1.bf16.xpose.msra.mxu0 0
      %699 = vmatprep.subr.bf16.mxu0 0
      %700 = vmatpush1.bf16.xpose.msra.mxu0 0
      %701 = vmatprep.subr.bf16.mxu0 0
      %702 = vmatpush1.bf16.xpose.msra.mxu0 0
      %703 = vmatprep.subr.bf16.mxu0 0
      %704 = vmatpush1.bf16.xpose.msra.mxu0 0
      %705 = vmatprep.subr.bf16.mxu0 0
      %706 = vmatpush1.bf16.xpose.msra.mxu0 0
      %707 = vmatprep.mubr.bf16.mxu0 0
      %708 = vmatmul.mubr.bf16.gmra.mrb[0].mxu0 %v670
      %v709 = vpop.f32.mrb[0].mxu0
      %v710 = vadd.f32 0.0, %v709
      %v711 = vpop.f32.mrb[0].mxu0
      %v712 = vpop.f32.mrb[0].mxu0
      %v713 = vpop.f32.mrb[0].mxu0
      %714 = vdwg.mxu0
      %v715 = vmul.f32 %v710, 0.35355338
      %v716 = vsel %vm556, %v715, -inf
      %717 = vmax.xlane.f32.xlu0 %v716
      %v718 = vpop.xlane.xlu0 %717
      %v719 = vsub.f32 %v715, %v718
      %v720 = vmul.f32 %v719, 1.442695
      %v721 = vpow.pop %v720
      %v722 = vsel %vm556, %v721, 0.0
      %723 = vadd.xlane.f32.xlu0 %v722
      %v724 = vpop.xlane.xlu0 %723
      %v725 = vrcp.pop %v724
      %v726 = vmul.f32 %v721, %v725
      %v727 = vpack.c.bf16 %v726, %v726
      %729 = vrot.lane.b32.xlu0 %v555, 120
      %v730 = vpop.permute.xlu0 %729
      %v732 = vsel %vm556, %v727, 0
      %v735 = vsel %vm619, %v730, 0
      %737 = vmatprep.subr.bf16.mxu0 0
      %738 = vmatpush1.bf16.msra.mxu0 %v735
      %739 = vmatprep.subr.bf16.mxu0 0
      %740 = vmatpush1.bf16.msra.mxu0 0
      %741 = vmatprep.subr.bf16.mxu0 0
      %742 = vmatpush1.bf16.msra.mxu0 0
      %743 = vmatprep.subr.bf16.mxu0 0
      %744 = vmatpush1.bf16.msra.mxu0 0
      %745 = vmatprep.subr.bf16.mxu0 0
      %746 = vmatpush1.bf16.msra.mxu0 0
      %747 = vmatprep.subr.bf16.mxu0 0
      %748 = vmatpush1.bf16.msra.mxu0 0
      %749 = vmatprep.subr.bf16.mxu0 0
      %750 = vmatpush1.bf16.msra.mxu0 0
      %751 = vmatprep.subr.bf16.mxu0 0
      %752 = vmatpush1.bf16.msra.mxu0 0
      %753 = vmatprep.subr.bf16.mxu0 0
      %754 = vmatpush1.bf16.msra.mxu0 0
      %755 = vmatprep.subr.bf16.mxu0 0
      %756 = vmatpush1.bf16.msra.mxu0 0
      %757 = vmatprep.subr.bf16.mxu0 0
      %758 = vmatpush1.bf16.msra.mxu0 0
      %759 = vmatprep.subr.bf16.mxu0 0
      %760 = vmatpush1.bf16.msra.mxu0 0
      %761 = vmatprep.subr.bf16.mxu0 0
      %762 = vmatpush1.bf16.msra.mxu0 0
      %763 = vmatprep.subr.bf16.mxu0 0
      %764 = vmatpush1.bf16.msra.mxu0 0
      %765 = vmatprep.subr.bf16.mxu0 0
      %766 = vmatpush1.bf16.msra.mxu0 0
      %767 = vmatprep.subr.bf16.mxu0 0
      %768 = vmatpush1.bf16.msra.mxu0 0
      %769 = vmatprep.mubr.bf16.mxu0 0
      %770 = vmatmul.mubr.bf16.gmra.mrb[0].mxu0 %v732
      %v771 = vpop.f32.mrb[0].mxu0
      %v772 = vadd.f32 0.0, %v771
      %v773 = vpop.f32.mrb[0].mxu0
      %v774 = vpop.f32.mrb[0].mxu0
      %v775 = vpop.f32.mrb[0].mxu0
      %776 = vdwg.mxu0
      %777 = vrot.lane.b32.xlu0 %v553, 112
      %v778 = vpop.permute.xlu0 %777
      %779 = vrot.lane.b32.xlu0 %v554, 112
      %v780 = vpop.permute.xlu0 %779
      %v782 = vsel %vm556, %v778, 0
      %v785 = vsel %vm556, %v780, 0
      %787 = vmatprep.subr.bf16.mxu0 0
      %788 = vmatpush1.bf16.xpose.msra.mxu0 %v785
      %789 = vmatprep.subr.bf16.mxu0 0
      %790 = vmatpush1.bf16.xpose.msra.mxu0 0
      %791 = vmatprep.subr.bf16.mxu0 0
      %792 = vmatpush1.bf16.xpose.msra.mxu0 0
      %793 = vmatprep.subr.bf16.mxu0 0
      %794 = vmatpush1.bf16.xpose.msra.mxu0 0
      %795 = vmatprep.subr.bf16.mxu0 0
      %796 = vmatpush1.bf16.xpose.msra.mxu0 0
      %797 = vmatprep.subr.bf16.mxu0 0
      %798 = vmatpush1.bf16.xpose.msra.mxu0 0
      %799 = vmatprep.subr.bf16.mxu0 0
      %800 = vmatpush1.bf16.xpose.msra.mxu0 0
      %801 = vmatprep.subr.bf16.mxu0 0
      %802 = vmatpush1.bf16.xpose.msra.mxu0 0
      %803 = vmatprep.subr.bf16.mxu0 0
      %804 = vmatpush1.bf16.xpose.msra.mxu0 0
      %805 = vmatprep.subr.bf16.mxu0 0
      %806 = vmatpush1.bf16.xpose.msra.mxu0 0
      %807 = vmatprep.subr.bf16.mxu0 0
      %808 = vmatpush1.bf16.xpose.msra.mxu0 0
      %809 = vmatprep.subr.bf16.mxu0 0
      %810 = vmatpush1.bf16.xpose.msra.mxu0 0
      %811 = vmatprep.subr.bf16.mxu0 0
      %812 = vmatpush1.bf16.xpose.msra.mxu0 0
      %813 = vmatprep.subr.bf16.mxu0 0
      %814 = vmatpush1.bf16.xpose.msra.mxu0 0
      %815 = vmatprep.subr.bf16.mxu0 0
      %816 = vmatpush1.bf16.xpose.msra.mxu0 0
      %817 = vmatprep.subr.bf16.mxu0 0
      %818 = vmatpush1.bf16.xpose.msra.mxu0 0
      %819 = vmatprep.mubr.bf16.mxu0 0
      %820 = vmatmul.mubr.bf16.gmra.mrb[0].mxu0 %v782
      %v821 = vpop.f32.mrb[0].mxu0
      %v822 = vadd.f32 0.0, %v821
      %v823 = vpop.f32.mrb[0].mxu0
      %v824 = vpop.f32.mrb[0].mxu0
      %v825 = vpop.f32.mrb[0].mxu0
      %826 = vdwg.mxu0
      %v827 = vmul.f32 %v822, 0.35355338
      %v828 = vsel %vm556, %v827, -inf
      %829 = vmax.xlane.f32.xlu0 %v828
      %v830 = vpop.xlane.xlu0 %829
      %v831 = vsub.f32 %v827, %v830
      %v832 = vmul.f32 %v831, 1.442695
      %v833 = vpow.pop %v832
      %v834 = vsel %vm556, %v833, 0.0
      %835 = vadd.xlane.f32.xlu0 %v834
      %v836 = vpop.xlane.xlu0 %835
      %v837 = vrcp.pop %v836
      %v838 = vmul.f32 %v833, %v837
      %v839 = vpack.c.bf16 %v838, %v838
      %840 = vrot.lane.b32.xlu0 %v555, 112
      %v841 = vpop.permute.xlu0 %840
      %v843 = vsel %vm556, %v839, 0
      %v846 = vsel %vm619, %v841, 0
      %848 = vmatprep.subr.bf16.mxu0 0
      %849 = vmatpush1.bf16.msra.mxu0 %v846
      %850 = vmatprep.subr.bf16.mxu0 0
      %851 = vmatpush1.bf16.msra.mxu0 0
      %852 = vmatprep.subr.bf16.mxu0 0
      %853 = vmatpush1.bf16.msra.mxu0 0
      %854 = vmatprep.subr.bf16.mxu0 0
      %855 = vmatpush1.bf16.msra.mxu0 0
      %856 = vmatprep.subr.bf16.mxu0 0
      %857 = vmatpush1.bf16.msra.mxu0 0
      %858 = vmatprep.subr.bf16.mxu0 0
      %859 = vmatpush1.bf16.msra.mxu0 0
      %860 = vmatprep.subr.bf16.mxu0 0
      %861 = vmatpush1.bf16.msra.mxu0 0
      %862 = vmatprep.subr.bf16.mxu0 0
      %863 = vmatpush1.bf16.msra.mxu0 0
      %864 = vmatprep.subr.bf16.mxu0 0
      %865 = vmatpush1.bf16.msra.mxu0 0
      %866 = vmatprep.subr.bf16.mxu0 0
      %867 = vmatpush1.bf16.msra.mxu0 0
      %868 = vmatprep.subr.bf16.mxu0 0
      %869 = vmatpush1.bf16.msra.mxu0 0
      %870 = vmatprep.subr.bf16.mxu0 0
      %871 = vmatpush1.bf16.msra.mxu0 0
      %872 = vmatprep.subr.bf16.mxu0 0
      %873 = vmatpush1.bf16.msra.mxu0 0
      %874 = vmatprep.subr.bf16.mxu0 0
      %875 = vmatpush1.bf16.msra.mxu0 0
      %876 = vmatprep.subr.bf16.mxu0 0
      %877 = vmatpush1.bf16.msra.mxu0 0
      %878 = vmatprep.subr.bf16.mxu0 0
      %879 = vmatpush1.bf16.msra.mxu0 0
      %880 = vmatprep.mubr.bf16.mxu0 0
      %881 = vmatmul.mubr.bf16.gmra.mrb[0].mxu0 %v843
      %v882 = vpop.f32.mrb[0].mxu0
      %v883 = vadd.f32 0.0, %v882
      %v884 = vpop.f32.mrb[0].mxu0
      %v885 = vpop.f32.mrb[0].mxu0
      %v886 = vpop.f32.mrb[0].mxu0
      %887 = vdwg.mxu0
      %888 = vrot.lane.b32.xlu0 %v553, 104
      %v889 = vpop.permute.xlu0 %888
      %890 = vrot.lane.b32.xlu0 %v554, 104
      %v891 = vpop.permute.xlu0 %890
      %v893 = vsel %vm556, %v889, 0
      %v896 = vsel %vm556, %v891, 0
      %898 = vmatprep.subr.bf16.mxu0 0
      %899 = vmatpush1.bf16.xpose.msra.mxu0 %v896
      %900 = vmatprep.subr.bf16.mxu0 0
      %901 = vmatpush1.bf16.xpose.msra.mxu0 0
      %902 = vmatprep.subr.bf16.mxu0 0
      %903 = vmatpush1.bf16.xpose.msra.mxu0 0
      %904 = vmatprep.subr.bf16.mxu0 0
      %905 = vmatpush1.bf16.xpose.msra.mxu0 0
      %906 = vmatprep.subr.bf16.mxu0 0
      %907 = vmatpush1.bf16.xpose.msra.mxu0 0
      %908 = vmatprep.subr.bf16.mxu0 0
      %909 = vmatpush1.bf16.xpose.msra.mxu0 0
      %910 = vmatprep.subr.bf16.mxu0 0
      %911 = vmatpush1.bf16.xpose.msra.mxu0 0
      %912 = vmatprep.subr.bf16.mxu0 0
      %913 = vmatpush1.bf16.xpose.msra.mxu0 0
      %914 = vmatprep.subr.bf16.mxu0 0
      %915 = vmatpush1.bf16.xpose.msra.mxu0 0
      %916 = vmatprep.subr.bf16.mxu0 0
      %917 = vmatpush1.bf16.xpose.msra.mxu0 0
      %918 = vmatprep.subr.bf16.mxu0 0
      %919 = vmatpush1.bf16.xpose.msra.mxu0 0
      %920 = vmatprep.subr.bf16.mxu0 0
      %921 = vmatpush1.bf16.xpose.msra.mxu0 0
      %922 = vmatprep.subr.bf16.mxu0 0
      %923 = vmatpush1.bf16.xpose.msra.mxu0 0
      %924 = vmatprep.subr.bf16.mxu0 0
      %925 = vmatpush1.bf16.xpose.msra.mxu0 0
      %926 = vmatprep.subr.bf16.mxu0 0
      %927 = vmatpush1.bf16.xpose.msra.mxu0 0
      %928 = vmatprep.subr.bf16.mxu0 0
      %929 = vmatpush1.bf16.xpose.msra.mxu0 0
      %930 = vmatprep.mubr.bf16.mxu0 0
      %931 = vmatmul.mubr.bf16.gmra.mrb[0].mxu0 %v893
      %v932 = vpop.f32.mrb[0].mxu0
      %v933 = vadd.f32 0.0, %v932
      %v934 = vpop.f32.mrb[0].mxu0
      %v935 = vpop.f32.mrb[0].mxu0
      %v936 = vpop.f32.mrb[0].mxu0
      %937 = vdwg.mxu0
      %v938 = vmul.f32 %v933, 0.35355338
      %v939 = vsel %vm556, %v938, -inf
      %940 = vmax.xlane.f32.xlu0 %v939
      %v941 = vpop.xlane.xlu0 %940
      %v942 = vsub.f32 %v938, %v941
      %v943 = vmul.f32 %v942, 1.442695
      %v944 = vpow.pop %v943
      %v945 = vsel %vm556, %v944, 0.0
      %946 = vadd.xlane.f32.xlu0 %v945
      %v947 = vpop.xlane.xlu0 %946
      %v948 = vrcp.pop %v947
      %v949 = vmul.f32 %v944, %v948
      %v950 = vpack.c.bf16 %v949, %v949
      %951 = vrot.lane.b32.xlu0 %v555, 104
      %v952 = vpop.permute.xlu0 %951
      %v954 = vsel %vm556, %v950, 0
      %v957 = vsel %vm619, %v952, 0
      %959 = vmatprep.subr.bf16.mxu0 0
      %960 = vmatpush1.bf16.msra.mxu0 %v957
      %961 = vmatprep.subr.bf16.mxu0 0
      %962 = vmatpush1.bf16.msra.mxu0 0
      %963 = vmatprep.subr.bf16.mxu0 0
      %964 = vmatpush1.bf16.msra.mxu0 0
      %965 = vmatprep.subr.bf16.mxu0 0
      %966 = vmatpush1.bf16.msra.mxu0 0
      %967 = vmatprep.subr.bf16.mxu0 0
      %968 = vmatpush1.bf16.msra.mxu0 0
      %969 = vmatprep.subr.bf16.mxu0 0
      %970 = vmatpush1.bf16.msra.mxu0 0
      %971 = vmatprep.subr.bf16.mxu0 0
      %972 = vmatpush1.bf16.msra.mxu0 0
      %973 = vmatprep.subr.bf16.mxu0 0
      %974 = vmatpush1.bf16.msra.mxu0 0
      %975 = vmatprep.subr.bf16.mxu0 0
      %976 = vmatpush1.bf16.msra.mxu0 0
      %977 = vmatprep.subr.bf16.mxu0 0
      %978 = vmatpush1.bf16.msra.mxu0 0
      %979 = vmatprep.subr.bf16.mxu0 0
      %980 = vmatpush1.bf16.msra.mxu0 0
      %981 = vmatprep.subr.bf16.mxu0 0
      %982 = vmatpush1.bf16.msra.mxu0 0
      %983 = vmatprep.subr.bf16.mxu0 0
      %984 = vmatpush1.bf16.msra.mxu0 0
      %985 = vmatprep.subr.bf16.mxu0 0
      %986 = vmatpush1.bf16.msra.mxu0 0
      %987 = vmatprep.subr.bf16.mxu0 0
      %988 = vmatpush1.bf16.msra.mxu0 0
      %989 = vmatprep.subr.bf16.mxu0 0
      %990 = vmatpush1.bf16.msra.mxu0 0
      %991 = vmatprep.mubr.bf16.mxu0 0
      %992 = vmatmul.mubr.bf16.gmra.mrb[0].mxu0 %v954
      %v993 = vpop.f32.mrb[0].mxu0
      %v994 = vadd.f32 0.0, %v993
      %v995 = vpop.f32.mrb[0].mxu0
      %v996 = vpop.f32.mrb[0].mxu0
      %v997 = vpop.f32.mrb[0].mxu0
      %998 = vdwg.mxu0
      %1000 = vrot.lane.b32.xlu0 %v772, 8
      %v1001 = vpop.permute.xlu0 %1000
      %1004 = vrot.lane.b32.xlu0 %v883, 16
      %v1005 = vpop.permute.xlu0 %1004
      %1008 = vrot.lane.b32.xlu0 %v994, 24
      %v1009 = vpop.permute.xlu0 %1008
      %v1011 = vsel %vm556, %v658, %v1001
      %vm1012 = vcmask 130048
      %v1013 = vsel %vm1012, %v1011, %v1005
      %vm1014 = vcmask 195584
      %v1015 = vsel %vm1014, %v1013, %v1009
      %v1016 = vpack.c.bf16 %v1015, %v1015
      %v1017 = vld [vmem:[%s5] sm:$0xf]
      %v1018 = vld [vmem:[%s5 + $0x4] sm:$0xf]
      %v1019 = vld [vmem:[%s5 + $0x8] sm:$0xf]
      %v1020 = vld [vmem:[%s5 + $0xc] sm:$0xf]
      %v1021 = vlaneseq
      %v1022 = vshrl.u32 %v1021, 7
      %v1023 = vsub.s32 0, %v1022
      %v1024 = vrot.slane %v362, %v1023
      %v1029 = vunpack.c.l.b16 %v1017
      %v1030 = vunpack.c.l.b16 %v1018
      %v1031 = vunpack.c.l.b16 %v1019
      %v1032 = vunpack.c.l.b16 %v1020
      %v1033 = vpack.c.b16 %v1030, %v1029
      %v1034 = vpack.c.b16 %v1032, %v1031
      %v1038 = vsel %vm389, %v1016, 0
      %1040 = vmatprep.subr.bf16.mxu0 0
      %1041 = vmatpush1.bf16.msra.mxu0 %v1033
      %1042 = vmatprep.subr.bf16.mxu0 0
      %1043 = vmatpush1.bf16.msra.mxu0 %v1034
      %1044 = vmatprep.subr.bf16.mxu0 0
      %1045 = vmatpush1.bf16.msra.mxu0 0
      %1046 = vmatprep.subr.bf16.mxu0 0
      %1047 = vmatpush1.bf16.msra.mxu0 0
      %1048 = vmatprep.subr.bf16.mxu0 0
      %1049 = vmatpush1.bf16.msra.mxu0 0
      %1050 = vmatprep.subr.bf16.mxu0 0
      %1051 = vmatpush1.bf16.msra.mxu0 0
      %1052 = vmatprep.subr.bf16.mxu0 0
      %1053 = vmatpush1.bf16.msra.mxu0 0
      %1054 = vmatprep.subr.bf16.mxu0 0
      %1055 = vmatpush1.bf16.msra.mxu0 0
      %1056 = vmatprep.subr.bf16.mxu0 0
      %1057 = vmatpush1.bf16.msra.mxu0 0
      %1058 = vmatprep.subr.bf16.mxu0 0
      %1059 = vmatpush1.bf16.msra.mxu0 0
      %1060 = vmatprep.subr.bf16.mxu0 0
      %1061 = vmatpush1.bf16.msra.mxu0 0
      %1062 = vmatprep.subr.bf16.mxu0 0
      %1063 = vmatpush1.bf16.msra.mxu0 0
      %1064 = vmatprep.subr.bf16.mxu0 0
      %1065 = vmatpush1.bf16.msra.mxu0 0
      %1066 = vmatprep.subr.bf16.mxu0 0
      %1067 = vmatpush1.bf16.msra.mxu0 0
      %1068 = vmatprep.subr.bf16.mxu0 0
      %1069 = vmatpush1.bf16.msra.mxu0 0
      %1070 = vmatprep.subr.bf16.mxu0 0
      %1071 = vmatpush1.bf16.msra.mxu0 0
      %1072 = vmatprep.mubr.bf16.mxu0 0
      %1073 = vmatmul.mubr.bf16.gmra.mrb[0].mxu0 %v1038
      %v1074 = vpop.f32.mrb[0].mxu0
      %v1075 = vadd.f32 %v1024, %v1074
      %v1076 = vpop.f32.mrb[0].mxu0
      %v1077 = vpop.f32.mrb[0].mxu0
      %v1078 = vpop.f32.mrb[0].mxu0
      %1079 = vdwg.mxu0
      %v1080 = vadd.f32 %v358, %v1075
      %v1081 = vsel %vm389, %v1080, 0.0
      %1082 = vadd.xlane.f32.xlu0 %v1081
      %v1083 = vpop.xlane.xlu0 %1082
      %v1084 = vrcp.pop 32.0
      %v1085 = vmul.f32 %v1083, %v1084
      %v1086 = vsub.f32 %v1080, %v1085
      %v1087 = vmul.f32 %v1086, %v1086
      %v1088 = vsel %vm389, %v1087, 0.0
      %1089 = vadd.xlane.f32.xlu0 %v1088
      %v1090 = vpop.xlane.xlu0 %1089
      %v1091 = vmul.f32 %v1090, %v1084
      %v1092 = vadd.f32 %v1091, 1e-05
      %v1093 = vrsqrt.pop %v1092
      %v1094 = vmul.f32 %v1086, %v1093
      %v1095 = vlaneseq
      %v1096 = vshrl.u32 %v1095, 7
      %v1097 = vsub.s32 0, %v1096
      %v1098 = vrot.slane %v363, %v1097
      %v1099 = vmul.f32 %v1094, %v1098
      %v1100 = vlaneseq
      %v1101 = vshrl.u32 %v1100, 7
      %v1102 = vsub.s32 0, %v1101
      %v1103 = vrot.slane %v364, %v1102
      %v1104 = vadd.f32 %v1099, %v1103
      %v1105 = vpack.c.bf16 %v1104, %v1104
      %v1106 = vld [vmem:[%s6] sm:$0xff]
      %v1107 = vld [vmem:[%s6 + $0x8] sm:$0xff]
      %v1108 = vld [vmem:[%s6 + $0x10] sm:$0xff]
      %v1109 = vld [vmem:[%s6 + $0x18] sm:$0xff]
      %v1110 = vld [vmem:[%s6 + $0x20] sm:$0xff]
      %v1111 = vld [vmem:[%s6 + $0x28] sm:$0xff]
      %v1112 = vld [vmem:[%s6 + $0x30] sm:$0xff]
      %v1113 = vld [vmem:[%s6 + $0x38] sm:$0xff]
      %v1114 = vld [vmem:[%s6 + $0x40] sm:$0xff]
      %v1115 = vld [vmem:[%s6 + $0x48] sm:$0xff]
      %v1116 = vld [vmem:[%s6 + $0x50] sm:$0xff]
      %v1117 = vld [vmem:[%s6 + $0x58] sm:$0xff]
      %v1118 = vld [vmem:[%s6 + $0x60] sm:$0xff]
      %v1119 = vld [vmem:[%s6 + $0x68] sm:$0xff]
      %v1120 = vld [vmem:[%s6 + $0x70] sm:$0xff]
      %v1121 = vld [vmem:[%s6 + $0x78] sm:$0xff]
      %v1122 = vld [vmem:[%s6 + $0x80] sm:$0xff]
      %v1123 = vld [vmem:[%s6 + $0x88] sm:$0xff]
      %v1124 = vld [vmem:[%s6 + $0x90] sm:$0xff]
      %v1125 = vld [vmem:[%s6 + $0x98] sm:$0xff]
      %v1126 = vld [vmem:[%s6 + $0xa0] sm:$0xff]
      %v1127 = vld [vmem:[%s6 + $0xa8] sm:$0xff]
      %v1128 = vld [vmem:[%s6 + $0xb0] sm:$0xff]
      %v1129 = vld [vmem:[%s6 + $0xb8] sm:$0xff]
      %v1130 = vld [vmem:[%s6 + $0xc0] sm:$0xff]
      %v1131 = vld [vmem:[%s6 + $0xc8] sm:$0xff]
      %v1132 = vld [vmem:[%s6 + $0xd0] sm:$0xff]
      %v1133 = vld [vmem:[%s6 + $0xd8] sm:$0xff]
      %v1134 = vld [vmem:[%s6 + $0xe0] sm:$0xff]
      %v1135 = vld [vmem:[%s6 + $0xe8] sm:$0xff]
      %v1136 = vld [vmem:[%s6 + $0xf0] sm:$0xff]
      %v1137 = vld [vmem:[%s6 + $0xf8] sm:$0xff]
      %v1138 = vld [vmem:[%s8] sm:$0xff]
      %v1139 = vld [vmem:[%s8 + $0x8] sm:$0xff]
      %v1142 = vlaneseq
      %v1143 = vshrl.u32 %v1142, 7
      %v1144 = vsub.s32 0, %v1143
      %v1145 = vrot.slane %v1138, %v1144
      %v1146 = vlaneseq
      %v1147 = vshrl.u32 %v1146, 7
      %v1148 = vsub.s32 1, %v1147
      %v1149 = vrot.slane %v1138, %v1148
      %v1150 = vlaneseq
      %v1151 = vshrl.u32 %v1150, 7
      %v1152 = vsub.s32 2, %v1151
      %v1153 = vrot.slane %v1138, %v1152
      %v1154 = vlaneseq
      %v1155 = vshrl.u32 %v1154, 7
      %v1156 = vsub.s32 3, %v1155
      %v1157 = vrot.slane %v1138, %v1156
      %v1158 = vlaneseq
      %v1159 = vshrl.u32 %v1158, 7
      %v1160 = vsub.s32 4, %v1159
      %v1161 = vrot.slane %v1138, %v1160
      %v1162 = vlaneseq
      %v1163 = vshrl.u32 %v1162, 7
      %v1164 = vsub.s32 5, %v1163
      %v1165 = vrot.slane %v1138, %v1164
      %v1166 = vlaneseq
      %v1167 = vshrl.u32 %v1166, 7
      %v1168 = vsub.s32 6, %v1167
      %v1169 = vrot.slane %v1138, %v1168
      %v1170 = vlaneseq
      %v1171 = vshrl.u32 %v1170, 7
      %v1172 = vsub.s32 7, %v1171
      %v1173 = vrot.slane %v1138, %v1172
      %v1174 = vlaneseq
      %v1175 = vshrl.u32 %v1174, 7
      %v1176 = vsub.s32 0, %v1175
      %v1177 = vrot.slane %v1139, %v1176
      %v1178 = vlaneseq
      %v1179 = vshrl.u32 %v1178, 7
      %v1180 = vsub.s32 1, %v1179
      %v1181 = vrot.slane %v1139, %v1180
      %v1182 = vlaneseq
      %v1183 = vshrl.u32 %v1182, 7
      %v1184 = vsub.s32 2, %v1183
      %v1185 = vrot.slane %v1139, %v1184
      %v1186 = vlaneseq
      %v1187 = vshrl.u32 %v1186, 7
      %v1188 = vsub.s32 3, %v1187
      %v1189 = vrot.slane %v1139, %v1188
      %v1190 = vlaneseq
      %v1191 = vshrl.u32 %v1190, 7
      %v1192 = vsub.s32 4, %v1191
      %v1193 = vrot.slane %v1139, %v1192
      %v1194 = vlaneseq
      %v1195 = vshrl.u32 %v1194, 7
      %v1196 = vsub.s32 5, %v1195
      %v1197 = vrot.slane %v1139, %v1196
      %v1198 = vlaneseq
      %v1199 = vshrl.u32 %v1198, 7
      %v1200 = vsub.s32 6, %v1199
      %v1201 = vrot.slane %v1139, %v1200
      %v1202 = vlaneseq
      %v1203 = vshrl.u32 %v1202, 7
      %v1204 = vsub.s32 7, %v1203
      %v1205 = vrot.slane %v1139, %v1204
      %v1254 = vunpack.c.l.b16 %v1106
      %v1255 = vunpack.c.h.b16 %v1106
      %v1256 = vunpack.c.l.b16 %v1107
      %v1257 = vunpack.c.h.b16 %v1107
      %v1258 = vunpack.c.l.b16 %v1108
      %v1259 = vunpack.c.h.b16 %v1108
      %v1260 = vunpack.c.l.b16 %v1109
      %v1261 = vunpack.c.h.b16 %v1109
      %v1262 = vunpack.c.l.b16 %v1110
      %v1263 = vunpack.c.h.b16 %v1110
      %v1264 = vunpack.c.l.b16 %v1111
      %v1265 = vunpack.c.h.b16 %v1111
      %v1266 = vunpack.c.l.b16 %v1112
      %v1267 = vunpack.c.h.b16 %v1112
      %v1268 = vunpack.c.l.b16 %v1113
      %v1269 = vunpack.c.h.b16 %v1113
      %v1270 = vunpack.c.l.b16 %v1114
      %v1271 = vunpack.c.h.b16 %v1114
      %v1272 = vunpack.c.l.b16 %v1115
      %v1273 = vunpack.c.h.b16 %v1115
      %v1274 = vunpack.c.l.b16 %v1116
      %v1275 = vunpack.c.h.b16 %v1116
      %v1276 = vunpack.c.l.b16 %v1117
      %v1277 = vunpack.c.h.b16 %v1117
      %v1278 = vunpack.c.l.b16 %v1118
      %v1279 = vunpack.c.h.b16 %v1118
      %v1280 = vunpack.c.l.b16 %v1119
      %v1281 = vunpack.c.h.b16 %v1119
      %v1282 = vunpack.c.l.b16 %v1120
      %v1283 = vunpack.c.h.b16 %v1120
      %v1284 = vunpack.c.l.b16 %v1121
      %v1285 = vunpack.c.h.b16 %v1121
      %v1286 = vunpack.c.l.b16 %v1122
      %v1287 = vunpack.c.h.b16 %v1122
      %v1288 = vunpack.c.l.b16 %v1123
      %v1289 = vunpack.c.h.b16 %v1123
      %v1290 = vunpack.c.l.b16 %v1124
      %v1291 = vunpack.c.h.b16 %v1124
      %v1292 = vunpack.c.l.b16 %v1125
      %v1293 = vunpack.c.h.b16 %v1125
      %v1294 = vunpack.c.l.b16 %v1126
      %v1295 = vunpack.c.h.b16 %v1126
      %v1296 = vunpack.c.l.b16 %v1127
      %v1297 = vunpack.c.h.b16 %v1127
      %v1298 = vunpack.c.l.b16 %v1128
      %v1299 = vunpack.c.h.b16 %v1128
      %v1300 = vunpack.c.l.b16 %v1129
      %v1301 = vunpack.c.h.b16 %v1129
      %v1302 = vunpack.c.l.b16 %v1130
      %v1303 = vunpack.c.h.b16 %v1130
      %v1304 = vunpack.c.l.b16 %v1131
      %v1305 = vunpack.c.h.b16 %v1131
      %v1306 = vunpack.c.l.b16 %v1132
      %v1307 = vunpack.c.h.b16 %v1132
      %v1308 = vunpack.c.l.b16 %v1133
      %v1309 = vunpack.c.h.b16 %v1133
      %v1310 = vunpack.c.l.b16 %v1134
      %v1311 = vunpack.c.h.b16 %v1134
      %v1312 = vunpack.c.l.b16 %v1135
      %v1313 = vunpack.c.h.b16 %v1135
      %v1314 = vunpack.c.l.b16 %v1136
      %v1315 = vunpack.c.h.b16 %v1136
      %v1316 = vunpack.c.l.b16 %v1137
      %v1317 = vunpack.c.h.b16 %v1137
      %v1318 = vpack.c.b16 %v1270, %v1254
      %v1319 = vpack.c.b16 %v1271, %v1255
      %v1320 = vpack.c.b16 %v1272, %v1256
      %v1321 = vpack.c.b16 %v1273, %v1257
      %v1322 = vpack.c.b16 %v1274, %v1258
      %v1323 = vpack.c.b16 %v1275, %v1259
      %v1324 = vpack.c.b16 %v1276, %v1260
      %v1325 = vpack.c.b16 %v1277, %v1261
      %v1326 = vpack.c.b16 %v1278, %v1262
      %v1327 = vpack.c.b16 %v1279, %v1263
      %v1328 = vpack.c.b16 %v1280, %v1264
      %v1329 = vpack.c.b16 %v1281, %v1265
      %v1330 = vpack.c.b16 %v1282, %v1266
      %v1331 = vpack.c.b16 %v1283, %v1267
      %v1332 = vpack.c.b16 %v1284, %v1268
      %v1333 = vpack.c.b16 %v1285, %v1269
      %v1334 = vpack.c.b16 %v1302, %v1286
      %v1335 = vpack.c.b16 %v1303, %v1287
      %v1336 = vpack.c.b16 %v1304, %v1288
      %v1337 = vpack.c.b16 %v1305, %v1289
      %v1338 = vpack.c.b16 %v1306, %v1290
      %v1339 = vpack.c.b16 %v1307, %v1291
      %v1340 = vpack.c.b16 %v1308, %v1292
      %v1341 = vpack.c.b16 %v1309, %v1293
      %v1342 = vpack.c.b16 %v1310, %v1294
      %v1343 = vpack.c.b16 %v1311, %v1295
      %v1344 = vpack.c.b16 %v1312, %v1296
      %v1345 = vpack.c.b16 %v1313, %v1297
      %v1346 = vpack.c.b16 %v1314, %v1298
      %v1347 = vpack.c.b16 %v1315, %v1299
      %v1348 = vpack.c.b16 %v1316, %v1300
      %v1349 = vpack.c.b16 %v1317, %v1301
      %v1383 = vsel %vm389, %v1105, 0
      %1385 = vmatprep.subr.bf16.mxu0 %v1319
      %1386 = vmatpush1.bf16.msra.mxu0 %v1318
      %1387 = vmatprep.subr.bf16.mxu0 %v1335
      %1388 = vmatpush1.bf16.msra.mxu0 %v1334
      %1389 = vmatprep.subr.bf16.mxu0 0
      %1390 = vmatpush1.bf16.msra.mxu0 0
      %1391 = vmatprep.subr.bf16.mxu0 0
      %1392 = vmatpush1.bf16.msra.mxu0 0
      %1393 = vmatprep.subr.bf16.mxu0 0
      %1394 = vmatpush1.bf16.msra.mxu0 0
      %1395 = vmatprep.subr.bf16.mxu0 0
      %1396 = vmatpush1.bf16.msra.mxu0 0
      %1397 = vmatprep.subr.bf16.mxu0 0
      %1398 = vmatpush1.bf16.msra.mxu0 0
      %1399 = vmatprep.subr.bf16.mxu0 0
      %1400 = vmatpush1.bf16.msra.mxu0 0
      %1401 = vmatprep.subr.bf16.mxu0 0
      %1402 = vmatpush1.bf16.msra.mxu0 0
      %1403 = vmatprep.subr.bf16.mxu0 0
      %1404 = vmatpush1.bf16.msra.mxu0 0
      %1405 = vmatprep.subr.bf16.mxu0 0
      %1406 = vmatpush1.bf16.msra.mxu0 0
      %1407 = vmatprep.subr.bf16.mxu0 0
      %1408 = vmatpush1.bf16.msra.mxu0 0
      %1409 = vmatprep.subr.bf16.mxu0 0
      %1410 = vmatpush1.bf16.msra.mxu0 0
      %1411 = vmatprep.subr.bf16.mxu0 0
      %1412 = vmatpush1.bf16.msra.mxu0 0
      %1413 = vmatprep.subr.bf16.mxu0 0
      %1414 = vmatpush1.bf16.msra.mxu0 0
      %1415 = vmatprep.subr.bf16.mxu0 0
      %1416 = vmatpush1.bf16.msra.mxu0 0
      %1417 = vmatprep.mubr.bf16.mxu0 0
      %1418 = vmatmul.mubr.bf16.gmra.mrb[0].mxu0 %v1383
      %v1419 = vpop.f32.mrb[0].mxu0
      %v1420 = vadd.f32 %v1145, %v1419
      %v1421 = vpop.f32.mrb[0].mxu0
      %v1422 = vadd.f32 %v1149, %v1421
      %v1423 = vpop.f32.mrb[0].mxu0
      %v1424 = vpop.f32.mrb[0].mxu0
      %1425 = vdwg.mxu0
      %1426 = vmatprep.subr.bf16.mxu0 %v1321
      %1427 = vmatpush1.bf16.msra.mxu0 %v1320
      %1428 = vmatprep.subr.bf16.mxu0 %v1337
      %1429 = vmatpush1.bf16.msra.mxu0 %v1336
      %1430 = vmatprep.subr.bf16.mxu0 0
      %1431 = vmatpush1.bf16.msra.mxu0 0
      %1432 = vmatprep.subr.bf16.mxu0 0
      %1433 = vmatpush1.bf16.msra.mxu0 0
      %1434 = vmatprep.subr.bf16.mxu0 0
      %1435 = vmatpush1.bf16.msra.mxu0 0
      %1436 = vmatprep.subr.bf16.mxu0 0
      %1437 = vmatpush1.bf16.msra.mxu0 0
      %1438 = vmatprep.subr.bf16.mxu0 0
      %1439 = vmatpush1.bf16.msra.mxu0 0
      %1440 = vmatprep.subr.bf16.mxu0 0
      %1441 = vmatpush1.bf16.msra.mxu0 0
      %1442 = vmatprep.subr.bf16.mxu0 0
      %1443 = vmatpush1.bf16.msra.mxu0 0
      %1444 = vmatprep.subr.bf16.mxu0 0
      %1445 = vmatpush1.bf16.msra.mxu0 0
      %1446 = vmatprep.subr.bf16.mxu0 0
      %1447 = vmatpush1.bf16.msra.mxu0 0
      %1448 = vmatprep.subr.bf16.mxu0 0
      %1449 = vmatpush1.bf16.msra.mxu0 0
      %1450 = vmatprep.subr.bf16.mxu0 0
      %1451 = vmatpush1.bf16.msra.mxu0 0
      %1452 = vmatprep.subr.bf16.mxu0 0
      %1453 = vmatpush1.bf16.msra.mxu0 0
      %1454 = vmatprep.subr.bf16.mxu0 0
      %1455 = vmatpush1.bf16.msra.mxu0 0
      %1456 = vmatprep.subr.bf16.mxu0 0
      %1457 = vmatpush1.bf16.msra.mxu0 0
      %1458 = vmatprep.mubr.bf16.mxu0 0
      %1459 = vmatmul.mubr.bf16.gmra.mrb[0].mxu0 %v1383
      %v1460 = vpop.f32.mrb[0].mxu0
      %v1461 = vadd.f32 %v1153, %v1460
      %v1462 = vpop.f32.mrb[0].mxu0
      %v1463 = vadd.f32 %v1157, %v1462
      %v1464 = vpop.f32.mrb[0].mxu0
      %v1465 = vpop.f32.mrb[0].mxu0
      %1466 = vdwg.mxu0
      %1467 = vmatprep.subr.bf16.mxu0 %v1323
      %1468 = vmatpush1.bf16.msra.mxu0 %v1322
      %1469 = vmatprep.subr.bf16.mxu0 %v1339
      %1470 = vmatpush1.bf16.msra.mxu0 %v1338
      %1471 = vmatprep.subr.bf16.mxu0 0
      %1472 = vmatpush1.bf16.msra.mxu0 0
      %1473 = vmatprep.subr.bf16.mxu0 0
      %1474 = vmatpush1.bf16.msra.mxu0 0
      %1475 = vmatprep.subr.bf16.mxu0 0
      %1476 = vmatpush1.bf16.msra.mxu0 0
      %1477 = vmatprep.subr.bf16.mxu0 0
      %1478 = vmatpush1.bf16.msra.mxu0 0
      %1479 = vmatprep.subr.bf16.mxu0 0
      %1480 = vmatpush1.bf16.msra.mxu0 0
      %1481 = vmatprep.subr.bf16.mxu0 0
      %1482 = vmatpush1.bf16.msra.mxu0 0
      %1483 = vmatprep.subr.bf16.mxu0 0
      %1484 = vmatpush1.bf16.msra.mxu0 0
      %1485 = vmatprep.subr.bf16.mxu0 0
      %1486 = vmatpush1.bf16.msra.mxu0 0
      %1487 = vmatprep.subr.bf16.mxu0 0
      %1488 = vmatpush1.bf16.msra.mxu0 0
      %1489 = vmatprep.subr.bf16.mxu0 0
      %1490 = vmatpush1.bf16.msra.mxu0 0
      %1491 = vmatprep.subr.bf16.mxu0 0
      %1492 = vmatpush1.bf16.msra.mxu0 0
      %1493 = vmatprep.subr.bf16.mxu0 0
      %1494 = vmatpush1.bf16.msra.mxu0 0
      %1495 = vmatprep.subr.bf16.mxu0 0
      %1496 = vmatpush1.bf16.msra.mxu0 0
      %1497 = vmatprep.subr.bf16.mxu0 0
      %1498 = vmatpush1.bf16.msra.mxu0 0
      %1499 = vmatprep.mubr.bf16.mxu0 0
      %1500 = vmatmul.mubr.bf16.gmra.mrb[0].mxu0 %v1383
      %v1501 = vpop.f32.mrb[0].mxu0
      %v1502 = vadd.f32 %v1161, %v1501
      %v1503 = vpop.f32.mrb[0].mxu0
      %v1504 = vadd.f32 %v1165, %v1503
      %v1505 = vpop.f32.mrb[0].mxu0
      %v1506 = vpop.f32.mrb[0].mxu0
      %1507 = vdwg.mxu0
      %1508 = vmatprep.subr.bf16.mxu0 %v1325
      %1509 = vmatpush1.bf16.msra.mxu0 %v1324
      %1510 = vmatprep.subr.bf16.mxu0 %v1341
      %1511 = vmatpush1.bf16.msra.mxu0 %v1340
      %1512 = vmatprep.subr.bf16.mxu0 0
      %1513 = vmatpush1.bf16.msra.mxu0 0
      %1514 = vmatprep.subr.bf16.mxu0 0
      %1515 = vmatpush1.bf16.msra.mxu0 0
      %1516 = vmatprep.subr.bf16.mxu0 0
      %1517 = vmatpush1.bf16.msra.mxu0 0
      %1518 = vmatprep.subr.bf16.mxu0 0
      %1519 = vmatpush1.bf16.msra.mxu0 0
      %1520 = vmatprep.subr.bf16.mxu0 0
      %1521 = vmatpush1.bf16.msra.mxu0 0
      %1522 = vmatprep.subr.bf16.mxu0 0
      %1523 = vmatpush1.bf16.msra.mxu0 0
      %1524 = vmatprep.subr.bf16.mxu0 0
      %1525 = vmatpush1.bf16.msra.mxu0 0
      %1526 = vmatprep.subr.bf16.mxu0 0
      %1527 = vmatpush1.bf16.msra.mxu0 0
      %1528 = vmatprep.subr.bf16.mxu0 0
      %1529 = vmatpush1.bf16.msra.mxu0 0
      %1530 = vmatprep.subr.bf16.mxu0 0
      %1531 = vmatpush1.bf16.msra.mxu0 0
      %1532 = vmatprep.subr.bf16.mxu0 0
      %1533 = vmatpush1.bf16.msra.mxu0 0
      %1534 = vmatprep.subr.bf16.mxu0 0
      %1535 = vmatpush1.bf16.msra.mxu0 0
      %1536 = vmatprep.subr.bf16.mxu0 0
      %1537 = vmatpush1.bf16.msra.mxu0 0
      %1538 = vmatprep.subr.bf16.mxu0 0
      %1539 = vmatpush1.bf16.msra.mxu0 0
      %1540 = vmatprep.mubr.bf16.mxu0 0
      %1541 = vmatmul.mubr.bf16.gmra.mrb[0].mxu0 %v1383
      %v1542 = vpop.f32.mrb[0].mxu0
      %v1543 = vadd.f32 %v1169, %v1542
      %v1544 = vpop.f32.mrb[0].mxu0
      %v1545 = vadd.f32 %v1173, %v1544
      %v1546 = vpop.f32.mrb[0].mxu0
      %v1547 = vpop.f32.mrb[0].mxu0
      %1548 = vdwg.mxu0
      %1549 = vmatprep.subr.bf16.mxu0 %v1327
      %1550 = vmatpush1.bf16.msra.mxu0 %v1326
      %1551 = vmatprep.subr.bf16.mxu0 %v1343
      %1552 = vmatpush1.bf16.msra.mxu0 %v1342
      %1553 = vmatprep.subr.bf16.mxu0 0
      %1554 = vmatpush1.bf16.msra.mxu0 0
      %1555 = vmatprep.subr.bf16.mxu0 0
      %1556 = vmatpush1.bf16.msra.mxu0 0
      %1557 = vmatprep.subr.bf16.mxu0 0
      %1558 = vmatpush1.bf16.msra.mxu0 0
      %1559 = vmatprep.subr.bf16.mxu0 0
      %1560 = vmatpush1.bf16.msra.mxu0 0
      %1561 = vmatprep.subr.bf16.mxu0 0
      %1562 = vmatpush1.bf16.msra.mxu0 0
      %1563 = vmatprep.subr.bf16.mxu0 0
      %1564 = vmatpush1.bf16.msra.mxu0 0
      %1565 = vmatprep.subr.bf16.mxu0 0
      %1566 = vmatpush1.bf16.msra.mxu0 0
      %1567 = vmatprep.subr.bf16.mxu0 0
      %1568 = vmatpush1.bf16.msra.mxu0 0
      %1569 = vmatprep.subr.bf16.mxu0 0
      %1570 = vmatpush1.bf16.msra.mxu0 0
      %1571 = vmatprep.subr.bf16.mxu0 0
      %1572 = vmatpush1.bf16.msra.mxu0 0
      %1573 = vmatprep.subr.bf16.mxu0 0
      %1574 = vmatpush1.bf16.msra.mxu0 0
      %1575 = vmatprep.subr.bf16.mxu0 0
      %1576 = vmatpush1.bf16.msra.mxu0 0
      %1577 = vmatprep.subr.bf16.mxu0 0
      %1578 = vmatpush1.bf16.msra.mxu0 0
      %1579 = vmatprep.subr.bf16.mxu0 0
      %1580 = vmatpush1.bf16.msra.mxu0 0
      %1581 = vmatprep.mubr.bf16.mxu0 0
      %1582 = vmatmul.mubr.bf16.gmra.mrb[0].mxu0 %v1383
      %v1583 = vpop.f32.mrb[0].mxu0
      %v1584 = vadd.f32 %v1177, %v1583
      %v1585 = vpop.f32.mrb[0].mxu0
      %v1586 = vadd.f32 %v1181, %v1585
      %v1587 = vpop.f32.mrb[0].mxu0
      %v1588 = vpop.f32.mrb[0].mxu0
      %1589 = vdwg.mxu0
      %1590 = vmatprep.subr.bf16.mxu0 %v1329
      %1591 = vmatpush1.bf16.msra.mxu0 %v1328
      %1592 = vmatprep.subr.bf16.mxu0 %v1345
      %1593 = vmatpush1.bf16.msra.mxu0 %v1344
      %1594 = vmatprep.subr.bf16.mxu0 0
      %1595 = vmatpush1.bf16.msra.mxu0 0
      %1596 = vmatprep.subr.bf16.mxu0 0
      %1597 = vmatpush1.bf16.msra.mxu0 0
      %1598 = vmatprep.subr.bf16.mxu0 0
      %1599 = vmatpush1.bf16.msra.mxu0 0
      %1600 = vmatprep.subr.bf16.mxu0 0
      %1601 = vmatpush1.bf16.msra.mxu0 0
      %1602 = vmatprep.subr.bf16.mxu0 0
      %1603 = vmatpush1.bf16.msra.mxu0 0
      %1604 = vmatprep.subr.bf16.mxu0 0
      %1605 = vmatpush1.bf16.msra.mxu0 0
      %1606 = vmatprep.subr.bf16.mxu0 0
      %1607 = vmatpush1.bf16.msra.mxu0 0
      %1608 = vmatprep.subr.bf16.mxu0 0
      %1609 = vmatpush1.bf16.msra.mxu0 0
      %1610 = vmatprep.subr.bf16.mxu0 0
      %1611 = vmatpush1.bf16.msra.mxu0 0
      %1612 = vmatprep.subr.bf16.mxu0 0
      %1613 = vmatpush1.bf16.msra.mxu0 0
      %1614 = vmatprep.subr.bf16.mxu0 0
      %1615 = vmatpush1.bf16.msra.mxu0 0
      %1616 = vmatprep.subr.bf16.mxu0 0
      %1617 = vmatpush1.bf16.msra.mxu0 0
      %1618 = vmatprep.subr.bf16.mxu0 0
      %1619 = vmatpush1.bf16.msra.mxu0 0
      %1620 = vmatprep.subr.bf16.mxu0 0
      %1621 = vmatpush1.bf16.msra.mxu0 0
      %1622 = vmatprep.mubr.bf16.mxu0 0
      %1623 = vmatmul.mubr.bf16.gmra.mrb[0].mxu0 %v1383
      %v1624 = vpop.f32.mrb[0].mxu0
      %v1625 = vadd.f32 %v1185, %v1624
      %v1626 = vpop.f32.mrb[0].mxu0
      %v1627 = vadd.f32 %v1189, %v1626
      %v1628 = vpop.f32.mrb[0].mxu0
      %v1629 = vpop.f32.mrb[0].mxu0
      %1630 = vdwg.mxu0
      %1631 = vmatprep.subr.bf16.mxu0 %v1331
      %1632 = vmatpush1.bf16.msra.mxu0 %v1330
      %1633 = vmatprep.subr.bf16.mxu0 %v1347
      %1634 = vmatpush1.bf16.msra.mxu0 %v1346
      %1635 = vmatprep.subr.bf16.mxu0 0
      %1636 = vmatpush1.bf16.msra.mxu0 0
      %1637 = vmatprep.subr.bf16.mxu0 0
      %1638 = vmatpush1.bf16.msra.mxu0 0
      %1639 = vmatprep.subr.bf16.mxu0 0
      %1640 = vmatpush1.bf16.msra.mxu0 0
      %1641 = vmatprep.subr.bf16.mxu0 0
      %1642 = vmatpush1.bf16.msra.mxu0 0
      %1643 = vmatprep.subr.bf16.mxu0 0
      %1644 = vmatpush1.bf16.msra.mxu0 0
      %1645 = vmatprep.subr.bf16.mxu0 0
      %1646 = vmatpush1.bf16.msra.mxu0 0
      %1647 = vmatprep.subr.bf16.mxu0 0
      %1648 = vmatpush1.bf16.msra.mxu0 0
      %1649 = vmatprep.subr.bf16.mxu0 0
      %1650 = vmatpush1.bf16.msra.mxu0 0
      %1651 = vmatprep.subr.bf16.mxu0 0
      %1652 = vmatpush1.bf16.msra.mxu0 0
      %1653 = vmatprep.subr.bf16.mxu0 0
      %1654 = vmatpush1.bf16.msra.mxu0 0
      %1655 = vmatprep.subr.bf16.mxu0 0
      %1656 = vmatpush1.bf16.msra.mxu0 0
      %1657 = vmatprep.subr.bf16.mxu0 0
      %1658 = vmatpush1.bf16.msra.mxu0 0
      %1659 = vmatprep.subr.bf16.mxu0 0
      %1660 = vmatpush1.bf16.msra.mxu0 0
      %1661 = vmatprep.subr.bf16.mxu0 0
      %1662 = vmatpush1.bf16.msra.mxu0 0
      %1663 = vmatprep.mubr.bf16.mxu0 0
      %1664 = vmatmul.mubr.bf16.gmra.mrb[0].mxu0 %v1383
      %v1665 = vpop.f32.mrb[0].mxu0
      %v1666 = vadd.f32 %v1193, %v1665
      %v1667 = vpop.f32.mrb[0].mxu0
      %v1668 = vadd.f32 %v1197, %v1667
      %v1669 = vpop.f32.mrb[0].mxu0
      %v1670 = vpop.f32.mrb[0].mxu0
      %1671 = vdwg.mxu0
      %1672 = vmatprep.subr.bf16.mxu0 %v1333
      %1673 = vmatpush1.bf16.msra.mxu0 %v1332
      %1674 = vmatprep.subr.bf16.mxu0 %v1349
      %1675 = vmatpush1.bf16.msra.mxu0 %v1348
      %1676 = vmatprep.subr.bf16.mxu0 0
      %1677 = vmatpush1.bf16.msra.mxu0 0
      %1678 = vmatprep.subr.bf16.mxu0 0
      %1679 = vmatpush1.bf16.msra.mxu0 0
      %1680 = vmatprep.subr.bf16.mxu0 0
      %1681 = vmatpush1.bf16.msra.mxu0 0
      %1682 = vmatprep.subr.bf16.mxu0 0
      %1683 = vmatpush1.bf16.msra.mxu0 0
      %1684 = vmatprep.subr.bf16.mxu0 0
      %1685 = vmatpush1.bf16.msra.mxu0 0
      %1686 = vmatprep.subr.bf16.mxu0 0
      %1687 = vmatpush1.bf16.msra.mxu0 0
      %1688 = vmatprep.subr.bf16.mxu0 0
      %1689 = vmatpush1.bf16.msra.mxu0 0
      %1690 = vmatprep.subr.bf16.mxu0 0
      %1691 = vmatpush1.bf16.msra.mxu0 0
      %1692 = vmatprep.subr.bf16.mxu0 0
      %1693 = vmatpush1.bf16.msra.mxu0 0
      %1694 = vmatprep.subr.bf16.mxu0 0
      %1695 = vmatpush1.bf16.msra.mxu0 0
      %1696 = vmatprep.subr.bf16.mxu0 0
      %1697 = vmatpush1.bf16.msra.mxu0 0
      %1698 = vmatprep.subr.bf16.mxu0 0
      %1699 = vmatpush1.bf16.msra.mxu0 0
      %1700 = vmatprep.subr.bf16.mxu0 0
      %1701 = vmatpush1.bf16.msra.mxu0 0
      %1702 = vmatprep.subr.bf16.mxu0 0
      %1703 = vmatpush1.bf16.msra.mxu0 0
      %1704 = vmatprep.mubr.bf16.mxu0 0
      %1705 = vmatmul.mubr.bf16.gmra.mrb[0].mxu0 %v1383
      %v1706 = vpop.f32.mrb[0].mxu0
      %v1707 = vadd.f32 %v1201, %v1706
      %v1708 = vpop.f32.mrb[0].mxu0
      %v1709 = vadd.f32 %v1205, %v1708
      %v1710 = vpop.f32.mrb[0].mxu0
      %v1711 = vpop.f32.mrb[0].mxu0
      %1712 = vdwg.mxu0
      %v1713 = vmax.f32 %v1420, 0.0
      %v1714 = vmax.f32 %v1422, 0.0
      %v1715 = vmax.f32 %v1461, 0.0
      %v1716 = vmax.f32 %v1463, 0.0
      %v1717 = vmax.f32 %v1502, 0.0
      %v1718 = vmax.f32 %v1504, 0.0
      %v1719 = vmax.f32 %v1543, 0.0
      %v1720 = vmax.f32 %v1545, 0.0
      %v1721 = vmax.f32 %v1584, 0.0
      %v1722 = vmax.f32 %v1586, 0.0
      %v1723 = vmax.f32 %v1625, 0.0
      %v1724 = vmax.f32 %v1627, 0.0
      %v1725 = vmax.f32 %v1666, 0.0
      %v1726 = vmax.f32 %v1668, 0.0
      %v1727 = vmax.f32 %v1707, 0.0
      %v1728 = vmax.f32 %v1709, 0.0
      %v1729 = vpack.c.bf16 %v1713, %v1713
      %v1730 = vpack.c.bf16 %v1714, %v1714
      %v1731 = vpack.c.bf16 %v1715, %v1715
      %v1732 = vpack.c.bf16 %v1716, %v1716
      %v1733 = vpack.c.bf16 %v1717, %v1717
      %v1734 = vpack.c.bf16 %v1718, %v1718
      %v1735 = vpack.c.bf16 %v1719, %v1719
      %v1736 = vpack.c.bf16 %v1720, %v1720
      %v1737 = vpack.c.bf16 %v1721, %v1721
      %v1738 = vpack.c.bf16 %v1722, %v1722
      %v1739 = vpack.c.bf16 %v1723, %v1723
      %v1740 = vpack.c.bf16 %v1724, %v1724
      %v1741 = vpack.c.bf16 %v1725, %v1725
      %v1742 = vpack.c.bf16 %v1726, %v1726
      %v1743 = vpack.c.bf16 %v1727, %v1727
      %v1744 = vpack.c.bf16 %v1728, %v1728
      %v1745 = vld [vmem:[%s7] sm:$0xf]
      %v1746 = vld [vmem:[%s7 + $0x4] sm:$0xf]
      %v1747 = vld [vmem:[%s7 + $0x8] sm:$0xf]
      %v1748 = vld [vmem:[%s7 + $0xc] sm:$0xf]
      %v1749 = vld [vmem:[%s7 + $0x10] sm:$0xf]
      %v1750 = vld [vmem:[%s7 + $0x14] sm:$0xf]
      %v1751 = vld [vmem:[%s7 + $0x18] sm:$0xf]
      %v1752 = vld [vmem:[%s7 + $0x1c] sm:$0xf]
      %v1753 = vld [vmem:[%s7 + $0x20] sm:$0xf]
      %v1754 = vld [vmem:[%s7 + $0x24] sm:$0xf]
      %v1755 = vld [vmem:[%s7 + $0x28] sm:$0xf]
      %v1756 = vld [vmem:[%s7 + $0x2c] sm:$0xf]
      %v1757 = vld [vmem:[%s7 + $0x30] sm:$0xf]
      %v1758 = vld [vmem:[%s7 + $0x34] sm:$0xf]
      %v1759 = vld [vmem:[%s7 + $0x38] sm:$0xf]
      %v1760 = vld [vmem:[%s7 + $0x3c] sm:$0xf]
      %v1761 = vld [vmem:[%s7 + $0x40] sm:$0xf]
      %v1762 = vld [vmem:[%s7 + $0x44] sm:$0xf]
      %v1763 = vld [vmem:[%s7 + $0x48] sm:$0xf]
      %v1764 = vld [vmem:[%s7 + $0x4c] sm:$0xf]
      %v1765 = vld [vmem:[%s7 + $0x50] sm:$0xf]
      %v1766 = vld [vmem:[%s7 + $0x54] sm:$0xf]
      %v1767 = vld [vmem:[%s7 + $0x58] sm:$0xf]
      %v1768 = vld [vmem:[%s7 + $0x5c] sm:$0xf]
      %v1769 = vld [vmem:[%s7 + $0x60] sm:$0xf]
      %v1770 = vld [vmem:[%s7 + $0x64] sm:$0xf]
      %v1771 = vld [vmem:[%s7 + $0x68] sm:$0xf]
      %v1772 = vld [vmem:[%s7 + $0x6c] sm:$0xf]
      %v1773 = vld [vmem:[%s7 + $0x70] sm:$0xf]
      %v1774 = vld [vmem:[%s7 + $0x74] sm:$0xf]
      %v1775 = vld [vmem:[%s7 + $0x78] sm:$0xf]
      %v1776 = vld [vmem:[%s7 + $0x7c] sm:$0xf]
      %v1777 = vld [vmem:[%s7 + $0x80] sm:$0xf]
      %v1778 = vld [vmem:[%s7 + $0x84] sm:$0xf]
      %v1779 = vld [vmem:[%s7 + $0x88] sm:$0xf]
      %v1780 = vld [vmem:[%s7 + $0x8c] sm:$0xf]
      %v1781 = vld [vmem:[%s7 + $0x90] sm:$0xf]
      %v1782 = vld [vmem:[%s7 + $0x94] sm:$0xf]
      %v1783 = vld [vmem:[%s7 + $0x98] sm:$0xf]
      %v1784 = vld [vmem:[%s7 + $0x9c] sm:$0xf]
      %v1785 = vld [vmem:[%s7 + $0xa0] sm:$0xf]
      %v1786 = vld [vmem:[%s7 + $0xa4] sm:$0xf]
      %v1787 = vld [vmem:[%s7 + $0xa8] sm:$0xf]
      %v1788 = vld [vmem:[%s7 + $0xac] sm:$0xf]
      %v1789 = vld [vmem:[%s7 + $0xb0] sm:$0xf]
      %v1790 = vld [vmem:[%s7 + $0xb4] sm:$0xf]
      %v1791 = vld [vmem:[%s7 + $0xb8] sm:$0xf]
      %v1792 = vld [vmem:[%s7 + $0xbc] sm:$0xf]
      %v1793 = vld [vmem:[%s7 + $0xc0] sm:$0xf]
      %v1794 = vld [vmem:[%s7 + $0xc4] sm:$0xf]
      %v1795 = vld [vmem:[%s7 + $0xc8] sm:$0xf]
      %v1796 = vld [vmem:[%s7 + $0xcc] sm:$0xf]
      %v1797 = vld [vmem:[%s7 + $0xd0] sm:$0xf]
      %v1798 = vld [vmem:[%s7 + $0xd4] sm:$0xf]
      %v1799 = vld [vmem:[%s7 + $0xd8] sm:$0xf]
      %v1800 = vld [vmem:[%s7 + $0xdc] sm:$0xf]
      %v1801 = vld [vmem:[%s7 + $0xe0] sm:$0xf]
      %v1802 = vld [vmem:[%s7 + $0xe4] sm:$0xf]
      %v1803 = vld [vmem:[%s7 + $0xe8] sm:$0xf]
      %v1804 = vld [vmem:[%s7 + $0xec] sm:$0xf]
      %v1805 = vld [vmem:[%s7 + $0xf0] sm:$0xf]
      %v1806 = vld [vmem:[%s7 + $0xf4] sm:$0xf]
      %v1807 = vld [vmem:[%s7 + $0xf8] sm:$0xf]
      %v1808 = vld [vmem:[%s7 + $0xfc] sm:$0xf]
      %v1809 = vld [vmem:[%s7 + $0x100] sm:$0xf]
      %v1810 = vld [vmem:[%s7 + $0x104] sm:$0xf]
      %v1811 = vld [vmem:[%s7 + $0x108] sm:$0xf]
      %v1812 = vld [vmem:[%s7 + $0x10c] sm:$0xf]
      %v1813 = vld [vmem:[%s7 + $0x110] sm:$0xf]
      %v1814 = vld [vmem:[%s7 + $0x114] sm:$0xf]
      %v1815 = vld [vmem:[%s7 + $0x118] sm:$0xf]
      %v1816 = vld [vmem:[%s7 + $0x11c] sm:$0xf]
      %v1817 = vld [vmem:[%s7 + $0x120] sm:$0xf]
      %v1818 = vld [vmem:[%s7 + $0x124] sm:$0xf]
      %v1819 = vld [vmem:[%s7 + $0x128] sm:$0xf]
      %v1820 = vld [vmem:[%s7 + $0x12c] sm:$0xf]
      %v1821 = vld [vmem:[%s7 + $0x130] sm:$0xf]
      %v1822 = vld [vmem:[%s7 + $0x134] sm:$0xf]
      %v1823 = vld [vmem:[%s7 + $0x138] sm:$0xf]
      %v1824 = vld [vmem:[%s7 + $0x13c] sm:$0xf]
      %v1825 = vld [vmem:[%s7 + $0x140] sm:$0xf]
      %v1826 = vld [vmem:[%s7 + $0x144] sm:$0xf]
      %v1827 = vld [vmem:[%s7 + $0x148] sm:$0xf]
      %v1828 = vld [vmem:[%s7 + $0x14c] sm:$0xf]
      %v1829 = vld [vmem:[%s7 + $0x150] sm:$0xf]
      %v1830 = vld [vmem:[%s7 + $0x154] sm:$0xf]
      %v1831 = vld [vmem:[%s7 + $0x158] sm:$0xf]
      %v1832 = vld [vmem:[%s7 + $0x15c] sm:$0xf]
      %v1833 = vld [vmem:[%s7 + $0x160] sm:$0xf]
      %v1834 = vld [vmem:[%s7 + $0x164] sm:$0xf]
      %v1835 = vld [vmem:[%s7 + $0x168] sm:$0xf]
      %v1836 = vld [vmem:[%s7 + $0x16c] sm:$0xf]
      %v1837 = vld [vmem:[%s7 + $0x170] sm:$0xf]
      %v1838 = vld [vmem:[%s7 + $0x174] sm:$0xf]
      %v1839 = vld [vmem:[%s7 + $0x178] sm:$0xf]
      %v1840 = vld [vmem:[%s7 + $0x17c] sm:$0xf]
      %v1841 = vld [vmem:[%s7 + $0x180] sm:$0xf]
      %v1842 = vld [vmem:[%s7 + $0x184] sm:$0xf]
      %v1843 = vld [vmem:[%s7 + $0x188] sm:$0xf]
      %v1844 = vld [vmem:[%s7 + $0x18c] sm:$0xf]
      %v1845 = vld [vmem:[%s7 + $0x190] sm:$0xf]
      %v1846 = vld [vmem:[%s7 + $0x194] sm:$0xf]
      %v1847 = vld [vmem:[%s7 + $0x198] sm:$0xf]
      %v1848 = vld [vmem:[%s7 + $0x19c] sm:$0xf]
      %v1849 = vld [vmem:[%s7 + $0x1a0] sm:$0xf]
      %v1850 = vld [vmem:[%s7 + $0x1a4] sm:$0xf]
      %v1851 = vld [vmem:[%s7 + $0x1a8] sm:$0xf]
      %v1852 = vld [vmem:[%s7 + $0x1ac] sm:$0xf]
      %v1853 = vld [vmem:[%s7 + $0x1b0] sm:$0xf]
      %v1854 = vld [vmem:[%s7 + $0x1b4] sm:$0xf]
      %v1855 = vld [vmem:[%s7 + $0x1b8] sm:$0xf]
      %v1856 = vld [vmem:[%s7 + $0x1bc] sm:$0xf]
      %v1857 = vld [vmem:[%s7 + $0x1c0] sm:$0xf]
      %v1858 = vld [vmem:[%s7 + $0x1c4] sm:$0xf]
      %v1859 = vld [vmem:[%s7 + $0x1c8] sm:$0xf]
      %v1860 = vld [vmem:[%s7 + $0x1cc] sm:$0xf]
      %v1861 = vld [vmem:[%s7 + $0x1d0] sm:$0xf]
      %v1862 = vld [vmem:[%s7 + $0x1d4] sm:$0xf]
      %v1863 = vld [vmem:[%s7 + $0x1d8] sm:$0xf]
      %v1864 = vld [vmem:[%s7 + $0x1dc] sm:$0xf]
      %v1865 = vld [vmem:[%s7 + $0x1e0] sm:$0xf]
      %v1866 = vld [vmem:[%s7 + $0x1e4] sm:$0xf]
      %v1867 = vld [vmem:[%s7 + $0x1e8] sm:$0xf]
      %v1868 = vld [vmem:[%s7 + $0x1ec] sm:$0xf]
      %v1869 = vld [vmem:[%s7 + $0x1f0] sm:$0xf]
      %v1870 = vld [vmem:[%s7 + $0x1f4] sm:$0xf]
      %v1871 = vld [vmem:[%s7 + $0x1f8] sm:$0xf]
      %v1872 = vld [vmem:[%s7 + $0x1fc] sm:$0xf]
      %v1873 = vld [vmem:[%s7 + $0x200] sm:$0xf]
      %v1874 = vld [vmem:[%s7 + $0x204] sm:$0xf]
      %v1875 = vld [vmem:[%s7 + $0x208] sm:$0xf]
      %v1876 = vld [vmem:[%s7 + $0x20c] sm:$0xf]
      %v1877 = vld [vmem:[%s7 + $0x210] sm:$0xf]
      %v1878 = vld [vmem:[%s7 + $0x214] sm:$0xf]
      %v1879 = vld [vmem:[%s7 + $0x218] sm:$0xf]
      %v1880 = vld [vmem:[%s7 + $0x21c] sm:$0xf]
      %v1881 = vld [vmem:[%s7 + $0x220] sm:$0xf]
      %v1882 = vld [vmem:[%s7 + $0x224] sm:$0xf]
      %v1883 = vld [vmem:[%s7 + $0x228] sm:$0xf]
      %v1884 = vld [vmem:[%s7 + $0x22c] sm:$0xf]
      %v1885 = vld [vmem:[%s7 + $0x230] sm:$0xf]
      %v1886 = vld [vmem:[%s7 + $0x234] sm:$0xf]
      %v1887 = vld [vmem:[%s7 + $0x238] sm:$0xf]
      %v1888 = vld [vmem:[%s7 + $0x23c] sm:$0xf]
      %v1889 = vld [vmem:[%s7 + $0x240] sm:$0xf]
      %v1890 = vld [vmem:[%s7 + $0x244] sm:$0xf]
      %v1891 = vld [vmem:[%s7 + $0x248] sm:$0xf]
      %v1892 = vld [vmem:[%s7 + $0x24c] sm:$0xf]
      %v1893 = vld [vmem:[%s7 + $0x250] sm:$0xf]
      %v1894 = vld [vmem:[%s7 + $0x254] sm:$0xf]
      %v1895 = vld [vmem:[%s7 + $0x258] sm:$0xf]
      %v1896 = vld [vmem:[%s7 + $0x25c] sm:$0xf]
      %v1897 = vld [vmem:[%s7 + $0x260] sm:$0xf]
      %v1898 = vld [vmem:[%s7 + $0x264] sm:$0xf]
      %v1899 = vld [vmem:[%s7 + $0x268] sm:$0xf]
      %v1900 = vld [vmem:[%s7 + $0x26c] sm:$0xf]
      %v1901 = vld [vmem:[%s7 + $0x270] sm:$0xf]
      %v1902 = vld [vmem:[%s7 + $0x274] sm:$0xf]
      %v1903 = vld [vmem:[%s7 + $0x278] sm:$0xf]
      %v1904 = vld [vmem:[%s7 + $0x27c] sm:$0xf]
      %v1905 = vld [vmem:[%s7 + $0x280] sm:$0xf]
      %v1906 = vld [vmem:[%s7 + $0x284] sm:$0xf]
      %v1907 = vld [vmem:[%s7 + $0x288] sm:$0xf]
      %v1908 = vld [vmem:[%s7 + $0x28c] sm:$0xf]
      %v1909 = vld [vmem:[%s7 + $0x290] sm:$0xf]
      %v1910 = vld [vmem:[%s7 + $0x294] sm:$0xf]
      %v1911 = vld [vmem:[%s7 + $0x298] sm:$0xf]
      %v1912 = vld [vmem:[%s7 + $0x29c] sm:$0xf]
      %v1913 = vld [vmem:[%s7 + $0x2a0] sm:$0xf]
      %v1914 = vld [vmem:[%s7 + $0x2a4] sm:$0xf]
      %v1915 = vld [vmem:[%s7 + $0x2a8] sm:$0xf]
      %v1916 = vld [vmem:[%s7 + $0x2ac] sm:$0xf]
      %v1917 = vld [vmem:[%s7 + $0x2b0] sm:$0xf]
      %v1918 = vld [vmem:[%s7 + $0x2b4] sm:$0xf]
      %v1919 = vld [vmem:[%s7 + $0x2b8] sm:$0xf]
      %v1920 = vld [vmem:[%s7 + $0x2bc] sm:$0xf]
      %v1921 = vld [vmem:[%s7 + $0x2c0] sm:$0xf]
      %v1922 = vld [vmem:[%s7 + $0x2c4] sm:$0xf]
      %v1923 = vld [vmem:[%s7 + $0x2c8] sm:$0xf]
      %v1924 = vld [vmem:[%s7 + $0x2cc] sm:$0xf]
      %v1925 = vld [vmem:[%s7 + $0x2d0] sm:$0xf]
      %v1926 = vld [vmem:[%s7 + $0x2d4] sm:$0xf]
      %v1927 = vld [vmem:[%s7 + $0x2d8] sm:$0xf]
      %v1928 = vld [vmem:[%s7 + $0x2dc] sm:$0xf]
      %v1929 = vld [vmem:[%s7 + $0x2e0] sm:$0xf]
      %v1930 = vld [vmem:[%s7 + $0x2e4] sm:$0xf]
      %v1931 = vld [vmem:[%s7 + $0x2e8] sm:$0xf]
      %v1932 = vld [vmem:[%s7 + $0x2ec] sm:$0xf]
      %v1933 = vld [vmem:[%s7 + $0x2f0] sm:$0xf]
      %v1934 = vld [vmem:[%s7 + $0x2f4] sm:$0xf]
      %v1935 = vld [vmem:[%s7 + $0x2f8] sm:$0xf]
      %v1936 = vld [vmem:[%s7 + $0x2fc] sm:$0xf]
      %v1937 = vld [vmem:[%s7 + $0x300] sm:$0xf]
      %v1938 = vld [vmem:[%s7 + $0x304] sm:$0xf]
      %v1939 = vld [vmem:[%s7 + $0x308] sm:$0xf]
      %v1940 = vld [vmem:[%s7 + $0x30c] sm:$0xf]
      %v1941 = vld [vmem:[%s7 + $0x310] sm:$0xf]
      %v1942 = vld [vmem:[%s7 + $0x314] sm:$0xf]
      %v1943 = vld [vmem:[%s7 + $0x318] sm:$0xf]
      %v1944 = vld [vmem:[%s7 + $0x31c] sm:$0xf]
      %v1945 = vld [vmem:[%s7 + $0x320] sm:$0xf]
      %v1946 = vld [vmem:[%s7 + $0x324] sm:$0xf]
      %v1947 = vld [vmem:[%s7 + $0x328] sm:$0xf]
      %v1948 = vld [vmem:[%s7 + $0x32c] sm:$0xf]
      %v1949 = vld [vmem:[%s7 + $0x330] sm:$0xf]
      %v1950 = vld [vmem:[%s7 + $0x334] sm:$0xf]
      %v1951 = vld [vmem:[%s7 + $0x338] sm:$0xf]
      %v1952 = vld [vmem:[%s7 + $0x33c] sm:$0xf]
      %v1953 = vld [vmem:[%s7 + $0x340] sm:$0xf]
      %v1954 = vld [vmem:[%s7 + $0x344] sm:$0xf]
      %v1955 = vld [vmem:[%s7 + $0x348] sm:$0xf]
      %v1956 = vld [vmem:[%s7 + $0x34c] sm:$0xf]
      %v1957 = vld [vmem:[%s7 + $0x350] sm:$0xf]
      %v1958 = vld [vmem:[%s7 + $0x354] sm:$0xf]
      %v1959 = vld [vmem:[%s7 + $0x358] sm:$0xf]
      %v1960 = vld [vmem:[%s7 + $0x35c] sm:$0xf]
      %v1961 = vld [vmem:[%s7 + $0x360] sm:$0xf]
      %v1962 = vld [vmem:[%s7 + $0x364] sm:$0xf]
      %v1963 = vld [vmem:[%s7 + $0x368] sm:$0xf]
      %v1964 = vld [vmem:[%s7 + $0x36c] sm:$0xf]
      %v1965 = vld [vmem:[%s7 + $0x370] sm:$0xf]
      %v1966 = vld [vmem:[%s7 + $0x374] sm:$0xf]
      %v1967 = vld [vmem:[%s7 + $0x378] sm:$0xf]
      %v1968 = vld [vmem:[%s7 + $0x37c] sm:$0xf]
      %v1969 = vld [vmem:[%s7 + $0x380] sm:$0xf]
      %v1970 = vld [vmem:[%s7 + $0x384] sm:$0xf]
      %v1971 = vld [vmem:[%s7 + $0x388] sm:$0xf]
      %v1972 = vld [vmem:[%s7 + $0x38c] sm:$0xf]
      %v1973 = vld [vmem:[%s7 + $0x390] sm:$0xf]
      %v1974 = vld [vmem:[%s7 + $0x394] sm:$0xf]
      %v1975 = vld [vmem:[%s7 + $0x398] sm:$0xf]
      %v1976 = vld [vmem:[%s7 + $0x39c] sm:$0xf]
      %v1977 = vld [vmem:[%s7 + $0x3a0] sm:$0xf]
      %v1978 = vld [vmem:[%s7 + $0x3a4] sm:$0xf]
      %v1979 = vld [vmem:[%s7 + $0x3a8] sm:$0xf]
      %v1980 = vld [vmem:[%s7 + $0x3ac] sm:$0xf]
      %v1981 = vld [vmem:[%s7 + $0x3b0] sm:$0xf]
      %v1982 = vld [vmem:[%s7 + $0x3b4] sm:$0xf]
      %v1983 = vld [vmem:[%s7 + $0x3b8] sm:$0xf]
      %v1984 = vld [vmem:[%s7 + $0x3bc] sm:$0xf]
      %v1985 = vld [vmem:[%s7 + $0x3c0] sm:$0xf]
      %v1986 = vld [vmem:[%s7 + $0x3c4] sm:$0xf]
      %v1987 = vld [vmem:[%s7 + $0x3c8] sm:$0xf]
      %v1988 = vld [vmem:[%s7 + $0x3cc] sm:$0xf]
      %v1989 = vld [vmem:[%s7 + $0x3d0] sm:$0xf]
      %v1990 = vld [vmem:[%s7 + $0x3d4] sm:$0xf]
      %v1991 = vld [vmem:[%s7 + $0x3d8] sm:$0xf]
      %v1992 = vld [vmem:[%s7 + $0x3dc] sm:$0xf]
      %v1993 = vld [vmem:[%s7 + $0x3e0] sm:$0xf]
      %v1994 = vld [vmem:[%s7 + $0x3e4] sm:$0xf]
      %v1995 = vld [vmem:[%s7 + $0x3e8] sm:$0xf]
      %v1996 = vld [vmem:[%s7 + $0x3ec] sm:$0xf]
      %v1997 = vld [vmem:[%s7 + $0x3f0] sm:$0xf]
      %v1998 = vld [vmem:[%s7 + $0x3f4] sm:$0xf]
      %v1999 = vld [vmem:[%s7 + $0x3f8] sm:$0xf]
      %v2000 = vld [vmem:[%s7 + $0x3fc] sm:$0xf]
      %v2001 = vlaneseq
      %v2002 = vshrl.u32 %v2001, 7
      %v2003 = vsub.s32 0, %v2002
      %v2004 = vrot.slane %v365, %v2003
      %v2261 = vunpack.c.l.b16 %v1745
      %v2262 = vunpack.c.l.b16 %v1746
      %v2263 = vunpack.c.l.b16 %v1747
      %v2264 = vunpack.c.l.b16 %v1748
      %v2265 = vunpack.c.l.b16 %v1749
      %v2266 = vunpack.c.l.b16 %v1750
      %v2267 = vunpack.c.l.b16 %v1751
      %v2268 = vunpack.c.l.b16 %v1752
      %v2269 = vunpack.c.l.b16 %v1753
      %v2270 = vunpack.c.l.b16 %v1754
      %v2271 = vunpack.c.l.b16 %v1755
      %v2272 = vunpack.c.l.b16 %v1756
      %v2273 = vunpack.c.l.b16 %v1757
      %v2274 = vunpack.c.l.b16 %v1758
      %v2275 = vunpack.c.l.b16 %v1759
      %v2276 = vunpack.c.l.b16 %v1760
      %v2277 = vunpack.c.l.b16 %v1761
      %v2278 = vunpack.c.l.b16 %v1762
      %v2279 = vunpack.c.l.b16 %v1763
      %v2280 = vunpack.c.l.b16 %v1764
      %v2281 = vunpack.c.l.b16 %v1765
      %v2282 = vunpack.c.l.b16 %v1766
      %v2283 = vunpack.c.l.b16 %v1767
      %v2284 = vunpack.c.l.b16 %v1768
      %v2285 = vunpack.c.l.b16 %v1769
      %v2286 = vunpack.c.l.b16 %v1770
      %v2287 = vunpack.c.l.b16 %v1771
      %v2288 = vunpack.c.l.b16 %v1772
      %v2289 = vunpack.c.l.b16 %v1773
      %v2290 = vunpack.c.l.b16 %v1774
      %v2291 = vunpack.c.l.b16 %v1775
      %v2292 = vunpack.c.l.b16 %v1776
      %v2293 = vunpack.c.l.b16 %v1777
      %v2294 = vunpack.c.l.b16 %v1778
      %v2295 = vunpack.c.l.b16 %v1779
      %v2296 = vunpack.c.l.b16 %v1780
      %v2297 = vunpack.c.l.b16 %v1781
      %v2298 = vunpack.c.l.b16 %v1782
      %v2299 = vunpack.c.l.b16 %v1783
      %v2300 = vunpack.c.l.b16 %v1784
      %v2301 = vunpack.c.l.b16 %v1785
      %v2302 = vunpack.c.l.b16 %v1786
      %v2303 = vunpack.c.l.b16 %v1787
      %v2304 = vunpack.c.l.b16 %v1788
      %v2305 = vunpack.c.l.b16 %v1789
      %v2306 = vunpack.c.l.b16 %v1790
      %v2307 = vunpack.c.l.b16 %v1791
      %v2308 = vunpack.c.l.b16 %v1792
      %v2309 = vunpack.c.l.b16 %v1793
      %v2310 = vunpack.c.l.b16 %v1794
      %v2311 = vunpack.c.l.b16 %v1795
      %v2312 = vunpack.c.l.b16 %v1796
      %v2313 = vunpack.c.l.b16 %v1797
      %v2314 = vunpack.c.l.b16 %v1798
      %v2315 = vunpack.c.l.b16 %v1799
      %v2316 = vunpack.c.l.b16 %v1800
      %v2317 = vunpack.c.l.b16 %v1801
      %v2318 = vunpack.c.l.b16 %v1802
      %v2319 = vunpack.c.l.b16 %v1803
      %v2320 = vunpack.c.l.b16 %v1804
      %v2321 = vunpack.c.l.b16 %v1805
      %v2322 = vunpack.c.l.b16 %v1806
      %v2323 = vunpack.c.l.b16 %v1807
      %v2324 = vunpack.c.l.b16 %v1808
      %v2325 = vunpack.c.l.b16 %v1809
      %v2326 = vunpack.c.l.b16 %v1810
      %v2327 = vunpack.c.l.b16 %v1811
      %v2328 = vunpack.c.l.b16 %v1812
      %v2329 = vunpack.c.l.b16 %v1813
      %v2330 = vunpack.c.l.b16 %v1814
      %v2331 = vunpack.c.l.b16 %v1815
      %v2332 = vunpack.c.l.b16 %v1816
      %v2333 = vunpack.c.l.b16 %v1817
      %v2334 = vunpack.c.l.b16 %v1818
      %v2335 = vunpack.c.l.b16 %v1819
      %v2336 = vunpack.c.l.b16 %v1820
      %v2337 = vunpack.c.l.b16 %v1821
      %v2338 = vunpack.c.l.b16 %v1822
      %v2339 = vunpack.c.l.b16 %v1823
      %v2340 = vunpack.c.l.b16 %v1824
      %v2341 = vunpack.c.l.b16 %v1825
      %v2342 = vunpack.c.l.b16 %v1826
      %v2343 = vunpack.c.l.b16 %v1827
      %v2344 = vunpack.c.l.b16 %v1828
      %v2345 = vunpack.c.l.b16 %v1829
      %v2346 = vunpack.c.l.b16 %v1830
      %v2347 = vunpack.c.l.b16 %v1831
      %v2348 = vunpack.c.l.b16 %v1832
      %v2349 = vunpack.c.l.b16 %v1833
      %v2350 = vunpack.c.l.b16 %v1834
      %v2351 = vunpack.c.l.b16 %v1835
      %v2352 = vunpack.c.l.b16 %v1836
      %v2353 = vunpack.c.l.b16 %v1837
      %v2354 = vunpack.c.l.b16 %v1838
      %v2355 = vunpack.c.l.b16 %v1839
      %v2356 = vunpack.c.l.b16 %v1840
      %v2357 = vunpack.c.l.b16 %v1841
      %v2358 = vunpack.c.l.b16 %v1842
      %v2359 = vunpack.c.l.b16 %v1843
      %v2360 = vunpack.c.l.b16 %v1844
      %v2361 = vunpack.c.l.b16 %v1845
      %v2362 = vunpack.c.l.b16 %v1846
      %v2363 = vunpack.c.l.b16 %v1847
      %v2364 = vunpack.c.l.b16 %v1848
      %v2365 = vunpack.c.l.b16 %v1849
      %v2366 = vunpack.c.l.b16 %v1850
      %v2367 = vunpack.c.l.b16 %v1851
      %v2368 = vunpack.c.l.b16 %v1852
      %v2369 = vunpack.c.l.b16 %v1853
      %v2370 = vunpack.c.l.b16 %v1854
      %v2371 = vunpack.c.l.b16 %v1855
      %v2372 = vunpack.c.l.b16 %v1856
      %v2373 = vunpack.c.l.b16 %v1857
      %v2374 = vunpack.c.l.b16 %v1858
      %v2375 = vunpack.c.l.b16 %v1859
      %v2376 = vunpack.c.l.b16 %v1860
      %v2377 = vunpack.c.l.b16 %v1861
      %v2378 = vunpack.c.l.b16 %v1862
      %v2379 = vunpack.c.l.b16 %v1863
      %v2380 = vunpack.c.l.b16 %v1864
      %v2381 = vunpack.c.l.b16 %v1865
      %v2382 = vunpack.c.l.b16 %v1866
      %v2383 = vunpack.c.l.b16 %v1867
      %v2384 = vunpack.c.l.b16 %v1868
      %v2385 = vunpack.c.l.b16 %v1869
      %v2386 = vunpack.c.l.b16 %v1870
      %v2387 = vunpack.c.l.b16 %v1871
      %v2388 = vunpack.c.l.b16 %v1872
      %v2389 = vunpack.c.l.b16 %v1873
      %v2390 = vunpack.c.l.b16 %v1874
      %v2391 = vunpack.c.l.b16 %v1875
      %v2392 = vunpack.c.l.b16 %v1876
      %v2393 = vunpack.c.l.b16 %v1877
      %v2394 = vunpack.c.l.b16 %v1878
      %v2395 = vunpack.c.l.b16 %v1879
      %v2396 = vunpack.c.l.b16 %v1880
      %v2397 = vunpack.c.l.b16 %v1881
      %v2398 = vunpack.c.l.b16 %v1882
      %v2399 = vunpack.c.l.b16 %v1883
      %v2400 = vunpack.c.l.b16 %v1884
      %v2401 = vunpack.c.l.b16 %v1885
      %v2402 = vunpack.c.l.b16 %v1886
      %v2403 = vunpack.c.l.b16 %v1887
      %v2404 = vunpack.c.l.b16 %v1888
      %v2405 = vunpack.c.l.b16 %v1889
      %v2406 = vunpack.c.l.b16 %v1890
      %v2407 = vunpack.c.l.b16 %v1891
      %v2408 = vunpack.c.l.b16 %v1892
      %v2409 = vunpack.c.l.b16 %v1893
      %v2410 = vunpack.c.l.b16 %v1894
      %v2411 = vunpack.c.l.b16 %v1895
      %v2412 = vunpack.c.l.b16 %v1896
      %v2413 = vunpack.c.l.b16 %v1897
      %v2414 = vunpack.c.l.b16 %v1898
      %v2415 = vunpack.c.l.b16 %v1899
      %v2416 = vunpack.c.l.b16 %v1900
      %v2417 = vunpack.c.l.b16 %v1901
      %v2418 = vunpack.c.l.b16 %v1902
      %v2419 = vunpack.c.l.b16 %v1903
      %v2420 = vunpack.c.l.b16 %v1904
      %v2421 = vunpack.c.l.b16 %v1905
      %v2422 = vunpack.c.l.b16 %v1906
      %v2423 = vunpack.c.l.b16 %v1907
      %v2424 = vunpack.c.l.b16 %v1908
      %v2425 = vunpack.c.l.b16 %v1909
      %v2426 = vunpack.c.l.b16 %v1910
      %v2427 = vunpack.c.l.b16 %v1911
      %v2428 = vunpack.c.l.b16 %v1912
      %v2429 = vunpack.c.l.b16 %v1913
      %v2430 = vunpack.c.l.b16 %v1914
      %v2431 = vunpack.c.l.b16 %v1915
      %v2432 = vunpack.c.l.b16 %v1916
      %v2433 = vunpack.c.l.b16 %v1917
      %v2434 = vunpack.c.l.b16 %v1918
      %v2435 = vunpack.c.l.b16 %v1919
      %v2436 = vunpack.c.l.b16 %v1920
      %v2437 = vunpack.c.l.b16 %v1921
      %v2438 = vunpack.c.l.b16 %v1922
      %v2439 = vunpack.c.l.b16 %v1923
      %v2440 = vunpack.c.l.b16 %v1924
      %v2441 = vunpack.c.l.b16 %v1925
      %v2442 = vunpack.c.l.b16 %v1926
      %v2443 = vunpack.c.l.b16 %v1927
      %v2444 = vunpack.c.l.b16 %v1928
      %v2445 = vunpack.c.l.b16 %v1929
      %v2446 = vunpack.c.l.b16 %v1930
      %v2447 = vunpack.c.l.b16 %v1931
      %v2448 = vunpack.c.l.b16 %v1932
      %v2449 = vunpack.c.l.b16 %v1933
      %v2450 = vunpack.c.l.b16 %v1934
      %v2451 = vunpack.c.l.b16 %v1935
      %v2452 = vunpack.c.l.b16 %v1936
      %v2453 = vunpack.c.l.b16 %v1937
      %v2454 = vunpack.c.l.b16 %v1938
      %v2455 = vunpack.c.l.b16 %v1939
      %v2456 = vunpack.c.l.b16 %v1940
      %v2457 = vunpack.c.l.b16 %v1941
      %v2458 = vunpack.c.l.b16 %v1942
      %v2459 = vunpack.c.l.b16 %v1943
      %v2460 = vunpack.c.l.b16 %v1944
      %v2461 = vunpack.c.l.b16 %v1945
      %v2462 = vunpack.c.l.b16 %v1946
      %v2463 = vunpack.c.l.b16 %v1947
      %v2464 = vunpack.c.l.b16 %v1948
      %v2465 = vunpack.c.l.b16 %v1949
      %v2466 = vunpack.c.l.b16 %v1950
      %v2467 = vunpack.c.l.b16 %v1951
      %v2468 = vunpack.c.l.b16 %v1952
      %v2469 = vunpack.c.l.b16 %v1953
      %v2470 = vunpack.c.l.b16 %v1954
      %v2471 = vunpack.c.l.b16 %v1955
      %v2472 = vunpack.c.l.b16 %v1956
      %v2473 = vunpack.c.l.b16 %v1957
      %v2474 = vunpack.c.l.b16 %v1958
      %v2475 = vunpack.c.l.b16 %v1959
      %v2476 = vunpack.c.l.b16 %v1960
      %v2477 = vunpack.c.l.b16 %v1961
      %v2478 = vunpack.c.l.b16 %v1962
      %v2479 = vunpack.c.l.b16 %v1963
      %v2480 = vunpack.c.l.b16 %v1964
      %v2481 = vunpack.c.l.b16 %v1965
      %v2482 = vunpack.c.l.b16 %v1966
      %v2483 = vunpack.c.l.b16 %v1967
      %v2484 = vunpack.c.l.b16 %v1968
      %v2485 = vunpack.c.l.b16 %v1969
      %v2486 = vunpack.c.l.b16 %v1970
      %v2487 = vunpack.c.l.b16 %v1971
      %v2488 = vunpack.c.l.b16 %v1972
      %v2489 = vunpack.c.l.b16 %v1973
      %v2490 = vunpack.c.l.b16 %v1974
      %v2491 = vunpack.c.l.b16 %v1975
      %v2492 = vunpack.c.l.b16 %v1976
      %v2493 = vunpack.c.l.b16 %v1977
      %v2494 = vunpack.c.l.b16 %v1978
      %v2495 = vunpack.c.l.b16 %v1979
      %v2496 = vunpack.c.l.b16 %v1980
      %v2497 = vunpack.c.l.b16 %v1981
      %v2498 = vunpack.c.l.b16 %v1982
      %v2499 = vunpack.c.l.b16 %v1983
      %v2500 = vunpack.c.l.b16 %v1984
      %v2501 = vunpack.c.l.b16 %v1985
      %v2502 = vunpack.c.l.b16 %v1986
      %v2503 = vunpack.c.l.b16 %v1987
      %v2504 = vunpack.c.l.b16 %v1988
      %v2505 = vunpack.c.l.b16 %v1989
      %v2506 = vunpack.c.l.b16 %v1990
      %v2507 = vunpack.c.l.b16 %v1991
      %v2508 = vunpack.c.l.b16 %v1992
      %v2509 = vunpack.c.l.b16 %v1993
      %v2510 = vunpack.c.l.b16 %v1994
      %v2511 = vunpack.c.l.b16 %v1995
      %v2512 = vunpack.c.l.b16 %v1996
      %v2513 = vunpack.c.l.b16 %v1997
      %v2514 = vunpack.c.l.b16 %v1998
      %v2515 = vunpack.c.l.b16 %v1999
      %v2516 = vunpack.c.l.b16 %v2000
      %v2517 = vpack.c.b16 %v2262, %v2261
      %v2518 = vpack.c.b16 %v2264, %v2263
      %v2519 = vpack.c.b16 %v2266, %v2265
      %v2520 = vpack.c.b16 %v2268, %v2267
      %v2521 = vpack.c.b16 %v2270, %v2269
      %v2522 = vpack.c.b16 %v2272, %v2271
      %v2523 = vpack.c.b16 %v2274, %v2273
      %v2524 = vpack.c.b16 %v2276, %v2275
      %v2525 = vpack.c.b16 %v2278, %v2277
      %v2526 = vpack.c.b16 %v2280, %v2279
      %v2527 = vpack.c.b16 %v2282, %v2281
      %v2528 = vpack.c.b16 %v2284, %v2283
      %v2529 = vpack.c.b16 %v2286, %v2285
      %v2530 = vpack.c.b16 %v2288, %v2287
      %v2531 = vpack.c.b16 %v2290, %v2289
      %v2532 = vpack.c.b16 %v2292, %v2291
      %v2533 = vpack.c.b16 %v2294, %v2293
      %v2534 = vpack.c.b16 %v2296, %v2295
      %v2535 = vpack.c.b16 %v2298, %v2297
      %v2536 = vpack.c.b16 %v2300, %v2299
      %v2537 = vpack.c.b16 %v2302, %v2301
      %v2538 = vpack.c.b16 %v2304, %v2303
      %v2539 = vpack.c.b16 %v2306, %v2305
      %v2540 = vpack.c.b16 %v2308, %v2307
      %v2541 = vpack.c.b16 %v2310, %v2309
      %v2542 = vpack.c.b16 %v2312, %v2311
      %v2543 = vpack.c.b16 %v2314, %v2313
      %v2544 = vpack.c.b16 %v2316, %v2315
      %v2545 = vpack.c.b16 %v2318, %v2317
      %v2546 = vpack.c.b16 %v2320, %v2319
      %v2547 = vpack.c.b16 %v2322, %v2321
      %v2548 = vpack.c.b16 %v2324, %v2323
      %v2549 = vpack.c.b16 %v2326, %v2325
      %v2550 = vpack.c.b16 %v2328, %v2327
      %v2551 = vpack.c.b16 %v2330, %v2329
      %v2552 = vpack.c.b16 %v2332, %v2331
      %v2553 = vpack.c.b16 %v2334, %v2333
      %v2554 = vpack.c.b16 %v2336, %v2335
      %v2555 = vpack.c.b16 %v2338, %v2337
      %v2556 = vpack.c.b16 %v2340, %v2339
      %v2557 = vpack.c.b16 %v2342, %v2341
      %v2558 = vpack.c.b16 %v2344, %v2343
      %v2559 = vpack.c.b16 %v2346, %v2345
      %v2560 = vpack.c.b16 %v2348, %v2347
      %v2561 = vpack.c.b16 %v2350, %v2349
      %v2562 = vpack.c.b16 %v2352, %v2351
      %v2563 = vpack.c.b16 %v2354, %v2353
      %v2564 = vpack.c.b16 %v2356, %v2355
      %v2565 = vpack.c.b16 %v2358, %v2357
      %v2566 = vpack.c.b16 %v2360, %v2359
      %v2567 = vpack.c.b16 %v2362, %v2361
      %v2568 = vpack.c.b16 %v2364, %v2363
      %v2569 = vpack.c.b16 %v2366, %v2365
      %v2570 = vpack.c.b16 %v2368, %v2367
      %v2571 = vpack.c.b16 %v2370, %v2369
      %v2572 = vpack.c.b16 %v2372, %v2371
      %v2573 = vpack.c.b16 %v2374, %v2373
      %v2574 = vpack.c.b16 %v2376, %v2375
      %v2575 = vpack.c.b16 %v2378, %v2377
      %v2576 = vpack.c.b16 %v2380, %v2379
      %v2577 = vpack.c.b16 %v2382, %v2381
      %v2578 = vpack.c.b16 %v2384, %v2383
      %v2579 = vpack.c.b16 %v2386, %v2385
      %v2580 = vpack.c.b16 %v2388, %v2387
      %v2581 = vpack.c.b16 %v2390, %v2389
      %v2582 = vpack.c.b16 %v2392, %v2391
      %v2583 = vpack.c.b16 %v2394, %v2393
      %v2584 = vpack.c.b16 %v2396, %v2395
      %v2585 = vpack.c.b16 %v2398, %v2397
      %v2586 = vpack.c.b16 %v2400, %v2399
      %v2587 = vpack.c.b16 %v2402, %v2401
      %v2588 = vpack.c.b16 %v2404, %v2403
      %v2589 = vpack.c.b16 %v2406, %v2405
      %v2590 = vpack.c.b16 %v2408, %v2407
      %v2591 = vpack.c.b16 %v2410, %v2409
      %v2592 = vpack.c.b16 %v2412, %v2411
      %v2593 = vpack.c.b16 %v2414, %v2413
      %v2594 = vpack.c.b16 %v2416, %v2415
      %v2595 = vpack.c.b16 %v2418, %v2417
      %v2596 = vpack.c.b16 %v2420, %v2419
      %v2597 = vpack.c.b16 %v2422, %v2421
      %v2598 = vpack.c.b16 %v2424, %v2423
      %v2599 = vpack.c.b16 %v2426, %v2425
      %v2600 = vpack.c.b16 %v2428, %v2427
      %v2601 = vpack.c.b16 %v2430, %v2429
      %v2602 = vpack.c.b16 %v2432, %v2431
      %v2603 = vpack.c.b16 %v2434, %v2433
      %v2604 = vpack.c.b16 %v2436, %v2435
      %v2605 = vpack.c.b16 %v2438, %v2437
      %v2606 = vpack.c.b16 %v2440, %v2439
      %v2607 = vpack.c.b16 %v2442, %v2441
      %v2608 = vpack.c.b16 %v2444, %v2443
      %v2609 = vpack.c.b16 %v2446, %v2445
      %v2610 = vpack.c.b16 %v2448, %v2447
      %v2611 = vpack.c.b16 %v2450, %v2449
      %v2612 = vpack.c.b16 %v2452, %v2451
      %v2613 = vpack.c.b16 %v2454, %v2453
      %v2614 = vpack.c.b16 %v2456, %v2455
      %v2615 = vpack.c.b16 %v2458, %v2457
      %v2616 = vpack.c.b16 %v2460, %v2459
      %v2617 = vpack.c.b16 %v2462, %v2461
      %v2618 = vpack.c.b16 %v2464, %v2463
      %v2619 = vpack.c.b16 %v2466, %v2465
      %v2620 = vpack.c.b16 %v2468, %v2467
      %v2621 = vpack.c.b16 %v2470, %v2469
      %v2622 = vpack.c.b16 %v2472, %v2471
      %v2623 = vpack.c.b16 %v2474, %v2473
      %v2624 = vpack.c.b16 %v2476, %v2475
      %v2625 = vpack.c.b16 %v2478, %v2477
      %v2626 = vpack.c.b16 %v2480, %v2479
      %v2627 = vpack.c.b16 %v2482, %v2481
      %v2628 = vpack.c.b16 %v2484, %v2483
      %v2629 = vpack.c.b16 %v2486, %v2485
      %v2630 = vpack.c.b16 %v2488, %v2487
      %v2631 = vpack.c.b16 %v2490, %v2489
      %v2632 = vpack.c.b16 %v2492, %v2491
      %v2633 = vpack.c.b16 %v2494, %v2493
      %v2634 = vpack.c.b16 %v2496, %v2495
      %v2635 = vpack.c.b16 %v2498, %v2497
      %v2636 = vpack.c.b16 %v2500, %v2499
      %v2637 = vpack.c.b16 %v2502, %v2501
      %v2638 = vpack.c.b16 %v2504, %v2503
      %v2639 = vpack.c.b16 %v2506, %v2505
      %v2640 = vpack.c.b16 %v2508, %v2507
      %v2641 = vpack.c.b16 %v2510, %v2509
      %v2642 = vpack.c.b16 %v2512, %v2511
      %v2643 = vpack.c.b16 %v2514, %v2513
      %v2644 = vpack.c.b16 %v2516, %v2515
      %2773 = vmatprep.subr.bf16.mxu0 0
      %2774 = vmatpush1.bf16.msra.mxu0 %v2517
      %2775 = vmatprep.subr.bf16.mxu0 0
      %2776 = vmatpush1.bf16.msra.mxu0 %v2518
      %2777 = vmatprep.subr.bf16.mxu0 0
      %2778 = vmatpush1.bf16.msra.mxu0 %v2519
      %2779 = vmatprep.subr.bf16.mxu0 0
      %2780 = vmatpush1.bf16.msra.mxu0 %v2520
      %2781 = vmatprep.subr.bf16.mxu0 0
      %2782 = vmatpush1.bf16.msra.mxu0 %v2521
      %2783 = vmatprep.subr.bf16.mxu0 0
      %2784 = vmatpush1.bf16.msra.mxu0 %v2522
      %2785 = vmatprep.subr.bf16.mxu0 0
      %2786 = vmatpush1.bf16.msra.mxu0 %v2523
      %2787 = vmatprep.subr.bf16.mxu0 0
      %2788 = vmatpush1.bf16.msra.mxu0 %v2524
      %2789 = vmatprep.subr.bf16.mxu0 0
      %2790 = vmatpush1.bf16.msra.mxu0 %v2525
      %2791 = vmatprep.subr.bf16.mxu0 0
      %2792 = vmatpush1.bf16.msra.mxu0 %v2526
      %2793 = vmatprep.subr.bf16.mxu0 0
      %2794 = vmatpush1.bf16.msra.mxu0 %v2527
      %2795 = vmatprep.subr.bf16.mxu0 0
      %2796 = vmatpush1.bf16.msra.mxu0 %v2528
      %2797 = vmatprep.subr.bf16.mxu0 0
      %2798 = vmatpush1.bf16.msra.mxu0 %v2529
      %2799 = vmatprep.subr.bf16.mxu0 0
      %2800 = vmatpush1.bf16.msra.mxu0 %v2530
      %2801 = vmatprep.subr.bf16.mxu0 0
      %2802 = vmatpush1.bf16.msra.mxu0 %v2531
      %2803 = vmatprep.subr.bf16.mxu0 0
      %2804 = vmatpush1.bf16.msra.mxu0 %v2532
      %2805 = vmatprep.mubr.bf16.mxu0 %v1730
      %2806 = vmatmul.mubr.bf16.gmra.mrb[0].mxu0 %v1729
      %v2807 = vpop.f32.mrb[0].mxu0
      %v2808 = vadd.f32 %v2004, %v2807
      %v2809 = vpop.f32.mrb[0].mxu0
      %v2810 = vpop.f32.mrb[0].mxu0
      %v2811 = vpop.f32.mrb[0].mxu0
      %2812 = vdwg.mxu0
      %2813 = vmatprep.subr.bf16.mxu0 0
      %2814 = vmatpush1.bf16.msra.mxu0 %v2533
      %2815 = vmatprep.subr.bf16.mxu0 0
      %2816 = vmatpush1.bf16.msra.mxu0 %v2534
      %2817 = vmatprep.subr.bf16.mxu0 0
      %2818 = vmatpush1.bf16.msra.mxu0 %v2535
      %2819 = vmatprep.subr.bf16.mxu0 0
      %2820 = vmatpush1.bf16.msra.mxu0 %v2536
      %2821 = vmatprep.subr.bf16.mxu0 0
      %2822 = vmatpush1.bf16.msra.mxu0 %v2537
      %2823 = vmatprep.subr.bf16.mxu0 0
      %2824 = vmatpush1.bf16.msra.mxu0 %v2538
      %2825 = vmatprep.subr.bf16.mxu0 0
      %2826 = vmatpush1.bf16.msra.mxu0 %v2539
      %2827 = vmatprep.subr.bf16.mxu0 0
      %2828 = vmatpush1.bf16.msra.mxu0 %v2540
      %2829 = vmatprep.subr.bf16.mxu0 0
      %2830 = vmatpush1.bf16.msra.mxu0 %v2541
      %2831 = vmatprep.subr.bf16.mxu0 0
      %2832 = vmatpush1.bf16.msra.mxu0 %v2542
      %2833 = vmatprep.subr.bf16.mxu0 0
      %2834 = vmatpush1.bf16.msra.mxu0 %v2543
      %2835 = vmatprep.subr.bf16.mxu0 0
      %2836 = vmatpush1.bf16.msra.mxu0 %v2544
      %2837 = vmatprep.subr.bf16.mxu0 0
      %2838 = vmatpush1.bf16.msra.mxu0 %v2545
      %2839 = vmatprep.subr.bf16.mxu0 0
      %2840 = vmatpush1.bf16.msra.mxu0 %v2546
      %2841 = vmatprep.subr.bf16.mxu0 0
      %2842 = vmatpush1.bf16.msra.mxu0 %v2547
      %2843 = vmatprep.subr.bf16.mxu0 0
      %2844 = vmatpush1.bf16.msra.mxu0 %v2548
      %2845 = vmatprep.mubr.bf16.mxu0 %v1732
      %2846 = vmatmul.mubr.bf16.gmra.mrb[0].mxu0 %v1731
      %v2847 = vpop.f32.mrb[0].mxu0
      %v2848 = vadd.f32 %v2808, %v2847
      %v2849 = vpop.f32.mrb[0].mxu0
      %v2850 = vpop.f32.mrb[0].mxu0
      %v2851 = vpop.f32.mrb[0].mxu0
      %2852 = vdwg.mxu0
      %2853 = vmatprep.subr.bf16.mxu0 0
      %2854 = vmatpush1.bf16.msra.mxu0 %v2549
      %2855 = vmatprep.subr.bf16.mxu0 0
      %2856 = vmatpush1.bf16.msra.mxu0 %v2550
      %2857 = vmatprep.subr.bf16.mxu0 0
      %2858 = vmatpush1.bf16.msra.mxu0 %v2551
      %2859 = vmatprep.subr.bf16.mxu0 0
      %2860 = vmatpush1.bf16.msra.mxu0 %v2552
      %2861 = vmatprep.subr.bf16.mxu0 0
      %2862 = vmatpush1.bf16.msra.mxu0 %v2553
      %2863 = vmatprep.subr.bf16.mxu0 0
      %2864 = vmatpush1.bf16.msra.mxu0 %v2554
      %2865 = vmatprep.subr.bf16.mxu0 0
      %2866 = vmatpush1.bf16.msra.mxu0 %v2555
      %2867 = vmatprep.subr.bf16.mxu0 0
      %2868 = vmatpush1.bf16.msra.mxu0 %v2556
      %2869 = vmatprep.subr.bf16.mxu0 0
      %2870 = vmatpush1.bf16.msra.mxu0 %v2557
      %2871 = vmatprep.subr.bf16.mxu0 0
      %2872 = vmatpush1.bf16.msra.mxu0 %v2558
      %2873 = vmatprep.subr.bf16.mxu0 0
      %2874 = vmatpush1.bf16.msra.mxu0 %v2559
      %2875 = vmatprep.subr.bf16.mxu0 0
      %2876 = vmatpush1.bf16.msra.mxu0 %v2560
      %2877 = vmatprep.subr.bf16.mxu0 0
      %2878 = vmatpush1.bf16.msra.mxu0 %v2561
      %2879 = vmatprep.subr.bf16.mxu0 0
      %2880 = vmatpush1.bf16.msra.mxu0 %v2562
      %2881 = vmatprep.subr.bf16.mxu0 0
      %2882 = vmatpush1.bf16.msra.mxu0 %v2563
      %2883 = vmatprep.subr.bf16.mxu0 0
      %2884 = vmatpush1.bf16.msra.mxu0 %v2564
      %2885 = vmatprep.mubr.bf16.mxu0 %v1734
      %2886 = vmatmul.mubr.bf16.gmra.mrb[0].mxu0 %v1733
      %v2887 = vpop.f32.mrb[0].mxu0
      %v2888 = vadd.f32 %v2848, %v2887
      %v2889 = vpop.f32.mrb[0].mxu0
      %v2890 = vpop.f32.mrb[0].mxu0
      %v2891 = vpop.f32.mrb[0].mxu0
      %2892 = vdwg.mxu0
      %2893 = vmatprep.subr.bf16.mxu0 0
      %2894 = vmatpush1.bf16.msra.mxu0 %v2565
      %2895 = vmatprep.subr.bf16.mxu0 0
      %2896 = vmatpush1.bf16.msra.mxu0 %v2566
      %2897 = vmatprep.subr.bf16.mxu0 0
      %2898 = vmatpush1.bf16.msra.mxu0 %v2567
      %2899 = vmatprep.subr.bf16.mxu0 0
      %2900 = vmatpush1.bf16.msra.mxu0 %v2568
      %2901 = vmatprep.subr.bf16.mxu0 0
      %2902 = vmatpush1.bf16.msra.mxu0 %v2569
      %2903 = vmatprep.subr.bf16.mxu0 0
      %2904 = vmatpush1.bf16.msra.mxu0 %v2570
      %2905 = vmatprep.subr.bf16.mxu0 0
      %2906 = vmatpush1.bf16.msra.mxu0 %v2571
      %2907 = vmatprep.subr.bf16.mxu0 0
      %2908 = vmatpush1.bf16.msra.mxu0 %v2572
      %2909 = vmatprep.subr.bf16.mxu0 0
      %2910 = vmatpush1.bf16.msra.mxu0 %v2573
      %2911 = vmatprep.subr.bf16.mxu0 0
      %2912 = vmatpush1.bf16.msra.mxu0 %v2574
      %2913 = vmatprep.subr.bf16.mxu0 0
      %2914 = vmatpush1.bf16.msra.mxu0 %v2575
      %2915 = vmatprep.subr.bf16.mxu0 0
      %2916 = vmatpush1.bf16.msra.mxu0 %v2576
      %2917 = vmatprep.subr.bf16.mxu0 0
      %2918 = vmatpush1.bf16.msra.mxu0 %v2577
      %2919 = vmatprep.subr.bf16.mxu0 0
      %2920 = vmatpush1.bf16.msra.mxu0 %v2578
      %2921 = vmatprep.subr.bf16.mxu0 0
      %2922 = vmatpush1.bf16.msra.mxu0 %v2579
      %2923 = vmatprep.subr.bf16.mxu0 0
      %2924 = vmatpush1.bf16.msra.mxu0 %v2580
      %2925 = vmatprep.mubr.bf16.mxu0 %v1736
      %2926 = vmatmul.mubr.bf16.gmra.mrb[0].mxu0 %v1735
      %v2927 = vpop.f32.mrb[0].mxu0
      %v2928 = vadd.f32 %v2888, %v2927
      %v2929 = vpop.f32.mrb[0].mxu0
      %v2930 = vpop.f32.mrb[0].mxu0
      %v2931 = vpop.f32.mrb[0].mxu0
      %2932 = vdwg.mxu0
      %2933 = vmatprep.subr.bf16.mxu0 0
      %2934 = vmatpush1.bf16.msra.mxu0 %v2581
      %2935 = vmatprep.subr.bf16.mxu0 0
      %2936 = vmatpush1.bf16.msra.mxu0 %v2582
      %2937 = vmatprep.subr.bf16.mxu0 0
      %2938 = vmatpush1.bf16.msra.mxu0 %v2583
      %2939 = vmatprep.subr.bf16.mxu0 0
      %2940 = vmatpush1.bf16.msra.mxu0 %v2584
      %2941 = vmatprep.subr.bf16.mxu0 0
      %2942 = vmatpush1.bf16.msra.mxu0 %v2585
      %2943 = vmatprep.subr.bf16.mxu0 0
      %2944 = vmatpush1.bf16.msra.mxu0 %v2586
      %2945 = vmatprep.subr.bf16.mxu0 0
      %2946 = vmatpush1.bf16.msra.mxu0 %v2587
      %2947 = vmatprep.subr.bf16.mxu0 0
      %2948 = vmatpush1.bf16.msra.mxu0 %v2588
      %2949 = vmatprep.subr.bf16.mxu0 0
      %2950 = vmatpush1.bf16.msra.mxu0 %v2589
      %2951 = vmatprep.subr.bf16.mxu0 0
      %2952 = vmatpush1.bf16.msra.mxu0 %v2590
      %2953 = vmatprep.subr.bf16.mxu0 0
      %2954 = vmatpush1.bf16.msra.mxu0 %v2591
      %2955 = vmatprep.subr.bf16.mxu0 0
      %2956 = vmatpush1.bf16.msra.mxu0 %v2592
      %2957 = vmatprep.subr.bf16.mxu0 0
      %2958 = vmatpush1.bf16.msra.mxu0 %v2593
      %2959 = vmatprep.subr.bf16.mxu0 0
      %2960 = vmatpush1.bf16.msra.mxu0 %v2594
      %2961 = vmatprep.subr.bf16.mxu0 0
      %2962 = vmatpush1.bf16.msra.mxu0 %v2595
      %2963 = vmatprep.subr.bf16.mxu0 0
      %2964 = vmatpush1.bf16.msra.mxu0 %v2596
      %2965 = vmatprep.mubr.bf16.mxu0 %v1738
      %2966 = vmatmul.mubr.bf16.gmra.mrb[0].mxu0 %v1737
      %v2967 = vpop.f32.mrb[0].mxu0
      %v2968 = vadd.f32 %v2928, %v2967
      %v2969 = vpop.f32.mrb[0].mxu0
      %v2970 = vpop.f32.mrb[0].mxu0
      %v2971 = vpop.f32.mrb[0].mxu0
      %2972 = vdwg.mxu0
      %2973 = vmatprep.subr.bf16.mxu0 0
      %2974 = vmatpush1.bf16.msra.mxu0 %v2597
      %2975 = vmatprep.subr.bf16.mxu0 0
      %2976 = vmatpush1.bf16.msra.mxu0 %v2598
      %2977 = vmatprep.subr.bf16.mxu0 0
      %2978 = vmatpush1.bf16.msra.mxu0 %v2599
      %2979 = vmatprep.subr.bf16.mxu0 0
      %2980 = vmatpush1.bf16.msra.mxu0 %v2600
      %2981 = vmatprep.subr.bf16.mxu0 0
      %2982 = vmatpush1.bf16.msra.mxu0 %v2601
      %2983 = vmatprep.subr.bf16.mxu0 0
      %2984 = vmatpush1.bf16.msra.mxu0 %v2602
      %2985 = vmatprep.subr.bf16.mxu0 0
      %2986 = vmatpush1.bf16.msra.mxu0 %v2603
      %2987 = vmatprep.subr.bf16.mxu0 0
      %2988 = vmatpush1.bf16.msra.mxu0 %v2604
      %2989 = vmatprep.subr.bf16.mxu0 0
      %2990 = vmatpush1.bf16.msra.mxu0 %v2605
      %2991 = vmatprep.subr.bf16.mxu0 0
      %2992 = vmatpush1.bf16.msra.mxu0 %v2606
      %2993 = vmatprep.subr.bf16.mxu0 0
      %2994 = vmatpush1.bf16.msra.mxu0 %v2607
      %2995 = vmatprep.subr.bf16.mxu0 0
      %2996 = vmatpush1.bf16.msra.mxu0 %v2608
      %2997 = vmatprep.subr.bf16.mxu0 0
      %2998 = vmatpush1.bf16.msra.mxu0 %v2609
      %2999 = vmatprep.subr.bf16.mxu0 0
      %3000 = vmatpush1.bf16.msra.mxu0 %v2610
      %3001 = vmatprep.subr.bf16.mxu0 0
      %3002 = vmatpush1.bf16.msra.mxu0 %v2611
      %3003 = vmatprep.subr.bf16.mxu0 0
      %3004 = vmatpush1.bf16.msra.mxu0 %v2612
      %3005 = vmatprep.mubr.bf16.mxu0 %v1740
      %3006 = vmatmul.mubr.bf16.gmra.mrb[0].mxu0 %v1739
      %v3007 = vpop.f32.mrb[0].mxu0
      %v3008 = vadd.f32 %v2968, %v3007
      %v3009 = vpop.f32.mrb[0].mxu0
      %v3010 = vpop.f32.mrb[0].mxu0
      %v3011 = vpop.f32.mrb[0].mxu0
      %3012 = vdwg.mxu0
      %3013 = vmatprep.subr.bf16.mxu0 0
      %3014 = vmatpush1.bf16.msra.mxu0 %v2613
      %3015 = vmatprep.subr.bf16.mxu0 0
      %3016 = vmatpush1.bf16.msra.mxu0 %v2614
      %3017 = vmatprep.subr.bf16.mxu0 0
      %3018 = vmatpush1.bf16.msra.mxu0 %v2615
      %3019 = vmatprep.subr.bf16.mxu0 0
      %3020 = vmatpush1.bf16.msra.mxu0 %v2616
      %3021 = vmatprep.subr.bf16.mxu0 0
      %3022 = vmatpush1.bf16.msra.mxu0 %v2617
      %3023 = vmatprep.subr.bf16.mxu0 0
      %3024 = vmatpush1.bf16.msra.mxu0 %v2618
      %3025 = vmatprep.subr.bf16.mxu0 0
      %3026 = vmatpush1.bf16.msra.mxu0 %v2619
      %3027 = vmatprep.subr.bf16.mxu0 0
      %3028 = vmatpush1.bf16.msra.mxu0 %v2620
      %3029 = vmatprep.subr.bf16.mxu0 0
      %3030 = vmatpush1.bf16.msra.mxu0 %v2621
      %3031 = vmatprep.subr.bf16.mxu0 0
      %3032 = vmatpush1.bf16.msra.mxu0 %v2622
      %3033 = vmatprep.subr.bf16.mxu0 0
      %3034 = vmatpush1.bf16.msra.mxu0 %v2623
      %3035 = vmatprep.subr.bf16.mxu0 0
      %3036 = vmatpush1.bf16.msra.mxu0 %v2624
      %3037 = vmatprep.subr.bf16.mxu0 0
      %3038 = vmatpush1.bf16.msra.mxu0 %v2625
      %3039 = vmatprep.subr.bf16.mxu0 0
      %3040 = vmatpush1.bf16.msra.mxu0 %v2626
      %3041 = vmatprep.subr.bf16.mxu0 0
      %3042 = vmatpush1.bf16.msra.mxu0 %v2627
      %3043 = vmatprep.subr.bf16.mxu0 0
      %3044 = vmatpush1.bf16.msra.mxu0 %v2628
      %3045 = vmatprep.mubr.bf16.mxu0 %v1742
      %3046 = vmatmul.mubr.bf16.gmra.mrb[0].mxu0 %v1741
      %v3047 = vpop.f32.mrb[0].mxu0
      %v3048 = vadd.f32 %v3008, %v3047
      %v3049 = vpop.f32.mrb[0].mxu0
      %v3050 = vpop.f32.mrb[0].mxu0
      %v3051 = vpop.f32.mrb[0].mxu0
      %3052 = vdwg.mxu0
      %3053 = vmatprep.subr.bf16.mxu0 0
      %3054 = vmatpush1.bf16.msra.mxu0 %v2629
      %3055 = vmatprep.subr.bf16.mxu0 0
      %3056 = vmatpush1.bf16.msra.mxu0 %v2630
      %3057 = vmatprep.subr.bf16.mxu0 0
      %3058 = vmatpush1.bf16.msra.mxu0 %v2631
      %3059 = vmatprep.subr.bf16.mxu0 0
      %3060 = vmatpush1.bf16.msra.mxu0 %v2632
      %3061 = vmatprep.subr.bf16.mxu0 0
      %3062 = vmatpush1.bf16.msra.mxu0 %v2633
      %3063 = vmatprep.subr.bf16.mxu0 0
      %3064 = vmatpush1.bf16.msra.mxu0 %v2634
      %3065 = vmatprep.subr.bf16.mxu0 0
      %3066 = vmatpush1.bf16.msra.mxu0 %v2635
      %3067 = vmatprep.subr.bf16.mxu0 0
      %3068 = vmatpush1.bf16.msra.mxu0 %v2636
      %3069 = vmatprep.subr.bf16.mxu0 0
      %3070 = vmatpush1.bf16.msra.mxu0 %v2637
      %3071 = vmatprep.subr.bf16.mxu0 0
      %3072 = vmatpush1.bf16.msra.mxu0 %v2638
      %3073 = vmatprep.subr.bf16.mxu0 0
      %3074 = vmatpush1.bf16.msra.mxu0 %v2639
      %3075 = vmatprep.subr.bf16.mxu0 0
      %3076 = vmatpush1.bf16.msra.mxu0 %v2640
      %3077 = vmatprep.subr.bf16.mxu0 0
      %3078 = vmatpush1.bf16.msra.mxu0 %v2641
      %3079 = vmatprep.subr.bf16.mxu0 0
      %3080 = vmatpush1.bf16.msra.mxu0 %v2642
      %3081 = vmatprep.subr.bf16.mxu0 0
      %3082 = vmatpush1.bf16.msra.mxu0 %v2643
      %3083 = vmatprep.subr.bf16.mxu0 0
      %3084 = vmatpush1.bf16.msra.mxu0 %v2644
      %3085 = vmatprep.mubr.bf16.mxu0 %v1744
      %3086 = vmatmul.mubr.bf16.gmra.mrb[0].mxu0 %v1743
      %v3087 = vpop.f32.mrb[0].mxu0
      %v3088 = vadd.f32 %v3048, %v3087
      %v3089 = vpop.f32.mrb[0].mxu0
      %v3090 = vpop.f32.mrb[0].mxu0
      %v3091 = vpop.f32.mrb[0].mxu0
      %3092 = vdwg.mxu0
      %v3093 = vadd.f32 %v1104, %v3088
      %v3094 = vsel %vm389, %v3093, 0.0
      %3095 = vadd.xlane.f32.xlu0 %v3094
      %v3096 = vpop.xlane.xlu0 %3095
      %v3097 = vmul.f32 %v3096, %v1084
      %v3098 = vsub.f32 %v3093, %v3097
      %v3099 = vmul.f32 %v3098, %v3098
      %v3100 = vsel %vm389, %v3099, 0.0
      %3101 = vadd.xlane.f32.xlu0 %v3100
      %v3102 = vpop.xlane.xlu0 %3101
      %v3103 = vmul.f32 %v3102, %v1084
      %v3104 = vadd.f32 %v3103, 1e-05
      %v3105 = vrsqrt.pop %v3104
      %v3106 = vmul.f32 %v3098, %v3105
      %v3107 = vlaneseq
      %v3108 = vshrl.u32 %v3107, 7
      %v3109 = vsub.s32 0, %v3108
      %v3110 = vrot.slane %v366, %v3109
      %v3111 = vmul.f32 %v3106, %v3110
      %v3112 = vlaneseq
      %v3113 = vshrl.u32 %v3112, 7
      %v3114 = vsub.s32 0, %v3113
      %v3115 = vrot.slane %v367, %v3114
      %v3116 = vadd.f32 %v3111, %v3115
      %3117 = vst.msk [vmem:[%s354] sm:$0xff] %vm389, %v3116
      %p3118 = scmp.lt.s32.totalorder %s21, 1
      %s3119 = scalar_select %p3118, %s21, 1
      %s3120 = smul.addr %s3119, 8
      %s3121 = scalar_lea.vmem %s10, %s3120
      // Predicated region
      $region61: #{transformer_forward.2} parent=59 // pred_check
        %p3122 = pneg %p254
      $region62: #{transformer_forward.2} parent=59 // pred_check_branch
        %3124 = sbr.rel (%p3122) target = $region64
      $region63: #{transformer_forward.2} parent=59 // pred_region
        _
      $region64: #{transformer_forward.2} parent=59 // pred_fallthru
        _
    $region60: #{transformer_forward.2} parent=5 // pred_fallthru
      _
    %p3125 = scmp.le.s32.totalorder 2, %s16
    // Predicated region
    $region65: #{transformer_forward.2} parent=5 // pred_check
      %p3126 = pneg %p3125
    $region66: #{transformer_forward.2} parent=5 // pred_check_branch
      %3128 = sbr.rel (%p3126) target = $region68
    $region67: #{transformer_forward.2} parent=5 // pred_region
      %s3129 = ssub.s32 %s16, 2
      // Predicated region
      $region69: #{transformer_forward.2} parent=67 // pred_check
        %p3130 = pneg %p260
      $region70: #{transformer_forward.2} parent=67 // pred_check_branch
        %3132 = sbr.rel (%p3130) target = $region72
      $region71: #{transformer_forward.2} parent=67 // pred_region
        %p3133 = scmp.lt.s32.totalorder %s22, 1
        %s3134 = scalar_select %p3133, %s22, 1
        %s3135 = smul.addr %s3134, 8
        %s3136 = scalar_lea.vmem %s10, %s3135
      $region72: #{transformer_forward.2} parent=67 // pred_fallthru
        _
    $region68: #{transformer_forward.2} parent=5 // pred_fallthru
      _
  $region6: #{transformer_forward.2} parent=0 // loop_footer
    %s20 = sadd.s32 1, %s16
  $region7: #{transformer_forward.2} parent=0 // loop_footer_branch
    %15 = sbr.rel target = $region3
  $region8: #{transformer_forward.2} parent=0 // loop_exit
    _

// kernel: transformer_forward.3
$region0: #{transformer_forward.3}
  #allocation0 [shape = 'u32[]', space=smem, size = 0x4, offset = 0x4, fixed_abs, tag = 'smem constant byte address 0x4 - core index']
  #allocation1 [shape = 'u32[144,128]{1,0:T(1,128)}', space=vmem, size = 0x12000, scoped, tag = 'internal scratch']
  %s0 = inlined_call_operand.vmem [shape: f32[2,8,32], index: 0, kind: input, shape index: {}]
  %s1 = inlined_call_operand.vmem [shape: bf16[32,32], index: 1, kind: input, shape index: {}]
  %s2 = inlined_call_operand.vmem [shape: bf16[32,32], index: 2, kind: input, shape index: {}]
  %s3 = inlined_call_operand.vmem [shape: bf16[32,32], index: 3, kind: input, shape index: {}]
  %s4 = inlined_call_operand.vmem [shape: bf16[32,32], index: 4, kind: input, shape index: {}]
  %s5 = inlined_call_operand.vmem [shape: bf16[32,2048], index: 5, kind: input, shape index: {}]
  %s6 = inlined_call_operand.vmem [shape: bf16[2048,32], index: 6, kind: input, shape index: {}]
  %s7 = inlined_call_operand.vmem [shape: f32[1,2048], index: 7, kind: input, shape index: {}]
  %s8 = inlined_call_operand.vmem [shape: f32[9,32], index: 8, kind: input, shape index: {}]
  %s9 = inlined_call_operand.vmem [shape: bf16[32,8], index: 9, kind: input, shape index: {}]
  %s10 = inlined_call_operand.vmem [shape: f32[1,8], index: 10, kind: input, shape index: {}]
  %s11 = inlined_call_operand.hbm [shape: f32[2,1,8], index: 11, kind: output, shape index: {}]
  %s12 = sld [smem:[#allocation0]]
  $region77: #{transformer_forward.3} parent=0
    _
  %s14 = ssub.s32 1, %s12
  %s15 = scalar_select 0, %s14, %s12
  $region1: #{transformer_forward.3} parent=0
    #allocation2 [shape = 'u8[1024]{0}', space=vmem, size = 0x400, scoped, tag = 'output window, operand 0']
    #allocation3 [shape = 's32[2]{0}', space=sflag, size = 0x8, scoped, tag = 'scoped memory for transformer_forward.3']
    %16 = vsyncpa [#allocation3], 0
    %s17 = scalar_lea.sflag [#allocation3], 1
    %18 = vsyncpa %s17, 0
    loop: start=0, step=1, limit=4
    $region2: #{transformer_forward.3} parent=1 // loop_pre_header
      _
    $region3: #{transformer_forward.3} parent=1 // loop_header
      %s20 = sphi 0, %s24
      %p21 = scmp.ge.s32.totalorder %s20, 4
      %s30 = sphi 0, %s32
      %s33 = sphi 0, %s30
      %s34 = sphi 0, %s33
      %s50 = sphi 0, %s34
      %s54 = sphi 0, %s54
      %s56 = sphi 0, %s54
      %s57 = sphi 0, %s56
      %s71 = sphi 0, %s57
      %s75 = sphi 0, %s75
      %s77 = sphi 0, %s75
      %s78 = sphi 0, %s77
      %s92 = sphi 0, %s78
      %s96 = sphi 0, %s96
      %s98 = sphi 0, %s96
      %s99 = sphi 0, %s98
      %s113 = sphi 0, %s99
      %s117 = sphi 0, %s117
      %s119 = sphi 0, %s117
      %s120 = sphi 0, %s119
      %s134 = sphi 0, %s120
      %s138 = sphi 0, %s138
      %s140 = sphi 0, %s138
      %s141 = sphi 0, %s140
      %s155 = sphi 0, %s141
      %s159 = sphi 0, %s159
      %s161 = sphi 0, %s159
      %s162 = sphi 0, %s161
      %s176 = sphi 0, %s162
      %s180 = sphi 0, %s180
      %s182 = sphi 0, %s180
      %s183 = sphi 0, %s182
      %s197 = sphi 0, %s183
      %s201 = sphi 0, %s201
      %s203 = sphi 0, %s201
      %s204 = sphi 0, %s203
      %s218 = sphi 0, %s204
      %s222 = sphi 0, %s222
      %s224 = sphi 0, %s222
      %s225 = sphi 0, %s224
      %s239 = sphi 0, %s225
      %s243 = sphi 0, %s243
      %s245 = sphi 0, %s243
      %s246 = sphi 0, %s245
      %s260 = sphi 0, %s246
      %s266 = sphi 0, %s268
      %s269 = sphi 0, %s266
      %s270 = sphi 0, %s269
      %s286 = sphi 0, %s270
    $region4: #{transformer_forward.3} parent=1 // loop_header_branch
      %23 = sbr.rel (%p21) target = $region8
    $region5: #{transformer_forward.3} parent=1 // loop_body
      %s25 = ssub.s32 %s20, 1
      %s26 = ssub.s32 %s20, 2
      %s27 = sadd.s32 %s20, 1
      %s28 = ssub.s32 %s20, %s27
      %p29 = scmp.eq.s32.totalorder %s28, 0
      %s31 = sadd.s32 %s30, 1
      %s32 = scalar_select %p29, %s30, %s31
      %p35 = pneg %p29
      %p36 = scmp.eq.s32.totalorder %s20, 1
      %p37 = por %p35, %p36
      %p38 = scmp.ne.s32.totalorder %s30, %s33
      %p39 = scmp.eq.s32.totalorder %s20, 0
      %p40 = por %p38, %p39
      %p41 = scmp.ne.s32.totalorder %s30, %s33
      %p42 = scmp.eq.s32.totalorder %s25, 1
      %p43 = por %p41, %p42
      %p44 = scmp.ne.s32.totalorder %s33, %s34
      %p45 = scmp.eq.s32.totalorder %s25, 0
      %p46 = por %p44, %p45
      %p47 = scmp.ne.s32.totalorder %s33, %s34
      %p48 = scmp.eq.s32.totalorder %s26, 1
      %p49 = por %p47, %p48
      %p51 = scmp.ne.s32.totalorder %s34, %s50
      %p52 = scmp.eq.s32.totalorder %s26, 0
      %p53 = por %p51, %p52
      %s55 = sadd.s32 %s54, 1
      %p58 = scmp.eq.s32.totalorder %s20, 1
      %p59 = scmp.ne.s32.totalorder %s54, %s56
      %p60 = scmp.eq.s32.totalorder %s20, 0
      %p61 = por %p59, %p60
      %p62 = scmp.ne.s32.totalorder %s54, %s56
      %p63 = scmp.eq.s32.totalorder %s25, 1
      %p64 = por %p62, %p63
      %p65 = scmp.ne.s32.totalorder %s56, %s57
      %p66 = scmp.eq.s32.totalorder %s25, 0
      %p67 = por %p65, %p66
      %p68 = scmp.ne.s32.totalorder %s56, %s57
      %p69 = scmp.eq.s32.totalorder %s26, 1
      %p70 = por %p68, %p69
      %p72 = scmp.ne.s32.totalorder %s57, %s71
      %p73 = scmp.eq.s32.totalorder %s26, 0
      %p74 = por %p72, %p73
      %s76 = sadd.s32 %s75, 1
      %p79 = scmp.eq.s32.totalorder %s20, 1
      %p80 = scmp.ne.s32.totalorder %s75, %s77
      %p81 = scmp.eq.s32.totalorder %s20, 0
      %p82 = por %p80, %p81
      %p83 = scmp.ne.s32.totalorder %s75, %s77
      %p84 = scmp.eq.s32.totalorder %s25, 1
      %p85 = por %p83, %p84
      %p86 = scmp.ne.s32.totalorder %s77, %s78
      %p87 = scmp.eq.s32.totalorder %s25, 0
      %p88 = por %p86, %p87
      %p89 = scmp.ne.s32.totalorder %s77, %s78
      %p90 = scmp.eq.s32.totalorder %s26, 1
      %p91 = por %p89, %p90
      %p93 = scmp.ne.s32.totalorder %s78, %s92
      %p94 = scmp.eq.s32.totalorder %s26, 0
      %p95 = por %p93, %p94
      %s97 = sadd.s32 %s96, 1
      %p100 = scmp.eq.s32.totalorder %s20, 1
      %p101 = scmp.ne.s32.totalorder %s96, %s98
      %p102 = scmp.eq.s32.totalorder %s20, 0
      %p103 = por %p101, %p102
      %p104 = scmp.ne.s32.totalorder %s96, %s98
      %p105 = scmp.eq.s32.totalorder %s25, 1
      %p106 = por %p104, %p105
      %p107 = scmp.ne.s32.totalorder %s98, %s99
      %p108 = scmp.eq.s32.totalorder %s25, 0
      %p109 = por %p107, %p108
      %p110 = scmp.ne.s32.totalorder %s98, %s99
      %p111 = scmp.eq.s32.totalorder %s26, 1
      %p112 = por %p110, %p111
      %p114 = scmp.ne.s32.totalorder %s99, %s113
      %p115 = scmp.eq.s32.totalorder %s26, 0
      %p116 = por %p114, %p115
      %s118 = sadd.s32 %s117, 1
      %p121 = scmp.eq.s32.totalorder %s20, 1
      %p122 = scmp.ne.s32.totalorder %s117, %s119
      %p123 = scmp.eq.s32.totalorder %s20, 0
      %p124 = por %p122, %p123
      %p125 = scmp.ne.s32.totalorder %s117, %s119
      %p126 = scmp.eq.s32.totalorder %s25, 1
      %p127 = por %p125, %p126
      %p128 = scmp.ne.s32.totalorder %s119, %s120
      %p129 = scmp.eq.s32.totalorder %s25, 0
      %p130 = por %p128, %p129
      %p131 = scmp.ne.s32.totalorder %s119, %s120
      %p132 = scmp.eq.s32.totalorder %s26, 1
      %p133 = por %p131, %p132
      %p135 = scmp.ne.s32.totalorder %s120, %s134
      %p136 = scmp.eq.s32.totalorder %s26, 0
      %p137 = por %p135, %p136
      %s139 = sadd.s32 %s138, 1
      %p142 = scmp.eq.s32.totalorder %s20, 1
      %p143 = scmp.ne.s32.totalorder %s138, %s140
      %p144 = scmp.eq.s32.totalorder %s20, 0
      %p145 = por %p143, %p144
      %p146 = scmp.ne.s32.totalorder %s138, %s140
      %p147 = scmp.eq.s32.totalorder %s25, 1
      %p148 = por %p146, %p147
      %p149 = scmp.ne.s32.totalorder %s140, %s141
      %p150 = scmp.eq.s32.totalorder %s25, 0
      %p151 = por %p149, %p150
      %p152 = scmp.ne.s32.totalorder %s140, %s141
      %p153 = scmp.eq.s32.totalorder %s26, 1
      %p154 = por %p152, %p153
      %p156 = scmp.ne.s32.totalorder %s141, %s155
      %p157 = scmp.eq.s32.totalorder %s26, 0
      %p158 = por %p156, %p157
      %s160 = sadd.s32 %s159, 1
      %p163 = scmp.eq.s32.totalorder %s20, 1
      %p164 = scmp.ne.s32.totalorder %s159, %s161
      %p165 = scmp.eq.s32.totalorder %s20, 0
      %p166 = por %p164, %p165
      %p167 = scmp.ne.s32.totalorder %s159, %s161
      %p168 = scmp.eq.s32.totalorder %s25, 1
      %p169 = por %p167, %p168
      %p170 = scmp.ne.s32.totalorder %s161, %s162
      %p171 = scmp.eq.s32.totalorder %s25, 0
      %p172 = por %p170, %p171
      %p173 = scmp.ne.s32.totalorder %s161, %s162
      %p174 = scmp.eq.s32.totalorder %s26, 1
      %p175 = por %p173, %p174
      %p177 = scmp.ne.s32.totalorder %s162, %s176
      %p178 = scmp.eq.s32.totalorder %s26, 0
      %p179 = por %p177, %p178
      %s181 = sadd.s32 %s180, 1
      %p184 = scmp.eq.s32.totalorder %s20, 1
      %p185 = scmp.ne.s32.totalorder %s180, %s182
      %p186 = scmp.eq.s32.totalorder %s20, 0
      %p187 = por %p185, %p186
      %p188 = scmp.ne.s32.totalorder %s180, %s182
      %p189 = scmp.eq.s32.totalorder %s25, 1
      %p190 = por %p188, %p189
      %p191 = scmp.ne.s32.totalorder %s182, %s183
      %p192 = scmp.eq.s32.totalorder %s25, 0
      %p193 = por %p191, %p192
      %p194 = scmp.ne.s32.totalorder %s182, %s183
      %p195 = scmp.eq.s32.totalorder %s26, 1
      %p196 = por %p194, %p195
      %p198 = scmp.ne.s32.totalorder %s183, %s197
      %p199 = scmp.eq.s32.totalorder %s26, 0
      %p200 = por %p198, %p199
      %s202 = sadd.s32 %s201, 1
      %p205 = scmp.eq.s32.totalorder %s20, 1
      %p206 = scmp.ne.s32.totalorder %s201, %s203
      %p207 = scmp.eq.s32.totalorder %s20, 0
      %p208 = por %p206, %p207
      %p209 = scmp.ne.s32.totalorder %s201, %s203
      %p210 = scmp.eq.s32.totalorder %s25, 1
      %p211 = por %p209, %p210
      %p212 = scmp.ne.s32.totalorder %s203, %s204
      %p213 = scmp.eq.s32.totalorder %s25, 0
      %p214 = por %p212, %p213
      %p215 = scmp.ne.s32.totalorder %s203, %s204
      %p216 = scmp.eq.s32.totalorder %s26, 1
      %p217 = por %p215, %p216
      %p219 = scmp.ne.s32.totalorder %s204, %s218
      %p220 = scmp.eq.s32.totalorder %s26, 0
      %p221 = por %p219, %p220
      %s223 = sadd.s32 %s222, 1
      %p226 = scmp.eq.s32.totalorder %s20, 1
      %p227 = scmp.ne.s32.totalorder %s222, %s224
      %p228 = scmp.eq.s32.totalorder %s20, 0
      %p229 = por %p227, %p228
      %p230 = scmp.ne.s32.totalorder %s222, %s224
      %p231 = scmp.eq.s32.totalorder %s25, 1
      %p232 = por %p230, %p231
      %p233 = scmp.ne.s32.totalorder %s224, %s225
      %p234 = scmp.eq.s32.totalorder %s25, 0
      %p235 = por %p233, %p234
      %p236 = scmp.ne.s32.totalorder %s224, %s225
      %p237 = scmp.eq.s32.totalorder %s26, 1
      %p238 = por %p236, %p237
      %p240 = scmp.ne.s32.totalorder %s225, %s239
      %p241 = scmp.eq.s32.totalorder %s26, 0
      %p242 = por %p240, %p241
      %s244 = sadd.s32 %s243, 1
      %p247 = scmp.eq.s32.totalorder %s20, 1
      %p248 = scmp.ne.s32.totalorder %s243, %s245
      %p249 = scmp.eq.s32.totalorder %s20, 0
      %p250 = por %p248, %p249
      %p251 = scmp.ne.s32.totalorder %s243, %s245
      %p252 = scmp.eq.s32.totalorder %s25, 1
      %p253 = por %p251, %p252
      %p254 = scmp.ne.s32.totalorder %s245, %s246
      %p255 = scmp.eq.s32.totalorder %s25, 0
      %p256 = por %p254, %p255
      %p257 = scmp.ne.s32.totalorder %s245, %s246
      %p258 = scmp.eq.s32.totalorder %s26, 1
      %p259 = por %p257, %p258
      %p261 = scmp.ne.s32.totalorder %s246, %s260
      %p262 = scmp.eq.s32.totalorder %s26, 0
      %p263 = por %p261, %p262
      %s264 = ssub.s32 %s20, %s27
      %p265 = scmp.eq.s32.totalorder %s264, 0
      %s267 = sadd.s32 %s266, 1
      %s268 = scalar_select %p265, %s266, %s267
      %p271 = pneg %p265
      %p272 = scmp.eq.s32.totalorder %s20, 1
      %p273 = por %p271, %p272
      %p274 = scmp.ne.s32.totalorder %s266, %s269
      %p275 = scmp.eq.s32.totalorder %s20, 0
      %p276 = por %p274, %p275
      %p277 = scmp.ne.s32.totalorder %s266, %s269
      %p278 = scmp.eq.s32.totalorder %s25, 1
      %p279 = por %p277, %p278
      %p280 = scmp.ne.s32.totalorder %s269, %s270
      %p281 = scmp.eq.s32.totalorder %s25, 0
      %p282 = por %p280, %p281
      %p283 = scmp.ne.s32.totalorder %s269, %s270
      %p284 = scmp.eq.s32.totalorder %s26, 1
      %p285 = por %p283, %p284
      %p287 = scmp.ne.s32.totalorder %s270, %s286
      %p288 = scmp.eq.s32.totalorder %s26, 0
      %p289 = por %p287, %p288
      %p290 = scmp.le.s32.totalorder 1, %s20
      %p291 = scmp.lt.s32.totalorder %s20, 3
      %p292 = pnand %p290, %p291
      %p293 = pneg %p292
      // Predicated region
      $region9: #{transformer_forward.3} parent=5 // pred_check
        _
      $region10: #{transformer_forward.3} parent=5 // pred_check_branch
        %295 = sbr.rel (%p292) target = $region12
      $region11: #{transformer_forward.3} parent=5 // pred_region
        %s296 = ssub.s32 %s20, 1
        // Predicated region
        $region13: #{transformer_forward.3} parent=11 // pred_check
          %p297 = pneg %p67
        $region14: #{transformer_forward.3} parent=11 // pred_check_branch
          %299 = sbr.rel (%p297) target = $region16
        $region15: #{transformer_forward.3} parent=11 // pred_region
          _
        $region16: #{transformer_forward.3} parent=11 // pred_fallthru
          _
        // Predicated region
        $region17: #{transformer_forward.3} parent=11 // pred_check
          %p300 = pneg %p88
        $region18: #{transformer_forward.3} parent=11 // pred_check_branch
          %302 = sbr.rel (%p300) target = $region20
        $region19: #{transformer_forward.3} parent=11 // pred_region
          _
        $region20: #{transformer_forward.3} parent=11 // pred_fallthru
          _
        // Predicated region
        $region21: #{transformer_forward.3} parent=11 // pred_check
          %p303 = pneg %p109
        $region22: #{transformer_forward.3} parent=11 // pred_check_branch
          %305 = sbr.rel (%p303) target = $region24
        $region23: #{transformer_forward.3} parent=11 // pred_region
          _
        $region24: #{transformer_forward.3} parent=11 // pred_fallthru
          _
        // Predicated region
        $region25: #{transformer_forward.3} parent=11 // pred_check
          %p306 = pneg %p130
        $region26: #{transformer_forward.3} parent=11 // pred_check_branch
          %308 = sbr.rel (%p306) target = $region28
        $region27: #{transformer_forward.3} parent=11 // pred_region
          _
        $region28: #{transformer_forward.3} parent=11 // pred_fallthru
          _
        // Predicated region
        $region29: #{transformer_forward.3} parent=11 // pred_check
          %p309 = pneg %p151
        $region30: #{transformer_forward.3} parent=11 // pred_check_branch
          %311 = sbr.rel (%p309) target = $region32
        $region31: #{transformer_forward.3} parent=11 // pred_region
          _
        $region32: #{transformer_forward.3} parent=11 // pred_fallthru
          _
        // Predicated region
        $region33: #{transformer_forward.3} parent=11 // pred_check
          %p312 = pneg %p172
        $region34: #{transformer_forward.3} parent=11 // pred_check_branch
          %314 = sbr.rel (%p312) target = $region36
        $region35: #{transformer_forward.3} parent=11 // pred_region
          _
        $region36: #{transformer_forward.3} parent=11 // pred_fallthru
          _
        // Predicated region
        $region37: #{transformer_forward.3} parent=11 // pred_check
          %p315 = pneg %p193
        $region38: #{transformer_forward.3} parent=11 // pred_check_branch
          %317 = sbr.rel (%p315) target = $region40
        $region39: #{transformer_forward.3} parent=11 // pred_region
          _
        $region40: #{transformer_forward.3} parent=11 // pred_fallthru
          _
        // Predicated region
        $region41: #{transformer_forward.3} parent=11 // pred_check
          %p318 = pneg %p214
        $region42: #{transformer_forward.3} parent=11 // pred_check_branch
          %320 = sbr.rel (%p318) target = $region44
        $region43: #{transformer_forward.3} parent=11 // pred_region
          _
        $region44: #{transformer_forward.3} parent=11 // pred_fallthru
          _
        // Predicated region
        $region45: #{transformer_forward.3} parent=11 // pred_check
          %p321 = pneg %p235
        $region46: #{transformer_forward.3} parent=11 // pred_check_branch
          %323 = sbr.rel (%p321) target = $region48
        $region47: #{transformer_forward.3} parent=11 // pred_region
          _
        $region48: #{transformer_forward.3} parent=11 // pred_fallthru
          _
        // Predicated region
        $region49: #{transformer_forward.3} parent=11 // pred_check
          %p324 = pneg %p256
        $region50: #{transformer_forward.3} parent=11 // pred_check_branch
          %326 = sbr.rel (%p324) target = $region52
        $region51: #{transformer_forward.3} parent=11 // pred_region
          _
        $region52: #{transformer_forward.3} parent=11 // pred_fallthru
          _
      $region12: #{transformer_forward.3} parent=5 // pred_fallthru
        _
      %p327 = scmp.lt.s32.totalorder %s20, 2
      // Predicated region
      $region53: #{transformer_forward.3} parent=5 // pred_check
        %p328 = pneg %p327
      $region54: #{transformer_forward.3} parent=5 // pred_check_branch
        %330 = sbr.rel (%p328) target = $region56
      $region55: #{transformer_forward.3} parent=5 // pred_region
        // Predicated region
        $region57: #{transformer_forward.3} parent=55 // pred_check
          %p331 = pneg %p40
        $region58: #{transformer_forward.3} parent=55 // pred_check_branch
          %333 = sbr.rel (%p331) target = $region60
        $region59: #{transformer_forward.3} parent=55 // pred_region
          %p334 = scmp.lt.s32.totalorder %s20, 1
          %s335 = scalar_select %p334, %s20, 1
          %s336 = smul.addr %s335, 8
          %s337 = scalar_lea.vmem %s0, %s336
        $region60: #{transformer_forward.3} parent=55 // pred_fallthru
          _
      $region56: #{transformer_forward.3} parent=5 // pred_fallthru
        _
      %p338 = scmp.le.s32.totalorder 1, %s20
      %p339 = scmp.lt.s32.totalorder %s20, 3
      %p340 = pnand %p338, %p339
      %p341 = pneg %p340
      // Predicated region
      $region61: #{transformer_forward.3} parent=5 // pred_check
        _
      $region62: #{transformer_forward.3} parent=5 // pred_check_branch
        %343 = sbr.rel (%p340) target = $region64
      $region63: #{transformer_forward.3} parent=5 // pred_region
        %s344 = ssub.s32 %s20, 1
        %p345 = scmp.lt.s32.totalorder %s25, 1
        %s346 = scalar_select %p345, %s25, 1
        %s347 = smul.addr %s346, 8
        %s348 = scalar_lea.vmem %s0, %s347
        %p349 = pneg %p46
        %p350 = pneg %p43
        %p351 = pneg %p67
        %p352 = pneg %p64
        %p353 = pneg %p88
        %p354 = pneg %p85
        %p355 = pneg %p109
        %p356 = pneg %p106
        %p357 = pneg %p130
        %p358 = pneg %p127
        %p359 = pneg %p151
        %p360 = pneg %p148
        %p361 = pneg %p172
        %p362 = pneg %p169
        %p363 = pneg %p193
        %p364 = pneg %p190
        %p365 = pneg %p214
        %p366 = pneg %p211
        %p367 = pneg %p235
        %p368 = pneg %p232
        %p369 = pneg %p256
        %p370 = pneg %p253
        %p371 = pneg %p282
        %p372 = pneg %p279
        %s373 = sand.u32 %s269, 1
        %s374 = scalar_lea.sflag [#allocation3], %s373
        %s375 = sand.u32 %s269, 1
        %s376 = scalar_lea.vmem [#allocation2], %s375
        %p377 = scmp.lt.s32.totalorder %s25, 1
        %s378 = scalar_select %p377, %s25, 1
        %s379 = smul.addr %s378, 8
        %s380 = scalar_lea.vmem %s0, %s379
        %v382 = vld [vmem:[%s380] sm:$0xff]
        %v383 = vld [vmem:[%s8] sm:$0x1]
        %v384 = vld [vmem:[%s8 + $0x1] sm:$0x1]
        %v385 = vld [vmem:[%s8 + $0x2] sm:$0x1]
        %v386 = vld [vmem:[%s8 + $0x3] sm:$0x1]
        %v387 = vld [vmem:[%s8 + $0x4] sm:$0x1]
        %v388 = vld [vmem:[%s8 + $0x5] sm:$0x1]
        %v389 = vld [vmem:[%s8 + $0x6] sm:$0x1]
        %v390 = vld [vmem:[%s8 + $0x7] sm:$0x1]
        %v391 = vld [vmem:[%s8 + $0x8] sm:$0x1]
        %v392 = vpack.c.bf16 %v382, %v382
        %v393 = vld [vmem:[%s1] sm:$0xf]
        %v394 = vld [vmem:[%s1 + $0x4] sm:$0xf]
        %v395 = vld [vmem:[%s1 + $0x8] sm:$0xf]
        %v396 = vld [vmem:[%s1 + $0xc] sm:$0xf]
        %v401 = vunpack.c.l.b16 %v393
        %v402 = vunpack.c.l.b16 %v394
        %v403 = vunpack.c.l.b16 %v395
        %v404 = vunpack.c.l.b16 %v396
        %v405 = vpack.c.b16 %v402, %v401
        %v406 = vpack.c.b16 %v404, %v403
        %vm409 = vcmask 261120
        %v411 = vsel %vm409, %v392, 0
        %413 = vmatprep.subr.bf16.mxu0 0
        %414 = vmatpush1.bf16.msra.mxu0 %v405
        %415 = vmatprep.subr.bf16.mxu0 0
        %416 = vmatpush1.bf16.msra.mxu0 %v406
        %417 = vmatprep.subr.bf16.mxu0 0
        %418 = vmatpush1.bf16.msra.mxu0 0
        %419 = vmatprep.subr.bf16.mxu0 0
        %420 = vmatpush1.bf16.msra.mxu0 0
        %421 = vmatprep.subr.bf16.mxu0 0
        %422 = vmatpush1.bf16.msra.mxu0 0
        %423 = vmatprep.subr.bf16.mxu0 0
        %424 = vmatpush1.bf16.msra.mxu0 0
        %425 = vmatprep.subr.bf16.mxu0 0
        %426 = vmatpush1.bf16.msra.mxu0 0
        %427 = vmatprep.subr.bf16.mxu0 0
        %428 = vmatpush1.bf16.msra.mxu0 0
        %429 = vmatprep.subr.bf16.mxu0 0
        %430 = vmatpush1.bf16.msra.mxu0 0
        %431 = vmatprep.subr.bf16.mxu0 0
        %432 = vmatpush1.bf16.msra.mxu0 0
        %433 = vmatprep.subr.bf16.mxu0 0
        %434 = vmatpush1.bf16.msra.mxu0 0
        %435 = vmatprep.subr.bf16.mxu0 0
        %436 = vmatpush1.bf16.msra.mxu0 0
        %437 = vmatprep.subr.bf16.mxu0 0
        %438 = vmatpush1.bf16.msra.mxu0 0
        %439 = vmatprep.subr.bf16.mxu0 0
        %440 = vmatpush1.bf16.msra.mxu0 0
        %441 = vmatprep.subr.bf16.mxu0 0
        %442 = vmatpush1.bf16.msra.mxu0 0
        %443 = vmatprep.subr.bf16.mxu0 0
        %444 = vmatpush1.bf16.msra.mxu0 0
        %445 = vmatprep.mubr.bf16.mxu0 0
        %446 = vmatmul.mubr.bf16.gmra.mrb[0].mxu0 %v411
        %v447 = vpop.f32.mrb[0].mxu0
        %v448 = vadd.f32 %v383, %v447
        %v449 = vpop.f32.mrb[0].mxu0
        %v450 = vpop.f32.mrb[0].mxu0
        %v451 = vpop.f32.mrb[0].mxu0
        %452 = vdwg.mxu0
        %v453 = vld [vmem:[%s2] sm:$0xf]
        %v454 = vld [vmem:[%s2 + $0x4] sm:$0xf]
        %v455 = vld [vmem:[%s2 + $0x8] sm:$0xf]
        %v456 = vld [vmem:[%s2 + $0xc] sm:$0xf]
        %v457 = vlaneseq
        %v458 = vshrl.u32 %v457, 7
        %v459 = vsub.s32 0, %v458
        %v460 = vrot.slane %v384, %v459
        %v465 = vunpack.c.l.b16 %v453
        %v466 = vunpack.c.l.b16 %v454
        %v467 = vunpack.c.l.b16 %v455
        %v468 = vunpack.c.l.b16 %v456
        %v469 = vpack.c.b16 %v466, %v465
        %v470 = vpack.c.b16 %v468, %v467
        %473 = vmatprep.subr.bf16.mxu0 0
        %474 = vmatpush1.bf16.msra.mxu0 %v469
        %475 = vmatprep.subr.bf16.mxu0 0
        %476 = vmatpush1.bf16.msra.mxu0 %v470
        %477 = vmatprep.subr.bf16.mxu0 0
        %478 = vmatpush1.bf16.msra.mxu0 0
        %479 = vmatprep.subr.bf16.mxu0 0
        %480 = vmatpush1.bf16.msra.mxu0 0
        %481 = vmatprep.subr.bf16.mxu0 0
        %482 = vmatpush1.bf16.msra.mxu0 0
        %483 = vmatprep.subr.bf16.mxu0 0
        %484 = vmatpush1.bf16.msra.mxu0 0
        %485 = vmatprep.subr.bf16.mxu0 0
        %486 = vmatpush1.bf16.msra.mxu0 0
        %487 = vmatprep.subr.bf16.mxu0 0
        %488 = vmatpush1.bf16.msra.mxu0 0
        %489 = vmatprep.subr.bf16.mxu0 0
        %490 = vmatpush1.bf16.msra.mxu0 0
        %491 = vmatprep.subr.bf16.mxu0 0
        %492 = vmatpush1.bf16.msra.mxu0 0
        %493 = vmatprep.subr.bf16.mxu0 0
        %494 = vmatpush1.bf16.msra.mxu0 0
        %495 = vmatprep.subr.bf16.mxu0 0
        %496 = vmatpush1.bf16.msra.mxu0 0
        %497 = vmatprep.subr.bf16.mxu0 0
        %498 = vmatpush1.bf16.msra.mxu0 0
        %499 = vmatprep.subr.bf16.mxu0 0
        %500 = vmatpush1.bf16.msra.mxu0 0
        %501 = vmatprep.subr.bf16.mxu0 0
        %502 = vmatpush1.bf16.msra.mxu0 0
        %503 = vmatprep.subr.bf16.mxu0 0
        %504 = vmatpush1.bf16.msra.mxu0 0
        %505 = vmatprep.mubr.bf16.mxu0 0
        %506 = vmatmul.mubr.bf16.gmra.mrb[0].mxu0 %v411
        %v507 = vpop.f32.mrb[0].mxu0
        %v508 = vadd.f32 %v460, %v507
        %v509 = vpop.f32.mrb[0].mxu0
        %v510 = vpop.f32.mrb[0].mxu0
        %v511 = vpop.f32.mrb[0].mxu0
        %512 = vdwg.mxu0
        %v513 = vld [vmem:[%s3] sm:$0xf]
        %v514 = vld [vmem:[%s3 + $0x4] sm:$0xf]
        %v515 = vld [vmem:[%s3 + $0x8] sm:$0xf]
        %v516 = vld [vmem:[%s3 + $0xc] sm:$0xf]
        %v517 = vlaneseq
        %v518 = vshrl.u32 %v517, 7
        %v519 = vsub.s32 0, %v518
        %v520 = vrot.slane %v385, %v519
        %v525 = vunpack.c.l.b16 %v513
        %v526 = vunpack.c.l.b16 %v514
        %v527 = vunpack.c.l.b16 %v515
        %v528 = vunpack.c.l.b16 %v516
        %v529 = vpack.c.b16 %v526, %v525
        %v530 = vpack.c.b16 %v528, %v527
        %533 = vmatprep.subr.bf16.mxu0 0
        %534 = vmatpush1.bf16.msra.mxu0 %v529
        %535 = vmatprep.subr.bf16.mxu0 0
        %536 = vmatpush1.bf16.msra.mxu0 %v530
        %537 = vmatprep.subr.bf16.mxu0 0
        %538 = vmatpush1.bf16.msra.mxu0 0
        %539 = vmatprep.subr.bf16.mxu0 0
        %540 = vmatpush1.bf16.msra.mxu0 0
        %541 = vmatprep.subr.bf16.mxu0 0
        %542 = vmatpush1.bf16.msra.mxu0 0
        %543 = vmatprep.subr.bf16.mxu0 0
        %544 = vmatpush1.bf16.msra.mxu0 0
        %545 = vmatprep.subr.bf16.mxu0 0
        %546 = vmatpush1.bf16.msra.mxu0 0
        %547 = vmatprep.subr.bf16.mxu0 0
        %548 = vmatpush1.bf16.msra.mxu0 0
        %549 = vmatprep.subr.bf16.mxu0 0
        %550 = vmatpush1.bf16.msra.mxu0 0
        %551 = vmatprep.subr.bf16.mxu0 0
        %552 = vmatpush1.bf16.msra.mxu0 0
        %553 = vmatprep.subr.bf16.mxu0 0
        %554 = vmatpush1.bf16.msra.mxu0 0
        %555 = vmatprep.subr.bf16.mxu0 0
        %556 = vmatpush1.bf16.msra.mxu0 0
        %557 = vmatprep.subr.bf16.mxu0 0
        %558 = vmatpush1.bf16.msra.mxu0 0
        %559 = vmatprep.subr.bf16.mxu0 0
        %560 = vmatpush1.bf16.msra.mxu0 0
        %561 = vmatprep.subr.bf16.mxu0 0
        %562 = vmatpush1.bf16.msra.mxu0 0
        %563 = vmatprep.subr.bf16.mxu0 0
        %564 = vmatpush1.bf16.msra.mxu0 0
        %565 = vmatprep.mubr.bf16.mxu0 0
        %566 = vmatmul.mubr.bf16.gmra.mrb[0].mxu0 %v411
        %v567 = vpop.f32.mrb[0].mxu0
        %v568 = vadd.f32 %v520, %v567
        %v569 = vpop.f32.mrb[0].mxu0
        %v570 = vpop.f32.mrb[0].mxu0
        %v571 = vpop.f32.mrb[0].mxu0
        %572 = vdwg.mxu0
        %v573 = vpack.c.bf16 %v448, %v448
        %v574 = vpack.c.bf16 %v508, %v508
        %v575 = vpack.c.bf16 %v568, %v568
        %vm576 = vcmask 64512
        %v578 = vsel %vm576, %v573, 0
        %v581 = vsel %vm576, %v574, 0
        %583 = vmatprep.subr.bf16.mxu0 0
        %584 = vmatpush1.bf16.xpose.msra.mxu0 %v581
        %585 = vmatprep.subr.bf16.mxu0 0
        %586 = vmatpush1.bf16.xpose.msra.mxu0 0
        %587 = vmatprep.subr.bf16.mxu0 0
        %588 = vmatpush1.bf16.xpose.msra.mxu0 0
        %589 = vmatprep.subr.bf16.mxu0 0
        %590 = vmatpush1.bf16.xpose.msra.mxu0 0
        %591 = vmatprep.subr.bf16.mxu0 0
        %592 = vmatpush1.bf16.xpose.msra.mxu0 0
        %593 = vmatprep.subr.bf16.mxu0 0
        %594 = vmatpush1.bf16.xpose.msra.mxu0 0
        %595 = vmatprep.subr.bf16.mxu0 0
        %596 = vmatpush1.bf16.xpose.msra.mxu0 0
        %597 = vmatprep.subr.bf16.mxu0 0
        %598 = vmatpush1.bf16.xpose.msra.mxu0 0
        %599 = vmatprep.subr.bf16.mxu0 0
        %600 = vmatpush1.bf16.xpose.msra.mxu0 0
        %601 = vmatprep.subr.bf16.mxu0 0
        %602 = vmatpush1.bf16.xpose.msra.mxu0 0
        %603 = vmatprep.subr.bf16.mxu0 0
        %604 = vmatpush1.bf16.xpose.msra.mxu0 0
        %605 = vmatprep.subr.bf16.mxu0 0
        %606 = vmatpush1.bf16.xpose.msra.mxu0 0
        %607 = vmatprep.subr.bf16.mxu0 0
        %608 = vmatpush1.bf16.xpose.msra.mxu0 0
        %609 = vmatprep.subr.bf16.mxu0 0
        %610 = vmatpush1.bf16.xpose.msra.mxu0 0
        %611 = vmatprep.subr.bf16.mxu0 0
        %612 = vmatpush1.bf16.xpose.msra.mxu0 0
        %613 = vmatprep.subr.bf16.mxu0 0
        %614 = vmatpush1.bf16.xpose.msra.mxu0 0
        %615 = vmatprep.mubr.bf16.mxu0 0
        %616 = vmatmul.mubr.bf16.gmra.mrb[0].mxu0 %v578
        %v617 = vpop.f32.mrb[0].mxu0
        %v618 = vadd.f32 0.0, %v617
        %v619 = vpop.f32.mrb[0].mxu0
        %v620 = vpop.f32.mrb[0].mxu0
        %v621 = vpop.f32.mrb[0].mxu0
        %622 = vdwg.mxu0
        %v623 = vmul.f32 %v618, 0.35355338
        %vm624 = vcmask 57344
        %v625 = vsel %vm624, %v623, -inf
        %626 = vmax.xlane.f32.xlu0 %v625
        %v627 = vpop.xlane.xlu0 %626
        %v628 = vsub.f32 %v623, %v627
        %v629 = vmul.f32 %v628, 1.442695
        %v630 = vpow.pop %v629
        %v631 = vsel %vm624, %v630, 0.0
        %632 = vadd.xlane.f32.xlu0 %v631
        %v633 = vpop.xlane.xlu0 %632
        %v634 = vrcp.pop %v633
        %v635 = vmul.f32 %v630, %v634
        %v636 = vpack.c.bf16 %v635, %v635
        %v638 = vsel %vm576, %v636, 0
        %vm640 = vcmask 1043456
        %v642 = vsel %vm640, %v575, 0
        %644 = vmatprep.subr.bf16.mxu0 0
        %645 = vmatpush1.bf16.msra.mxu0 %v642
        %646 = vmatprep.subr.bf16.mxu0 0
        %647 = vmatpush1.bf16.msra.mxu0 0
        %648 = vmatprep.subr.bf16.mxu0 0
        %649 = vmatpush1.bf16.msra.mxu0 0
        %650 = vmatprep.subr.bf16.mxu0 0
        %651 = vmatpush1.bf16.msra.mxu0 0
        %652 = vmatprep.subr.bf16.mxu0 0
        %653 = vmatpush1.bf16.msra.mxu0 0
        %654 = vmatprep.subr.bf16.mxu0 0
        %655 = vmatpush1.bf16.msra.mxu0 0
        %656 = vmatprep.subr.bf16.mxu0 0
        %657 = vmatpush1.bf16.msra.mxu0 0
        %658 = vmatprep.subr.bf16.mxu0 0
        %659 = vmatpush1.bf16.msra.mxu0 0
        %660 = vmatprep.subr.bf16.mxu0 0
        %661 = vmatpush1.bf16.msra.mxu0 0
        %662 = vmatprep.subr.bf16.mxu0 0
        %663 = vmatpush1.bf16.msra.mxu0 0
        %664 = vmatprep.subr.bf16.mxu0 0
        %665 = vmatpush1.bf16.msra.mxu0 0
        %666 = vmatprep.subr.bf16.mxu0 0
        %667 = vmatpush1.bf16.msra.mxu0 0
        %668 = vmatprep.subr.bf16.mxu0 0
        %669 = vmatpush1.bf16.msra.mxu0 0
        %670 = vmatprep.subr.bf16.mxu0 0
        %671 = vmatpush1.bf16.msra.mxu0 0
        %672 = vmatprep.subr.bf16.mxu0 0
        %673 = vmatpush1.bf16.msra.mxu0 0
        %674 = vmatprep.subr.bf16.mxu0 0
        %675 = vmatpush1.bf16.msra.mxu0 0
        %676 = vmatprep.mubr.bf16.mxu0 0
        %677 = vmatmul.mubr.bf16.gmra.mrb[0].mxu0 %v638
        %v678 = vpop.f32.mrb[0].mxu0
        %v679 = vadd.f32 0.0, %v678
        %v680 = vpop.f32.mrb[0].mxu0
        %v681 = vpop.f32.mrb[0].mxu0
        %v682 = vpop.f32.mrb[0].mxu0
        %683 = vdwg.mxu0
        %685 = vrot.lane.b32.xlu0 %v573, 120
        %v686 = vpop.permute.xlu0 %685
        %688 = vrot.lane.b32.xlu0 %v574, 120
        %v689 = vpop.permute.xlu0 %688
        %v691 = vsel %vm576, %v686, 0
        %v694 = vsel %vm576, %v689, 0
        %696 = vmatprep.subr.bf16.mxu0 0
        %697 = vmatpush1.bf16.xpose.msra.mxu0 %v694
        %698 = vmatprep.subr.bf16.mxu0 0
        %699 = vmatpush1.bf16.xpose.msra.mxu0 0
        %700 = vmatprep.subr.bf16.mxu0 0
        %701 = vmatpush1.bf16.xpose.msra.mxu0 0
        %702 = vmatprep.subr.bf16.mxu0 0
        %703 = vmatpush1.bf16.xpose.msra.mxu0 0
        %704 = vmatprep.subr.bf16.mxu0 0
        %705 = vmatpush1.bf16.xpose.msra.mxu0 0
        %706 = vmatprep.subr.bf16.mxu0 0
        %707 = vmatpush1.bf16.xpose.msra.mxu0 0
        %708 = vmatprep.subr.bf16.mxu0 0
        %709 = vmatpush1.bf16.xpose.msra.mxu0 0
        %710 = vmatprep.subr.bf16.mxu0 0
        %711 = vmatpush1.bf16.xpose.msra.mxu0 0
        %712 = vmatprep.subr.bf16.mxu0 0
        %713 = vmatpush1.bf16.xpose.msra.mxu0 0
        %714 = vmatprep.subr.bf16.mxu0 0
        %715 = vmatpush1.bf16.xpose.msra.mxu0 0
        %716 = vmatprep.subr.bf16.mxu0 0
        %717 = vmatpush1.bf16.xpose.msra.mxu0 0
        %718 = vmatprep.subr.bf16.mxu0 0
        %719 = vmatpush1.bf16.xpose.msra.mxu0 0
        %720 = vmatprep.subr.bf16.mxu0 0
        %721 = vmatpush1.bf16.xpose.msra.mxu0 0
        %722 = vmatprep.subr.bf16.mxu0 0
        %723 = vmatpush1.bf16.xpose.msra.mxu0 0
        %724 = vmatprep.subr.bf16.mxu0 0
        %725 = vmatpush1.bf16.xpose.msra.mxu0 0
        %726 = vmatprep.subr.bf16.mxu0 0
        %727 = vmatpush1.bf16.xpose.msra.mxu0 0
        %728 = vmatprep.mubr.bf16.mxu0 0
        %729 = vmatmul.mubr.bf16.gmra.mrb[0].mxu0 %v691
        %v730 = vpop.f32.mrb[0].mxu0
        %v731 = vadd.f32 0.0, %v730
        %v732 = vpop.f32.mrb[0].mxu0
        %v733 = vpop.f32.mrb[0].mxu0
        %v734 = vpop.f32.mrb[0].mxu0
        %735 = vdwg.mxu0
        %v736 = vmul.f32 %v731, 0.35355338
        %v737 = vsel %vm624, %v736, -inf
        %738 = vmax.xlane.f32.xlu0 %v737
        %v739 = vpop.xlane.xlu0 %738
        %v740 = vsub.f32 %v736, %v739
        %v741 = vmul.f32 %v740, 1.442695
        %v742 = vpow.pop %v741
        %v743 = vsel %vm624, %v742, 0.0
        %744 = vadd.xlane.f32.xlu0 %v743
        %v745 = vpop.xlane.xlu0 %744
        %v746 = vrcp.pop %v745
        %v747 = vmul.f32 %v742, %v746
        %v748 = vpack.c.bf16 %v747, %v747
        %750 = vrot.lane.b32.xlu0 %v575, 120
        %v751 = vpop.permute.xlu0 %750
        %v753 = vsel %vm576, %v748, 0
        %v756 = vsel %vm640, %v751, 0
        %758 = vmatprep.subr.bf16.mxu0 0
        %759 = vmatpush1.bf16.msra.mxu0 %v756
        %760 = vmatprep.subr.bf16.mxu0 0
        %761 = vmatpush1.bf16.msra.mxu0 0
        %762 = vmatprep.subr.bf16.mxu0 0
        %763 = vmatpush1.bf16.msra.mxu0 0
        %764 = vmatprep.subr.bf16.mxu0 0
        %765 = vmatpush1.bf16.msra.mxu0 0
        %766 = vmatprep.subr.bf16.mxu0 0
        %767 = vmatpush1.bf16.msra.mxu0 0
        %768 = vmatprep.subr.bf16.mxu0 0
        %769 = vmatpush1.bf16.msra.mxu0 0
        %770 = vmatprep.subr.bf16.mxu0 0
        %771 = vmatpush1.bf16.msra.mxu0 0
        %772 = vmatprep.subr.bf16.mxu0 0
        %773 = vmatpush1.bf16.msra.mxu0 0
        %774 = vmatprep.subr.bf16.mxu0 0
        %775 = vmatpush1.bf16.msra.mxu0 0
        %776 = vmatprep.subr.bf16.mxu0 0
        %777 = vmatpush1.bf16.msra.mxu0 0
        %778 = vmatprep.subr.bf16.mxu0 0
        %779 = vmatpush1.bf16.msra.mxu0 0
        %780 = vmatprep.subr.bf16.mxu0 0
        %781 = vmatpush1.bf16.msra.mxu0 0
        %782 = vmatprep.subr.bf16.mxu0 0
        %783 = vmatpush1.bf16.msra.mxu0 0
        %784 = vmatprep.subr.bf16.mxu0 0
        %785 = vmatpush1.bf16.msra.mxu0 0
        %786 = vmatprep.subr.bf16.mxu0 0
        %787 = vmatpush1.bf16.msra.mxu0 0
        %788 = vmatprep.subr.bf16.mxu0 0
        %789 = vmatpush1.bf16.msra.mxu0 0
        %790 = vmatprep.mubr.bf16.mxu0 0
        %791 = vmatmul.mubr.bf16.gmra.mrb[0].mxu0 %v753
        %v792 = vpop.f32.mrb[0].mxu0
        %v793 = vadd.f32 0.0, %v792
        %v794 = vpop.f32.mrb[0].mxu0
        %v795 = vpop.f32.mrb[0].mxu0
        %v796 = vpop.f32.mrb[0].mxu0
        %797 = vdwg.mxu0
        %798 = vrot.lane.b32.xlu0 %v573, 112
        %v799 = vpop.permute.xlu0 %798
        %800 = vrot.lane.b32.xlu0 %v574, 112
        %v801 = vpop.permute.xlu0 %800
        %v803 = vsel %vm576, %v799, 0
        %v806 = vsel %vm576, %v801, 0
        %808 = vmatprep.subr.bf16.mxu0 0
        %809 = vmatpush1.bf16.xpose.msra.mxu0 %v806
        %810 = vmatprep.subr.bf16.mxu0 0
        %811 = vmatpush1.bf16.xpose.msra.mxu0 0
        %812 = vmatprep.subr.bf16.mxu0 0
        %813 = vmatpush1.bf16.xpose.msra.mxu0 0
        %814 = vmatprep.subr.bf16.mxu0 0
        %815 = vmatpush1.bf16.xpose.msra.mxu0 0
        %816 = vmatprep.subr.bf16.mxu0 0
        %817 = vmatpush1.bf16.xpose.msra.mxu0 0
        %818 = vmatprep.subr.bf16.mxu0 0
        %819 = vmatpush1.bf16.xpose.msra.mxu0 0
        %820 = vmatprep.subr.bf16.mxu0 0
        %821 = vmatpush1.bf16.xpose.msra.mxu0 0
        %822 = vmatprep.subr.bf16.mxu0 0
        %823 = vmatpush1.bf16.xpose.msra.mxu0 0
        %824 = vmatprep.subr.bf16.mxu0 0
        %825 = vmatpush1.bf16.xpose.msra.mxu0 0
        %826 = vmatprep.subr.bf16.mxu0 0
        %827 = vmatpush1.bf16.xpose.msra.mxu0 0
        %828 = vmatprep.subr.bf16.mxu0 0
        %829 = vmatpush1.bf16.xpose.msra.mxu0 0
        %830 = vmatprep.subr.bf16.mxu0 0
        %831 = vmatpush1.bf16.xpose.msra.mxu0 0
        %832 = vmatprep.subr.bf16.mxu0 0
        %833 = vmatpush1.bf16.xpose.msra.mxu0 0
        %834 = vmatprep.subr.bf16.mxu0 0
        %835 = vmatpush1.bf16.xpose.msra.mxu0 0
        %836 = vmatprep.subr.bf16.mxu0 0
        %837 = vmatpush1.bf16.xpose.msra.mxu0 0
        %838 = vmatprep.subr.bf16.mxu0 0
        %839 = vmatpush1.bf16.xpose.msra.mxu0 0
        %840 = vmatprep.mubr.bf16.mxu0 0
        %841 = vmatmul.mubr.bf16.gmra.mrb[0].mxu0 %v803
        %v842 = vpop.f32.mrb[0].mxu0
        %v843 = vadd.f32 0.0, %v842
        %v844 = vpop.f32.mrb[0].mxu0
        %v845 = vpop.f32.mrb[0].mxu0
        %v846 = vpop.f32.mrb[0].mxu0
        %847 = vdwg.mxu0
        %v848 = vmul.f32 %v843, 0.35355338
        %v849 = vsel %vm624, %v848, -inf
        %850 = vmax.xlane.f32.xlu0 %v849
        %v851 = vpop.xlane.xlu0 %850
        %v852 = vsub.f32 %v848, %v851
        %v853 = vmul.f32 %v852, 1.442695
        %v854 = vpow.pop %v853
        %v855 = vsel %vm624, %v854, 0.0
        %856 = vadd.xlane.f32.xlu0 %v855
        %v857 = vpop.xlane.xlu0 %856
        %v858 = vrcp.pop %v857
        %v859 = vmul.f32 %v854, %v858
        %v860 = vpack.c.bf16 %v859, %v859
        %861 = vrot.lane.b32.xlu0 %v575, 112
        %v862 = vpop.permute.xlu0 %861
        %v864 = vsel %vm576, %v860, 0
        %v867 = vsel %vm640, %v862, 0
        %869 = vmatprep.subr.bf16.mxu0 0
        %870 = vmatpush1.bf16.msra.mxu0 %v867
        %871 = vmatprep.subr.bf16.mxu0 0
        %872 = vmatpush1.bf16.msra.mxu0 0
        %873 = vmatprep.subr.bf16.mxu0 0
        %874 = vmatpush1.bf16.msra.mxu0 0
        %875 = vmatprep.subr.bf16.mxu0 0
        %876 = vmatpush1.bf16.msra.mxu0 0
        %877 = vmatprep.subr.bf16.mxu0 0
        %878 = vmatpush1.bf16.msra.mxu0 0
        %879 = vmatprep.subr.bf16.mxu0 0
        %880 = vmatpush1.bf16.msra.mxu0 0
        %881 = vmatprep.subr.bf16.mxu0 0
        %882 = vmatpush1.bf16.msra.mxu0 0
        %883 = vmatprep.subr.bf16.mxu0 0
        %884 = vmatpush1.bf16.msra.mxu0 0
        %885 = vmatprep.subr.bf16.mxu0 0
        %886 = vmatpush1.bf16.msra.mxu0 0
        %887 = vmatprep.subr.bf16.mxu0 0
        %888 = vmatpush1.bf16.msra.mxu0 0
        %889 = vmatprep.subr.bf16.mxu0 0
        %890 = vmatpush1.bf16.msra.mxu0 0
        %891 = vmatprep.subr.bf16.mxu0 0
        %892 = vmatpush1.bf16.msra.mxu0 0
        %893 = vmatprep.subr.bf16.mxu0 0
        %894 = vmatpush1.bf16.msra.mxu0 0
        %895 = vmatprep.subr.bf16.mxu0 0
        %896 = vmatpush1.bf16.msra.mxu0 0
        %897 = vmatprep.subr.bf16.mxu0 0
        %898 = vmatpush1.bf16.msra.mxu0 0
        %899 = vmatprep.subr.bf16.mxu0 0
        %900 = vmatpush1.bf16.msra.mxu0 0
        %901 = vmatprep.mubr.bf16.mxu0 0
        %902 = vmatmul.mubr.bf16.gmra.mrb[0].mxu0 %v864
        %v903 = vpop.f32.mrb[0].mxu0
        %v904 = vadd.f32 0.0, %v903
        %v905 = vpop.f32.mrb[0].mxu0
        %v906 = vpop.f32.mrb[0].mxu0
        %v907 = vpop.f32.mrb[0].mxu0
        %908 = vdwg.mxu0
        %909 = vrot.lane.b32.xlu0 %v573, 104
        %v910 = vpop.permute.xlu0 %909
        %911 = vrot.lane.b32.xlu0 %v574, 104
        %v912 = vpop.permute.xlu0 %911
        %v914 = vsel %vm576, %v910, 0
        %v917 = vsel %vm576, %v912, 0
        %919 = vmatprep.subr.bf16.mxu0 0
        %920 = vmatpush1.bf16.xpose.msra.mxu0 %v917
        %921 = vmatprep.subr.bf16.mxu0 0
        %922 = vmatpush1.bf16.xpose.msra.mxu0 0
        %923 = vmatprep.subr.bf16.mxu0 0
        %924 = vmatpush1.bf16.xpose.msra.mxu0 0
        %925 = vmatprep.subr.bf16.mxu0 0
        %926 = vmatpush1.bf16.xpose.msra.mxu0 0
        %927 = vmatprep.subr.bf16.mxu0 0
        %928 = vmatpush1.bf16.xpose.msra.mxu0 0
        %929 = vmatprep.subr.bf16.mxu0 0
        %930 = vmatpush1.bf16.xpose.msra.mxu0 0
        %931 = vmatprep.subr.bf16.mxu0 0
        %932 = vmatpush1.bf16.xpose.msra.mxu0 0
        %933 = vmatprep.subr.bf16.mxu0 0
        %934 = vmatpush1.bf16.xpose.msra.mxu0 0
        %935 = vmatprep.subr.bf16.mxu0 0
        %936 = vmatpush1.bf16.xpose.msra.mxu0 0
        %937 = vmatprep.subr.bf16.mxu0 0
        %938 = vmatpush1.bf16.xpose.msra.mxu0 0
        %939 = vmatprep.subr.bf16.mxu0 0
        %940 = vmatpush1.bf16.xpose.msra.mxu0 0
        %941 = vmatprep.subr.bf16.mxu0 0
        %942 = vmatpush1.bf16.xpose.msra.mxu0 0
        %943 = vmatprep.subr.bf16.mxu0 0
        %944 = vmatpush1.bf16.xpose.msra.mxu0 0
        %945 = vmatprep.subr.bf16.mxu0 0
        %946 = vmatpush1.bf16.xpose.msra.mxu0 0
        %947 = vmatprep.subr.bf16.mxu0 0
        %948 = vmatpush1.bf16.xpose.msra.mxu0 0
        %949 = vmatprep.subr.bf16.mxu0 0
        %950 = vmatpush1.bf16.xpose.msra.mxu0 0
        %951 = vmatprep.mubr.bf16.mxu0 0
        %952 = vmatmul.mubr.bf16.gmra.mrb[0].mxu0 %v914
        %v953 = vpop.f32.mrb[0].mxu0
        %v954 = vadd.f32 0.0, %v953
        %v955 = vpop.f32.mrb[0].mxu0
        %v956 = vpop.f32.mrb[0].mxu0
        %v957 = vpop.f32.mrb[0].mxu0
        %958 = vdwg.mxu0
        %v959 = vmul.f32 %v954, 0.35355338
        %v960 = vsel %vm624, %v959, -inf
        %961 = vmax.xlane.f32.xlu0 %v960
        %v962 = vpop.xlane.xlu0 %961
        %v963 = vsub.f32 %v959, %v962
        %v964 = vmul.f32 %v963, 1.442695
        %v965 = vpow.pop %v964
        %v966 = vsel %vm624, %v965, 0.0
        %967 = vadd.xlane.f32.xlu0 %v966
        %v968 = vpop.xlane.xlu0 %967
        %v969 = vrcp.pop %v968
        %v970 = vmul.f32 %v965, %v969
        %v971 = vpack.c.bf16 %v970, %v970
        %972 = vrot.lane.b32.xlu0 %v575, 104
        %v973 = vpop.permute.xlu0 %972
        %v975 = vsel %vm576, %v971, 0
        %v978 = vsel %vm640, %v973, 0
        %980 = vmatprep.subr.bf16.mxu0 0
        %981 = vmatpush1.bf16.msra.mxu0 %v978
        %982 = vmatprep.subr.bf16.mxu0 0
        %983 = vmatpush1.bf16.msra.mxu0 0
        %984 = vmatprep.subr.bf16.mxu0 0
        %985 = vmatpush1.bf16.msra.mxu0 0
        %986 = vmatprep.subr.bf16.mxu0 0
        %987 = vmatpush1.bf16.msra.mxu0 0
        %988 = vmatprep.subr.bf16.mxu0 0
        %989 = vmatpush1.bf16.msra.mxu0 0
        %990 = vmatprep.subr.bf16.mxu0 0
        %991 = vmatpush1.bf16.msra.mxu0 0
        %992 = vmatprep.subr.bf16.mxu0 0
        %993 = vmatpush1.bf16.msra.mxu0 0
        %994 = vmatprep.subr.bf16.mxu0 0
        %995 = vmatpush1.bf16.msra.mxu0 0
        %996 = vmatprep.subr.bf16.mxu0 0
        %997 = vmatpush1.bf16.msra.mxu0 0
        %998 = vmatprep.subr.bf16.mxu0 0
        %999 = vmatpush1.bf16.msra.mxu0 0
        %1000 = vmatprep.subr.bf16.mxu0 0
        %1001 = vmatpush1.bf16.msra.mxu0 0
        %1002 = vmatprep.subr.bf16.mxu0 0
        %1003 = vmatpush1.bf16.msra.mxu0 0
        %1004 = vmatprep.subr.bf16.mxu0 0
        %1005 = vmatpush1.bf16.msra.mxu0 0
        %1006 = vmatprep.subr.bf16.mxu0 0
        %1007 = vmatpush1.bf16.msra.mxu0 0
        %1008 = vmatprep.subr.bf16.mxu0 0
        %1009 = vmatpush1.bf16.msra.mxu0 0
        %1010 = vmatprep.subr.bf16.mxu0 0
        %1011 = vmatpush1.bf16.msra.mxu0 0
        %1012 = vmatprep.mubr.bf16.mxu0 0
        %1013 = vmatmul.mubr.bf16.gmra.mrb[0].mxu0 %v975
        %v1014 = vpop.f32.mrb[0].mxu0
        %v1015 = vadd.f32 0.0, %v1014
        %v1016 = vpop.f32.mrb[0].mxu0
        %v1017 = vpop.f32.mrb[0].mxu0
        %v1018 = vpop.f32.mrb[0].mxu0
        %1019 = vdwg.mxu0
        %1021 = vrot.lane.b32.xlu0 %v793, 8
        %v1022 = vpop.permute.xlu0 %1021
        %1025 = vrot.lane.b32.xlu0 %v904, 16
        %v1026 = vpop.permute.xlu0 %1025
        %1029 = vrot.lane.b32.xlu0 %v1015, 24
        %v1030 = vpop.permute.xlu0 %1029
        %v1032 = vsel %vm576, %v679, %v1022
        %vm1033 = vcmask 130048
        %v1034 = vsel %vm1033, %v1032, %v1026
        %vm1035 = vcmask 195584
        %v1036 = vsel %vm1035, %v1034, %v1030
        %v1037 = vpack.c.bf16 %v1036, %v1036
        %v1038 = vld [vmem:[%s4] sm:$0xf]
        %v1039 = vld [vmem:[%s4 + $0x4] sm:$0xf]
        %v1040 = vld [vmem:[%s4 + $0x8] sm:$0xf]
        %v1041 = vld [vmem:[%s4 + $0xc] sm:$0xf]
        %v1046 = vunpack.c.l.b16 %v1038
        %v1047 = vunpack.c.l.b16 %v1039
        %v1048 = vunpack.c.l.b16 %v1040
        %v1049 = vunpack.c.l.b16 %v1041
        %v1050 = vpack.c.b16 %v1047, %v1046
        %v1051 = vpack.c.b16 %v1049, %v1048
        %v1055 = vsel %vm409, %v1037, 0
        %1057 = vmatprep.subr.bf16.mxu0 0
        %1058 = vmatpush1.bf16.msra.mxu0 %v1050
        %1059 = vmatprep.subr.bf16.mxu0 0
        %1060 = vmatpush1.bf16.msra.mxu0 %v1051
        %1061 = vmatprep.subr.bf16.mxu0 0
        %1062 = vmatpush1.bf16.msra.mxu0 0
        %1063 = vmatprep.subr.bf16.mxu0 0
        %1064 = vmatpush1.bf16.msra.mxu0 0
        %1065 = vmatprep.subr.bf16.mxu0 0
        %1066 = vmatpush1.bf16.msra.mxu0 0
        %1067 = vmatprep.subr.bf16.mxu0 0
        %1068 = vmatpush1.bf16.msra.mxu0 0
        %1069 = vmatprep.subr.bf16.mxu0 0
        %1070 = vmatpush1.bf16.msra.mxu0 0
        %1071 = vmatprep.subr.bf16.mxu0 0
        %1072 = vmatpush1.bf16.msra.mxu0 0
        %1073 = vmatprep.subr.bf16.mxu0 0
        %1074 = vmatpush1.bf16.msra.mxu0 0
        %1075 = vmatprep.subr.bf16.mxu0 0
        %1076 = vmatpush1.bf16.msra.mxu0 0
        %1077 = vmatprep.subr.bf16.mxu0 0
        %1078 = vmatpush1.bf16.msra.mxu0 0
        %1079 = vmatprep.subr.bf16.mxu0 0
        %1080 = vmatpush1.bf16.msra.mxu0 0
        %1081 = vmatprep.subr.bf16.mxu0 0
        %1082 = vmatpush1.bf16.msra.mxu0 0
        %1083 = vmatprep.subr.bf16.mxu0 0
        %1084 = vmatpush1.bf16.msra.mxu0 0
        %1085 = vmatprep.subr.bf16.mxu0 0
        %1086 = vmatpush1.bf16.msra.mxu0 0
        %1087 = vmatprep.subr.bf16.mxu0 0
        %1088 = vmatpush1.bf16.msra.mxu0 0
        %1089 = vmatprep.mubr.bf16.mxu0 0
        %1090 = vmatmul.mubr.bf16.gmra.mrb[0].mxu0 %v1055
        %v1091 = vpop.f32.mrb[0].mxu0
        %v1092 = vadd.f32 %v386, %v1091
        %v1093 = vpop.f32.mrb[0].mxu0
        %v1094 = vpop.f32.mrb[0].mxu0
        %v1095 = vpop.f32.mrb[0].mxu0
        %1096 = vdwg.mxu0
        %v1097 = vadd.f32 %v382, %v1092
        %vm1098 = vcmask 253952
        %v1099 = vsel %vm1098, %v1097, 0.0
        %1100 = vadd.xlane.f32.xlu0 %v1099
        %v1101 = vpop.xlane.xlu0 %1100
        %v1102 = vrcp.pop 32.0
        %v1103 = vmul.f32 %v1101, %v1102
        %v1104 = vsub.f32 %v1097, %v1103
        %v1105 = vmul.f32 %v1104, %v1104
        %v1106 = vsel %vm1098, %v1105, 0.0
        %1107 = vadd.xlane.f32.xlu0 %v1106
        %v1108 = vpop.xlane.xlu0 %1107
        %v1109 = vmul.f32 %v1108, %v1102
        %v1110 = vadd.f32 %v1109, 1e-05
        %v1111 = vrsqrt.pop %v1110
        %v1112 = vmul.f32 %v1104, %v1111
        %v1113 = vmul.f32 %v1112, %v387
        %v1114 = vadd.f32 %v1113, %v388
        %v1115 = vpack.c.bf16 %v1114, %v1114
        %v1116 = vld [vmem:[%s5] sm:$0xff]
        %v1117 = vld [vmem:[%s5 + $0x8] sm:$0xff]
        %v1118 = vld [vmem:[%s5 + $0x10] sm:$0xff]
        %v1119 = vld [vmem:[%s5 + $0x18] sm:$0xff]
        %v1120 = vld [vmem:[%s5 + $0x20] sm:$0xff]
        %v1121 = vld [vmem:[%s5 + $0x28] sm:$0xff]
        %v1122 = vld [vmem:[%s5 + $0x30] sm:$0xff]
        %v1123 = vld [vmem:[%s5 + $0x38] sm:$0xff]
        %v1124 = vld [vmem:[%s5 + $0x40] sm:$0xff]
        %v1125 = vld [vmem:[%s5 + $0x48] sm:$0xff]
        %v1126 = vld [vmem:[%s5 + $0x50] sm:$0xff]
        %v1127 = vld [vmem:[%s5 + $0x58] sm:$0xff]
        %v1128 = vld [vmem:[%s5 + $0x60] sm:$0xff]
        %v1129 = vld [vmem:[%s5 + $0x68] sm:$0xff]
        %v1130 = vld [vmem:[%s5 + $0x70] sm:$0xff]
        %v1131 = vld [vmem:[%s5 + $0x78] sm:$0xff]
        %v1132 = vld [vmem:[%s5 + $0x80] sm:$0xff]
        %v1133 = vld [vmem:[%s5 + $0x88] sm:$0xff]
        %v1134 = vld [vmem:[%s5 + $0x90] sm:$0xff]
        %v1135 = vld [vmem:[%s5 + $0x98] sm:$0xff]
        %v1136 = vld [vmem:[%s5 + $0xa0] sm:$0xff]
        %v1137 = vld [vmem:[%s5 + $0xa8] sm:$0xff]
        %v1138 = vld [vmem:[%s5 + $0xb0] sm:$0xff]
        %v1139 = vld [vmem:[%s5 + $0xb8] sm:$0xff]
        %v1140 = vld [vmem:[%s5 + $0xc0] sm:$0xff]
        %v1141 = vld [vmem:[%s5 + $0xc8] sm:$0xff]
        %v1142 = vld [vmem:[%s5 + $0xd0] sm:$0xff]
        %v1143 = vld [vmem:[%s5 + $0xd8] sm:$0xff]
        %v1144 = vld [vmem:[%s5 + $0xe0] sm:$0xff]
        %v1145 = vld [vmem:[%s5 + $0xe8] sm:$0xff]
        %v1146 = vld [vmem:[%s5 + $0xf0] sm:$0xff]
        %v1147 = vld [vmem:[%s5 + $0xf8] sm:$0xff]
        %v1148 = vld [vmem:[%s7] sm:$0xff]
        %v1149 = vld [vmem:[%s7 + $0x8] sm:$0xff]
        %v1182 = vunpack.c.l.b16 %v1116
        %v1183 = vunpack.c.h.b16 %v1116
        %v1184 = vunpack.c.l.b16 %v1117
        %v1185 = vunpack.c.h.b16 %v1117
        %v1186 = vunpack.c.l.b16 %v1118
        %v1187 = vunpack.c.h.b16 %v1118
        %v1188 = vunpack.c.l.b16 %v1119
        %v1189 = vunpack.c.h.b16 %v1119
        %v1190 = vunpack.c.l.b16 %v1120
        %v1191 = vunpack.c.h.b16 %v1120
        %v1192 = vunpack.c.l.b16 %v1121
        %v1193 = vunpack.c.h.b16 %v1121
        %v1194 = vunpack.c.l.b16 %v1122
        %v1195 = vunpack.c.h.b16 %v1122
        %v1196 = vunpack.c.l.b16 %v1123
        %v1197 = vunpack.c.h.b16 %v1123
        %v1198 = vunpack.c.l.b16 %v1124
        %v1199 = vunpack.c.h.b16 %v1124
        %v1200 = vunpack.c.l.b16 %v1125
        %v1201 = vunpack.c.h.b16 %v1125
        %v1202 = vunpack.c.l.b16 %v1126
        %v1203 = vunpack.c.h.b16 %v1126
        %v1204 = vunpack.c.l.b16 %v1127
        %v1205 = vunpack.c.h.b16 %v1127
        %v1206 = vunpack.c.l.b16 %v1128
        %v1207 = vunpack.c.h.b16 %v1128
        %v1208 = vunpack.c.l.b16 %v1129
        %v1209 = vunpack.c.h.b16 %v1129
        %v1210 = vunpack.c.l.b16 %v1130
        %v1211 = vunpack.c.h.b16 %v1130
        %v1212 = vunpack.c.l.b16 %v1131
        %v1213 = vunpack.c.h.b16 %v1131
        %v1214 = vunpack.c.l.b16 %v1132
        %v1215 = vunpack.c.h.b16 %v1132
        %v1216 = vunpack.c.l.b16 %v1133
        %v1217 = vunpack.c.h.b16 %v1133
        %v1218 = vunpack.c.l.b16 %v1134
        %v1219 = vunpack.c.h.b16 %v1134
        %v1220 = vunpack.c.l.b16 %v1135
        %v1221 = vunpack.c.h.b16 %v1135
        %v1222 = vunpack.c.l.b16 %v1136
        %v1223 = vunpack.c.h.b16 %v1136
        %v1224 = vunpack.c.l.b16 %v1137
        %v1225 = vunpack.c.h.b16 %v1137
        %v1226 = vunpack.c.l.b16 %v1138
        %v1227 = vunpack.c.h.b16 %v1138
        %v1228 = vunpack.c.l.b16 %v1139
        %v1229 = vunpack.c.h.b16 %v1139
        %v1230 = vunpack.c.l.b16 %v1140
        %v1231 = vunpack.c.h.b16 %v1140
        %v1232 = vunpack.c.l.b16 %v1141
        %v1233 = vunpack.c.h.b16 %v1141
        %v1234 = vunpack.c.l.b16 %v1142
        %v1235 = vunpack.c.h.b16 %v1142
        %v1236 = vunpack.c.l.b16 %v1143
        %v1237 = vunpack.c.h.b16 %v1143
        %v1238 = vunpack.c.l.b16 %v1144
        %v1239 = vunpack.c.h.b16 %v1144
        %v1240 = vunpack.c.l.b16 %v1145
        %v1241 = vunpack.c.h.b16 %v1145
        %v1242 = vunpack.c.l.b16 %v1146
        %v1243 = vunpack.c.h.b16 %v1146
        %v1244 = vunpack.c.l.b16 %v1147
        %v1245 = vunpack.c.h.b16 %v1147
        %v1246 = vpack.c.b16 %v1198, %v1182
        %v1247 = vpack.c.b16 %v1199, %v1183
        %v1248 = vpack.c.b16 %v1200, %v1184
        %v1249 = vpack.c.b16 %v1201, %v1185
        %v1250 = vpack.c.b16 %v1202, %v1186
        %v1251 = vpack.c.b16 %v1203, %v1187
        %v1252 = vpack.c.b16 %v1204, %v1188
        %v1253 = vpack.c.b16 %v1205, %v1189
        %v1254 = vpack.c.b16 %v1206, %v1190
        %v1255 = vpack.c.b16 %v1207, %v1191
        %v1256 = vpack.c.b16 %v1208, %v1192
        %v1257 = vpack.c.b16 %v1209, %v1193
        %v1258 = vpack.c.b16 %v1210, %v1194
        %v1259 = vpack.c.b16 %v1211, %v1195
        %v1260 = vpack.c.b16 %v1212, %v1196
        %v1261 = vpack.c.b16 %v1213, %v1197
        %v1262 = vpack.c.b16 %v1230, %v1214
        %v1263 = vpack.c.b16 %v1231, %v1215
        %v1264 = vpack.c.b16 %v1232, %v1216
        %v1265 = vpack.c.b16 %v1233, %v1217
        %v1266 = vpack.c.b16 %v1234, %v1218
        %v1267 = vpack.c.b16 %v1235, %v1219
        %v1268 = vpack.c.b16 %v1236, %v1220
        %v1269 = vpack.c.b16 %v1237, %v1221
        %v1270 = vpack.c.b16 %v1238, %v1222
        %v1271 = vpack.c.b16 %v1239, %v1223
        %v1272 = vpack.c.b16 %v1240, %v1224
        %v1273 = vpack.c.b16 %v1241, %v1225
        %v1274 = vpack.c.b16 %v1242, %v1226
        %v1275 = vpack.c.b16 %v1243, %v1227
        %v1276 = vpack.c.b16 %v1244, %v1228
        %v1277 = vpack.c.b16 %v1245, %v1229
        %v1312 = vlaneseq
        %v1313 = vshrl.u32 %v1312, 7
        %v1314 = vsub.s32 0, %v1313
        %v1315 = vrot.slane %v1148, %v1314
        %v1316 = vlaneseq
        %v1317 = vshrl.u32 %v1316, 7
        %v1318 = vsub.s32 1, %v1317
        %v1319 = vrot.slane %v1148, %v1318
        %v1320 = vlaneseq
        %v1321 = vshrl.u32 %v1320, 7
        %v1322 = vsub.s32 2, %v1321
        %v1323 = vrot.slane %v1148, %v1322
        %v1324 = vlaneseq
        %v1325 = vshrl.u32 %v1324, 7
        %v1326 = vsub.s32 3, %v1325
        %v1327 = vrot.slane %v1148, %v1326
        %v1328 = vlaneseq
        %v1329 = vshrl.u32 %v1328, 7
        %v1330 = vsub.s32 4, %v1329
        %v1331 = vrot.slane %v1148, %v1330
        %v1332 = vlaneseq
        %v1333 = vshrl.u32 %v1332, 7
        %v1334 = vsub.s32 5, %v1333
        %v1335 = vrot.slane %v1148, %v1334
        %v1336 = vlaneseq
        %v1337 = vshrl.u32 %v1336, 7
        %v1338 = vsub.s32 6, %v1337
        %v1339 = vrot.slane %v1148, %v1338
        %v1340 = vlaneseq
        %v1341 = vshrl.u32 %v1340, 7
        %v1342 = vsub.s32 7, %v1341
        %v1343 = vrot.slane %v1148, %v1342
        %v1344 = vlaneseq
        %v1345 = vshrl.u32 %v1344, 7
        %v1346 = vsub.s32 0, %v1345
        %v1347 = vrot.slane %v1149, %v1346
        %v1348 = vlaneseq
        %v1349 = vshrl.u32 %v1348, 7
        %v1350 = vsub.s32 1, %v1349
        %v1351 = vrot.slane %v1149, %v1350
        %v1352 = vlaneseq
        %v1353 = vshrl.u32 %v1352, 7
        %v1354 = vsub.s32 2, %v1353
        %v1355 = vrot.slane %v1149, %v1354
        %v1356 = vlaneseq
        %v1357 = vshrl.u32 %v1356, 7
        %v1358 = vsub.s32 3, %v1357
        %v1359 = vrot.slane %v1149, %v1358
        %v1360 = vlaneseq
        %v1361 = vshrl.u32 %v1360, 7
        %v1362 = vsub.s32 4, %v1361
        %v1363 = vrot.slane %v1149, %v1362
        %v1364 = vlaneseq
        %v1365 = vshrl.u32 %v1364, 7
        %v1366 = vsub.s32 5, %v1365
        %v1367 = vrot.slane %v1149, %v1366
        %v1368 = vlaneseq
        %v1369 = vshrl.u32 %v1368, 7
        %v1370 = vsub.s32 6, %v1369
        %v1371 = vrot.slane %v1149, %v1370
        %v1372 = vlaneseq
        %v1373 = vshrl.u32 %v1372, 7
        %v1374 = vsub.s32 7, %v1373
        %v1375 = vrot.slane %v1149, %v1374
        %v1393 = vsel %vm409, %v1115, 0
        %1395 = vmatprep.subr.bf16.mxu0 %v1247
        %1396 = vmatpush1.bf16.msra.mxu0 %v1246
        %1397 = vmatprep.subr.bf16.mxu0 %v1263
        %1398 = vmatpush1.bf16.msra.mxu0 %v1262
        %1399 = vmatprep.subr.bf16.mxu0 0
        %1400 = vmatpush1.bf16.msra.mxu0 0
        %1401 = vmatprep.subr.bf16.mxu0 0
        %1402 = vmatpush1.bf16.msra.mxu0 0
        %1403 = vmatprep.subr.bf16.mxu0 0
        %1404 = vmatpush1.bf16.msra.mxu0 0
        %1405 = vmatprep.subr.bf16.mxu0 0
        %1406 = vmatpush1.bf16.msra.mxu0 0
        %1407 = vmatprep.subr.bf16.mxu0 0
        %1408 = vmatpush1.bf16.msra.mxu0 0
        %1409 = vmatprep.subr.bf16.mxu0 0
        %1410 = vmatpush1.bf16.msra.mxu0 0
        %1411 = vmatprep.subr.bf16.mxu0 0
        %1412 = vmatpush1.bf16.msra.mxu0 0
        %1413 = vmatprep.subr.bf16.mxu0 0
        %1414 = vmatpush1.bf16.msra.mxu0 0
        %1415 = vmatprep.subr.bf16.mxu0 0
        %1416 = vmatpush1.bf16.msra.mxu0 0
        %1417 = vmatprep.subr.bf16.mxu0 0
        %1418 = vmatpush1.bf16.msra.mxu0 0
        %1419 = vmatprep.subr.bf16.mxu0 0
        %1420 = vmatpush1.bf16.msra.mxu0 0
        %1421 = vmatprep.subr.bf16.mxu0 0
        %1422 = vmatpush1.bf16.msra.mxu0 0
        %1423 = vmatprep.subr.bf16.mxu0 0
        %1424 = vmatpush1.bf16.msra.mxu0 0
        %1425 = vmatprep.subr.bf16.mxu0 0
        %1426 = vmatpush1.bf16.msra.mxu0 0
        %1427 = vmatprep.mubr.bf16.mxu0 0
        %1428 = vmatmul.mubr.bf16.gmra.mrb[0].mxu0 %v1393
        %v1429 = vpop.f32.mrb[0].mxu0
        %v1430 = vadd.f32 %v1315, %v1429
        %v1431 = vpop.f32.mrb[0].mxu0
        %v1432 = vadd.f32 %v1319, %v1431
        %v1433 = vpop.f32.mrb[0].mxu0
        %v1434 = vpop.f32.mrb[0].mxu0
        %1435 = vdwg.mxu0
        %1436 = vmatprep.subr.bf16.mxu0 %v1249
        %1437 = vmatpush1.bf16.msra.mxu0 %v1248
        %1438 = vmatprep.subr.bf16.mxu0 %v1265
        %1439 = vmatpush1.bf16.msra.mxu0 %v1264
        %1440 = vmatprep.subr.bf16.mxu0 0
        %1441 = vmatpush1.bf16.msra.mxu0 0
        %1442 = vmatprep.subr.bf16.mxu0 0
        %1443 = vmatpush1.bf16.msra.mxu0 0
        %1444 = vmatprep.subr.bf16.mxu0 0
        %1445 = vmatpush1.bf16.msra.mxu0 0
        %1446 = vmatprep.subr.bf16.mxu0 0
        %1447 = vmatpush1.bf16.msra.mxu0 0
        %1448 = vmatprep.subr.bf16.mxu0 0
        %1449 = vmatpush1.bf16.msra.mxu0 0
        %1450 = vmatprep.subr.bf16.mxu0 0
        %1451 = vmatpush1.bf16.msra.mxu0 0
        %1452 = vmatprep.subr.bf16.mxu0 0
        %1453 = vmatpush1.bf16.msra.mxu0 0
        %1454 = vmatprep.subr.bf16.mxu0 0
        %1455 = vmatpush1.bf16.msra.mxu0 0
        %1456 = vmatprep.subr.bf16.mxu0 0
        %1457 = vmatpush1.bf16.msra.mxu0 0
        %1458 = vmatprep.subr.bf16.mxu0 0
        %1459 = vmatpush1.bf16.msra.mxu0 0
        %1460 = vmatprep.subr.bf16.mxu0 0
        %1461 = vmatpush1.bf16.msra.mxu0 0
        %1462 = vmatprep.subr.bf16.mxu0 0
        %1463 = vmatpush1.bf16.msra.mxu0 0
        %1464 = vmatprep.subr.bf16.mxu0 0
        %1465 = vmatpush1.bf16.msra.mxu0 0
        %1466 = vmatprep.subr.bf16.mxu0 0
        %1467 = vmatpush1.bf16.msra.mxu0 0
        %1468 = vmatprep.mubr.bf16.mxu0 0
        %1469 = vmatmul.mubr.bf16.gmra.mrb[0].mxu0 %v1393
        %v1470 = vpop.f32.mrb[0].mxu0
        %v1471 = vadd.f32 %v1323, %v1470
        %v1472 = vpop.f32.mrb[0].mxu0
        %v1473 = vadd.f32 %v1327, %v1472
        %v1474 = vpop.f32.mrb[0].mxu0
        %v1475 = vpop.f32.mrb[0].mxu0
        %1476 = vdwg.mxu0
        %1477 = vmatprep.subr.bf16.mxu0 %v1251
        %1478 = vmatpush1.bf16.msra.mxu0 %v1250
        %1479 = vmatprep.subr.bf16.mxu0 %v1267
        %1480 = vmatpush1.bf16.msra.mxu0 %v1266
        %1481 = vmatprep.subr.bf16.mxu0 0
        %1482 = vmatpush1.bf16.msra.mxu0 0
        %1483 = vmatprep.subr.bf16.mxu0 0
        %1484 = vmatpush1.bf16.msra.mxu0 0
        %1485 = vmatprep.subr.bf16.mxu0 0
        %1486 = vmatpush1.bf16.msra.mxu0 0
        %1487 = vmatprep.subr.bf16.mxu0 0
        %1488 = vmatpush1.bf16.msra.mxu0 0
        %1489 = vmatprep.subr.bf16.mxu0 0
        %1490 = vmatpush1.bf16.msra.mxu0 0
        %1491 = vmatprep.subr.bf16.mxu0 0
        %1492 = vmatpush1.bf16.msra.mxu0 0
        %1493 = vmatprep.subr.bf16.mxu0 0
        %1494 = vmatpush1.bf16.msra.mxu0 0
        %1495 = vmatprep.subr.bf16.mxu0 0
        %1496 = vmatpush1.bf16.msra.mxu0 0
        %1497 = vmatprep.subr.bf16.mxu0 0
        %1498 = vmatpush1.bf16.msra.mxu0 0
        %1499 = vmatprep.subr.bf16.mxu0 0
        %1500 = vmatpush1.bf16.msra.mxu0 0
        %1501 = vmatprep.subr.bf16.mxu0 0
        %1502 = vmatpush1.bf16.msra.mxu0 0
        %1503 = vmatprep.subr.bf16.mxu0 0
        %1504 = vmatpush1.bf16.msra.mxu0 0
        %1505 = vmatprep.subr.bf16.mxu0 0
        %1506 = vmatpush1.bf16.msra.mxu0 0
        %1507 = vmatprep.subr.bf16.mxu0 0
        %1508 = vmatpush1.bf16.msra.mxu0 0
        %1509 = vmatprep.mubr.bf16.mxu0 0
        %1510 = vmatmul.mubr.bf16.gmra.mrb[0].mxu0 %v1393
        %v1511 = vpop.f32.mrb[0].mxu0
        %v1512 = vadd.f32 %v1331, %v1511
        %v1513 = vpop.f32.mrb[0].mxu0
        %v1514 = vadd.f32 %v1335, %v1513
        %v1515 = vpop.f32.mrb[0].mxu0
        %v1516 = vpop.f32.mrb[0].mxu0
        %1517 = vdwg.mxu0
        %1518 = vmatprep.subr.bf16.mxu0 %v1253
        %1519 = vmatpush1.bf16.msra.mxu0 %v1252
        %1520 = vmatprep.subr.bf16.mxu0 %v1269
        %1521 = vmatpush1.bf16.msra.mxu0 %v1268
        %1522 = vmatprep.subr.bf16.mxu0 0
        %1523 = vmatpush1.bf16.msra.mxu0 0
        %1524 = vmatprep.subr.bf16.mxu0 0
        %1525 = vmatpush1.bf16.msra.mxu0 0
        %1526 = vmatprep.subr.bf16.mxu0 0
        %1527 = vmatpush1.bf16.msra.mxu0 0
        %1528 = vmatprep.subr.bf16.mxu0 0
        %1529 = vmatpush1.bf16.msra.mxu0 0
        %1530 = vmatprep.subr.bf16.mxu0 0
        %1531 = vmatpush1.bf16.msra.mxu0 0
        %1532 = vmatprep.subr.bf16.mxu0 0
        %1533 = vmatpush1.bf16.msra.mxu0 0
        %1534 = vmatprep.subr.bf16.mxu0 0
        %1535 = vmatpush1.bf16.msra.mxu0 0
        %1536 = vmatprep.subr.bf16.mxu0 0
        %1537 = vmatpush1.bf16.msra.mxu0 0
        %1538 = vmatprep.subr.bf16.mxu0 0
        %1539 = vmatpush1.bf16.msra.mxu0 0
        %1540 = vmatprep.subr.bf16.mxu0 0
        %1541 = vmatpush1.bf16.msra.mxu0 0
        %1542 = vmatprep.subr.bf16.mxu0 0
        %1543 = vmatpush1.bf16.msra.mxu0 0
        %1544 = vmatprep.subr.bf16.mxu0 0
        %1545 = vmatpush1.bf16.msra.mxu0 0
        %1546 = vmatprep.subr.bf16.mxu0 0
        %1547 = vmatpush1.bf16.msra.mxu0 0
        %1548 = vmatprep.subr.bf16.mxu0 0
        %1549 = vmatpush1.bf16.msra.mxu0 0
        %1550 = vmatprep.mubr.bf16.mxu0 0
        %1551 = vmatmul.mubr.bf16.gmra.mrb[0].mxu0 %v1393
        %v1552 = vpop.f32.mrb[0].mxu0
        %v1553 = vadd.f32 %v1339, %v1552
        %v1554 = vpop.f32.mrb[0].mxu0
        %v1555 = vadd.f32 %v1343, %v1554
        %v1556 = vpop.f32.mrb[0].mxu0
        %v1557 = vpop.f32.mrb[0].mxu0
        %1558 = vdwg.mxu0
        %1559 = vmatprep.subr.bf16.mxu0 %v1255
        %1560 = vmatpush1.bf16.msra.mxu0 %v1254
        %1561 = vmatprep.subr.bf16.mxu0 %v1271
        %1562 = vmatpush1.bf16.msra.mxu0 %v1270
        %1563 = vmatprep.subr.bf16.mxu0 0
        %1564 = vmatpush1.bf16.msra.mxu0 0
        %1565 = vmatprep.subr.bf16.mxu0 0
        %1566 = vmatpush1.bf16.msra.mxu0 0
        %1567 = vmatprep.subr.bf16.mxu0 0
        %1568 = vmatpush1.bf16.msra.mxu0 0
        %1569 = vmatprep.subr.bf16.mxu0 0
        %1570 = vmatpush1.bf16.msra.mxu0 0
        %1571 = vmatprep.subr.bf16.mxu0 0
        %1572 = vmatpush1.bf16.msra.mxu0 0
        %1573 = vmatprep.subr.bf16.mxu0 0
        %1574 = vmatpush1.bf16.msra.mxu0 0
        %1575 = vmatprep.subr.bf16.mxu0 0
        %1576 = vmatpush1.bf16.msra.mxu0 0
        %1577 = vmatprep.subr.bf16.mxu0 0
        %1578 = vmatpush1.bf16.msra.mxu0 0
        %1579 = vmatprep.subr.bf16.mxu0 0
        %1580 = vmatpush1.bf16.msra.mxu0 0
        %1581 = vmatprep.subr.bf16.mxu0 0
        %1582 = vmatpush1.bf16.msra.mxu0 0
        %1583 = vmatprep.subr.bf16.mxu0 0
        %1584 = vmatpush1.bf16.msra.mxu0 0
        %1585 = vmatprep.subr.bf16.mxu0 0
        %1586 = vmatpush1.bf16.msra.mxu0 0
        %1587 = vmatprep.subr.bf16.mxu0 0
        %1588 = vmatpush1.bf16.msra.mxu0 0
        %1589 = vmatprep.subr.bf16.mxu0 0
        %1590 = vmatpush1.bf16.msra.mxu0 0
        %1591 = vmatprep.mubr.bf16.mxu0 0
        %1592 = vmatmul.mubr.bf16.gmra.mrb[0].mxu0 %v1393
        %v1593 = vpop.f32.mrb[0].mxu0
        %v1594 = vadd.f32 %v1347, %v1593
        %v1595 = vpop.f32.mrb[0].mxu0
        %v1596 = vadd.f32 %v1351, %v1595
        %v1597 = vpop.f32.mrb[0].mxu0
        %v1598 = vpop.f32.mrb[0].mxu0
        %1599 = vdwg.mxu0
        %1600 = vmatprep.subr.bf16.mxu0 %v1257
        %1601 = vmatpush1.bf16.msra.mxu0 %v1256
        %1602 = vmatprep.subr.bf16.mxu0 %v1273
        %1603 = vmatpush1.bf16.msra.mxu0 %v1272
        %1604 = vmatprep.subr.bf16.mxu0 0
        %1605 = vmatpush1.bf16.msra.mxu0 0
        %1606 = vmatprep.subr.bf16.mxu0 0
        %1607 = vmatpush1.bf16.msra.mxu0 0
        %1608 = vmatprep.subr.bf16.mxu0 0
        %1609 = vmatpush1.bf16.msra.mxu0 0
        %1610 = vmatprep.subr.bf16.mxu0 0
        %1611 = vmatpush1.bf16.msra.mxu0 0
        %1612 = vmatprep.subr.bf16.mxu0 0
        %1613 = vmatpush1.bf16.msra.mxu0 0
        %1614 = vmatprep.subr.bf16.mxu0 0
        %1615 = vmatpush1.bf16.msra.mxu0 0
        %1616 = vmatprep.subr.bf16.mxu0 0
        %1617 = vmatpush1.bf16.msra.mxu0 0
        %1618 = vmatprep.subr.bf16.mxu0 0
        %1619 = vmatpush1.bf16.msra.mxu0 0
        %1620 = vmatprep.subr.bf16.mxu0 0
        %1621 = vmatpush1.bf16.msra.mxu0 0
        %1622 = vmatprep.subr.bf16.mxu0 0
        %1623 = vmatpush1.bf16.msra.mxu0 0
        %1624 = vmatprep.subr.bf16.mxu0 0
        %1625 = vmatpush1.bf16.msra.mxu0 0
        %1626 = vmatprep.subr.bf16.mxu0 0
        %1627 = vmatpush1.bf16.msra.mxu0 0
        %1628 = vmatprep.subr.bf16.mxu0 0
        %1629 = vmatpush1.bf16.msra.mxu0 0
        %1630 = vmatprep.subr.bf16.mxu0 0
        %1631 = vmatpush1.bf16.msra.mxu0 0
        %1632 = vmatprep.mubr.bf16.mxu0 0
        %1633 = vmatmul.mubr.bf16.gmra.mrb[0].mxu0 %v1393
        %v1634 = vpop.f32.mrb[0].mxu0
        %v1635 = vadd.f32 %v1355, %v1634
        %v1636 = vpop.f32.mrb[0].mxu0
        %v1637 = vadd.f32 %v1359, %v1636
        %v1638 = vpop.f32.mrb[0].mxu0
        %v1639 = vpop.f32.mrb[0].mxu0
        %1640 = vdwg.mxu0
        %1641 = vmatprep.subr.bf16.mxu0 %v1259
        %1642 = vmatpush1.bf16.msra.mxu0 %v1258
        %1643 = vmatprep.subr.bf16.mxu0 %v1275
        %1644 = vmatpush1.bf16.msra.mxu0 %v1274
        %1645 = vmatprep.subr.bf16.mxu0 0
        %1646 = vmatpush1.bf16.msra.mxu0 0
        %1647 = vmatprep.subr.bf16.mxu0 0
        %1648 = vmatpush1.bf16.msra.mxu0 0
        %1649 = vmatprep.subr.bf16.mxu0 0
        %1650 = vmatpush1.bf16.msra.mxu0 0
        %1651 = vmatprep.subr.bf16.mxu0 0
        %1652 = vmatpush1.bf16.msra.mxu0 0
        %1653 = vmatprep.subr.bf16.mxu0 0
        %1654 = vmatpush1.bf16.msra.mxu0 0
        %1655 = vmatprep.subr.bf16.mxu0 0
        %1656 = vmatpush1.bf16.msra.mxu0 0
        %1657 = vmatprep.subr.bf16.mxu0 0
        %1658 = vmatpush1.bf16.msra.mxu0 0
        %1659 = vmatprep.subr.bf16.mxu0 0
        %1660 = vmatpush1.bf16.msra.mxu0 0
        %1661 = vmatprep.subr.bf16.mxu0 0
        %1662 = vmatpush1.bf16.msra.mxu0 0
        %1663 = vmatprep.subr.bf16.mxu0 0
        %1664 = vmatpush1.bf16.msra.mxu0 0
        %1665 = vmatprep.subr.bf16.mxu0 0
        %1666 = vmatpush1.bf16.msra.mxu0 0
        %1667 = vmatprep.subr.bf16.mxu0 0
        %1668 = vmatpush1.bf16.msra.mxu0 0
        %1669 = vmatprep.subr.bf16.mxu0 0
        %1670 = vmatpush1.bf16.msra.mxu0 0
        %1671 = vmatprep.subr.bf16.mxu0 0
        %1672 = vmatpush1.bf16.msra.mxu0 0
        %1673 = vmatprep.mubr.bf16.mxu0 0
        %1674 = vmatmul.mubr.bf16.gmra.mrb[0].mxu0 %v1393
        %v1675 = vpop.f32.mrb[0].mxu0
        %v1676 = vadd.f32 %v1363, %v1675
        %v1677 = vpop.f32.mrb[0].mxu0
        %v1678 = vadd.f32 %v1367, %v1677
        %v1679 = vpop.f32.mrb[0].mxu0
        %v1680 = vpop.f32.mrb[0].mxu0
        %1681 = vdwg.mxu0
        %1682 = vmatprep.subr.bf16.mxu0 %v1261
        %1683 = vmatpush1.bf16.msra.mxu0 %v1260
        %1684 = vmatprep.subr.bf16.mxu0 %v1277
        %1685 = vmatpush1.bf16.msra.mxu0 %v1276
        %1686 = vmatprep.subr.bf16.mxu0 0
        %1687 = vmatpush1.bf16.msra.mxu0 0
        %1688 = vmatprep.subr.bf16.mxu0 0
        %1689 = vmatpush1.bf16.msra.mxu0 0
        %1690 = vmatprep.subr.bf16.mxu0 0
        %1691 = vmatpush1.bf16.msra.mxu0 0
        %1692 = vmatprep.subr.bf16.mxu0 0
        %1693 = vmatpush1.bf16.msra.mxu0 0
        %1694 = vmatprep.subr.bf16.mxu0 0
        %1695 = vmatpush1.bf16.msra.mxu0 0
        %1696 = vmatprep.subr.bf16.mxu0 0
        %1697 = vmatpush1.bf16.msra.mxu0 0
        %1698 = vmatprep.subr.bf16.mxu0 0
        %1699 = vmatpush1.bf16.msra.mxu0 0
        %1700 = vmatprep.subr.bf16.mxu0 0
        %1701 = vmatpush1.bf16.msra.mxu0 0
        %1702 = vmatprep.subr.bf16.mxu0 0
        %1703 = vmatpush1.bf16.msra.mxu0 0
        %1704 = vmatprep.subr.bf16.mxu0 0
        %1705 = vmatpush1.bf16.msra.mxu0 0
        %1706 = vmatprep.subr.bf16.mxu0 0
        %1707 = vmatpush1.bf16.msra.mxu0 0
        %1708 = vmatprep.subr.bf16.mxu0 0
        %1709 = vmatpush1.bf16.msra.mxu0 0
        %1710 = vmatprep.subr.bf16.mxu0 0
        %1711 = vmatpush1.bf16.msra.mxu0 0
        %1712 = vmatprep.subr.bf16.mxu0 0
        %1713 = vmatpush1.bf16.msra.mxu0 0
        %1714 = vmatprep.mubr.bf16.mxu0 0
        %1715 = vmatmul.mubr.bf16.gmra.mrb[0].mxu0 %v1393
        %v1716 = vpop.f32.mrb[0].mxu0
        %v1717 = vadd.f32 %v1371, %v1716
        %v1718 = vpop.f32.mrb[0].mxu0
        %v1719 = vadd.f32 %v1375, %v1718
        %v1720 = vpop.f32.mrb[0].mxu0
        %v1721 = vpop.f32.mrb[0].mxu0
        %1722 = vdwg.mxu0
        %v1723 = vmax.f32 %v1430, 0.0
        %v1724 = vmax.f32 %v1432, 0.0
        %v1725 = vmax.f32 %v1471, 0.0
        %v1726 = vmax.f32 %v1473, 0.0
        %v1727 = vmax.f32 %v1512, 0.0
        %v1728 = vmax.f32 %v1514, 0.0
        %v1729 = vmax.f32 %v1553, 0.0
        %v1730 = vmax.f32 %v1555, 0.0
        %v1731 = vmax.f32 %v1594, 0.0
        %v1732 = vmax.f32 %v1596, 0.0
        %v1733 = vmax.f32 %v1635, 0.0
        %v1734 = vmax.f32 %v1637, 0.0
        %v1735 = vmax.f32 %v1676, 0.0
        %v1736 = vmax.f32 %v1678, 0.0
        %v1737 = vmax.f32 %v1717, 0.0
        %v1738 = vmax.f32 %v1719, 0.0
        %v1739 = vpack.c.bf16 %v1723, %v1723
        %v1740 = vpack.c.bf16 %v1724, %v1724
        %v1741 = vpack.c.bf16 %v1725, %v1725
        %v1742 = vpack.c.bf16 %v1726, %v1726
        %v1743 = vpack.c.bf16 %v1727, %v1727
        %v1744 = vpack.c.bf16 %v1728, %v1728
        %v1745 = vpack.c.bf16 %v1729, %v1729
        %v1746 = vpack.c.bf16 %v1730, %v1730
        %v1747 = vpack.c.bf16 %v1731, %v1731
        %v1748 = vpack.c.bf16 %v1732, %v1732
        %v1749 = vpack.c.bf16 %v1733, %v1733
        %v1750 = vpack.c.bf16 %v1734, %v1734
        %v1751 = vpack.c.bf16 %v1735, %v1735
        %v1752 = vpack.c.bf16 %v1736, %v1736
        %v1753 = vpack.c.bf16 %v1737, %v1737
        %v1754 = vpack.c.bf16 %v1738, %v1738
        %v1755 = vld [vmem:[%s6] sm:$0xf]
        %v1756 = vld [vmem:[%s6 + $0x4] sm:$0xf]
        %v1757 = vld [vmem:[%s6 + $0x8] sm:$0xf]
        %v1758 = vld [vmem:[%s6 + $0xc] sm:$0xf]
        %v1759 = vld [vmem:[%s6 + $0x10] sm:$0xf]
        %v1760 = vld [vmem:[%s6 + $0x14] sm:$0xf]
        %v1761 = vld [vmem:[%s6 + $0x18] sm:$0xf]
        %v1762 = vld [vmem:[%s6 + $0x1c] sm:$0xf]
        %v1763 = vld [vmem:[%s6 + $0x20] sm:$0xf]
        %v1764 = vld [vmem:[%s6 + $0x24] sm:$0xf]
        %v1765 = vld [vmem:[%s6 + $0x28] sm:$0xf]
        %v1766 = vld [vmem:[%s6 + $0x2c] sm:$0xf]
        %v1767 = vld [vmem:[%s6 + $0x30] sm:$0xf]
        %v1768 = vld [vmem:[%s6 + $0x34] sm:$0xf]
        %v1769 = vld [vmem:[%s6 + $0x38] sm:$0xf]
        %v1770 = vld [vmem:[%s6 + $0x3c] sm:$0xf]
        %v1771 = vld [vmem:[%s6 + $0x40] sm:$0xf]
        %v1772 = vld [vmem:[%s6 + $0x44] sm:$0xf]
        %v1773 = vld [vmem:[%s6 + $0x48] sm:$0xf]
        %v1774 = vld [vmem:[%s6 + $0x4c] sm:$0xf]
        %v1775 = vld [vmem:[%s6 + $0x50] sm:$0xf]
        %v1776 = vld [vmem:[%s6 + $0x54] sm:$0xf]
        %v1777 = vld [vmem:[%s6 + $0x58] sm:$0xf]
        %v1778 = vld [vmem:[%s6 + $0x5c] sm:$0xf]
        %v1779 = vld [vmem:[%s6 + $0x60] sm:$0xf]
        %v1780 = vld [vmem:[%s6 + $0x64] sm:$0xf]
        %v1781 = vld [vmem:[%s6 + $0x68] sm:$0xf]
        %v1782 = vld [vmem:[%s6 + $0x6c] sm:$0xf]
        %v1783 = vld [vmem:[%s6 + $0x70] sm:$0xf]
        %v1784 = vld [vmem:[%s6 + $0x74] sm:$0xf]
        %v1785 = vld [vmem:[%s6 + $0x78] sm:$0xf]
        %v1786 = vld [vmem:[%s6 + $0x7c] sm:$0xf]
        %v1787 = vld [vmem:[%s6 + $0x80] sm:$0xf]
        %v1788 = vld [vmem:[%s6 + $0x84] sm:$0xf]
        %v1789 = vld [vmem:[%s6 + $0x88] sm:$0xf]
        %v1790 = vld [vmem:[%s6 + $0x8c] sm:$0xf]
        %v1791 = vld [vmem:[%s6 + $0x90] sm:$0xf]
        %v1792 = vld [vmem:[%s6 + $0x94] sm:$0xf]
        %v1793 = vld [vmem:[%s6 + $0x98] sm:$0xf]
        %v1794 = vld [vmem:[%s6 + $0x9c] sm:$0xf]
        %v1795 = vld [vmem:[%s6 + $0xa0] sm:$0xf]
        %v1796 = vld [vmem:[%s6 + $0xa4] sm:$0xf]
        %v1797 = vld [vmem:[%s6 + $0xa8] sm:$0xf]
        %v1798 = vld [vmem:[%s6 + $0xac] sm:$0xf]
        %v1799 = vld [vmem:[%s6 + $0xb0] sm:$0xf]
        %v1800 = vld [vmem:[%s6 + $0xb4] sm:$0xf]
        %v1801 = vld [vmem:[%s6 + $0xb8] sm:$0xf]
        %v1802 = vld [vmem:[%s6 + $0xbc] sm:$0xf]
        %v1803 = vld [vmem:[%s6 + $0xc0] sm:$0xf]
        %v1804 = vld [vmem:[%s6 + $0xc4] sm:$0xf]
        %v1805 = vld [vmem:[%s6 + $0xc8] sm:$0xf]
        %v1806 = vld [vmem:[%s6 + $0xcc] sm:$0xf]
        %v1807 = vld [vmem:[%s6 + $0xd0] sm:$0xf]
        %v1808 = vld [vmem:[%s6 + $0xd4] sm:$0xf]
        %v1809 = vld [vmem:[%s6 + $0xd8] sm:$0xf]
        %v1810 = vld [vmem:[%s6 + $0xdc] sm:$0xf]
        %v1811 = vld [vmem:[%s6 + $0xe0] sm:$0xf]
        %v1812 = vld [vmem:[%s6 + $0xe4] sm:$0xf]
        %v1813 = vld [vmem:[%s6 + $0xe8] sm:$0xf]
        %v1814 = vld [vmem:[%s6 + $0xec] sm:$0xf]
        %v1815 = vld [vmem:[%s6 + $0xf0] sm:$0xf]
        %v1816 = vld [vmem:[%s6 + $0xf4] sm:$0xf]
        %v1817 = vld [vmem:[%s6 + $0xf8] sm:$0xf]
        %v1818 = vld [vmem:[%s6 + $0xfc] sm:$0xf]
        %v1819 = vld [vmem:[%s6 + $0x100] sm:$0xf]
        %v1820 = vld [vmem:[%s6 + $0x104] sm:$0xf]
        %v1821 = vld [vmem:[%s6 + $0x108] sm:$0xf]
        %v1822 = vld [vmem:[%s6 + $0x10c] sm:$0xf]
        %v1823 = vld [vmem:[%s6 + $0x110] sm:$0xf]
        %v1824 = vld [vmem:[%s6 + $0x114] sm:$0xf]
        %v1825 = vld [vmem:[%s6 + $0x118] sm:$0xf]
        %v1826 = vld [vmem:[%s6 + $0x11c] sm:$0xf]
        %v1827 = vld [vmem:[%s6 + $0x120] sm:$0xf]
        %v1828 = vld [vmem:[%s6 + $0x124] sm:$0xf]
        %v1829 = vld [vmem:[%s6 + $0x128] sm:$0xf]
        %v1830 = vld [vmem:[%s6 + $0x12c] sm:$0xf]
        %v1831 = vld [vmem:[%s6 + $0x130] sm:$0xf]
        %v1832 = vld [vmem:[%s6 + $0x134] sm:$0xf]
        %v1833 = vld [vmem:[%s6 + $0x138] sm:$0xf]
        %v1834 = vld [vmem:[%s6 + $0x13c] sm:$0xf]
        %v1835 = vld [vmem:[%s6 + $0x140] sm:$0xf]
        %v1836 = vld [vmem:[%s6 + $0x144] sm:$0xf]
        %v1837 = vld [vmem:[%s6 + $0x148] sm:$0xf]
        %v1838 = vld [vmem:[%s6 + $0x14c] sm:$0xf]
        %v1839 = vld [vmem:[%s6 + $0x150] sm:$0xf]
        %v1840 = vld [vmem:[%s6 + $0x154] sm:$0xf]
        %v1841 = vld [vmem:[%s6 + $0x158] sm:$0xf]
        %v1842 = vld [vmem:[%s6 + $0x15c] sm:$0xf]
        %v1843 = vld [vmem:[%s6 + $0x160] sm:$0xf]
        %v1844 = vld [vmem:[%s6 + $0x164] sm:$0xf]
        %v1845 = vld [vmem:[%s6 + $0x168] sm:$0xf]
        %v1846 = vld [vmem:[%s6 + $0x16c] sm:$0xf]
        %v1847 = vld [vmem:[%s6 + $0x170] sm:$0xf]
        %v1848 = vld [vmem:[%s6 + $0x174] sm:$0xf]
        %v1849 = vld [vmem:[%s6 + $0x178] sm:$0xf]
        %v1850 = vld [vmem:[%s6 + $0x17c] sm:$0xf]
        %v1851 = vld [vmem:[%s6 + $0x180] sm:$0xf]
        %v1852 = vld [vmem:[%s6 + $0x184] sm:$0xf]
        %v1853 = vld [vmem:[%s6 + $0x188] sm:$0xf]
        %v1854 = vld [vmem:[%s6 + $0x18c] sm:$0xf]
        %v1855 = vld [vmem:[%s6 + $0x190] sm:$0xf]
        %v1856 = vld [vmem:[%s6 + $0x194] sm:$0xf]
        %v1857 = vld [vmem:[%s6 + $0x198] sm:$0xf]
        %v1858 = vld [vmem:[%s6 + $0x19c] sm:$0xf]
        %v1859 = vld [vmem:[%s6 + $0x1a0] sm:$0xf]
        %v1860 = vld [vmem:[%s6 + $0x1a4] sm:$0xf]
        %v1861 = vld [vmem:[%s6 + $0x1a8] sm:$0xf]
        %v1862 = vld [vmem:[%s6 + $0x1ac] sm:$0xf]
        %v1863 = vld [vmem:[%s6 + $0x1b0] sm:$0xf]
        %v1864 = vld [vmem:[%s6 + $0x1b4] sm:$0xf]
        %v1865 = vld [vmem:[%s6 + $0x1b8] sm:$0xf]
        %v1866 = vld [vmem:[%s6 + $0x1bc] sm:$0xf]
        %v1867 = vld [vmem:[%s6 + $0x1c0] sm:$0xf]
        %v1868 = vld [vmem:[%s6 + $0x1c4] sm:$0xf]
        %v1869 = vld [vmem:[%s6 + $0x1c8] sm:$0xf]
        %v1870 = vld [vmem:[%s6 + $0x1cc] sm:$0xf]
        %v1871 = vld [vmem:[%s6 + $0x1d0] sm:$0xf]
        %v1872 = vld [vmem:[%s6 + $0x1d4] sm:$0xf]
        %v1873 = vld [vmem:[%s6 + $0x1d8] sm:$0xf]
        %v1874 = vld [vmem:[%s6 + $0x1dc] sm:$0xf]
        %v1875 = vld [vmem:[%s6 + $0x1e0] sm:$0xf]
        %v1876 = vld [vmem:[%s6 + $0x1e4] sm:$0xf]
        %v1877 = vld [vmem:[%s6 + $0x1e8] sm:$0xf]
        %v1878 = vld [vmem:[%s6 + $0x1ec] sm:$0xf]
        %v1879 = vld [vmem:[%s6 + $0x1f0] sm:$0xf]
        %v1880 = vld [vmem:[%s6 + $0x1f4] sm:$0xf]
        %v1881 = vld [vmem:[%s6 + $0x1f8] sm:$0xf]
        %v1882 = vld [vmem:[%s6 + $0x1fc] sm:$0xf]
        %v1883 = vld [vmem:[%s6 + $0x200] sm:$0xf]
        %v1884 = vld [vmem:[%s6 + $0x204] sm:$0xf]
        %v1885 = vld [vmem:[%s6 + $0x208] sm:$0xf]
        %v1886 = vld [vmem:[%s6 + $0x20c] sm:$0xf]
        %v1887 = vld [vmem:[%s6 + $0x210] sm:$0xf]
        %v1888 = vld [vmem:[%s6 + $0x214] sm:$0xf]
        %v1889 = vld [vmem:[%s6 + $0x218] sm:$0xf]
        %v1890 = vld [vmem:[%s6 + $0x21c] sm:$0xf]
        %v1891 = vld [vmem:[%s6 + $0x220] sm:$0xf]
        %v1892 = vld [vmem:[%s6 + $0x224] sm:$0xf]
        %v1893 = vld [vmem:[%s6 + $0x228] sm:$0xf]
        %v1894 = vld [vmem:[%s6 + $0x22c] sm:$0xf]
        %v1895 = vld [vmem:[%s6 + $0x230] sm:$0xf]
        %v1896 = vld [vmem:[%s6 + $0x234] sm:$0xf]
        %v1897 = vld [vmem:[%s6 + $0x238] sm:$0xf]
        %v1898 = vld [vmem:[%s6 + $0x23c] sm:$0xf]
        %v1899 = vld [vmem:[%s6 + $0x240] sm:$0xf]
        %v1900 = vld [vmem:[%s6 + $0x244] sm:$0xf]
        %v1901 = vld [vmem:[%s6 + $0x248] sm:$0xf]
        %v1902 = vld [vmem:[%s6 + $0x24c] sm:$0xf]
        %v1903 = vld [vmem:[%s6 + $0x250] sm:$0xf]
        %v1904 = vld [vmem:[%s6 + $0x254] sm:$0xf]
        %v1905 = vld [vmem:[%s6 + $0x258] sm:$0xf]
        %v1906 = vld [vmem:[%s6 + $0x25c] sm:$0xf]
        %v1907 = vld [vmem:[%s6 + $0x260] sm:$0xf]
        %v1908 = vld [vmem:[%s6 + $0x264] sm:$0xf]
        %v1909 = vld [vmem:[%s6 + $0x268] sm:$0xf]
        %v1910 = vld [vmem:[%s6 + $0x26c] sm:$0xf]
        %v1911 = vld [vmem:[%s6 + $0x270] sm:$0xf]
        %v1912 = vld [vmem:[%s6 + $0x274] sm:$0xf]
        %v1913 = vld [vmem:[%s6 + $0x278] sm:$0xf]
        %v1914 = vld [vmem:[%s6 + $0x27c] sm:$0xf]
        %v1915 = vld [vmem:[%s6 + $0x280] sm:$0xf]
        %v1916 = vld [vmem:[%s6 + $0x284] sm:$0xf]
        %v1917 = vld [vmem:[%s6 + $0x288] sm:$0xf]
        %v1918 = vld [vmem:[%s6 + $0x28c] sm:$0xf]
        %v1919 = vld [vmem:[%s6 + $0x290] sm:$0xf]
        %v1920 = vld [vmem:[%s6 + $0x294] sm:$0xf]
        %v1921 = vld [vmem:[%s6 + $0x298] sm:$0xf]
        %v1922 = vld [vmem:[%s6 + $0x29c] sm:$0xf]
        %v1923 = vld [vmem:[%s6 + $0x2a0] sm:$0xf]
        %v1924 = vld [vmem:[%s6 + $0x2a4] sm:$0xf]
        %v1925 = vld [vmem:[%s6 + $0x2a8] sm:$0xf]
        %v1926 = vld [vmem:[%s6 + $0x2ac] sm:$0xf]
        %v1927 = vld [vmem:[%s6 + $0x2b0] sm:$0xf]
        %v1928 = vld [vmem:[%s6 + $0x2b4] sm:$0xf]
        %v1929 = vld [vmem:[%s6 + $0x2b8] sm:$0xf]
        %v1930 = vld [vmem:[%s6 + $0x2bc] sm:$0xf]
        %v1931 = vld [vmem:[%s6 + $0x2c0] sm:$0xf]
        %v1932 = vld [vmem:[%s6 + $0x2c4] sm:$0xf]
        %v1933 = vld [vmem:[%s6 + $0x2c8] sm:$0xf]
        %v1934 = vld [vmem:[%s6 + $0x2cc] sm:$0xf]
        %v1935 = vld [vmem:[%s6 + $0x2d0] sm:$0xf]
        %v1936 = vld [vmem:[%s6 + $0x2d4] sm:$0xf]
        %v1937 = vld [vmem:[%s6 + $0x2d8] sm:$0xf]
        %v1938 = vld [vmem:[%s6 + $0x2dc] sm:$0xf]
        %v1939 = vld [vmem:[%s6 + $0x2e0] sm:$0xf]
        %v1940 = vld [vmem:[%s6 + $0x2e4] sm:$0xf]
        %v1941 = vld [vmem:[%s6 + $0x2e8] sm:$0xf]
        %v1942 = vld [vmem:[%s6 + $0x2ec] sm:$0xf]
        %v1943 = vld [vmem:[%s6 + $0x2f0] sm:$0xf]
        %v1944 = vld [vmem:[%s6 + $0x2f4] sm:$0xf]
        %v1945 = vld [vmem:[%s6 + $0x2f8] sm:$0xf]
        %v1946 = vld [vmem:[%s6 + $0x2fc] sm:$0xf]
        %v1947 = vld [vmem:[%s6 + $0x300] sm:$0xf]
        %v1948 = vld [vmem:[%s6 + $0x304] sm:$0xf]
        %v1949 = vld [vmem:[%s6 + $0x308] sm:$0xf]
        %v1950 = vld [vmem:[%s6 + $0x30c] sm:$0xf]
        %v1951 = vld [vmem:[%s6 + $0x310] sm:$0xf]
        %v1952 = vld [vmem:[%s6 + $0x314] sm:$0xf]
        %v1953 = vld [vmem:[%s6 + $0x318] sm:$0xf]
        %v1954 = vld [vmem:[%s6 + $0x31c] sm:$0xf]
        %v1955 = vld [vmem:[%s6 + $0x320] sm:$0xf]
        %v1956 = vld [vmem:[%s6 + $0x324] sm:$0xf]
        %v1957 = vld [vmem:[%s6 + $0x328] sm:$0xf]
        %v1958 = vld [vmem:[%s6 + $0x32c] sm:$0xf]
        %v1959 = vld [vmem:[%s6 + $0x330] sm:$0xf]
        %v1960 = vld [vmem:[%s6 + $0x334] sm:$0xf]
        %v1961 = vld [vmem:[%s6 + $0x338] sm:$0xf]
        %v1962 = vld [vmem:[%s6 + $0x33c] sm:$0xf]
        %v1963 = vld [vmem:[%s6 + $0x340] sm:$0xf]
        %v1964 = vld [vmem:[%s6 + $0x344] sm:$0xf]
        %v1965 = vld [vmem:[%s6 + $0x348] sm:$0xf]
        %v1966 = vld [vmem:[%s6 + $0x34c] sm:$0xf]
        %v1967 = vld [vmem:[%s6 + $0x350] sm:$0xf]
        %v1968 = vld [vmem:[%s6 + $0x354] sm:$0xf]
        %v1969 = vld [vmem:[%s6 + $0x358] sm:$0xf]
        %v1970 = vld [vmem:[%s6 + $0x35c] sm:$0xf]
        %v1971 = vld [vmem:[%s6 + $0x360] sm:$0xf]
        %v1972 = vld [vmem:[%s6 + $0x364] sm:$0xf]
        %v1973 = vld [vmem:[%s6 + $0x368] sm:$0xf]
        %v1974 = vld [vmem:[%s6 + $0x36c] sm:$0xf]
        %v1975 = vld [vmem:[%s6 + $0x370] sm:$0xf]
        %v1976 = vld [vmem:[%s6 + $0x374] sm:$0xf]
        %v1977 = vld [vmem:[%s6 + $0x378] sm:$0xf]
        %v1978 = vld [vmem:[%s6 + $0x37c] sm:$0xf]
        %v1979 = vld [vmem:[%s6 + $0x380] sm:$0xf]
        %v1980 = vld [vmem:[%s6 + $0x384] sm:$0xf]
        %v1981 = vld [vmem:[%s6 + $0x388] sm:$0xf]
        %v1982 = vld [vmem:[%s6 + $0x38c] sm:$0xf]
        %v1983 = vld [vmem:[%s6 + $0x390] sm:$0xf]
        %v1984 = vld [vmem:[%s6 + $0x394] sm:$0xf]
        %v1985 = vld [vmem:[%s6 + $0x398] sm:$0xf]
        %v1986 = vld [vmem:[%s6 + $0x39c] sm:$0xf]
        %v1987 = vld [vmem:[%s6 + $0x3a0] sm:$0xf]
        %v1988 = vld [vmem:[%s6 + $0x3a4] sm:$0xf]
        %v1989 = vld [vmem:[%s6 + $0x3a8] sm:$0xf]
        %v1990 = vld [vmem:[%s6 + $0x3ac] sm:$0xf]
        %v1991 = vld [vmem:[%s6 + $0x3b0] sm:$0xf]
        %v1992 = vld [vmem:[%s6 + $0x3b4] sm:$0xf]
        %v1993 = vld [vmem:[%s6 + $0x3b8] sm:$0xf]
        %v1994 = vld [vmem:[%s6 + $0x3bc] sm:$0xf]
        %v1995 = vld [vmem:[%s6 + $0x3c0] sm:$0xf]
        %v1996 = vld [vmem:[%s6 + $0x3c4] sm:$0xf]
        %v1997 = vld [vmem:[%s6 + $0x3c8] sm:$0xf]
        %v1998 = vld [vmem:[%s6 + $0x3cc] sm:$0xf]
        %v1999 = vld [vmem:[%s6 + $0x3d0] sm:$0xf]
        %v2000 = vld [vmem:[%s6 + $0x3d4] sm:$0xf]
        %v2001 = vld [vmem:[%s6 + $0x3d8] sm:$0xf]
        %v2002 = vld [vmem:[%s6 + $0x3dc] sm:$0xf]
        %v2003 = vld [vmem:[%s6 + $0x3e0] sm:$0xf]
        %v2004 = vld [vmem:[%s6 + $0x3e4] sm:$0xf]
        %v2005 = vld [vmem:[%s6 + $0x3e8] sm:$0xf]
        %v2006 = vld [vmem:[%s6 + $0x3ec] sm:$0xf]
        %v2007 = vld [vmem:[%s6 + $0x3f0] sm:$0xf]
        %v2008 = vld [vmem:[%s6 + $0x3f4] sm:$0xf]
        %v2009 = vld [vmem:[%s6 + $0x3f8] sm:$0xf]
        %v2010 = vld [vmem:[%s6 + $0x3fc] sm:$0xf]
        %v2267 = vunpack.c.l.b16 %v1755
        %v2268 = vunpack.c.l.b16 %v1756
        %v2269 = vunpack.c.l.b16 %v1757
        %v2270 = vunpack.c.l.b16 %v1758
        %v2271 = vunpack.c.l.b16 %v1759
        %v2272 = vunpack.c.l.b16 %v1760
        %v2273 = vunpack.c.l.b16 %v1761
        %v2274 = vunpack.c.l.b16 %v1762
        %v2275 = vunpack.c.l.b16 %v1763
        %v2276 = vunpack.c.l.b16 %v1764
        %v2277 = vunpack.c.l.b16 %v1765
        %v2278 = vunpack.c.l.b16 %v1766
        %v2279 = vunpack.c.l.b16 %v1767
        %v2280 = vunpack.c.l.b16 %v1768
        %v2281 = vunpack.c.l.b16 %v1769
        %v2282 = vunpack.c.l.b16 %v1770
        %v2283 = vunpack.c.l.b16 %v1771
        %v2284 = vunpack.c.l.b16 %v1772
        %v2285 = vunpack.c.l.b16 %v1773
        %v2286 = vunpack.c.l.b16 %v1774
        %v2287 = vunpack.c.l.b16 %v1775
        %v2288 = vunpack.c.l.b16 %v1776
        %v2289 = vunpack.c.l.b16 %v1777
        %v2290 = vunpack.c.l.b16 %v1778
        %v2291 = vunpack.c.l.b16 %v1779
        %v2292 = vunpack.c.l.b16 %v1780
        %v2293 = vunpack.c.l.b16 %v1781
        %v2294 = vunpack.c.l.b16 %v1782
        %v2295 = vunpack.c.l.b16 %v1783
        %v2296 = vunpack.c.l.b16 %v1784
        %v2297 = vunpack.c.l.b16 %v1785
        %v2298 = vunpack.c.l.b16 %v1786
        %v2299 = vunpack.c.l.b16 %v1787
        %v2300 = vunpack.c.l.b16 %v1788
        %v2301 = vunpack.c.l.b16 %v1789
        %v2302 = vunpack.c.l.b16 %v1790
        %v2303 = vunpack.c.l.b16 %v1791
        %v2304 = vunpack.c.l.b16 %v1792
        %v2305 = vunpack.c.l.b16 %v1793
        %v2306 = vunpack.c.l.b16 %v1794
        %v2307 = vunpack.c.l.b16 %v1795
        %v2308 = vunpack.c.l.b16 %v1796
        %v2309 = vunpack.c.l.b16 %v1797
        %v2310 = vunpack.c.l.b16 %v1798
        %v2311 = vunpack.c.l.b16 %v1799
        %v2312 = vunpack.c.l.b16 %v1800
        %v2313 = vunpack.c.l.b16 %v1801
        %v2314 = vunpack.c.l.b16 %v1802
        %v2315 = vunpack.c.l.b16 %v1803
        %v2316 = vunpack.c.l.b16 %v1804
        %v2317 = vunpack.c.l.b16 %v1805
        %v2318 = vunpack.c.l.b16 %v1806
        %v2319 = vunpack.c.l.b16 %v1807
        %v2320 = vunpack.c.l.b16 %v1808
        %v2321 = vunpack.c.l.b16 %v1809
        %v2322 = vunpack.c.l.b16 %v1810
        %v2323 = vunpack.c.l.b16 %v1811
        %v2324 = vunpack.c.l.b16 %v1812
        %v2325 = vunpack.c.l.b16 %v1813
        %v2326 = vunpack.c.l.b16 %v1814
        %v2327 = vunpack.c.l.b16 %v1815
        %v2328 = vunpack.c.l.b16 %v1816
        %v2329 = vunpack.c.l.b16 %v1817
        %v2330 = vunpack.c.l.b16 %v1818
        %v2331 = vunpack.c.l.b16 %v1819
        %v2332 = vunpack.c.l.b16 %v1820
        %v2333 = vunpack.c.l.b16 %v1821
        %v2334 = vunpack.c.l.b16 %v1822
        %v2335 = vunpack.c.l.b16 %v1823
        %v2336 = vunpack.c.l.b16 %v1824
        %v2337 = vunpack.c.l.b16 %v1825
        %v2338 = vunpack.c.l.b16 %v1826
        %v2339 = vunpack.c.l.b16 %v1827
        %v2340 = vunpack.c.l.b16 %v1828
        %v2341 = vunpack.c.l.b16 %v1829
        %v2342 = vunpack.c.l.b16 %v1830
        %v2343 = vunpack.c.l.b16 %v1831
        %v2344 = vunpack.c.l.b16 %v1832
        %v2345 = vunpack.c.l.b16 %v1833
        %v2346 = vunpack.c.l.b16 %v1834
        %v2347 = vunpack.c.l.b16 %v1835
        %v2348 = vunpack.c.l.b16 %v1836
        %v2349 = vunpack.c.l.b16 %v1837
        %v2350 = vunpack.c.l.b16 %v1838
        %v2351 = vunpack.c.l.b16 %v1839
        %v2352 = vunpack.c.l.b16 %v1840
        %v2353 = vunpack.c.l.b16 %v1841
        %v2354 = vunpack.c.l.b16 %v1842
        %v2355 = vunpack.c.l.b16 %v1843
        %v2356 = vunpack.c.l.b16 %v1844
        %v2357 = vunpack.c.l.b16 %v1845
        %v2358 = vunpack.c.l.b16 %v1846
        %v2359 = vunpack.c.l.b16 %v1847
        %v2360 = vunpack.c.l.b16 %v1848
        %v2361 = vunpack.c.l.b16 %v1849
        %v2362 = vunpack.c.l.b16 %v1850
        %v2363 = vunpack.c.l.b16 %v1851
        %v2364 = vunpack.c.l.b16 %v1852
        %v2365 = vunpack.c.l.b16 %v1853
        %v2366 = vunpack.c.l.b16 %v1854
        %v2367 = vunpack.c.l.b16 %v1855
        %v2368 = vunpack.c.l.b16 %v1856
        %v2369 = vunpack.c.l.b16 %v1857
        %v2370 = vunpack.c.l.b16 %v1858
        %v2371 = vunpack.c.l.b16 %v1859
        %v2372 = vunpack.c.l.b16 %v1860
        %v2373 = vunpack.c.l.b16 %v1861
        %v2374 = vunpack.c.l.b16 %v1862
        %v2375 = vunpack.c.l.b16 %v1863
        %v2376 = vunpack.c.l.b16 %v1864
        %v2377 = vunpack.c.l.b16 %v1865
        %v2378 = vunpack.c.l.b16 %v1866
        %v2379 = vunpack.c.l.b16 %v1867
        %v2380 = vunpack.c.l.b16 %v1868
        %v2381 = vunpack.c.l.b16 %v1869
        %v2382 = vunpack.c.l.b16 %v1870
        %v2383 = vunpack.c.l.b16 %v1871
        %v2384 = vunpack.c.l.b16 %v1872
        %v2385 = vunpack.c.l.b16 %v1873
        %v2386 = vunpack.c.l.b16 %v1874
        %v2387 = vunpack.c.l.b16 %v1875
        %v2388 = vunpack.c.l.b16 %v1876
        %v2389 = vunpack.c.l.b16 %v1877
        %v2390 = vunpack.c.l.b16 %v1878
        %v2391 = vunpack.c.l.b16 %v1879
        %v2392 = vunpack.c.l.b16 %v1880
        %v2393 = vunpack.c.l.b16 %v1881
        %v2394 = vunpack.c.l.b16 %v1882
        %v2395 = vunpack.c.l.b16 %v1883
        %v2396 = vunpack.c.l.b16 %v1884
        %v2397 = vunpack.c.l.b16 %v1885
        %v2398 = vunpack.c.l.b16 %v1886
        %v2399 = vunpack.c.l.b16 %v1887
        %v2400 = vunpack.c.l.b16 %v1888
        %v2401 = vunpack.c.l.b16 %v1889
        %v2402 = vunpack.c.l.b16 %v1890
        %v2403 = vunpack.c.l.b16 %v1891
        %v2404 = vunpack.c.l.b16 %v1892
        %v2405 = vunpack.c.l.b16 %v1893
        %v2406 = vunpack.c.l.b16 %v1894
        %v2407 = vunpack.c.l.b16 %v1895
        %v2408 = vunpack.c.l.b16 %v1896
        %v2409 = vunpack.c.l.b16 %v1897
        %v2410 = vunpack.c.l.b16 %v1898
        %v2411 = vunpack.c.l.b16 %v1899
        %v2412 = vunpack.c.l.b16 %v1900
        %v2413 = vunpack.c.l.b16 %v1901
        %v2414 = vunpack.c.l.b16 %v1902
        %v2415 = vunpack.c.l.b16 %v1903
        %v2416 = vunpack.c.l.b16 %v1904
        %v2417 = vunpack.c.l.b16 %v1905
        %v2418 = vunpack.c.l.b16 %v1906
        %v2419 = vunpack.c.l.b16 %v1907
        %v2420 = vunpack.c.l.b16 %v1908
        %v2421 = vunpack.c.l.b16 %v1909
        %v2422 = vunpack.c.l.b16 %v1910
        %v2423 = vunpack.c.l.b16 %v1911
        %v2424 = vunpack.c.l.b16 %v1912
        %v2425 = vunpack.c.l.b16 %v1913
        %v2426 = vunpack.c.l.b16 %v1914
        %v2427 = vunpack.c.l.b16 %v1915
        %v2428 = vunpack.c.l.b16 %v1916
        %v2429 = vunpack.c.l.b16 %v1917
        %v2430 = vunpack.c.l.b16 %v1918
        %v2431 = vunpack.c.l.b16 %v1919
        %v2432 = vunpack.c.l.b16 %v1920
        %v2433 = vunpack.c.l.b16 %v1921
        %v2434 = vunpack.c.l.b16 %v1922
        %v2435 = vunpack.c.l.b16 %v1923
        %v2436 = vunpack.c.l.b16 %v1924
        %v2437 = vunpack.c.l.b16 %v1925
        %v2438 = vunpack.c.l.b16 %v1926
        %v2439 = vunpack.c.l.b16 %v1927
        %v2440 = vunpack.c.l.b16 %v1928
        %v2441 = vunpack.c.l.b16 %v1929
        %v2442 = vunpack.c.l.b16 %v1930
        %v2443 = vunpack.c.l.b16 %v1931
        %v2444 = vunpack.c.l.b16 %v1932
        %v2445 = vunpack.c.l.b16 %v1933
        %v2446 = vunpack.c.l.b16 %v1934
        %v2447 = vunpack.c.l.b16 %v1935
        %v2448 = vunpack.c.l.b16 %v1936
        %v2449 = vunpack.c.l.b16 %v1937
        %v2450 = vunpack.c.l.b16 %v1938
        %v2451 = vunpack.c.l.b16 %v1939
        %v2452 = vunpack.c.l.b16 %v1940
        %v2453 = vunpack.c.l.b16 %v1941
        %v2454 = vunpack.c.l.b16 %v1942
        %v2455 = vunpack.c.l.b16 %v1943
        %v2456 = vunpack.c.l.b16 %v1944
        %v2457 = vunpack.c.l.b16 %v1945
        %v2458 = vunpack.c.l.b16 %v1946
        %v2459 = vunpack.c.l.b16 %v1947
        %v2460 = vunpack.c.l.b16 %v1948
        %v2461 = vunpack.c.l.b16 %v1949
        %v2462 = vunpack.c.l.b16 %v1950
        %v2463 = vunpack.c.l.b16 %v1951
        %v2464 = vunpack.c.l.b16 %v1952
        %v2465 = vunpack.c.l.b16 %v1953
        %v2466 = vunpack.c.l.b16 %v1954
        %v2467 = vunpack.c.l.b16 %v1955
        %v2468 = vunpack.c.l.b16 %v1956
        %v2469 = vunpack.c.l.b16 %v1957
        %v2470 = vunpack.c.l.b16 %v1958
        %v2471 = vunpack.c.l.b16 %v1959
        %v2472 = vunpack.c.l.b16 %v1960
        %v2473 = vunpack.c.l.b16 %v1961
        %v2474 = vunpack.c.l.b16 %v1962
        %v2475 = vunpack.c.l.b16 %v1963
        %v2476 = vunpack.c.l.b16 %v1964
        %v2477 = vunpack.c.l.b16 %v1965
        %v2478 = vunpack.c.l.b16 %v1966
        %v2479 = vunpack.c.l.b16 %v1967
        %v2480 = vunpack.c.l.b16 %v1968
        %v2481 = vunpack.c.l.b16 %v1969
        %v2482 = vunpack.c.l.b16 %v1970
        %v2483 = vunpack.c.l.b16 %v1971
        %v2484 = vunpack.c.l.b16 %v1972
        %v2485 = vunpack.c.l.b16 %v1973
        %v2486 = vunpack.c.l.b16 %v1974
        %v2487 = vunpack.c.l.b16 %v1975
        %v2488 = vunpack.c.l.b16 %v1976
        %v2489 = vunpack.c.l.b16 %v1977
        %v2490 = vunpack.c.l.b16 %v1978
        %v2491 = vunpack.c.l.b16 %v1979
        %v2492 = vunpack.c.l.b16 %v1980
        %v2493 = vunpack.c.l.b16 %v1981
        %v2494 = vunpack.c.l.b16 %v1982
        %v2495 = vunpack.c.l.b16 %v1983
        %v2496 = vunpack.c.l.b16 %v1984
        %v2497 = vunpack.c.l.b16 %v1985
        %v2498 = vunpack.c.l.b16 %v1986
        %v2499 = vunpack.c.l.b16 %v1987
        %v2500 = vunpack.c.l.b16 %v1988
        %v2501 = vunpack.c.l.b16 %v1989
        %v2502 = vunpack.c.l.b16 %v1990
        %v2503 = vunpack.c.l.b16 %v1991
        %v2504 = vunpack.c.l.b16 %v1992
        %v2505 = vunpack.c.l.b16 %v1993
        %v2506 = vunpack.c.l.b16 %v1994
        %v2507 = vunpack.c.l.b16 %v1995
        %v2508 = vunpack.c.l.b16 %v1996
        %v2509 = vunpack.c.l.b16 %v1997
        %v2510 = vunpack.c.l.b16 %v1998
        %v2511 = vunpack.c.l.b16 %v1999
        %v2512 = vunpack.c.l.b16 %v2000
        %v2513 = vunpack.c.l.b16 %v2001
        %v2514 = vunpack.c.l.b16 %v2002
        %v2515 = vunpack.c.l.b16 %v2003
        %v2516 = vunpack.c.l.b16 %v2004
        %v2517 = vunpack.c.l.b16 %v2005
        %v2518 = vunpack.c.l.b16 %v2006
        %v2519 = vunpack.c.l.b16 %v2007
        %v2520 = vunpack.c.l.b16 %v2008
        %v2521 = vunpack.c.l.b16 %v2009
        %v2522 = vunpack.c.l.b16 %v2010
        %v2523 = vpack.c.b16 %v2268, %v2267
        %v2524 = vpack.c.b16 %v2270, %v2269
        %v2525 = vpack.c.b16 %v2272, %v2271
        %v2526 = vpack.c.b16 %v2274, %v2273
        %v2527 = vpack.c.b16 %v2276, %v2275
        %v2528 = vpack.c.b16 %v2278, %v2277
        %v2529 = vpack.c.b16 %v2280, %v2279
        %v2530 = vpack.c.b16 %v2282, %v2281
        %v2531 = vpack.c.b16 %v2284, %v2283
        %v2532 = vpack.c.b16 %v2286, %v2285
        %v2533 = vpack.c.b16 %v2288, %v2287
        %v2534 = vpack.c.b16 %v2290, %v2289
        %v2535 = vpack.c.b16 %v2292, %v2291
        %v2536 = vpack.c.b16 %v2294, %v2293
        %v2537 = vpack.c.b16 %v2296, %v2295
        %v2538 = vpack.c.b16 %v2298, %v2297
        %v2539 = vpack.c.b16 %v2300, %v2299
        %v2540 = vpack.c.b16 %v2302, %v2301
        %v2541 = vpack.c.b16 %v2304, %v2303
        %v2542 = vpack.c.b16 %v2306, %v2305
        %v2543 = vpack.c.b16 %v2308, %v2307
        %v2544 = vpack.c.b16 %v2310, %v2309
        %v2545 = vpack.c.b16 %v2312, %v2311
        %v2546 = vpack.c.b16 %v2314, %v2313
        %v2547 = vpack.c.b16 %v2316, %v2315
        %v2548 = vpack.c.b16 %v2318, %v2317
        %v2549 = vpack.c.b16 %v2320, %v2319
        %v2550 = vpack.c.b16 %v2322, %v2321
        %v2551 = vpack.c.b16 %v2324, %v2323
        %v2552 = vpack.c.b16 %v2326, %v2325
        %v2553 = vpack.c.b16 %v2328, %v2327
        %v2554 = vpack.c.b16 %v2330, %v2329
        %v2555 = vpack.c.b16 %v2332, %v2331
        %v2556 = vpack.c.b16 %v2334, %v2333
        %v2557 = vpack.c.b16 %v2336, %v2335
        %v2558 = vpack.c.b16 %v2338, %v2337
        %v2559 = vpack.c.b16 %v2340, %v2339
        %v2560 = vpack.c.b16 %v2342, %v2341
        %v2561 = vpack.c.b16 %v2344, %v2343
        %v2562 = vpack.c.b16 %v2346, %v2345
        %v2563 = vpack.c.b16 %v2348, %v2347
        %v2564 = vpack.c.b16 %v2350, %v2349
        %v2565 = vpack.c.b16 %v2352, %v2351
        %v2566 = vpack.c.b16 %v2354, %v2353
        %v2567 = vpack.c.b16 %v2356, %v2355
        %v2568 = vpack.c.b16 %v2358, %v2357
        %v2569 = vpack.c.b16 %v2360, %v2359
        %v2570 = vpack.c.b16 %v2362, %v2361
        %v2571 = vpack.c.b16 %v2364, %v2363
        %v2572 = vpack.c.b16 %v2366, %v2365
        %v2573 = vpack.c.b16 %v2368, %v2367
        %v2574 = vpack.c.b16 %v2370, %v2369
        %v2575 = vpack.c.b16 %v2372, %v2371
        %v2576 = vpack.c.b16 %v2374, %v2373
        %v2577 = vpack.c.b16 %v2376, %v2375
        %v2578 = vpack.c.b16 %v2378, %v2377
        %v2579 = vpack.c.b16 %v2380, %v2379
        %v2580 = vpack.c.b16 %v2382, %v2381
        %v2581 = vpack.c.b16 %v2384, %v2383
        %v2582 = vpack.c.b16 %v2386, %v2385
        %v2583 = vpack.c.b16 %v2388, %v2387
        %v2584 = vpack.c.b16 %v2390, %v2389
        %v2585 = vpack.c.b16 %v2392, %v2391
        %v2586 = vpack.c.b16 %v2394, %v2393
        %v2587 = vpack.c.b16 %v2396, %v2395
        %v2588 = vpack.c.b16 %v2398, %v2397
        %v2589 = vpack.c.b16 %v2400, %v2399
        %v2590 = vpack.c.b16 %v2402, %v2401
        %v2591 = vpack.c.b16 %v2404, %v2403
        %v2592 = vpack.c.b16 %v2406, %v2405
        %v2593 = vpack.c.b16 %v2408, %v2407
        %v2594 = vpack.c.b16 %v2410, %v2409
        %v2595 = vpack.c.b16 %v2412, %v2411
        %v2596 = vpack.c.b16 %v2414, %v2413
        %v2597 = vpack.c.b16 %v2416, %v2415
        %v2598 = vpack.c.b16 %v2418, %v2417
        %v2599 = vpack.c.b16 %v2420, %v2419
        %v2600 = vpack.c.b16 %v2422, %v2421
        %v2601 = vpack.c.b16 %v2424, %v2423
        %v2602 = vpack.c.b16 %v2426, %v2425
        %v2603 = vpack.c.b16 %v2428, %v2427
        %v2604 = vpack.c.b16 %v2430, %v2429
        %v2605 = vpack.c.b16 %v2432, %v2431
        %v2606 = vpack.c.b16 %v2434, %v2433
        %v2607 = vpack.c.b16 %v2436, %v2435
        %v2608 = vpack.c.b16 %v2438, %v2437
        %v2609 = vpack.c.b16 %v2440, %v2439
        %v2610 = vpack.c.b16 %v2442, %v2441
        %v2611 = vpack.c.b16 %v2444, %v2443
        %v2612 = vpack.c.b16 %v2446, %v2445
        %v2613 = vpack.c.b16 %v2448, %v2447
        %v2614 = vpack.c.b16 %v2450, %v2449
        %v2615 = vpack.c.b16 %v2452, %v2451
        %v2616 = vpack.c.b16 %v2454, %v2453
        %v2617 = vpack.c.b16 %v2456, %v2455
        %v2618 = vpack.c.b16 %v2458, %v2457
        %v2619 = vpack.c.b16 %v2460, %v2459
        %v2620 = vpack.c.b16 %v2462, %v2461
        %v2621 = vpack.c.b16 %v2464, %v2463
        %v2622 = vpack.c.b16 %v2466, %v2465
        %v2623 = vpack.c.b16 %v2468, %v2467
        %v2624 = vpack.c.b16 %v2470, %v2469
        %v2625 = vpack.c.b16 %v2472, %v2471
        %v2626 = vpack.c.b16 %v2474, %v2473
        %v2627 = vpack.c.b16 %v2476, %v2475
        %v2628 = vpack.c.b16 %v2478, %v2477
        %v2629 = vpack.c.b16 %v2480, %v2479
        %v2630 = vpack.c.b16 %v2482, %v2481
        %v2631 = vpack.c.b16 %v2484, %v2483
        %v2632 = vpack.c.b16 %v2486, %v2485
        %v2633 = vpack.c.b16 %v2488, %v2487
        %v2634 = vpack.c.b16 %v2490, %v2489
        %v2635 = vpack.c.b16 %v2492, %v2491
        %v2636 = vpack.c.b16 %v2494, %v2493
        %v2637 = vpack.c.b16 %v2496, %v2495
        %v2638 = vpack.c.b16 %v2498, %v2497
        %v2639 = vpack.c.b16 %v2500, %v2499
        %v2640 = vpack.c.b16 %v2502, %v2501
        %v2641 = vpack.c.b16 %v2504, %v2503
        %v2642 = vpack.c.b16 %v2506, %v2505
        %v2643 = vpack.c.b16 %v2508, %v2507
        %v2644 = vpack.c.b16 %v2510, %v2509
        %v2645 = vpack.c.b16 %v2512, %v2511
        %v2646 = vpack.c.b16 %v2514, %v2513
        %v2647 = vpack.c.b16 %v2516, %v2515
        %v2648 = vpack.c.b16 %v2518, %v2517
        %v2649 = vpack.c.b16 %v2520, %v2519
        %v2650 = vpack.c.b16 %v2522, %v2521
        %2779 = vmatprep.subr.bf16.mxu0 0
        %2780 = vmatpush1.bf16.msra.mxu0 %v2523
        %2781 = vmatprep.subr.bf16.mxu0 0
        %2782 = vmatpush1.bf16.msra.mxu0 %v2524
        %2783 = vmatprep.subr.bf16.mxu0 0
        %2784 = vmatpush1.bf16.msra.mxu0 %v2525
        %2785 = vmatprep.subr.bf16.mxu0 0
        %2786 = vmatpush1.bf16.msra.mxu0 %v2526
        %2787 = vmatprep.subr.bf16.mxu0 0
        %2788 = vmatpush1.bf16.msra.mxu0 %v2527
        %2789 = vmatprep.subr.bf16.mxu0 0
        %2790 = vmatpush1.bf16.msra.mxu0 %v2528
        %2791 = vmatprep.subr.bf16.mxu0 0
        %2792 = vmatpush1.bf16.msra.mxu0 %v2529
        %2793 = vmatprep.subr.bf16.mxu0 0
        %2794 = vmatpush1.bf16.msra.mxu0 %v2530
        %2795 = vmatprep.subr.bf16.mxu0 0
        %2796 = vmatpush1.bf16.msra.mxu0 %v2531
        %2797 = vmatprep.subr.bf16.mxu0 0
        %2798 = vmatpush1.bf16.msra.mxu0 %v2532
        %2799 = vmatprep.subr.bf16.mxu0 0
        %2800 = vmatpush1.bf16.msra.mxu0 %v2533
        %2801 = vmatprep.subr.bf16.mxu0 0
        %2802 = vmatpush1.bf16.msra.mxu0 %v2534
        %2803 = vmatprep.subr.bf16.mxu0 0
        %2804 = vmatpush1.bf16.msra.mxu0 %v2535
        %2805 = vmatprep.subr.bf16.mxu0 0
        %2806 = vmatpush1.bf16.msra.mxu0 %v2536
        %2807 = vmatprep.subr.bf16.mxu0 0
        %2808 = vmatpush1.bf16.msra.mxu0 %v2537
        %2809 = vmatprep.subr.bf16.mxu0 0
        %2810 = vmatpush1.bf16.msra.mxu0 %v2538
        %2811 = vmatprep.mubr.bf16.mxu0 %v1740
        %2812 = vmatmul.mubr.bf16.gmra.mrb[0].mxu0 %v1739
        %v2813 = vpop.f32.mrb[0].mxu0
        %v2814 = vadd.f32 %v389, %v2813
        %v2815 = vpop.f32.mrb[0].mxu0
        %v2816 = vpop.f32.mrb[0].mxu0
        %v2817 = vpop.f32.mrb[0].mxu0
        %2818 = vdwg.mxu0
        %2819 = vmatprep.subr.bf16.mxu0 0
        %2820 = vmatpush1.bf16.msra.mxu0 %v2539
        %2821 = vmatprep.subr.bf16.mxu0 0
        %2822 = vmatpush1.bf16.msra.mxu0 %v2540
        %2823 = vmatprep.subr.bf16.mxu0 0
        %2824 = vmatpush1.bf16.msra.mxu0 %v2541
        %2825 = vmatprep.subr.bf16.mxu0 0
        %2826 = vmatpush1.bf16.msra.mxu0 %v2542
        %2827 = vmatprep.subr.bf16.mxu0 0
        %2828 = vmatpush1.bf16.msra.mxu0 %v2543
        %2829 = vmatprep.subr.bf16.mxu0 0
        %2830 = vmatpush1.bf16.msra.mxu0 %v2544
        %2831 = vmatprep.subr.bf16.mxu0 0
        %2832 = vmatpush1.bf16.msra.mxu0 %v2545
        %2833 = vmatprep.subr.bf16.mxu0 0
        %2834 = vmatpush1.bf16.msra.mxu0 %v2546
        %2835 = vmatprep.subr.bf16.mxu0 0
        %2836 = vmatpush1.bf16.msra.mxu0 %v2547
        %2837 = vmatprep.subr.bf16.mxu0 0
        %2838 = vmatpush1.bf16.msra.mxu0 %v2548
        %2839 = vmatprep.subr.bf16.mxu0 0
        %2840 = vmatpush1.bf16.msra.mxu0 %v2549
        %2841 = vmatprep.subr.bf16.mxu0 0
        %2842 = vmatpush1.bf16.msra.mxu0 %v2550
        %2843 = vmatprep.subr.bf16.mxu0 0
        %2844 = vmatpush1.bf16.msra.mxu0 %v2551
        %2845 = vmatprep.subr.bf16.mxu0 0
        %2846 = vmatpush1.bf16.msra.mxu0 %v2552
        %2847 = vmatprep.subr.bf16.mxu0 0
        %2848 = vmatpush1.bf16.msra.mxu0 %v2553
        %2849 = vmatprep.subr.bf16.mxu0 0
        %2850 = vmatpush1.bf16.msra.mxu0 %v2554
        %2851 = vmatprep.mubr.bf16.mxu0 %v1742
        %2852 = vmatmul.mubr.bf16.gmra.mrb[0].mxu0 %v1741
        %v2853 = vpop.f32.mrb[0].mxu0
        %v2854 = vadd.f32 %v2814, %v2853
        %v2855 = vpop.f32.mrb[0].mxu0
        %v2856 = vpop.f32.mrb[0].mxu0
        %v2857 = vpop.f32.mrb[0].mxu0
        %2858 = vdwg.mxu0
        %2859 = vmatprep.subr.bf16.mxu0 0
        %2860 = vmatpush1.bf16.msra.mxu0 %v2555
        %2861 = vmatprep.subr.bf16.mxu0 0
        %2862 = vmatpush1.bf16.msra.mxu0 %v2556
        %2863 = vmatprep.subr.bf16.mxu0 0
        %2864 = vmatpush1.bf16.msra.mxu0 %v2557
        %2865 = vmatprep.subr.bf16.mxu0 0
        %2866 = vmatpush1.bf16.msra.mxu0 %v2558
        %2867 = vmatprep.subr.bf16.mxu0 0
        %2868 = vmatpush1.bf16.msra.mxu0 %v2559
        %2869 = vmatprep.subr.bf16.mxu0 0
        %2870 = vmatpush1.bf16.msra.mxu0 %v2560
        %2871 = vmatprep.subr.bf16.mxu0 0
        %2872 = vmatpush1.bf16.msra.mxu0 %v2561
        %2873 = vmatprep.subr.bf16.mxu0 0
        %2874 = vmatpush1.bf16.msra.mxu0 %v2562
        %2875 = vmatprep.subr.bf16.mxu0 0
        %2876 = vmatpush1.bf16.msra.mxu0 %v2563
        %2877 = vmatprep.subr.bf16.mxu0 0
        %2878 = vmatpush1.bf16.msra.mxu0 %v2564
        %2879 = vmatprep.subr.bf16.mxu0 0
        %2880 = vmatpush1.bf16.msra.mxu0 %v2565
        %2881 = vmatprep.subr.bf16.mxu0 0
        %2882 = vmatpush1.bf16.msra.mxu0 %v2566
        %2883 = vmatprep.subr.bf16.mxu0 0
        %2884 = vmatpush1.bf16.msra.mxu0 %v2567
        %2885 = vmatprep.subr.bf16.mxu0 0
        %2886 = vmatpush1.bf16.msra.mxu0 %v2568
        %2887 = vmatprep.subr.bf16.mxu0 0
        %2888 = vmatpush1.bf16.msra.mxu0 %v2569
        %2889 = vmatprep.subr.bf16.mxu0 0
        %2890 = vmatpush1.bf16.msra.mxu0 %v2570
        %2891 = vmatprep.mubr.bf16.mxu0 %v1744
        %2892 = vmatmul.mubr.bf16.gmra.mrb[0].mxu0 %v1743
        %v2893 = vpop.f32.mrb[0].mxu0
        %v2894 = vadd.f32 %v2854, %v2893
        %v2895 = vpop.f32.mrb[0].mxu0
        %v2896 = vpop.f32.mrb[0].mxu0
        %v2897 = vpop.f32.mrb[0].mxu0
        %2898 = vdwg.mxu0
        %2899 = vmatprep.subr.bf16.mxu0 0
        %2900 = vmatpush1.bf16.msra.mxu0 %v2571
        %2901 = vmatprep.subr.bf16.mxu0 0
        %2902 = vmatpush1.bf16.msra.mxu0 %v2572
        %2903 = vmatprep.subr.bf16.mxu0 0
        %2904 = vmatpush1.bf16.msra.mxu0 %v2573
        %2905 = vmatprep.subr.bf16.mxu0 0
        %2906 = vmatpush1.bf16.msra.mxu0 %v2574
        %2907 = vmatprep.subr.bf16.mxu0 0
        %2908 = vmatpush1.bf16.msra.mxu0 %v2575
        %2909 = vmatprep.subr.bf16.mxu0 0
        %2910 = vmatpush1.bf16.msra.mxu0 %v2576
        %2911 = vmatprep.subr.bf16.mxu0 0
        %2912 = vmatpush1.bf16.msra.mxu0 %v2577
        %2913 = vmatprep.subr.bf16.mxu0 0
        %2914 = vmatpush1.bf16.msra.mxu0 %v2578
        %2915 = vmatprep.subr.bf16.mxu0 0
        %2916 = vmatpush1.bf16.msra.mxu0 %v2579
        %2917 = vmatprep.subr.bf16.mxu0 0
        %2918 = vmatpush1.bf16.msra.mxu0 %v2580
        %2919 = vmatprep.subr.bf16.mxu0 0
        %2920 = vmatpush1.bf16.msra.mxu0 %v2581
        %2921 = vmatprep.subr.bf16.mxu0 0
        %2922 = vmatpush1.bf16.msra.mxu0 %v2582
        %2923 = vmatprep.subr.bf16.mxu0 0
        %2924 = vmatpush1.bf16.msra.mxu0 %v2583
        %2925 = vmatprep.subr.bf16.mxu0 0
        %2926 = vmatpush1.bf16.msra.mxu0 %v2584
        %2927 = vmatprep.subr.bf16.mxu0 0
        %2928 = vmatpush1.bf16.msra.mxu0 %v2585
        %2929 = vmatprep.subr.bf16.mxu0 0
        %2930 = vmatpush1.bf16.msra.mxu0 %v2586
        %2931 = vmatprep.mubr.bf16.mxu0 %v1746
        %2932 = vmatmul.mubr.bf16.gmra.mrb[0].mxu0 %v1745
        %v2933 = vpop.f32.mrb[0].mxu0
        %v2934 = vadd.f32 %v2894, %v2933
        %v2935 = vpop.f32.mrb[0].mxu0
        %v2936 = vpop.f32.mrb[0].mxu0
        %v2937 = vpop.f32.mrb[0].mxu0
        %2938 = vdwg.mxu0
        %2939 = vmatprep.subr.bf16.mxu0 0
        %2940 = vmatpush1.bf16.msra.mxu0 %v2587
        %2941 = vmatprep.subr.bf16.mxu0 0
        %2942 = vmatpush1.bf16.msra.mxu0 %v2588
        %2943 = vmatprep.subr.bf16.mxu0 0
        %2944 = vmatpush1.bf16.msra.mxu0 %v2589
        %2945 = vmatprep.subr.bf16.mxu0 0
        %2946 = vmatpush1.bf16.msra.mxu0 %v2590
        %2947 = vmatprep.subr.bf16.mxu0 0
        %2948 = vmatpush1.bf16.msra.mxu0 %v2591
        %2949 = vmatprep.subr.bf16.mxu0 0
        %2950 = vmatpush1.bf16.msra.mxu0 %v2592
        %2951 = vmatprep.subr.bf16.mxu0 0
        %2952 = vmatpush1.bf16.msra.mxu0 %v2593
        %2953 = vmatprep.subr.bf16.mxu0 0
        %2954 = vmatpush1.bf16.msra.mxu0 %v2594
        %2955 = vmatprep.subr.bf16.mxu0 0
        %2956 = vmatpush1.bf16.msra.mxu0 %v2595
        %2957 = vmatprep.subr.bf16.mxu0 0
        %2958 = vmatpush1.bf16.msra.mxu0 %v2596
        %2959 = vmatprep.subr.bf16.mxu0 0
        %2960 = vmatpush1.bf16.msra.mxu0 %v2597
        %2961 = vmatprep.subr.bf16.mxu0 0
        %2962 = vmatpush1.bf16.msra.mxu0 %v2598
        %2963 = vmatprep.subr.bf16.mxu0 0
        %2964 = vmatpush1.bf16.msra.mxu0 %v2599
        %2965 = vmatprep.subr.bf16.mxu0 0
        %2966 = vmatpush1.bf16.msra.mxu0 %v2600
        %2967 = vmatprep.subr.bf16.mxu0 0
        %2968 = vmatpush1.bf16.msra.mxu0 %v2601
        %2969 = vmatprep.subr.bf16.mxu0 0
        %2970 = vmatpush1.bf16.msra.mxu0 %v2602
        %2971 = vmatprep.mubr.bf16.mxu0 %v1748
        %2972 = vmatmul.mubr.bf16.gmra.mrb[0].mxu0 %v1747
        %v2973 = vpop.f32.mrb[0].mxu0
        %v2974 = vadd.f32 %v2934, %v2973
        %v2975 = vpop.f32.mrb[0].mxu0
        %v2976 = vpop.f32.mrb[0].mxu0
        %v2977 = vpop.f32.mrb[0].mxu0
        %2978 = vdwg.mxu0
        %2979 = vmatprep.subr.bf16.mxu0 0
        %2980 = vmatpush1.bf16.msra.mxu0 %v2603
        %2981 = vmatprep.subr.bf16.mxu0 0
        %2982 = vmatpush1.bf16.msra.mxu0 %v2604
        %2983 = vmatprep.subr.bf16.mxu0 0
        %2984 = vmatpush1.bf16.msra.mxu0 %v2605
        %2985 = vmatprep.subr.bf16.mxu0 0
        %2986 = vmatpush1.bf16.msra.mxu0 %v2606
        %2987 = vmatprep.subr.bf16.mxu0 0
        %2988 = vmatpush1.bf16.msra.mxu0 %v2607
        %2989 = vmatprep.subr.bf16.mxu0 0
        %2990 = vmatpush1.bf16.msra.mxu0 %v2608
        %2991 = vmatprep.subr.bf16.mxu0 0
        %2992 = vmatpush1.bf16.msra.mxu0 %v2609
        %2993 = vmatprep.subr.bf16.mxu0 0
        %2994 = vmatpush1.bf16.msra.mxu0 %v2610
        %2995 = vmatprep.subr.bf16.mxu0 0
        %2996 = vmatpush1.bf16.msra.mxu0 %v2611
        %2997 = vmatprep.subr.bf16.mxu0 0
        %2998 = vmatpush1.bf16.msra.mxu0 %v2612
        %2999 = vmatprep.subr.bf16.mxu0 0
        %3000 = vmatpush1.bf16.msra.mxu0 %v2613
        %3001 = vmatprep.subr.bf16.mxu0 0
        %3002 = vmatpush1.bf16.msra.mxu0 %v2614
        %3003 = vmatprep.subr.bf16.mxu0 0
        %3004 = vmatpush1.bf16.msra.mxu0 %v2615
        %3005 = vmatprep.subr.bf16.mxu0 0
        %3006 = vmatpush1.bf16.msra.mxu0 %v2616
        %3007 = vmatprep.subr.bf16.mxu0 0
        %3008 = vmatpush1.bf16.msra.mxu0 %v2617
        %3009 = vmatprep.subr.bf16.mxu0 0
        %3010 = vmatpush1.bf16.msra.mxu0 %v2618
        %3011 = vmatprep.mubr.bf16.mxu0 %v1750
        %3012 = vmatmul.mubr.bf16.gmra.mrb[0].mxu0 %v1749
        %v3013 = vpop.f32.mrb[0].mxu0
        %v3014 = vadd.f32 %v2974, %v3013
        %v3015 = vpop.f32.mrb[0].mxu0
        %v3016 = vpop.f32.mrb[0].mxu0
        %v3017 = vpop.f32.mrb[0].mxu0
        %3018 = vdwg.mxu0
        %3019 = vmatprep.subr.bf16.mxu0 0
        %3020 = vmatpush1.bf16.msra.mxu0 %v2619
        %3021 = vmatprep.subr.bf16.mxu0 0
        %3022 = vmatpush1.bf16.msra.mxu0 %v2620
        %3023 = vmatprep.subr.bf16.mxu0 0
        %3024 = vmatpush1.bf16.msra.mxu0 %v2621
        %3025 = vmatprep.subr.bf16.mxu0 0
        %3026 = vmatpush1.bf16.msra.mxu0 %v2622
        %3027 = vmatprep.subr.bf16.mxu0 0
        %3028 = vmatpush1.bf16.msra.mxu0 %v2623
        %3029 = vmatprep.subr.bf16.mxu0 0
        %3030 = vmatpush1.bf16.msra.mxu0 %v2624
        %3031 = vmatprep.subr.bf16.mxu0 0
        %3032 = vmatpush1.bf16.msra.mxu0 %v2625
        %3033 = vmatprep.subr.bf16.mxu0 0
        %3034 = vmatpush1.bf16.msra.mxu0 %v2626
        %3035 = vmatprep.subr.bf16.mxu0 0
        %3036 = vmatpush1.bf16.msra.mxu0 %v2627
        %3037 = vmatprep.subr.bf16.mxu0 0
        %3038 = vmatpush1.bf16.msra.mxu0 %v2628
        %3039 = vmatprep.subr.bf16.mxu0 0
        %3040 = vmatpush1.bf16.msra.mxu0 %v2629
        %3041 = vmatprep.subr.bf16.mxu0 0
        %3042 = vmatpush1.bf16.msra.mxu0 %v2630
        %3043 = vmatprep.subr.bf16.mxu0 0
        %3044 = vmatpush1.bf16.msra.mxu0 %v2631
        %3045 = vmatprep.subr.bf16.mxu0 0
        %3046 = vmatpush1.bf16.msra.mxu0 %v2632
        %3047 = vmatprep.subr.bf16.mxu0 0
        %3048 = vmatpush1.bf16.msra.mxu0 %v2633
        %3049 = vmatprep.subr.bf16.mxu0 0
        %3050 = vmatpush1.bf16.msra.mxu0 %v2634
        %3051 = vmatprep.mubr.bf16.mxu0 %v1752
        %3052 = vmatmul.mubr.bf16.gmra.mrb[0].mxu0 %v1751
        %v3053 = vpop.f32.mrb[0].mxu0
        %v3054 = vadd.f32 %v3014, %v3053
        %v3055 = vpop.f32.mrb[0].mxu0
        %v3056 = vpop.f32.mrb[0].mxu0
        %v3057 = vpop.f32.mrb[0].mxu0
        %3058 = vdwg.mxu0
        %3059 = vmatprep.subr.bf16.mxu0 0
        %3060 = vmatpush1.bf16.msra.mxu0 %v2635
        %3061 = vmatprep.subr.bf16.mxu0 0
        %3062 = vmatpush1.bf16.msra.mxu0 %v2636
        %3063 = vmatprep.subr.bf16.mxu0 0
        %3064 = vmatpush1.bf16.msra.mxu0 %v2637
        %3065 = vmatprep.subr.bf16.mxu0 0
        %3066 = vmatpush1.bf16.msra.mxu0 %v2638
        %3067 = vmatprep.subr.bf16.mxu0 0
        %3068 = vmatpush1.bf16.msra.mxu0 %v2639
        %3069 = vmatprep.subr.bf16.mxu0 0
        %3070 = vmatpush1.bf16.msra.mxu0 %v2640
        %3071 = vmatprep.subr.bf16.mxu0 0
        %3072 = vmatpush1.bf16.msra.mxu0 %v2641
        %3073 = vmatprep.subr.bf16.mxu0 0
        %3074 = vmatpush1.bf16.msra.mxu0 %v2642
        %3075 = vmatprep.subr.bf16.mxu0 0
        %3076 = vmatpush1.bf16.msra.mxu0 %v2643
        %3077 = vmatprep.subr.bf16.mxu0 0
        %3078 = vmatpush1.bf16.msra.mxu0 %v2644
        %3079 = vmatprep.subr.bf16.mxu0 0
        %3080 = vmatpush1.bf16.msra.mxu0 %v2645
        %3081 = vmatprep.subr.bf16.mxu0 0
        %3082 = vmatpush1.bf16.msra.mxu0 %v2646
        %3083 = vmatprep.subr.bf16.mxu0 0
        %3084 = vmatpush1.bf16.msra.mxu0 %v2647
        %3085 = vmatprep.subr.bf16.mxu0 0
        %3086 = vmatpush1.bf16.msra.mxu0 %v2648
        %3087 = vmatprep.subr.bf16.mxu0 0
        %3088 = vmatpush1.bf16.msra.mxu0 %v2649
        %3089 = vmatprep.subr.bf16.mxu0 0
        %3090 = vmatpush1.bf16.msra.mxu0 %v2650
        %3091 = vmatprep.mubr.bf16.mxu0 %v1754
        %3092 = vmatmul.mubr.bf16.gmra.mrb[0].mxu0 %v1753
        %v3093 = vpop.f32.mrb[0].mxu0
        %v3094 = vadd.f32 %v3054, %v3093
        %v3095 = vpop.f32.mrb[0].mxu0
        %v3096 = vpop.f32.mrb[0].mxu0
        %v3097 = vpop.f32.mrb[0].mxu0
        %3098 = vdwg.mxu0
        %v3099 = vadd.f32 %v1114, %v3094
        %v3100 = vsel %vm1098, %v3099, 0.0
        %3101 = vadd.xlane.f32.xlu0 %v3100
        %v3102 = vpop.xlane.xlu0 %3101
        %v3103 = vmul.f32 %v3102, %v1102
        %v3104 = vsub.f32 %v3099, %v3103
        %v3105 = vmul.f32 %v3104, %v3104
        %v3106 = vsel %vm1098, %v3105, 0.0
        %3107 = vadd.xlane.f32.xlu0 %v3106
        %v3108 = vpop.xlane.xlu0 %3107
        %v3109 = vmul.f32 %v3108, %v1102
        %v3110 = vadd.f32 %v3109, 1e-05
        %v3111 = vrsqrt.pop %v3110
        %v3112 = vmul.f32 %v3104, %v3111
        %v3113 = vmul.f32 %v3112, %v390
        %v3114 = vadd.f32 %v3113, %v391
        %v3115 = vpack.c.bf16 %v3114, %v3114
        %v3116 = vld [vmem:[%s9] sm:$0xf]
        %v3117 = vld [vmem:[%s9 + $0x4] sm:$0xf]
        %v3118 = vld [vmem:[%s9 + $0x8] sm:$0xf]
        %v3119 = vld [vmem:[%s9 + $0xc] sm:$0xf]
        %v3120 = vld [vmem:[%s10] sm:$0x1]
        %v3125 = vunpack.c.l.b16 %v3116
        %v3126 = vunpack.c.l.b16 %v3117
        %v3127 = vunpack.c.l.b16 %v3118
        %v3128 = vunpack.c.l.b16 %v3119
        %v3129 = vpack.c.b16 %v3126, %v3125
        %v3130 = vpack.c.b16 %v3128, %v3127
        %v3134 = vsel %vm409, %v3115, 0
        %3136 = vmatprep.subr.bf16.mxu0 0
        %3137 = vmatpush1.bf16.msra.mxu0 %v3129
        %3138 = vmatprep.subr.bf16.mxu0 0
        %3139 = vmatpush1.bf16.msra.mxu0 %v3130
        %3140 = vmatprep.subr.bf16.mxu0 0
        %3141 = vmatpush1.bf16.msra.mxu0 0
        %3142 = vmatprep.subr.bf16.mxu0 0
        %3143 = vmatpush1.bf16.msra.mxu0 0
        %3144 = vmatprep.subr.bf16.mxu0 0
        %3145 = vmatpush1.bf16.msra.mxu0 0
        %3146 = vmatprep.subr.bf16.mxu0 0
        %3147 = vmatpush1.bf16.msra.mxu0 0
        %3148 = vmatprep.subr.bf16.mxu0 0
        %3149 = vmatpush1.bf16.msra.mxu0 0
        %3150 = vmatprep.subr.bf16.mxu0 0
        %3151 = vmatpush1.bf16.msra.mxu0 0
        %3152 = vmatprep.subr.bf16.mxu0 0
        %3153 = vmatpush1.bf16.msra.mxu0 0
        %3154 = vmatprep.subr.bf16.mxu0 0
        %3155 = vmatpush1.bf16.msra.mxu0 0
        %3156 = vmatprep.subr.bf16.mxu0 0
        %3157 = vmatpush1.bf16.msra.mxu0 0
        %3158 = vmatprep.subr.bf16.mxu0 0
        %3159 = vmatpush1.bf16.msra.mxu0 0
        %3160 = vmatprep.subr.bf16.mxu0 0
        %3161 = vmatpush1.bf16.msra.mxu0 0
        %3162 = vmatprep.subr.bf16.mxu0 0
        %3163 = vmatpush1.bf16.msra.mxu0 0
        %3164 = vmatprep.subr.bf16.mxu0 0
        %3165 = vmatpush1.bf16.msra.mxu0 0
        %3166 = vmatprep.subr.bf16.mxu0 0
        %3167 = vmatpush1.bf16.msra.mxu0 0
        %3168 = vmatprep.mubr.bf16.mxu0 0
        %3169 = vmatmul.mubr.bf16.gmra.mrb[0].mxu0 %v3134
        %v3170 = vpop.f32.mrb[0].mxu0
        %v3171 = vadd.f32 %v3120, %v3170
        %v3172 = vpop.f32.mrb[0].mxu0
        %v3173 = vpop.f32.mrb[0].mxu0
        %v3174 = vpop.f32.mrb[0].mxu0
        %3175 = vdwg.mxu0
        %3176 = vst.msk [vmem:[%s376] sm:$0x1] %vm624, %v3171
        %s3177 = sand.u32 %s269, 1
        %s3178 = scalar_lea.sflag [#allocation3], %s3177
        %s3179 = sand.u32 %s269, 1
        %s3180 = scalar_lea.vmem [#allocation2], %s3179
        // Predicated region
        $region65: #{transformer_forward.3} parent=63 // pred_check
          %p3181 = pneg %p279
        $region66: #{transformer_forward.3} parent=63 // pred_check_branch
          %3183 = sbr.rel (%p3181) target = $region68
        $region67: #{transformer_forward.3} parent=63 // pred_region
          %s3185 = ssub.s32 16, 16
          %3186 = vsyncadd %s3178, %s3185
          %s3187 = smul.addr %s25, 16
          %s3188 = scalar_lea.hbm %s11, %s3187
          %s3190 = sshll.u32 %s3180, 4
          %s3191 = int_to_ptr.vmem [resolvable:$true] %s3190
          %3193 = dma.vmem_to_hbm [thread:$0]  %s3191, 16, %s3188, %s3178
        $region68: #{transformer_forward.3} parent=63 // pred_fallthru
          _
      $region64: #{transformer_forward.3} parent=5 // pred_fallthru
        _
      %p3194 = scmp.le.s32.totalorder 2, %s20
      // Predicated region
      $region69: #{transformer_forward.3} parent=5 // pred_check
        %p3195 = pneg %p3194
      $region70: #{transformer_forward.3} parent=5 // pred_check_branch
        %3197 = sbr.rel (%p3195) target = $region72
      $region71: #{transformer_forward.3} parent=5 // pred_region
        %s3198 = ssub.s32 %s20, 2
        // Predicated region
        $region73: #{transformer_forward.3} parent=71 // pred_check
          %p3199 = pneg %p285
        $region74: #{transformer_forward.3} parent=71 // pred_check_branch
          %3201 = sbr.rel (%p3199) target = $region76
        $region75: #{transformer_forward.3} parent=71 // pred_region
          %s3202 = sand.u32 %s270, 1
          %s3203 = scalar_lea.sflag [#allocation3], %s3202
          %s3204 = sand.u32 %s270, 1
          %s3205 = scalar_lea.vmem [#allocation2], %s3204
          %3206 = dma.done %s3203, 16
        $region76: #{transformer_forward.3} parent=71 // pred_fallthru
          _
      $region72: #{transformer_forward.3} parent=5 // pred_fallthru
        _
    $region6: #{transformer_forward.3} parent=1 // loop_footer
      %s24 = sadd.s32 1, %s20
    $region7: #{transformer_forward.3} parent=1 // loop_footer_branch
      %19 = sbr.rel target = $region3
    $region8: #{transformer_forward.3} parent=1 // loop_exit
      _
    %3207 = vsyncpa [#allocation3], 1
    %s3208 = scalar_lea.sflag [#allocation3], 1
    %3209 = vsyncpa %s3208, 1

</llo_original>
